<compile_context>
chip_gen: v7x
topology: tpu7x:2x2x1
jax: 0.10.0
libtpu: 0.0.40
codegen_flags: <defaults>
</compile_context>

<pallas_src>
import jax
import jax.numpy as jnp
from jax import lax
from jax.experimental import pallas as pl
from jax.experimental.pallas import tpu as pltpu

HIDDEN = 256   # LSTM hidden size (fixed by the module)
MID = 64       # hidden2 output size
INP = 1        # LSTM input size


def regrnet_kernel(x_ref,                       # (seq, batch, 1)        f32
                   wih0_ref, whh0_ref, b0_ref,  # (1,4H) f32, (H,4H) bf16, (1,4H) f32
                   w1_ref, b1_ref,              # (2H,4H) bf16, (1,4H) f32
                   w2_ref, b2_ref,              # (H,64) f32, (1,64) f32
                   w3_ref, b3_ref,              # (1,64) f32, (1,1) f32
                   out_ref,                     # (batch, 1) f32
                   g0_ref):                     # scratch (seq, batch, 4H) f32
    seq = x_ref.shape[0]
    batch = x_ref.shape[1]
    H = whh0_ref.shape[0]

    # ---- Off-critical-path precompute: layer-0 input projection (+ combined
    # bias) for every timestep in one vectorized VPU op; per step we only index.
    g0_ref[...] = x_ref[...] * wih0_ref[...] + b0_ref[...]

    # Weights stay resident across the recurrence (tiny: ~1.6 MiB total).
    whh0 = whh0_ref[...]     # bf16 (H, 4H)
    w1 = w1_ref[...]         # bf16 (2H, 4H)  == vstack([W_ih1, W_hh1])
    b1 = b1_ref[...]         # f32  (1, 4H)

    def lstm_cell(gates, c_prev):
        # PyTorch gate order: i, f, g, o.  All elementwise math in f32.
        i = jax.nn.sigmoid(gates[:, 0 * H:1 * H])
        f = jax.nn.sigmoid(gates[:, 1 * H:2 * H])
        g = jnp.tanh(gates[:, 2 * H:3 * H])
        o = jax.nn.sigmoid(gates[:, 3 * H:4 * H])
        c = f * c_prev + i * g
        h = o * jnp.tanh(c)
        return h, c

    def step(t, carry):
        h0, c0, h1, c1 = carry
        # Layer 0: precomputed input projection + one bf16 MXU matmul,
        # accumulated in f32.
        gates0 = g0_ref[t] + jnp.dot(h0.astype(jnp.bfloat16), whh0,
                                     preferred_element_type=jnp.float32)
        h0, c0 = lstm_cell(gates0, c0)
        # Layer 1: single fused GEMM  [h0 | h1] @ [W_ih1 ; W_hh1]  (K = 2H).
        hcat = jnp.concatenate(
            [h0.astype(jnp.bfloat16), h1.astype(jnp.bfloat16)], axis=1)
        gates1 = jnp.dot(hcat, w1, preferred_element_type=jnp.float32) + b1
        h1, c1 = lstm_cell(gates1, c1)
        return h0, c0, h1, c1

    zeros = jnp.zeros((batch, H), jnp.float32)
    # seq is a small static trip count -> fully unroll the recurrence.
    _, _, h1, _ = lax.fori_loop(0, seq, step, (zeros, zeros, zeros, zeros),
                                unroll=True)

    # Heads on the last timestep of the layer-2 output (exactly h1 here).
    z = jnp.dot(h1, w2_ref[...], preferred_element_type=jnp.float32) + b2_ref[...]
    # out: Linear(64, 1) as a VPU multiply + lane reduction (skip the MXU for N=1).
    y = jnp.sum(z * w3_ref[...], axis=-1, keepdims=True) + b3_ref[...]
    out_ref[...] = y


def init_params(key):
    """Deterministic synthetic parameters with PyTorch-equivalent shapes,
    pre-transposed / fused / down-cast so the kernel computes `h @ W`:
      - layer-1 input & recurrent weights fused into one (2H, 4H) matrix,
      - big recurrent matrices stored in bf16 (f32 accumulation in-kernel),
      - bias pairs (b_ih + b_hh) combined."""
    ks = jax.random.split(key, 12)
    s = 1.0 / jnp.sqrt(jnp.float32(HIDDEN))

    def u(k, shape):
        return jax.random.uniform(k, shape, jnp.float32, -s, s)

    # LSTM layer 0 (PyTorch: W_ih (4H,1), W_hh (4H,H), b_ih (4H,), b_hh (4H,))
    wih0 = u(ks[0], (4 * HIDDEN, INP)).T                          # (1, 4H)  f32
    whh0 = u(ks[1], (4 * HIDDEN, HIDDEN)).T.astype(jnp.bfloat16)  # (H, 4H)  bf16
    b0 = (u(ks[2], (4 * HIDDEN,)) + u(ks[3], (4 * HIDDEN,))).reshape(1, 4 * HIDDEN)
    # LSTM layer 1 (W_ih (4H,H), W_hh (4H,H)) -> fused (2H, 4H) bf16
    wih1 = u(ks[4], (4 * HIDDEN, HIDDEN)).T                       # (H, 4H)
    whh1 = u(ks[5], (4 * HIDDEN, HIDDEN)).T                       # (H, 4H)
    w1 = jnp.concatenate([wih1, whh1], axis=0).astype(jnp.bfloat16)  # (2H, 4H)
    b1 = (u(ks[6], (4 * HIDDEN,)) + u(ks[7], (4 * HIDDEN,))).reshape(1, 4 * HIDDEN)
    # hidden2: Linear(256, 64)
    w2 = u(ks[8], (MID, HIDDEN)).T                                # (H, 64)  f32
    b2 = u(ks[9], (MID,)).reshape(1, MID)
    # out: Linear(64, 1), stored as a row vector for the VPU lane-reduce.
    w3 = u(ks[10], (1, MID))                                      # (1, 64)  f32
    b3 = u(ks[11], (1,)).reshape(1, 1)
    return (wih0, whh0, b0, w1, b1, w2, b2, w3, b3)


@jax.jit
def regrnet_forward(x, params):
    seq, batch, _ = x.shape
    vmem = pl.BlockSpec(memory_space=pltpu.MemorySpace.VMEM)
    out = pl.pallas_call(
        regrnet_kernel,
        out_shape=jax.ShapeDtypeStruct((batch, 1), jnp.float32),
        in_specs=[vmem] * (1 + len(params)),
        out_specs=vmem,
        scratch_shapes=[pltpu.VMEM((seq, batch, 4 * HIDDEN), jnp.float32)],
    )(x, *params)
    return out.reshape(1, batch, 1)


def regrnet_reference(x, params):
    """Pure-JAX reference of the identical forward pass (same fused layout and
    bf16-weight / f32-accumulate precision policy) for the correctness check.
    Structurally it matches the PyTorch module: 2-layer LSTM, heads applied to
    the last timestep, output reshaped to (1, batch, 1)."""
    wih0, whh0, b0, w1, b1, w2, b2, w3, b3 = params
    seq, batch, _ = x.shape
    H = whh0.shape[0]

    g0_all = x * wih0 + b0                                   # (seq, batch, 4H)

    def cell(gates, c_prev):
        i = jax.nn.sigmoid(gates[:, 0 * H:1 * H])
        f = jax.nn.sigmoid(gates[:, 1 * H:2 * H])
        g = jnp.tanh(gates[:, 2 * H:3 * H])
        o = jax.nn.sigmoid(gates[:, 3 * H:4 * H])
        c = f * c_prev + i * g
        return o * jnp.tanh(c), c

    h0 = c0 = h1 = c1 = jnp.zeros((batch, H), jnp.float32)
    for t in range(seq):
        gates0 = g0_all[t] + jnp.dot(h0.astype(jnp.bfloat16), whh0,
                                     preferred_element_type=jnp.float32)
        h0, c0 = cell(gates0, c0)
        hcat = jnp.concatenate(
            [h0.astype(jnp.bfloat16), h1.astype(jnp.bfloat16)], axis=1)
        gates1 = jnp.dot(hcat, w1, preferred_element_type=jnp.float32) + b1
        h1, c1 = cell(gates1, c1)

    z = jnp.dot(h1, w2, preferred_element_type=jnp.float32) + b2
    y = jnp.sum(z * w3, axis=-1, keepdims=True) + b3
    return y.reshape(1, batch, 1)


if __name__ == "__main__":
    key = jax.random.PRNGKey(0)
    k_p, k_x = jax.random.split(key)
    params = init_params(k_p)

    seq_len, batch = 8, 2
    x = jax.random.normal(k_x, (seq_len, batch, INP), jnp.float32)

    y = regrnet_forward(x, params)
    jax.block_until_ready(y)

    y_ref = regrnet_reference(x, params)
    assert y.shape == (1, batch, 1)
    assert jnp.allclose(y, y_ref, rtol=1e-3, atol=1e-3), (y, y_ref)

    print("KERNEL_OK")
</pallas_src>

<mosaic_0001>
module attributes {stable_mosaic.version = 11 : i64} {
  func.func @regrnet_kernel(%arg0: memref<8x2x1xf32, #tpu.memory_space<vmem>>, %arg1: memref<1x1024xf32, #tpu.memory_space<vmem>>, %arg2: memref<256x1024xbf16, #tpu.memory_space<vmem>>, %arg3: memref<1x1024xf32, #tpu.memory_space<vmem>>, %arg4: memref<512x1024xbf16, #tpu.memory_space<vmem>>, %arg5: memref<1x1024xf32, #tpu.memory_space<vmem>>, %arg6: memref<256x64xf32, #tpu.memory_space<vmem>>, %arg7: memref<1x64xf32, #tpu.memory_space<vmem>>, %arg8: memref<1x64xf32, #tpu.memory_space<vmem>>, %arg9: memref<1x1xf32, #tpu.memory_space<vmem>>, %arg10: memref<2x1xf32, #tpu.memory_space<vmem>>, %arg11: memref<8x2x1024xf32, #tpu.memory_space<vmem>>) attributes {dimension_semantics = [], scalar_prefetch = 0 : i64, scratch_operands = 1 : i64, tpu.core_type = #tpu.core_type<tc>} {
    %c0 = arith.constant 0 : index
    %c0_0 = arith.constant 0 : index
    %c0_1 = arith.constant 0 : index
    %0 = vector.load %arg0[%c0, %c0_0, %c0_1] : memref<8x2x1xf32, #tpu.memory_space<vmem>>, vector<8x2x1xf32>
    %c0_2 = arith.constant 0 : index
    %c0_3 = arith.constant 0 : index
    %1 = vector.load %arg1[%c0_2, %c0_3] : memref<1x1024xf32, #tpu.memory_space<vmem>>, vector<1x1024xf32>
    %2 = vector.shape_cast %1 : vector<1x1024xf32> to vector<1x1x1024xf32>
    %3 = vector.broadcast %0 : vector<8x2x1xf32> to vector<8x2x1024xf32>
    %4 = vector.broadcast %2 : vector<1x1x1024xf32> to vector<8x2x1024xf32>
    %5 = arith.mulf %3, %4 : vector<8x2x1024xf32>
    %c0_4 = arith.constant 0 : index
    %c0_5 = arith.constant 0 : index
    %6 = vector.load %arg3[%c0_4, %c0_5] : memref<1x1024xf32, #tpu.memory_space<vmem>>, vector<1x1024xf32>
    %7 = vector.shape_cast %6 : vector<1x1024xf32> to vector<1x1x1024xf32>
    %8 = vector.broadcast %7 : vector<1x1x1024xf32> to vector<8x2x1024xf32>
    %9 = arith.addf %5, %8 : vector<8x2x1024xf32>
    %c0_6 = arith.constant 0 : index
    %c0_7 = arith.constant 0 : index
    %c0_8 = arith.constant 0 : index
    %10 = vector.load %arg11[%c0_6, %c0_7, %c0_8] : memref<8x2x1024xf32, #tpu.memory_space<vmem>>, vector<8x2x1024xf32>
    tpu.vector_store %arg11[%c0_6, %c0_7, %c0_8], %9 {strides = array<i32>} : memref<8x2x1024xf32, #tpu.memory_space<vmem>>, vector<8x2x1024xf32>,
    %c0_9 = arith.constant 0 : index
    %c0_10 = arith.constant 0 : index
    %11 = vector.load %arg2[%c0_9, %c0_10] : memref<256x1024xbf16, #tpu.memory_space<vmem>>, vector<256x1024xbf16>
    %c0_11 = arith.constant 0 : index
    %c0_12 = arith.constant 0 : index
    %12 = vector.load %arg4[%c0_11, %c0_12] : memref<512x1024xbf16, #tpu.memory_space<vmem>>, vector<512x1024xbf16>
    %c0_13 = arith.constant 0 : index
    %c0_14 = arith.constant 0 : index
    %13 = vector.load %arg5[%c0_13, %c0_14] : memref<1x1024xf32, #tpu.memory_space<vmem>>, vector<1x1024xf32>
    %cst = arith.constant 0.000000e+00 : f32
    %14 = vector.broadcast %cst : f32 to vector<2x256xf32>
    %c0_i32 = arith.constant 0 : i32
    %15 = arith.index_cast %c0_i32 : i32 to index
    %c0_15 = arith.constant 0 : index
    %c0_16 = arith.constant 0 : index
    %16 = vector.load %arg11[%15, %c0_15, %c0_16] : memref<8x2x1024xf32, #tpu.memory_space<vmem>>, vector<1x2x1024xf32>
    %17 = vector.shape_cast %16 : vector<1x2x1024xf32> to vector<2x1024xf32>
    %18 = arith.truncf %14 : vector<2x256xf32> to vector<2x256xbf16>
    %cst_17 = arith.constant dense<0.000000e+00> : vector<2x1024xf32>
    %19 = tpu.matmul %18, %11, %cst_17 {dimension_numbers = #tpu.dot_dimension_numbers<[1], [0], [0], [1], [0, 0, 1, 1], [], []>} : vector<2x256xbf16>, vector<256x1024xbf16>, vector<2x1024xf32> -> vector<2x1024xf32>
    %20 = arith.addf %17, %19 : vector<2x1024xf32>
    %21 = vector.extract_strided_slice %20 {offsets = [0, 0], sizes = [2, 256], strides = [1, 1]} : vector<2x1024xf32> to vector<2x256xf32>
    %22 = arith.negf %21 : vector<2x256xf32>
    %23 = math.exp %22 : vector<2x256xf32>
    %cst_18 = arith.constant 1.000000e+00 : f32
    %24 = vector.broadcast %cst_18 : f32 to vector<2x256xf32>
    %25 = arith.addf %24, %23 : vector<2x256xf32>
    %26 = arith.divf %24, %25 : vector<2x256xf32>
    %27 = vector.extract_strided_slice %20 {offsets = [0, 256], sizes = [2, 256], strides = [1, 1]} : vector<2x1024xf32> to vector<2x256xf32>
    %28 = arith.negf %27 : vector<2x256xf32>
    %29 = math.exp %28 : vector<2x256xf32>
    %cst_19 = arith.constant 1.000000e+00 : f32
    %30 = vector.broadcast %cst_19 : f32 to vector<2x256xf32>
    %31 = arith.addf %30, %29 : vector<2x256xf32>
    %32 = arith.divf %30, %31 : vector<2x256xf32>
    %33 = vector.extract_strided_slice %20 {offsets = [0, 512], sizes = [2, 256], strides = [1, 1]} : vector<2x1024xf32> to vector<2x256xf32>
    %34 = math.tanh %33 : vector<2x256xf32>
    %35 = vector.extract_strided_slice %20 {offsets = [0, 768], sizes = [2, 256], strides = [1, 1]} : vector<2x1024xf32> to vector<2x256xf32>
    %36 = arith.negf %35 : vector<2x256xf32>
    %37 = math.exp %36 : vector<2x256xf32>
    %cst_20 = arith.constant 1.000000e+00 : f32
    %38 = vector.broadcast %cst_20 : f32 to vector<2x256xf32>
    %39 = arith.addf %38, %37 : vector<2x256xf32>
    %40 = arith.divf %38, %39 : vector<2x256xf32>
    %41 = arith.mulf %32, %14 : vector<2x256xf32>
    %42 = arith.mulf %26, %34 : vector<2x256xf32>
    %43 = arith.addf %41, %42 : vector<2x256xf32>
    %44 = math.tanh %43 : vector<2x256xf32>
    %45 = arith.mulf %40, %44 : vector<2x256xf32>
    %46 = arith.truncf %45 : vector<2x256xf32> to vector<2x256xbf16>
    %47 = arith.truncf %14 : vector<2x256xf32> to vector<2x256xbf16>
    %48 = tpu.concatenate %46, %47 in 1 : vector<2x256xbf16>, vector<2x256xbf16> -> vector<2x512xbf16>
    %cst_21 = arith.constant dense<0.000000e+00> : vector<2x1024xf32>
    %49 = tpu.matmul %48, %12, %cst_21 {dimension_numbers = #tpu.dot_dimension_numbers<[1], [0], [0], [1], [0, 0, 1, 1], [], []>} : vector<2x512xbf16>, vector<512x1024xbf16>, vector<2x1024xf32> -> vector<2x1024xf32>
    %50 = vector.broadcast %13 : vector<1x1024xf32> to vector<2x1024xf32>
    %51 = arith.addf %49, %50 : vector<2x1024xf32>
    %52 = vector.extract_strided_slice %51 {offsets = [0, 0], sizes = [2, 256], strides = [1, 1]} : vector<2x1024xf32> to vector<2x256xf32>
    %53 = arith.negf %52 : vector<2x256xf32>
    %54 = math.exp %53 : vector<2x256xf32>
    %cst_22 = arith.constant 1.000000e+00 : f32
    %55 = vector.broadcast %cst_22 : f32 to vector<2x256xf32>
    %56 = arith.addf %55, %54 : vector<2x256xf32>
    %57 = arith.divf %55, %56 : vector<2x256xf32>
    %58 = vector.extract_strided_slice %51 {offsets = [0, 256], sizes = [2, 256], strides = [1, 1]} : vector<2x1024xf32> to vector<2x256xf32>
    %59 = arith.negf %58 : vector<2x256xf32>
    %60 = math.exp %59 : vector<2x256xf32>
    %cst_23 = arith.constant 1.000000e+00 : f32
    %61 = vector.broadcast %cst_23 : f32 to vector<2x256xf32>
    %62 = arith.addf %61, %60 : vector<2x256xf32>
    %63 = arith.divf %61, %62 : vector<2x256xf32>
    %64 = vector.extract_strided_slice %51 {offsets = [0, 512], sizes = [2, 256], strides = [1, 1]} : vector<2x1024xf32> to vector<2x256xf32>
    %65 = math.tanh %64 : vector<2x256xf32>
    %66 = vector.extract_strided_slice %51 {offsets = [0, 768], sizes = [2, 256], strides = [1, 1]} : vector<2x1024xf32> to vector<2x256xf32>
    %67 = arith.negf %66 : vector<2x256xf32>
    %68 = math.exp %67 : vector<2x256xf32>
    %cst_24 = arith.constant 1.000000e+00 : f32
    %69 = vector.broadcast %cst_24 : f32 to vector<2x256xf32>
    %70 = arith.addf %69, %68 : vector<2x256xf32>
    %71 = arith.divf %69, %70 : vector<2x256xf32>
    %72 = arith.mulf %63, %14 : vector<2x256xf32>
    %73 = arith.mulf %57, %65 : vector<2x256xf32>
    %74 = arith.addf %72, %73 : vector<2x256xf32>
    %75 = math.tanh %74 : vector<2x256xf32>
    %76 = arith.mulf %71, %75 : vector<2x256xf32>
    %c1_i32 = arith.constant 1 : i32
    %77 = arith.index_cast %c1_i32 : i32 to index
    %c0_25 = arith.constant 0 : index
    %c0_26 = arith.constant 0 : index
    %78 = vector.load %arg11[%77, %c0_25, %c0_26] : memref<8x2x1024xf32, #tpu.memory_space<vmem>>, vector<1x2x1024xf32>
    %79 = vector.shape_cast %78 : vector<1x2x1024xf32> to vector<2x1024xf32>
    %80 = arith.truncf %45 : vector<2x256xf32> to vector<2x256xbf16>
    %cst_27 = arith.constant dense<0.000000e+00> : vector<2x1024xf32>
    %81 = tpu.matmul %80, %11, %cst_27 {dimension_numbers = #tpu.dot_dimension_numbers<[1], [0], [0], [1], [0, 0, 1, 1], [], []>} : vector<2x256xbf16>, vector<256x1024xbf16>, vector<2x1024xf32> -> vector<2x1024xf32>
    %82 = arith.addf %79, %81 : vector<2x1024xf32>
    %83 = vector.extract_strided_slice %82 {offsets = [0, 0], sizes = [2, 256], strides = [1, 1]} : vector<2x1024xf32> to vector<2x256xf32>
    %84 = arith.negf %83 : vector<2x256xf32>
    %85 = math.exp %84 : vector<2x256xf32>
    %cst_28 = arith.constant 1.000000e+00 : f32
    %86 = vector.broadcast %cst_28 : f32 to vector<2x256xf32>
    %87 = arith.addf %86, %85 : vector<2x256xf32>
    %88 = arith.divf %86, %87 : vector<2x256xf32>
    %89 = vector.extract_strided_slice %82 {offsets = [0, 256], sizes = [2, 256], strides = [1, 1]} : vector<2x1024xf32> to vector<2x256xf32>
    %90 = arith.negf %89 : vector<2x256xf32>
    %91 = math.exp %90 : vector<2x256xf32>
    %cst_29 = arith.constant 1.000000e+00 : f32
    %92 = vector.broadcast %cst_29 : f32 to vector<2x256xf32>
    %93 = arith.addf %92, %91 : vector<2x256xf32>
    %94 = arith.divf %92, %93 : vector<2x256xf32>
    %95 = vector.extract_strided_slice %82 {offsets = [0, 512], sizes = [2, 256], strides = [1, 1]} : vector<2x1024xf32> to vector<2x256xf32>
    %96 = math.tanh %95 : vector<2x256xf32>
    %97 = vector.extract_strided_slice %82 {offsets = [0, 768], sizes = [2, 256], strides = [1, 1]} : vector<2x1024xf32> to vector<2x256xf32>
    %98 = arith.negf %97 : vector<2x256xf32>
    %99 = math.exp %98 : vector<2x256xf32>
    %cst_30 = arith.constant 1.000000e+00 : f32
    %100 = vector.broadcast %cst_30 : f32 to vector<2x256xf32>
    %101 = arith.addf %100, %99 : vector<2x256xf32>
    %102 = arith.divf %100, %101 : vector<2x256xf32>
    %103 = arith.mulf %94, %43 : vector<2x256xf32>
    %104 = arith.mulf %88, %96 : vector<2x256xf32>
    %105 = arith.addf %103, %104 : vector<2x256xf32>
    %106 = math.tanh %105 : vector<2x256xf32>
    %107 = arith.mulf %102, %106 : vector<2x256xf32>
    %108 = arith.truncf %107 : vector<2x256xf32> to vector<2x256xbf16>
    %109 = arith.truncf %76 : vector<2x256xf32> to vector<2x256xbf16>
    %110 = tpu.concatenate %108, %109 in 1 : vector<2x256xbf16>, vector<2x256xbf16> -> vector<2x512xbf16>
    %cst_31 = arith.constant dense<0.000000e+00> : vector<2x1024xf32>
    %111 = tpu.matmul %110, %12, %cst_31 {dimension_numbers = #tpu.dot_dimension_numbers<[1], [0], [0], [1], [0, 0, 1, 1], [], []>} : vector<2x512xbf16>, vector<512x1024xbf16>, vector<2x1024xf32> -> vector<2x1024xf32>
    %112 = vector.broadcast %13 : vector<1x1024xf32> to vector<2x1024xf32>
    %113 = arith.addf %111, %112 : vector<2x1024xf32>
    %114 = vector.extract_strided_slice %113 {offsets = [0, 0], sizes = [2, 256], strides = [1, 1]} : vector<2x1024xf32> to vector<2x256xf32>
    %115 = arith.negf %114 : vector<2x256xf32>
    %116 = math.exp %115 : vector<2x256xf32>
    %cst_32 = arith.constant 1.000000e+00 : f32
    %117 = vector.broadcast %cst_32 : f32 to vector<2x256xf32>
    %118 = arith.addf %117, %116 : vector<2x256xf32>
    %119 = arith.divf %117, %118 : vector<2x256xf32>
    %120 = vector.extract_strided_slice %113 {offsets = [0, 256], sizes = [2, 256], strides = [1, 1]} : vector<2x1024xf32> to vector<2x256xf32>
    %121 = arith.negf %120 : vector<2x256xf32>
    %122 = math.exp %121 : vector<2x256xf32>
    %cst_33 = arith.constant 1.000000e+00 : f32
    %123 = vector.broadcast %cst_33 : f32 to vector<2x256xf32>
    %124 = arith.addf %123, %122 : vector<2x256xf32>
    %125 = arith.divf %123, %124 : vector<2x256xf32>
    %126 = vector.extract_strided_slice %113 {offsets = [0, 512], sizes = [2, 256], strides = [1, 1]} : vector<2x1024xf32> to vector<2x256xf32>
    %127 = math.tanh %126 : vector<2x256xf32>
    %128 = vector.extract_strided_slice %113 {offsets = [0, 768], sizes = [2, 256], strides = [1, 1]} : vector<2x1024xf32> to vector<2x256xf32>
    %129 = arith.negf %128 : vector<2x256xf32>
    %130 = math.exp %129 : vector<2x256xf32>
    %cst_34 = arith.constant 1.000000e+00 : f32
    %131 = vector.broadcast %cst_34 : f32 to vector<2x256xf32>
    %132 = arith.addf %131, %130 : vector<2x256xf32>
    %133 = arith.divf %131, %132 : vector<2x256xf32>
    %134 = arith.mulf %125, %74 : vector<2x256xf32>
    %135 = arith.mulf %119, %127 : vector<2x256xf32>
    %136 = arith.addf %134, %135 : vector<2x256xf32>
    %137 = math.tanh %136 : vector<2x256xf32>
    %138 = arith.mulf %133, %137 : vector<2x256xf32>
    %c2_i32 = arith.constant 2 : i32
    %139 = arith.index_cast %c2_i32 : i32 to index
    %c0_35 = arith.constant 0 : index
    %c0_36 = arith.constant 0 : index
    %140 = vector.load %arg11[%139, %c0_35, %c0_36] : memref<8x2x1024xf32, #tpu.memory_space<vmem>>, vector<1x2x1024xf32>
    %141 = vector.shape_cast %140 : vector<1x2x1024xf32> to vector<2x1024xf32>
    %142 = arith.truncf %107 : vector<2x256xf32> to vector<2x256xbf16>
    %cst_37 = arith.constant dense<0.000000e+00> : vector<2x1024xf32>
    %143 = tpu.matmul %142, %11, %cst_37 {dimension_numbers = #tpu.dot_dimension_numbers<[1], [0], [0], [1], [0, 0, 1, 1], [], []>} : vector<2x256xbf16>, vector<256x1024xbf16>, vector<2x1024xf32> -> vector<2x1024xf32>
    %144 = arith.addf %141, %143 : vector<2x1024xf32>
    %145 = vector.extract_strided_slice %144 {offsets = [0, 0], sizes = [2, 256], strides = [1, 1]} : vector<2x1024xf32> to vector<2x256xf32>
    %146 = arith.negf %145 : vector<2x256xf32>
    %147 = math.exp %146 : vector<2x256xf32>
    %cst_38 = arith.constant 1.000000e+00 : f32
    %148 = vector.broadcast %cst_38 : f32 to vector<2x256xf32>
    %149 = arith.addf %148, %147 : vector<2x256xf32>
    %150 = arith.divf %148, %149 : vector<2x256xf32>
    %151 = vector.extract_strided_slice %144 {offsets = [0, 256], sizes = [2, 256], strides = [1, 1]} : vector<2x1024xf32> to vector<2x256xf32>
    %152 = arith.negf %151 : vector<2x256xf32>
    %153 = math.exp %152 : vector<2x256xf32>
    %cst_39 = arith.constant 1.000000e+00 : f32
    %154 = vector.broadcast %cst_39 : f32 to vector<2x256xf32>
    %155 = arith.addf %154, %153 : vector<2x256xf32>
    %156 = arith.divf %154, %155 : vector<2x256xf32>
    %157 = vector.extract_strided_slice %144 {offsets = [0, 512], sizes = [2, 256], strides = [1, 1]} : vector<2x1024xf32> to vector<2x256xf32>
    %158 = math.tanh %157 : vector<2x256xf32>
    %159 = vector.extract_strided_slice %144 {offsets = [0, 768], sizes = [2, 256], strides = [1, 1]} : vector<2x1024xf32> to vector<2x256xf32>
    %160 = arith.negf %159 : vector<2x256xf32>
    %161 = math.exp %160 : vector<2x256xf32>
    %cst_40 = arith.constant 1.000000e+00 : f32
    %162 = vector.broadcast %cst_40 : f32 to vector<2x256xf32>
    %163 = arith.addf %162, %161 : vector<2x256xf32>
    %164 = arith.divf %162, %163 : vector<2x256xf32>
    %165 = arith.mulf %156, %105 : vector<2x256xf32>
    %166 = arith.mulf %150, %158 : vector<2x256xf32>
    %167 = arith.addf %165, %166 : vector<2x256xf32>
    %168 = math.tanh %167 : vector<2x256xf32>
    %169 = arith.mulf %164, %168 : vector<2x256xf32>
    %170 = arith.truncf %169 : vector<2x256xf32> to vector<2x256xbf16>
    %171 = arith.truncf %138 : vector<2x256xf32> to vector<2x256xbf16>
    %172 = tpu.concatenate %170, %171 in 1 : vector<2x256xbf16>, vector<2x256xbf16> -> vector<2x512xbf16>
    %cst_41 = arith.constant dense<0.000000e+00> : vector<2x1024xf32>
    %173 = tpu.matmul %172, %12, %cst_41 {dimension_numbers = #tpu.dot_dimension_numbers<[1], [0], [0], [1], [0, 0, 1, 1], [], []>} : vector<2x512xbf16>, vector<512x1024xbf16>, vector<2x1024xf32> -> vector<2x1024xf32>
    %174 = vector.broadcast %13 : vector<1x1024xf32> to vector<2x1024xf32>
    %175 = arith.addf %173, %174 : vector<2x1024xf32>
    %176 = vector.extract_strided_slice %175 {offsets = [0, 0], sizes = [2, 256], strides = [1, 1]} : vector<2x1024xf32> to vector<2x256xf32>
    %177 = arith.negf %176 : vector<2x256xf32>
    %178 = math.exp %177 : vector<2x256xf32>
    %cst_42 = arith.constant 1.000000e+00 : f32
    %179 = vector.broadcast %cst_42 : f32 to vector<2x256xf32>
    %180 = arith.addf %179, %178 : vector<2x256xf32>
    %181 = arith.divf %179, %180 : vector<2x256xf32>
    %182 = vector.extract_strided_slice %175 {offsets = [0, 256], sizes = [2, 256], strides = [1, 1]} : vector<2x1024xf32> to vector<2x256xf32>
    %183 = arith.negf %182 : vector<2x256xf32>
    %184 = math.exp %183 : vector<2x256xf32>
    %cst_43 = arith.constant 1.000000e+00 : f32
    %185 = vector.broadcast %cst_43 : f32 to vector<2x256xf32>
    %186 = arith.addf %185, %184 : vector<2x256xf32>
    %187 = arith.divf %185, %186 : vector<2x256xf32>
    %188 = vector.extract_strided_slice %175 {offsets = [0, 512], sizes = [2, 256], strides = [1, 1]} : vector<2x1024xf32> to vector<2x256xf32>
    %189 = math.tanh %188 : vector<2x256xf32>
    %190 = vector.extract_strided_slice %175 {offsets = [0, 768], sizes = [2, 256], strides = [1, 1]} : vector<2x1024xf32> to vector<2x256xf32>
    %191 = arith.negf %190 : vector<2x256xf32>
    %192 = math.exp %191 : vector<2x256xf32>
    %cst_44 = arith.constant 1.000000e+00 : f32
    %193 = vector.broadcast %cst_44 : f32 to vector<2x256xf32>
    %194 = arith.addf %193, %192 : vector<2x256xf32>
    %195 = arith.divf %193, %194 : vector<2x256xf32>
    %196 = arith.mulf %187, %136 : vector<2x256xf32>
    %197 = arith.mulf %181, %189 : vector<2x256xf32>
    %198 = arith.addf %196, %197 : vector<2x256xf32>
    %199 = math.tanh %198 : vector<2x256xf32>
    %200 = arith.mulf %195, %199 : vector<2x256xf32>
    %c3_i32 = arith.constant 3 : i32
    %201 = arith.index_cast %c3_i32 : i32 to index
    %c0_45 = arith.constant 0 : index
    %c0_46 = arith.constant 0 : index
    %202 = vector.load %arg11[%201, %c0_45, %c0_46] : memref<8x2x1024xf32, #tpu.memory_space<vmem>>, vector<1x2x1024xf32>
    %203 = vector.shape_cast %202 : vector<1x2x1024xf32> to vector<2x1024xf32>
    %204 = arith.truncf %169 : vector<2x256xf32> to vector<2x256xbf16>
    %cst_47 = arith.constant dense<0.000000e+00> : vector<2x1024xf32>
    %205 = tpu.matmul %204, %11, %cst_47 {dimension_numbers = #tpu.dot_dimension_numbers<[1], [0], [0], [1], [0, 0, 1, 1], [], []>} : vector<2x256xbf16>, vector<256x1024xbf16>, vector<2x1024xf32> -> vector<2x1024xf32>
    %206 = arith.addf %203, %205 : vector<2x1024xf32>
    %207 = vector.extract_strided_slice %206 {offsets = [0, 0], sizes = [2, 256], strides = [1, 1]} : vector<2x1024xf32> to vector<2x256xf32>
    %208 = arith.negf %207 : vector<2x256xf32>
    %209 = math.exp %208 : vector<2x256xf32>
    %cst_48 = arith.constant 1.000000e+00 : f32
    %210 = vector.broadcast %cst_48 : f32 to vector<2x256xf32>
    %211 = arith.addf %210, %209 : vector<2x256xf32>
    %212 = arith.divf %210, %211 : vector<2x256xf32>
    %213 = vector.extract_strided_slice %206 {offsets = [0, 256], sizes = [2, 256], strides = [1, 1]} : vector<2x1024xf32> to vector<2x256xf32>
    %214 = arith.negf %213 : vector<2x256xf32>
    %215 = math.exp %214 : vector<2x256xf32>
    %cst_49 = arith.constant 1.000000e+00 : f32
    %216 = vector.broadcast %cst_49 : f32 to vector<2x256xf32>
    %217 = arith.addf %216, %215 : vector<2x256xf32>
    %218 = arith.divf %216, %217 : vector<2x256xf32>
    %219 = vector.extract_strided_slice %206 {offsets = [0, 512], sizes = [2, 256], strides = [1, 1]} : vector<2x1024xf32> to vector<2x256xf32>
    %220 = math.tanh %219 : vector<2x256xf32>
    %221 = vector.extract_strided_slice %206 {offsets = [0, 768], sizes = [2, 256], strides = [1, 1]} : vector<2x1024xf32> to vector<2x256xf32>
    %222 = arith.negf %221 : vector<2x256xf32>
    %223 = math.exp %222 : vector<2x256xf32>
    %cst_50 = arith.constant 1.000000e+00 : f32
    %224 = vector.broadcast %cst_50 : f32 to vector<2x256xf32>
    %225 = arith.addf %224, %223 : vector<2x256xf32>
    %226 = arith.divf %224, %225 : vector<2x256xf32>
    %227 = arith.mulf %218, %167 : vector<2x256xf32>
    %228 = arith.mulf %212, %220 : vector<2x256xf32>
    %229 = arith.addf %227, %228 : vector<2x256xf32>
    %230 = math.tanh %229 : vector<2x256xf32>
    %231 = arith.mulf %226, %230 : vector<2x256xf32>
    %232 = arith.truncf %231 : vector<2x256xf32> to vector<2x256xbf16>
    %233 = arith.truncf %200 : vector<2x256xf32> to vector<2x256xbf16>
    %234 = tpu.concatenate %232, %233 in 1 : vector<2x256xbf16>, vector<2x256xbf16> -> vector<2x512xbf16>
    %cst_51 = arith.constant dense<0.000000e+00> : vector<2x1024xf32>
    %235 = tpu.matmul %234, %12, %cst_51 {dimension_numbers = #tpu.dot_dimension_numbers<[1], [0], [0], [1], [0, 0, 1, 1], [], []>} : vector<2x512xbf16>, vector<512x1024xbf16>, vector<2x1024xf32> -> vector<2x1024xf32>
    %236 = vector.broadcast %13 : vector<1x1024xf32> to vector<2x1024xf32>
    %237 = arith.addf %235, %236 : vector<2x1024xf32>
    %238 = vector.extract_strided_slice %237 {offsets = [0, 0], sizes = [2, 256], strides = [1, 1]} : vector<2x1024xf32> to vector<2x256xf32>
    %239 = arith.negf %238 : vector<2x256xf32>
    %240 = math.exp %239 : vector<2x256xf32>
    %cst_52 = arith.constant 1.000000e+00 : f32
    %241 = vector.broadcast %cst_52 : f32 to vector<2x256xf32>
    %242 = arith.addf %241, %240 : vector<2x256xf32>
    %243 = arith.divf %241, %242 : vector<2x256xf32>
    %244 = vector.extract_strided_slice %237 {offsets = [0, 256], sizes = [2, 256], strides = [1, 1]} : vector<2x1024xf32> to vector<2x256xf32>
    %245 = arith.negf %244 : vector<2x256xf32>
    %246 = math.exp %245 : vector<2x256xf32>
    %cst_53 = arith.constant 1.000000e+00 : f32
    %247 = vector.broadcast %cst_53 : f32 to vector<2x256xf32>
    %248 = arith.addf %247, %246 : vector<2x256xf32>
    %249 = arith.divf %247, %248 : vector<2x256xf32>
    %250 = vector.extract_strided_slice %237 {offsets = [0, 512], sizes = [2, 256], strides = [1, 1]} : vector<2x1024xf32> to vector<2x256xf32>
    %251 = math.tanh %250 : vector<2x256xf32>
    %252 = vector.extract_strided_slice %237 {offsets = [0, 768], sizes = [2, 256], strides = [1, 1]} : vector<2x1024xf32> to vector<2x256xf32>
    %253 = arith.negf %252 : vector<2x256xf32>
    %254 = math.exp %253 : vector<2x256xf32>
    %cst_54 = arith.constant 1.000000e+00 : f32
    %255 = vector.broadcast %cst_54 : f32 to vector<2x256xf32>
    %256 = arith.addf %255, %254 : vector<2x256xf32>
    %257 = arith.divf %255, %256 : vector<2x256xf32>
    %258 = arith.mulf %249, %198 : vector<2x256xf32>
    %259 = arith.mulf %243, %251 : vector<2x256xf32>
    %260 = arith.addf %258, %259 : vector<2x256xf32>
    %261 = math.tanh %260 : vector<2x256xf32>
    %262 = arith.mulf %257, %261 : vector<2x256xf32>
    %c4_i32 = arith.constant 4 : i32
    %263 = arith.index_cast %c4_i32 : i32 to index
    %c0_55 = arith.constant 0 : index
    %c0_56 = arith.constant 0 : index
    %264 = vector.load %arg11[%263, %c0_55, %c0_56] : memref<8x2x1024xf32, #tpu.memory_space<vmem>>, vector<1x2x1024xf32>
    %265 = vector.shape_cast %264 : vector<1x2x1024xf32> to vector<2x1024xf32>
    %266 = arith.truncf %231 : vector<2x256xf32> to vector<2x256xbf16>
    %cst_57 = arith.constant dense<0.000000e+00> : vector<2x1024xf32>
    %267 = tpu.matmul %266, %11, %cst_57 {dimension_numbers = #tpu.dot_dimension_numbers<[1], [0], [0], [1], [0, 0, 1, 1], [], []>} : vector<2x256xbf16>, vector<256x1024xbf16>, vector<2x1024xf32> -> vector<2x1024xf32>
    %268 = arith.addf %265, %267 : vector<2x1024xf32>
    %269 = vector.extract_strided_slice %268 {offsets = [0, 0], sizes = [2, 256], strides = [1, 1]} : vector<2x1024xf32> to vector<2x256xf32>
    %270 = arith.negf %269 : vector<2x256xf32>
    %271 = math.exp %270 : vector<2x256xf32>
    %cst_58 = arith.constant 1.000000e+00 : f32
    %272 = vector.broadcast %cst_58 : f32 to vector<2x256xf32>
    %273 = arith.addf %272, %271 : vector<2x256xf32>
    %274 = arith.divf %272, %273 : vector<2x256xf32>
    %275 = vector.extract_strided_slice %268 {offsets = [0, 256], sizes = [2, 256], strides = [1, 1]} : vector<2x1024xf32> to vector<2x256xf32>
    %276 = arith.negf %275 : vector<2x256xf32>
    %277 = math.exp %276 : vector<2x256xf32>
    %cst_59 = arith.constant 1.000000e+00 : f32
    %278 = vector.broadcast %cst_59 : f32 to vector<2x256xf32>
    %279 = arith.addf %278, %277 : vector<2x256xf32>
    %280 = arith.divf %278, %279 : vector<2x256xf32>
    %281 = vector.extract_strided_slice %268 {offsets = [0, 512], sizes = [2, 256], strides = [1, 1]} : vector<2x1024xf32> to vector<2x256xf32>
    %282 = math.tanh %281 : vector<2x256xf32>
    %283 = vector.extract_strided_slice %268 {offsets = [0, 768], sizes = [2, 256], strides = [1, 1]} : vector<2x1024xf32> to vector<2x256xf32>
    %284 = arith.negf %283 : vector<2x256xf32>
    %285 = math.exp %284 : vector<2x256xf32>
    %cst_60 = arith.constant 1.000000e+00 : f32
    %286 = vector.broadcast %cst_60 : f32 to vector<2x256xf32>
    %287 = arith.addf %286, %285 : vector<2x256xf32>
    %288 = arith.divf %286, %287 : vector<2x256xf32>
    %289 = arith.mulf %280, %229 : vector<2x256xf32>
    %290 = arith.mulf %274, %282 : vector<2x256xf32>
    %291 = arith.addf %289, %290 : vector<2x256xf32>
    %292 = math.tanh %291 : vector<2x256xf32>
    %293 = arith.mulf %288, %292 : vector<2x256xf32>
    %294 = arith.truncf %293 : vector<2x256xf32> to vector<2x256xbf16>
    %295 = arith.truncf %262 : vector<2x256xf32> to vector<2x256xbf16>
    %296 = tpu.concatenate %294, %295 in 1 : vector<2x256xbf16>, vector<2x256xbf16> -> vector<2x512xbf16>
    %cst_61 = arith.constant dense<0.000000e+00> : vector<2x1024xf32>
    %297 = tpu.matmul %296, %12, %cst_61 {dimension_numbers = #tpu.dot_dimension_numbers<[1], [0], [0], [1], [0, 0, 1, 1], [], []>} : vector<2x512xbf16>, vector<512x1024xbf16>, vector<2x1024xf32> -> vector<2x1024xf32>
    %298 = vector.broadcast %13 : vector<1x1024xf32> to vector<2x1024xf32>
    %299 = arith.addf %297, %298 : vector<2x1024xf32>
    %300 = vector.extract_strided_slice %299 {offsets = [0, 0], sizes = [2, 256], strides = [1, 1]} : vector<2x1024xf32> to vector<2x256xf32>
    %301 = arith.negf %300 : vector<2x256xf32>
    %302 = math.exp %301 : vector<2x256xf32>
    %cst_62 = arith.constant 1.000000e+00 : f32
    %303 = vector.broadcast %cst_62 : f32 to vector<2x256xf32>
    %304 = arith.addf %303, %302 : vector<2x256xf32>
    %305 = arith.divf %303, %304 : vector<2x256xf32>
    %306 = vector.extract_strided_slice %299 {offsets = [0, 256], sizes = [2, 256], strides = [1, 1]} : vector<2x1024xf32> to vector<2x256xf32>
    %307 = arith.negf %306 : vector<2x256xf32>
    %308 = math.exp %307 : vector<2x256xf32>
    %cst_63 = arith.constant 1.000000e+00 : f32
    %309 = vector.broadcast %cst_63 : f32 to vector<2x256xf32>
    %310 = arith.addf %309, %308 : vector<2x256xf32>
    %311 = arith.divf %309, %310 : vector<2x256xf32>
    %312 = vector.extract_strided_slice %299 {offsets = [0, 512], sizes = [2, 256], strides = [1, 1]} : vector<2x1024xf32> to vector<2x256xf32>
    %313 = math.tanh %312 : vector<2x256xf32>
    %314 = vector.extract_strided_slice %299 {offsets = [0, 768], sizes = [2, 256], strides = [1, 1]} : vector<2x1024xf32> to vector<2x256xf32>
    %315 = arith.negf %314 : vector<2x256xf32>
    %316 = math.exp %315 : vector<2x256xf32>
    %cst_64 = arith.constant 1.000000e+00 : f32
    %317 = vector.broadcast %cst_64 : f32 to vector<2x256xf32>
    %318 = arith.addf %317, %316 : vector<2x256xf32>
    %319 = arith.divf %317, %318 : vector<2x256xf32>
    %320 = arith.mulf %311, %260 : vector<2x256xf32>
    %321 = arith.mulf %305, %313 : vector<2x256xf32>
    %322 = arith.addf %320, %321 : vector<2x256xf32>
    %323 = math.tanh %322 : vector<2x256xf32>
    %324 = arith.mulf %319, %323 : vector<2x256xf32>
    %c5_i32 = arith.constant 5 : i32
    %325 = arith.index_cast %c5_i32 : i32 to index
    %c0_65 = arith.constant 0 : index
    %c0_66 = arith.constant 0 : index
    %326 = vector.load %arg11[%325, %c0_65, %c0_66] : memref<8x2x1024xf32, #tpu.memory_space<vmem>>, vector<1x2x1024xf32>
    %327 = vector.shape_cast %326 : vector<1x2x1024xf32> to vector<2x1024xf32>
    %328 = arith.truncf %293 : vector<2x256xf32> to vector<2x256xbf16>
    %cst_67 = arith.constant dense<0.000000e+00> : vector<2x1024xf32>
    %329 = tpu.matmul %328, %11, %cst_67 {dimension_numbers = #tpu.dot_dimension_numbers<[1], [0], [0], [1], [0, 0, 1, 1], [], []>} : vector<2x256xbf16>, vector<256x1024xbf16>, vector<2x1024xf32> -> vector<2x1024xf32>
    %330 = arith.addf %327, %329 : vector<2x1024xf32>
    %331 = vector.extract_strided_slice %330 {offsets = [0, 0], sizes = [2, 256], strides = [1, 1]} : vector<2x1024xf32> to vector<2x256xf32>
    %332 = arith.negf %331 : vector<2x256xf32>
    %333 = math.exp %332 : vector<2x256xf32>
    %cst_68 = arith.constant 1.000000e+00 : f32
    %334 = vector.broadcast %cst_68 : f32 to vector<2x256xf32>
    %335 = arith.addf %334, %333 : vector<2x256xf32>
    %336 = arith.divf %334, %335 : vector<2x256xf32>
    %337 = vector.extract_strided_slice %330 {offsets = [0, 256], sizes = [2, 256], strides = [1, 1]} : vector<2x1024xf32> to vector<2x256xf32>
    %338 = arith.negf %337 : vector<2x256xf32>
    %339 = math.exp %338 : vector<2x256xf32>
    %cst_69 = arith.constant 1.000000e+00 : f32
    %340 = vector.broadcast %cst_69 : f32 to vector<2x256xf32>
    %341 = arith.addf %340, %339 : vector<2x256xf32>
    %342 = arith.divf %340, %341 : vector<2x256xf32>
    %343 = vector.extract_strided_slice %330 {offsets = [0, 512], sizes = [2, 256], strides = [1, 1]} : vector<2x1024xf32> to vector<2x256xf32>
    %344 = math.tanh %343 : vector<2x256xf32>
    %345 = vector.extract_strided_slice %330 {offsets = [0, 768], sizes = [2, 256], strides = [1, 1]} : vector<2x1024xf32> to vector<2x256xf32>
    %346 = arith.negf %345 : vector<2x256xf32>
    %347 = math.exp %346 : vector<2x256xf32>
    %cst_70 = arith.constant 1.000000e+00 : f32
    %348 = vector.broadcast %cst_70 : f32 to vector<2x256xf32>
    %349 = arith.addf %348, %347 : vector<2x256xf32>
    %350 = arith.divf %348, %349 : vector<2x256xf32>
    %351 = arith.mulf %342, %291 : vector<2x256xf32>
    %352 = arith.mulf %336, %344 : vector<2x256xf32>
    %353 = arith.addf %351, %352 : vector<2x256xf32>
    %354 = math.tanh %353 : vector<2x256xf32>
    %355 = arith.mulf %350, %354 : vector<2x256xf32>
    %356 = arith.truncf %355 : vector<2x256xf32> to vector<2x256xbf16>
    %357 = arith.truncf %324 : vector<2x256xf32> to vector<2x256xbf16>
    %358 = tpu.concatenate %356, %357 in 1 : vector<2x256xbf16>, vector<2x256xbf16> -> vector<2x512xbf16>
    %cst_71 = arith.constant dense<0.000000e+00> : vector<2x1024xf32>
    %359 = tpu.matmul %358, %12, %cst_71 {dimension_numbers = #tpu.dot_dimension_numbers<[1], [0], [0], [1], [0, 0, 1, 1], [], []>} : vector<2x512xbf16>, vector<512x1024xbf16>, vector<2x1024xf32> -> vector<2x1024xf32>
    %360 = vector.broadcast %13 : vector<1x1024xf32> to vector<2x1024xf32>
    %361 = arith.addf %359, %360 : vector<2x1024xf32>
    %362 = vector.extract_strided_slice %361 {offsets = [0, 0], sizes = [2, 256], strides = [1, 1]} : vector<2x1024xf32> to vector<2x256xf32>
    %363 = arith.negf %362 : vector<2x256xf32>
    %364 = math.exp %363 : vector<2x256xf32>
    %cst_72 = arith.constant 1.000000e+00 : f32
    %365 = vector.broadcast %cst_72 : f32 to vector<2x256xf32>
    %366 = arith.addf %365, %364 : vector<2x256xf32>
    %367 = arith.divf %365, %366 : vector<2x256xf32>
    %368 = vector.extract_strided_slice %361 {offsets = [0, 256], sizes = [2, 256], strides = [1, 1]} : vector<2x1024xf32> to vector<2x256xf32>
    %369 = arith.negf %368 : vector<2x256xf32>
    %370 = math.exp %369 : vector<2x256xf32>
    %cst_73 = arith.constant 1.000000e+00 : f32
    %371 = vector.broadcast %cst_73 : f32 to vector<2x256xf32>
    %372 = arith.addf %371, %370 : vector<2x256xf32>
    %373 = arith.divf %371, %372 : vector<2x256xf32>
    %374 = vector.extract_strided_slice %361 {offsets = [0, 512], sizes = [2, 256], strides = [1, 1]} : vector<2x1024xf32> to vector<2x256xf32>
    %375 = math.tanh %374 : vector<2x256xf32>
    %376 = vector.extract_strided_slice %361 {offsets = [0, 768], sizes = [2, 256], strides = [1, 1]} : vector<2x1024xf32> to vector<2x256xf32>
    %377 = arith.negf %376 : vector<2x256xf32>
    %378 = math.exp %377 : vector<2x256xf32>
    %cst_74 = arith.constant 1.000000e+00 : f32
    %379 = vector.broadcast %cst_74 : f32 to vector<2x256xf32>
    %380 = arith.addf %379, %378 : vector<2x256xf32>
    %381 = arith.divf %379, %380 : vector<2x256xf32>
    %382 = arith.mulf %373, %322 : vector<2x256xf32>
    %383 = arith.mulf %367, %375 : vector<2x256xf32>
    %384 = arith.addf %382, %383 : vector<2x256xf32>
    %385 = math.tanh %384 : vector<2x256xf32>
    %386 = arith.mulf %381, %385 : vector<2x256xf32>
    %c6_i32 = arith.constant 6 : i32
    %387 = arith.index_cast %c6_i32 : i32 to index
    %c0_75 = arith.constant 0 : index
    %c0_76 = arith.constant 0 : index
    %388 = vector.load %arg11[%387, %c0_75, %c0_76] : memref<8x2x1024xf32, #tpu.memory_space<vmem>>, vector<1x2x1024xf32>
    %389 = vector.shape_cast %388 : vector<1x2x1024xf32> to vector<2x1024xf32>
    %390 = arith.truncf %355 : vector<2x256xf32> to vector<2x256xbf16>
    %cst_77 = arith.constant dense<0.000000e+00> : vector<2x1024xf32>
    %391 = tpu.matmul %390, %11, %cst_77 {dimension_numbers = #tpu.dot_dimension_numbers<[1], [0], [0], [1], [0, 0, 1, 1], [], []>} : vector<2x256xbf16>, vector<256x1024xbf16>, vector<2x1024xf32> -> vector<2x1024xf32>
    %392 = arith.addf %389, %391 : vector<2x1024xf32>
    %393 = vector.extract_strided_slice %392 {offsets = [0, 0], sizes = [2, 256], strides = [1, 1]} : vector<2x1024xf32> to vector<2x256xf32>
    %394 = arith.negf %393 : vector<2x256xf32>
    %395 = math.exp %394 : vector<2x256xf32>
    %cst_78 = arith.constant 1.000000e+00 : f32
    %396 = vector.broadcast %cst_78 : f32 to vector<2x256xf32>
    %397 = arith.addf %396, %395 : vector<2x256xf32>
    %398 = arith.divf %396, %397 : vector<2x256xf32>
    %399 = vector.extract_strided_slice %392 {offsets = [0, 256], sizes = [2, 256], strides = [1, 1]} : vector<2x1024xf32> to vector<2x256xf32>
    %400 = arith.negf %399 : vector<2x256xf32>
    %401 = math.exp %400 : vector<2x256xf32>
    %cst_79 = arith.constant 1.000000e+00 : f32
    %402 = vector.broadcast %cst_79 : f32 to vector<2x256xf32>
    %403 = arith.addf %402, %401 : vector<2x256xf32>
    %404 = arith.divf %402, %403 : vector<2x256xf32>
    %405 = vector.extract_strided_slice %392 {offsets = [0, 512], sizes = [2, 256], strides = [1, 1]} : vector<2x1024xf32> to vector<2x256xf32>
    %406 = math.tanh %405 : vector<2x256xf32>
    %407 = vector.extract_strided_slice %392 {offsets = [0, 768], sizes = [2, 256], strides = [1, 1]} : vector<2x1024xf32> to vector<2x256xf32>
    %408 = arith.negf %407 : vector<2x256xf32>
    %409 = math.exp %408 : vector<2x256xf32>
    %cst_80 = arith.constant 1.000000e+00 : f32
    %410 = vector.broadcast %cst_80 : f32 to vector<2x256xf32>
    %411 = arith.addf %410, %409 : vector<2x256xf32>
    %412 = arith.divf %410, %411 : vector<2x256xf32>
    %413 = arith.mulf %404, %353 : vector<2x256xf32>
    %414 = arith.mulf %398, %406 : vector<2x256xf32>
    %415 = arith.addf %413, %414 : vector<2x256xf32>
    %416 = math.tanh %415 : vector<2x256xf32>
    %417 = arith.mulf %412, %416 : vector<2x256xf32>
    %418 = arith.truncf %417 : vector<2x256xf32> to vector<2x256xbf16>
    %419 = arith.truncf %386 : vector<2x256xf32> to vector<2x256xbf16>
    %420 = tpu.concatenate %418, %419 in 1 : vector<2x256xbf16>, vector<2x256xbf16> -> vector<2x512xbf16>
    %cst_81 = arith.constant dense<0.000000e+00> : vector<2x1024xf32>
    %421 = tpu.matmul %420, %12, %cst_81 {dimension_numbers = #tpu.dot_dimension_numbers<[1], [0], [0], [1], [0, 0, 1, 1], [], []>} : vector<2x512xbf16>, vector<512x1024xbf16>, vector<2x1024xf32> -> vector<2x1024xf32>
    %422 = vector.broadcast %13 : vector<1x1024xf32> to vector<2x1024xf32>
    %423 = arith.addf %421, %422 : vector<2x1024xf32>
    %424 = vector.extract_strided_slice %423 {offsets = [0, 0], sizes = [2, 256], strides = [1, 1]} : vector<2x1024xf32> to vector<2x256xf32>
    %425 = arith.negf %424 : vector<2x256xf32>
    %426 = math.exp %425 : vector<2x256xf32>
    %cst_82 = arith.constant 1.000000e+00 : f32
    %427 = vector.broadcast %cst_82 : f32 to vector<2x256xf32>
    %428 = arith.addf %427, %426 : vector<2x256xf32>
    %429 = arith.divf %427, %428 : vector<2x256xf32>
    %430 = vector.extract_strided_slice %423 {offsets = [0, 256], sizes = [2, 256], strides = [1, 1]} : vector<2x1024xf32> to vector<2x256xf32>
    %431 = arith.negf %430 : vector<2x256xf32>
    %432 = math.exp %431 : vector<2x256xf32>
    %cst_83 = arith.constant 1.000000e+00 : f32
    %433 = vector.broadcast %cst_83 : f32 to vector<2x256xf32>
    %434 = arith.addf %433, %432 : vector<2x256xf32>
    %435 = arith.divf %433, %434 : vector<2x256xf32>
    %436 = vector.extract_strided_slice %423 {offsets = [0, 512], sizes = [2, 256], strides = [1, 1]} : vector<2x1024xf32> to vector<2x256xf32>
    %437 = math.tanh %436 : vector<2x256xf32>
    %438 = vector.extract_strided_slice %423 {offsets = [0, 768], sizes = [2, 256], strides = [1, 1]} : vector<2x1024xf32> to vector<2x256xf32>
    %439 = arith.negf %438 : vector<2x256xf32>
    %440 = math.exp %439 : vector<2x256xf32>
    %cst_84 = arith.constant 1.000000e+00 : f32
    %441 = vector.broadcast %cst_84 : f32 to vector<2x256xf32>
    %442 = arith.addf %441, %440 : vector<2x256xf32>
    %443 = arith.divf %441, %442 : vector<2x256xf32>
    %444 = arith.mulf %435, %384 : vector<2x256xf32>
    %445 = arith.mulf %429, %437 : vector<2x256xf32>
    %446 = arith.addf %444, %445 : vector<2x256xf32>
    %447 = math.tanh %446 : vector<2x256xf32>
    %448 = arith.mulf %443, %447 : vector<2x256xf32>
    %c7_i32 = arith.constant 7 : i32
    %449 = arith.index_cast %c7_i32 : i32 to index
    %c0_85 = arith.constant 0 : index
    %c0_86 = arith.constant 0 : index
    %450 = vector.load %arg11[%449, %c0_85, %c0_86] : memref<8x2x1024xf32, #tpu.memory_space<vmem>>, vector<1x2x1024xf32>
    %451 = vector.shape_cast %450 : vector<1x2x1024xf32> to vector<2x1024xf32>
    %452 = arith.truncf %417 : vector<2x256xf32> to vector<2x256xbf16>
    %cst_87 = arith.constant dense<0.000000e+00> : vector<2x1024xf32>
    %453 = tpu.matmul %452, %11, %cst_87 {dimension_numbers = #tpu.dot_dimension_numbers<[1], [0], [0], [1], [0, 0, 1, 1], [], []>} : vector<2x256xbf16>, vector<256x1024xbf16>, vector<2x1024xf32> -> vector<2x1024xf32>
    %454 = arith.addf %451, %453 : vector<2x1024xf32>
    %455 = vector.extract_strided_slice %454 {offsets = [0, 0], sizes = [2, 256], strides = [1, 1]} : vector<2x1024xf32> to vector<2x256xf32>
    %456 = arith.negf %455 : vector<2x256xf32>
    %457 = math.exp %456 : vector<2x256xf32>
    %cst_88 = arith.constant 1.000000e+00 : f32
    %458 = vector.broadcast %cst_88 : f32 to vector<2x256xf32>
    %459 = arith.addf %458, %457 : vector<2x256xf32>
    %460 = arith.divf %458, %459 : vector<2x256xf32>
    %461 = vector.extract_strided_slice %454 {offsets = [0, 256], sizes = [2, 256], strides = [1, 1]} : vector<2x1024xf32> to vector<2x256xf32>
    %462 = arith.negf %461 : vector<2x256xf32>
    %463 = math.exp %462 : vector<2x256xf32>
    %cst_89 = arith.constant 1.000000e+00 : f32
    %464 = vector.broadcast %cst_89 : f32 to vector<2x256xf32>
    %465 = arith.addf %464, %463 : vector<2x256xf32>
    %466 = arith.divf %464, %465 : vector<2x256xf32>
    %467 = vector.extract_strided_slice %454 {offsets = [0, 512], sizes = [2, 256], strides = [1, 1]} : vector<2x1024xf32> to vector<2x256xf32>
    %468 = math.tanh %467 : vector<2x256xf32>
    %469 = vector.extract_strided_slice %454 {offsets = [0, 768], sizes = [2, 256], strides = [1, 1]} : vector<2x1024xf32> to vector<2x256xf32>
    %470 = arith.negf %469 : vector<2x256xf32>
    %471 = math.exp %470 : vector<2x256xf32>
    %cst_90 = arith.constant 1.000000e+00 : f32
    %472 = vector.broadcast %cst_90 : f32 to vector<2x256xf32>
    %473 = arith.addf %472, %471 : vector<2x256xf32>
    %474 = arith.divf %472, %473 : vector<2x256xf32>
    %475 = arith.mulf %466, %415 : vector<2x256xf32>
    %476 = arith.mulf %460, %468 : vector<2x256xf32>
    %477 = arith.addf %475, %476 : vector<2x256xf32>
    %478 = math.tanh %477 : vector<2x256xf32>
    %479 = arith.mulf %474, %478 : vector<2x256xf32>
    %480 = arith.truncf %479 : vector<2x256xf32> to vector<2x256xbf16>
    %481 = arith.truncf %448 : vector<2x256xf32> to vector<2x256xbf16>
    %482 = tpu.concatenate %480, %481 in 1 : vector<2x256xbf16>, vector<2x256xbf16> -> vector<2x512xbf16>
    %cst_91 = arith.constant dense<0.000000e+00> : vector<2x1024xf32>
    %483 = tpu.matmul %482, %12, %cst_91 {dimension_numbers = #tpu.dot_dimension_numbers<[1], [0], [0], [1], [0, 0, 1, 1], [], []>} : vector<2x512xbf16>, vector<512x1024xbf16>, vector<2x1024xf32> -> vector<2x1024xf32>
    %484 = vector.broadcast %13 : vector<1x1024xf32> to vector<2x1024xf32>
    %485 = arith.addf %483, %484 : vector<2x1024xf32>
    %486 = vector.extract_strided_slice %485 {offsets = [0, 0], sizes = [2, 256], strides = [1, 1]} : vector<2x1024xf32> to vector<2x256xf32>
    %487 = arith.negf %486 : vector<2x256xf32>
    %488 = math.exp %487 : vector<2x256xf32>
    %cst_92 = arith.constant 1.000000e+00 : f32
    %489 = vector.broadcast %cst_92 : f32 to vector<2x256xf32>
    %490 = arith.addf %489, %488 : vector<2x256xf32>
    %491 = arith.divf %489, %490 : vector<2x256xf32>
    %492 = vector.extract_strided_slice %485 {offsets = [0, 256], sizes = [2, 256], strides = [1, 1]} : vector<2x1024xf32> to vector<2x256xf32>
    %493 = arith.negf %492 : vector<2x256xf32>
    %494 = math.exp %493 : vector<2x256xf32>
    %cst_93 = arith.constant 1.000000e+00 : f32
    %495 = vector.broadcast %cst_93 : f32 to vector<2x256xf32>
    %496 = arith.addf %495, %494 : vector<2x256xf32>
    %497 = arith.divf %495, %496 : vector<2x256xf32>
    %498 = vector.extract_strided_slice %485 {offsets = [0, 512], sizes = [2, 256], strides = [1, 1]} : vector<2x1024xf32> to vector<2x256xf32>
    %499 = math.tanh %498 : vector<2x256xf32>
    %500 = vector.extract_strided_slice %485 {offsets = [0, 768], sizes = [2, 256], strides = [1, 1]} : vector<2x1024xf32> to vector<2x256xf32>
    %501 = arith.negf %500 : vector<2x256xf32>
    %502 = math.exp %501 : vector<2x256xf32>
    %cst_94 = arith.constant 1.000000e+00 : f32
    %503 = vector.broadcast %cst_94 : f32 to vector<2x256xf32>
    %504 = arith.addf %503, %502 : vector<2x256xf32>
    %505 = arith.divf %503, %504 : vector<2x256xf32>
    %506 = arith.mulf %497, %446 : vector<2x256xf32>
    %507 = arith.mulf %491, %499 : vector<2x256xf32>
    %508 = arith.addf %506, %507 : vector<2x256xf32>
    %509 = math.tanh %508 : vector<2x256xf32>
    %510 = arith.mulf %505, %509 : vector<2x256xf32>
    %c8_i32 = arith.constant 8 : i32
    %c0_95 = arith.constant 0 : index
    %c0_96 = arith.constant 0 : index
    %511 = vector.load %arg6[%c0_95, %c0_96] : memref<256x64xf32, #tpu.memory_space<vmem>>, vector<256x64xf32>
    %cst_97 = arith.constant dense<0.000000e+00> : vector<2x64xf32>
    %512 = tpu.matmul %510, %511, %cst_97 {dimension_numbers = #tpu.dot_dimension_numbers<[1], [0], [0], [1], [0, 0, 1, 1], [], []>} : vector<2x256xf32>, vector<256x64xf32>, vector<2x64xf32> -> vector<2x64xf32>
    %c0_98 = arith.constant 0 : index
    %c0_99 = arith.constant 0 : index
    %513 = vector.load %arg7[%c0_98, %c0_99] : memref<1x64xf32, #tpu.memory_space<vmem>>, vector<1x64xf32>
    %514 = vector.broadcast %513 : vector<1x64xf32> to vector<2x64xf32>
    %515 = arith.addf %512, %514 : vector<2x64xf32>
    %c0_100 = arith.constant 0 : index
    %c0_101 = arith.constant 0 : index
    %516 = vector.load %arg8[%c0_100, %c0_101] : memref<1x64xf32, #tpu.memory_space<vmem>>, vector<1x64xf32>
    %517 = vector.broadcast %516 : vector<1x64xf32> to vector<2x64xf32>
    %518 = arith.mulf %515, %517 : vector<2x64xf32>
    %cst_102 = arith.constant dense<0.000000e+00> : vector<2xf32>
    %519 = vector.multi_reduction <add>, %518, %cst_102 [1] : vector<2x64xf32> to vector<2xf32>
    %520 = vector.shape_cast %519 : vector<2xf32> to vector<2x1xf32>
    %c0_103 = arith.constant 0 : index
    %c0_104 = arith.constant 0 : index
    %521 = vector.load %arg9[%c0_103, %c0_104] : memref<1x1xf32, #tpu.memory_space<vmem>>, vector<1x1xf32>
    %522 = vector.broadcast %521 : vector<1x1xf32> to vector<2x1xf32>
    %523 = arith.addf %520, %522 : vector<2x1xf32>
    %c0_105 = arith.constant 0 : index
    %c0_106 = arith.constant 0 : index
    %524 = vector.load %arg10[%c0_105, %c0_106] : memref<2x1xf32, #tpu.memory_space<vmem>>, vector<2x1xf32>
    tpu.vector_store %arg10[%c0_105, %c0_106], %523 {strides = array<i32>} : memref<2x1xf32, #tpu.memory_space<vmem>>, vector<2x1xf32>,
    return
  }
}

</mosaic_0001>

<llo_original>
// kernel: regrnet_forward.1
$region0: #{regrnet_forward.1}
  #allocation0 [shape = 'u32[]', space=smem, size = 0x4, offset = 0x4, fixed_abs, tag = 'smem constant byte address 0x4 - core index']
  #allocation1 [shape = 'u32[144,128]{1,0:T(1,128)}', space=vmem, size = 0x12000, scoped, tag = 'internal scratch']
  #allocation2 [shape = 'f32[8,2,1024]{2,1,0:T(2,128)}', space=vmem, size = 0x10000, scoped, tag = 'scratch operand']
  #allocation3 [shape = 'f32[1,1]{1,0:T(1,128)S(1)}', space=vmem, size = 0x200, scoped, tag = 'scoped memory for regrnet_forward.1']
  %s0 = inlined_call_operand.vmem [shape: f32[8,2,1], index: 0, kind: input, shape index: {}]
  %s1 = inlined_call_operand.vmem [shape: f32[1,1024], index: 1, kind: input, shape index: {}]
  %s2 = inlined_call_operand.hbm [shape: bf16[256,1024], index: 2, kind: input, shape index: {}]
  %s3 = inlined_call_operand.vmem [shape: f32[1,1024], index: 3, kind: input, shape index: {}]
  %s4 = inlined_call_operand.hbm [shape: bf16[512,1024], index: 4, kind: input, shape index: {}]
  %s5 = inlined_call_operand.vmem [shape: f32[1,1024], index: 5, kind: input, shape index: {}]
  %s6 = inlined_call_operand.vmem [shape: f32[256,64], index: 6, kind: input, shape index: {}]
  %s7 = inlined_call_operand.vmem [shape: f32[1,64], index: 7, kind: input, shape index: {}]
  %s8 = inlined_call_operand.vmem [shape: f32[1,64], index: 8, kind: input, shape index: {}]
  %s9 = inlined_call_operand.<no memory space> [shape: f32[1,1], index: 9, kind: input, shape index: {}]
  %s10 = inlined_call_operand.vmem [shape: f32[2,1], index: 10, kind: output, shape index: {}]
  %s11 = sld [smem:[#allocation0]]
  $region58: #{regrnet_forward.1} parent=0
    _
  %s13 = ssub.s32 1, %s11
  %s14 = scalar_select 0, %s13, %s11
  %v15 = vstv %s9
  %16 = vst [vmem:[#allocation3] sm:$0x1] %v15
  $region1: #{regrnet_forward.1} parent=0
    #allocation4 [shape = 'u8[524288]{0}', space=vmem, size = 0x80000, scoped, tag = 'input window, operand 2, single buffered']
    #allocation5 [shape = 's32[1]{0}', space=sflag, size = 0x4, scoped, tag = 'scoped memory for regrnet_forward.1']
    #allocation6 [shape = 'u8[1048576]{0}', space=vmem, size = 0x100000, scoped, tag = 'input window, operand 4, single buffered']
    #allocation7 [shape = 's32[1]{0}', space=sflag, size = 0x4, scoped, tag = 'scoped memory for regrnet_forward.1']
    %17 = vsyncpa [#allocation5], 0
    %18 = vsyncpa [#allocation7], 0
    // Predicated region
    $region2: #{regrnet_forward.1} parent=1 // pred_check
      _
    $region3: #{regrnet_forward.1} parent=1 // pred_check_branch
      %20 = sbr.rel (0) target = $region5
    $region4: #{regrnet_forward.1} parent=1 // pred_region
      _
    $region5: #{regrnet_forward.1} parent=1 // pred_fallthru
      _
    // Predicated region
    $region6: #{regrnet_forward.1} parent=1 // pred_check
      _
    $region7: #{regrnet_forward.1} parent=1 // pred_check_branch
      %22 = sbr.rel (0) target = $region9
    $region8: #{regrnet_forward.1} parent=1 // pred_region
      _
    $region9: #{regrnet_forward.1} parent=1 // pred_fallthru
      _
    // Predicated region
    $region10: #{regrnet_forward.1} parent=1 // pred_check
      _
    $region11: #{regrnet_forward.1} parent=1 // pred_check_branch
      %24 = sbr.rel (0) target = $region13
    $region12: #{regrnet_forward.1} parent=1 // pred_region
      %s26 = ssub.s32 16384, 16384
      %27 = vsyncadd [#allocation5], %s26
      %s28 = sshll.u32 [#allocation4], 4
      %s29 = int_to_ptr.vmem [resolvable:$true] %s28
      %34 = dma.hbm_to_vmem [thread:$0]  %s2, 16384, %s29, [#allocation5], 512, 512, 32
    $region13: #{regrnet_forward.1} parent=1 // pred_fallthru
      _
    // Predicated region
    $region14: #{regrnet_forward.1} parent=1 // pred_check
      _
    $region15: #{regrnet_forward.1} parent=1 // pred_check_branch
      %36 = sbr.rel (0) target = $region17
    $region16: #{regrnet_forward.1} parent=1 // pred_region
      _
    $region17: #{regrnet_forward.1} parent=1 // pred_fallthru
      _
    // Predicated region
    $region18: #{regrnet_forward.1} parent=1 // pred_check
      _
    $region19: #{regrnet_forward.1} parent=1 // pred_check_branch
      %38 = sbr.rel (0) target = $region21
    $region20: #{regrnet_forward.1} parent=1 // pred_region
      %s40 = ssub.s32 32768, 32768
      %41 = vsyncadd [#allocation7], %s40
      %s42 = sshll.u32 [#allocation6], 4
      %s43 = int_to_ptr.vmem [resolvable:$true] %s42
      %48 = dma.hbm_to_vmem [thread:$0]  %s4, 32768, %s43, [#allocation7], 512, 512, 32
    $region21: #{regrnet_forward.1} parent=1 // pred_fallthru
      _
    // Predicated region
    $region22: #{regrnet_forward.1} parent=1 // pred_check
      _
    $region23: #{regrnet_forward.1} parent=1 // pred_check_branch
      %50 = sbr.rel (0) target = $region25
    $region24: #{regrnet_forward.1} parent=1 // pred_region
      _
    $region25: #{regrnet_forward.1} parent=1 // pred_fallthru
      _
    // Predicated region
    $region26: #{regrnet_forward.1} parent=1 // pred_check
      _
    $region27: #{regrnet_forward.1} parent=1 // pred_check_branch
      %52 = sbr.rel (0) target = $region29
    $region28: #{regrnet_forward.1} parent=1 // pred_region
      _
    $region29: #{regrnet_forward.1} parent=1 // pred_fallthru
      _
    // Predicated region
    $region30: #{regrnet_forward.1} parent=1 // pred_check
      _
    $region31: #{regrnet_forward.1} parent=1 // pred_check_branch
      %54 = sbr.rel (0) target = $region33
    $region32: #{regrnet_forward.1} parent=1 // pred_region
      _
    $region33: #{regrnet_forward.1} parent=1 // pred_fallthru
      _
    // Predicated region
    $region34: #{regrnet_forward.1} parent=1 // pred_check
      _
    $region35: #{regrnet_forward.1} parent=1 // pred_check_branch
      %56 = sbr.rel (0) target = $region37
    $region36: #{regrnet_forward.1} parent=1 // pred_region
      _
    $region37: #{regrnet_forward.1} parent=1 // pred_fallthru
      _
    // Predicated region
    $region38: #{regrnet_forward.1} parent=1 // pred_check
      _
    $region39: #{regrnet_forward.1} parent=1 // pred_check_branch
      %58 = sbr.rel (0) target = $region41
    $region40: #{regrnet_forward.1} parent=1 // pred_region
      _
    $region41: #{regrnet_forward.1} parent=1 // pred_fallthru
      _
    // Predicated region
    $region42: #{regrnet_forward.1} parent=1 // pred_check
      _
    $region43: #{regrnet_forward.1} parent=1 // pred_check_branch
      %60 = sbr.rel (0) target = $region45
    $region44: #{regrnet_forward.1} parent=1 // pred_region
      %61 = dma.done [#allocation5], 16384
    $region45: #{regrnet_forward.1} parent=1 // pred_fallthru
      _
    // Predicated region
    $region46: #{regrnet_forward.1} parent=1 // pred_check
      _
    $region47: #{regrnet_forward.1} parent=1 // pred_check_branch
      %63 = sbr.rel (0) target = $region49
    $region48: #{regrnet_forward.1} parent=1 // pred_region
      %64 = dma.done [#allocation7], 32768
    $region49: #{regrnet_forward.1} parent=1 // pred_fallthru
      _
    %v66 = vld [vmem:[%s0] sm:$0x3]
    %v67 = vld [vmem:[%s0 + $0x2] sm:$0x3]
    %v68 = vld [vmem:[%s0 + $0x4] sm:$0x3]
    %v69 = vld [vmem:[%s0 + $0x6] sm:$0x3]
    %v70 = vld [vmem:[%s0 + $0x8] sm:$0x3]
    %v71 = vld [vmem:[%s0 + $0xa] sm:$0x3]
    %v72 = vld [vmem:[%s0 + $0xc] sm:$0x3]
    %v73 = vld [vmem:[%s0 + $0xe] sm:$0x3]
    %v74 = vld [vmem:[%s1] sm:$0xff]
    %76 = vset.pattern.permute.xlu0 0
    %77 = vperm.xlu0 %76, %v66
    %v78 = vpop.permute.xlu0 %77
    %81 = vset.pattern.permute.xlu0 0
    %82 = vperm.xlu0 %81, %v67
    %v83 = vpop.permute.xlu0 %82
    %86 = vset.pattern.permute.xlu0 0
    %87 = vperm.xlu0 %86, %v68
    %v88 = vpop.permute.xlu0 %87
    %91 = vset.pattern.permute.xlu0 0
    %92 = vperm.xlu0 %91, %v69
    %v93 = vpop.permute.xlu0 %92
    %96 = vset.pattern.permute.xlu0 0
    %97 = vperm.xlu0 %96, %v70
    %v98 = vpop.permute.xlu0 %97
    %101 = vset.pattern.permute.xlu0 0
    %102 = vperm.xlu0 %101, %v71
    %v103 = vpop.permute.xlu0 %102
    %106 = vset.pattern.permute.xlu0 0
    %107 = vperm.xlu0 %106, %v72
    %v108 = vpop.permute.xlu0 %107
    %111 = vset.pattern.permute.xlu0 0
    %112 = vperm.xlu0 %111, %v73
    %v113 = vpop.permute.xlu0 %112
    %v116 = vlaneseq
    %v117 = vshrl.u32 %v116, 7
    %v118 = vsub.s32 0, %v117
    %v119 = vrot.slane %v74, %v118
    %v120 = vlaneseq
    %v121 = vshrl.u32 %v120, 7
    %v122 = vsub.s32 1, %v121
    %v123 = vrot.slane %v74, %v122
    %v124 = vlaneseq
    %v125 = vshrl.u32 %v124, 7
    %v126 = vsub.s32 2, %v125
    %v127 = vrot.slane %v74, %v126
    %v128 = vlaneseq
    %v129 = vshrl.u32 %v128, 7
    %v130 = vsub.s32 3, %v129
    %v131 = vrot.slane %v74, %v130
    %v132 = vlaneseq
    %v133 = vshrl.u32 %v132, 7
    %v134 = vsub.s32 4, %v133
    %v135 = vrot.slane %v74, %v134
    %v136 = vlaneseq
    %v137 = vshrl.u32 %v136, 7
    %v138 = vsub.s32 5, %v137
    %v139 = vrot.slane %v74, %v138
    %v140 = vlaneseq
    %v141 = vshrl.u32 %v140, 7
    %v142 = vsub.s32 6, %v141
    %v143 = vrot.slane %v74, %v142
    %v144 = vlaneseq
    %v145 = vshrl.u32 %v144, 7
    %v146 = vsub.s32 7, %v145
    %v147 = vrot.slane %v74, %v146
    %v156 = vmul.f32 %v78, %v119
    %v157 = vmul.f32 %v78, %v123
    %v158 = vmul.f32 %v78, %v127
    %v159 = vmul.f32 %v78, %v131
    %v160 = vmul.f32 %v78, %v135
    %v161 = vmul.f32 %v78, %v139
    %v162 = vmul.f32 %v78, %v143
    %v163 = vmul.f32 %v78, %v147
    %v164 = vmul.f32 %v83, %v119
    %v165 = vmul.f32 %v83, %v123
    %v166 = vmul.f32 %v83, %v127
    %v167 = vmul.f32 %v83, %v131
    %v168 = vmul.f32 %v83, %v135
    %v169 = vmul.f32 %v83, %v139
    %v170 = vmul.f32 %v83, %v143
    %v171 = vmul.f32 %v83, %v147
    %v172 = vmul.f32 %v88, %v119
    %v173 = vmul.f32 %v88, %v123
    %v174 = vmul.f32 %v88, %v127
    %v175 = vmul.f32 %v88, %v131
    %v176 = vmul.f32 %v88, %v135
    %v177 = vmul.f32 %v88, %v139
    %v178 = vmul.f32 %v88, %v143
    %v179 = vmul.f32 %v88, %v147
    %v180 = vmul.f32 %v93, %v119
    %v181 = vmul.f32 %v93, %v123
    %v182 = vmul.f32 %v93, %v127
    %v183 = vmul.f32 %v93, %v131
    %v184 = vmul.f32 %v93, %v135
    %v185 = vmul.f32 %v93, %v139
    %v186 = vmul.f32 %v93, %v143
    %v187 = vmul.f32 %v93, %v147
    %v188 = vmul.f32 %v98, %v119
    %v189 = vmul.f32 %v98, %v123
    %v190 = vmul.f32 %v98, %v127
    %v191 = vmul.f32 %v98, %v131
    %v192 = vmul.f32 %v98, %v135
    %v193 = vmul.f32 %v98, %v139
    %v194 = vmul.f32 %v98, %v143
    %v195 = vmul.f32 %v98, %v147
    %v196 = vmul.f32 %v103, %v119
    %v197 = vmul.f32 %v103, %v123
    %v198 = vmul.f32 %v103, %v127
    %v199 = vmul.f32 %v103, %v131
    %v200 = vmul.f32 %v103, %v135
    %v201 = vmul.f32 %v103, %v139
    %v202 = vmul.f32 %v103, %v143
    %v203 = vmul.f32 %v103, %v147
    %v204 = vmul.f32 %v108, %v119
    %v205 = vmul.f32 %v108, %v123
    %v206 = vmul.f32 %v108, %v127
    %v207 = vmul.f32 %v108, %v131
    %v208 = vmul.f32 %v108, %v135
    %v209 = vmul.f32 %v108, %v139
    %v210 = vmul.f32 %v108, %v143
    %v211 = vmul.f32 %v108, %v147
    %v212 = vmul.f32 %v113, %v119
    %v213 = vmul.f32 %v113, %v123
    %v214 = vmul.f32 %v113, %v127
    %v215 = vmul.f32 %v113, %v131
    %v216 = vmul.f32 %v113, %v135
    %v217 = vmul.f32 %v113, %v139
    %v218 = vmul.f32 %v113, %v143
    %v219 = vmul.f32 %v113, %v147
    %v220 = vld [vmem:[%s3] sm:$0xff]
    %v222 = vlaneseq
    %v223 = vshrl.u32 %v222, 7
    %v224 = vsub.s32 0, %v223
    %v225 = vrot.slane %v220, %v224
    %v226 = vlaneseq
    %v227 = vshrl.u32 %v226, 7
    %v228 = vsub.s32 1, %v227
    %v229 = vrot.slane %v220, %v228
    %v230 = vlaneseq
    %v231 = vshrl.u32 %v230, 7
    %v232 = vsub.s32 2, %v231
    %v233 = vrot.slane %v220, %v232
    %v234 = vlaneseq
    %v235 = vshrl.u32 %v234, 7
    %v236 = vsub.s32 3, %v235
    %v237 = vrot.slane %v220, %v236
    %v238 = vlaneseq
    %v239 = vshrl.u32 %v238, 7
    %v240 = vsub.s32 4, %v239
    %v241 = vrot.slane %v220, %v240
    %v242 = vlaneseq
    %v243 = vshrl.u32 %v242, 7
    %v244 = vsub.s32 5, %v243
    %v245 = vrot.slane %v220, %v244
    %v246 = vlaneseq
    %v247 = vshrl.u32 %v246, 7
    %v248 = vsub.s32 6, %v247
    %v249 = vrot.slane %v220, %v248
    %v250 = vlaneseq
    %v251 = vshrl.u32 %v250, 7
    %v252 = vsub.s32 7, %v251
    %v253 = vrot.slane %v220, %v252
    %v262 = vadd.f32 %v156, %v225
    %v263 = vadd.f32 %v157, %v229
    %v264 = vadd.f32 %v158, %v233
    %v265 = vadd.f32 %v159, %v237
    %v266 = vadd.f32 %v160, %v241
    %v267 = vadd.f32 %v161, %v245
    %v268 = vadd.f32 %v162, %v249
    %v269 = vadd.f32 %v163, %v253
    %v270 = vadd.f32 %v164, %v225
    %v271 = vadd.f32 %v165, %v229
    %v272 = vadd.f32 %v166, %v233
    %v273 = vadd.f32 %v167, %v237
    %v274 = vadd.f32 %v168, %v241
    %v275 = vadd.f32 %v169, %v245
    %v276 = vadd.f32 %v170, %v249
    %v277 = vadd.f32 %v171, %v253
    %v278 = vadd.f32 %v172, %v225
    %v279 = vadd.f32 %v173, %v229
    %v280 = vadd.f32 %v174, %v233
    %v281 = vadd.f32 %v175, %v237
    %v282 = vadd.f32 %v176, %v241
    %v283 = vadd.f32 %v177, %v245
    %v284 = vadd.f32 %v178, %v249
    %v285 = vadd.f32 %v179, %v253
    %v286 = vadd.f32 %v180, %v225
    %v287 = vadd.f32 %v181, %v229
    %v288 = vadd.f32 %v182, %v233
    %v289 = vadd.f32 %v183, %v237
    %v290 = vadd.f32 %v184, %v241
    %v291 = vadd.f32 %v185, %v245
    %v292 = vadd.f32 %v186, %v249
    %v293 = vadd.f32 %v187, %v253
    %v294 = vadd.f32 %v188, %v225
    %v295 = vadd.f32 %v189, %v229
    %v296 = vadd.f32 %v190, %v233
    %v297 = vadd.f32 %v191, %v237
    %v298 = vadd.f32 %v192, %v241
    %v299 = vadd.f32 %v193, %v245
    %v300 = vadd.f32 %v194, %v249
    %v301 = vadd.f32 %v195, %v253
    %v302 = vadd.f32 %v196, %v225
    %v303 = vadd.f32 %v197, %v229
    %v304 = vadd.f32 %v198, %v233
    %v305 = vadd.f32 %v199, %v237
    %v306 = vadd.f32 %v200, %v241
    %v307 = vadd.f32 %v201, %v245
    %v308 = vadd.f32 %v202, %v249
    %v309 = vadd.f32 %v203, %v253
    %v310 = vadd.f32 %v204, %v225
    %v311 = vadd.f32 %v205, %v229
    %v312 = vadd.f32 %v206, %v233
    %v313 = vadd.f32 %v207, %v237
    %v314 = vadd.f32 %v208, %v241
    %v315 = vadd.f32 %v209, %v245
    %v316 = vadd.f32 %v210, %v249
    %v317 = vadd.f32 %v211, %v253
    %v318 = vadd.f32 %v212, %v225
    %v319 = vadd.f32 %v213, %v229
    %v320 = vadd.f32 %v214, %v233
    %v321 = vadd.f32 %v215, %v237
    %v322 = vadd.f32 %v216, %v241
    %v323 = vadd.f32 %v217, %v245
    %v324 = vadd.f32 %v218, %v249
    %v325 = vadd.f32 %v219, %v253
    %v390 = vcombine.low %v262, %v263
    %v391 = vcombine.low %v264, %v265
    %v393 = vunpack.c.l.s4 1983009808
    %v394 = vunpack.c.0.s8 %v393
    %v395 = vlaneseq
    %v396 = vshrl.u32 %v395, 7
    %v397 = vsub.s32 %v394, %v396
    %v398 = vrot.slane %v390, %v397
    %v400 = vunpack.c.l.s4 1983009808
    %v401 = vunpack.c.0.s8 %v400
    %v402 = vlaneseq
    %v403 = vshrl.u32 %v402, 7
    %v404 = vsub.s32 %v401, %v403
    %v405 = vrot.slane %v391, %v404
    %v406 = vcombine.low %v398, %v405
    %v407 = vcombine.low %v266, %v267
    %v408 = vcombine.low %v268, %v269
    %v410 = vunpack.c.l.s4 1983009808
    %v411 = vunpack.c.0.s8 %v410
    %v412 = vlaneseq
    %v413 = vshrl.u32 %v412, 7
    %v414 = vsub.s32 %v411, %v413
    %v415 = vrot.slane %v407, %v414
    %v417 = vunpack.c.l.s4 1983009808
    %v418 = vunpack.c.0.s8 %v417
    %v419 = vlaneseq
    %v420 = vshrl.u32 %v419, 7
    %v421 = vsub.s32 %v418, %v420
    %v422 = vrot.slane %v408, %v421
    %v423 = vcombine.low %v415, %v422
    %v424 = vcombine.low %v270, %v271
    %v425 = vcombine.low %v272, %v273
    %v427 = vunpack.c.l.s4 1983009808
    %v428 = vunpack.c.0.s8 %v427
    %v429 = vlaneseq
    %v430 = vshrl.u32 %v429, 7
    %v431 = vsub.s32 %v428, %v430
    %v432 = vrot.slane %v424, %v431
    %v434 = vunpack.c.l.s4 1983009808
    %v435 = vunpack.c.0.s8 %v434
    %v436 = vlaneseq
    %v437 = vshrl.u32 %v436, 7
    %v438 = vsub.s32 %v435, %v437
    %v439 = vrot.slane %v425, %v438
    %v440 = vcombine.low %v432, %v439
    %v441 = vcombine.low %v274, %v275
    %v442 = vcombine.low %v276, %v277
    %v444 = vunpack.c.l.s4 1983009808
    %v445 = vunpack.c.0.s8 %v444
    %v446 = vlaneseq
    %v447 = vshrl.u32 %v446, 7
    %v448 = vsub.s32 %v445, %v447
    %v449 = vrot.slane %v441, %v448
    %v451 = vunpack.c.l.s4 1983009808
    %v452 = vunpack.c.0.s8 %v451
    %v453 = vlaneseq
    %v454 = vshrl.u32 %v453, 7
    %v455 = vsub.s32 %v452, %v454
    %v456 = vrot.slane %v442, %v455
    %v457 = vcombine.low %v449, %v456
    %v458 = vcombine.low %v278, %v279
    %v459 = vcombine.low %v280, %v281
    %v461 = vunpack.c.l.s4 1983009808
    %v462 = vunpack.c.0.s8 %v461
    %v463 = vlaneseq
    %v464 = vshrl.u32 %v463, 7
    %v465 = vsub.s32 %v462, %v464
    %v466 = vrot.slane %v458, %v465
    %v468 = vunpack.c.l.s4 1983009808
    %v469 = vunpack.c.0.s8 %v468
    %v470 = vlaneseq
    %v471 = vshrl.u32 %v470, 7
    %v472 = vsub.s32 %v469, %v471
    %v473 = vrot.slane %v459, %v472
    %v474 = vcombine.low %v466, %v473
    %v475 = vcombine.low %v282, %v283
    %v476 = vcombine.low %v284, %v285
    %v478 = vunpack.c.l.s4 1983009808
    %v479 = vunpack.c.0.s8 %v478
    %v480 = vlaneseq
    %v481 = vshrl.u32 %v480, 7
    %v482 = vsub.s32 %v479, %v481
    %v483 = vrot.slane %v475, %v482
    %v485 = vunpack.c.l.s4 1983009808
    %v486 = vunpack.c.0.s8 %v485
    %v487 = vlaneseq
    %v488 = vshrl.u32 %v487, 7
    %v489 = vsub.s32 %v486, %v488
    %v490 = vrot.slane %v476, %v489
    %v491 = vcombine.low %v483, %v490
    %v492 = vcombine.low %v286, %v287
    %v493 = vcombine.low %v288, %v289
    %v495 = vunpack.c.l.s4 1983009808
    %v496 = vunpack.c.0.s8 %v495
    %v497 = vlaneseq
    %v498 = vshrl.u32 %v497, 7
    %v499 = vsub.s32 %v496, %v498
    %v500 = vrot.slane %v492, %v499
    %v502 = vunpack.c.l.s4 1983009808
    %v503 = vunpack.c.0.s8 %v502
    %v504 = vlaneseq
    %v505 = vshrl.u32 %v504, 7
    %v506 = vsub.s32 %v503, %v505
    %v507 = vrot.slane %v493, %v506
    %v508 = vcombine.low %v500, %v507
    %v509 = vcombine.low %v290, %v291
    %v510 = vcombine.low %v292, %v293
    %v512 = vunpack.c.l.s4 1983009808
    %v513 = vunpack.c.0.s8 %v512
    %v514 = vlaneseq
    %v515 = vshrl.u32 %v514, 7
    %v516 = vsub.s32 %v513, %v515
    %v517 = vrot.slane %v509, %v516
    %v519 = vunpack.c.l.s4 1983009808
    %v520 = vunpack.c.0.s8 %v519
    %v521 = vlaneseq
    %v522 = vshrl.u32 %v521, 7
    %v523 = vsub.s32 %v520, %v522
    %v524 = vrot.slane %v510, %v523
    %v525 = vcombine.low %v517, %v524
    %v526 = vcombine.low %v294, %v295
    %v527 = vcombine.low %v296, %v297
    %v529 = vunpack.c.l.s4 1983009808
    %v530 = vunpack.c.0.s8 %v529
    %v531 = vlaneseq
    %v532 = vshrl.u32 %v531, 7
    %v533 = vsub.s32 %v530, %v532
    %v534 = vrot.slane %v526, %v533
    %v536 = vunpack.c.l.s4 1983009808
    %v537 = vunpack.c.0.s8 %v536
    %v538 = vlaneseq
    %v539 = vshrl.u32 %v538, 7
    %v540 = vsub.s32 %v537, %v539
    %v541 = vrot.slane %v527, %v540
    %v542 = vcombine.low %v534, %v541
    %v543 = vcombine.low %v298, %v299
    %v544 = vcombine.low %v300, %v301
    %v546 = vunpack.c.l.s4 1983009808
    %v547 = vunpack.c.0.s8 %v546
    %v548 = vlaneseq
    %v549 = vshrl.u32 %v548, 7
    %v550 = vsub.s32 %v547, %v549
    %v551 = vrot.slane %v543, %v550
    %v553 = vunpack.c.l.s4 1983009808
    %v554 = vunpack.c.0.s8 %v553
    %v555 = vlaneseq
    %v556 = vshrl.u32 %v555, 7
    %v557 = vsub.s32 %v554, %v556
    %v558 = vrot.slane %v544, %v557
    %v559 = vcombine.low %v551, %v558
    %v560 = vcombine.low %v302, %v303
    %v561 = vcombine.low %v304, %v305
    %v563 = vunpack.c.l.s4 1983009808
    %v564 = vunpack.c.0.s8 %v563
    %v565 = vlaneseq
    %v566 = vshrl.u32 %v565, 7
    %v567 = vsub.s32 %v564, %v566
    %v568 = vrot.slane %v560, %v567
    %v570 = vunpack.c.l.s4 1983009808
    %v571 = vunpack.c.0.s8 %v570
    %v572 = vlaneseq
    %v573 = vshrl.u32 %v572, 7
    %v574 = vsub.s32 %v571, %v573
    %v575 = vrot.slane %v561, %v574
    %v576 = vcombine.low %v568, %v575
    %v577 = vcombine.low %v306, %v307
    %v578 = vcombine.low %v308, %v309
    %v580 = vunpack.c.l.s4 1983009808
    %v581 = vunpack.c.0.s8 %v580
    %v582 = vlaneseq
    %v583 = vshrl.u32 %v582, 7
    %v584 = vsub.s32 %v581, %v583
    %v585 = vrot.slane %v577, %v584
    %v587 = vunpack.c.l.s4 1983009808
    %v588 = vunpack.c.0.s8 %v587
    %v589 = vlaneseq
    %v590 = vshrl.u32 %v589, 7
    %v591 = vsub.s32 %v588, %v590
    %v592 = vrot.slane %v578, %v591
    %v593 = vcombine.low %v585, %v592
    %v594 = vcombine.low %v310, %v311
    %v595 = vcombine.low %v312, %v313
    %v597 = vunpack.c.l.s4 1983009808
    %v598 = vunpack.c.0.s8 %v597
    %v599 = vlaneseq
    %v600 = vshrl.u32 %v599, 7
    %v601 = vsub.s32 %v598, %v600
    %v602 = vrot.slane %v594, %v601
    %v604 = vunpack.c.l.s4 1983009808
    %v605 = vunpack.c.0.s8 %v604
    %v606 = vlaneseq
    %v607 = vshrl.u32 %v606, 7
    %v608 = vsub.s32 %v605, %v607
    %v609 = vrot.slane %v595, %v608
    %v610 = vcombine.low %v602, %v609
    %v611 = vcombine.low %v314, %v315
    %v612 = vcombine.low %v316, %v317
    %v614 = vunpack.c.l.s4 1983009808
    %v615 = vunpack.c.0.s8 %v614
    %v616 = vlaneseq
    %v617 = vshrl.u32 %v616, 7
    %v618 = vsub.s32 %v615, %v617
    %v619 = vrot.slane %v611, %v618
    %v621 = vunpack.c.l.s4 1983009808
    %v622 = vunpack.c.0.s8 %v621
    %v623 = vlaneseq
    %v624 = vshrl.u32 %v623, 7
    %v625 = vsub.s32 %v622, %v624
    %v626 = vrot.slane %v612, %v625
    %v627 = vcombine.low %v619, %v626
    %v628 = vcombine.low %v318, %v319
    %v629 = vcombine.low %v320, %v321
    %v631 = vunpack.c.l.s4 1983009808
    %v632 = vunpack.c.0.s8 %v631
    %v633 = vlaneseq
    %v634 = vshrl.u32 %v633, 7
    %v635 = vsub.s32 %v632, %v634
    %v636 = vrot.slane %v628, %v635
    %v638 = vunpack.c.l.s4 1983009808
    %v639 = vunpack.c.0.s8 %v638
    %v640 = vlaneseq
    %v641 = vshrl.u32 %v640, 7
    %v642 = vsub.s32 %v639, %v641
    %v643 = vrot.slane %v629, %v642
    %v644 = vcombine.low %v636, %v643
    %v645 = vcombine.low %v322, %v323
    %v646 = vcombine.low %v324, %v325
    %v648 = vunpack.c.l.s4 1983009808
    %v649 = vunpack.c.0.s8 %v648
    %v650 = vlaneseq
    %v651 = vshrl.u32 %v650, 7
    %v652 = vsub.s32 %v649, %v651
    %v653 = vrot.slane %v645, %v652
    %v655 = vunpack.c.l.s4 1983009808
    %v656 = vunpack.c.0.s8 %v655
    %v657 = vlaneseq
    %v658 = vshrl.u32 %v657, 7
    %v659 = vsub.s32 %v656, %v658
    %v660 = vrot.slane %v646, %v659
    %v661 = vcombine.low %v653, %v660
    %678 = vst [vmem:[#allocation2] sm:$0xff] %v406
    %679 = vst [vmem:[#allocation2 + $0x8] sm:$0xff] %v423
    %680 = vst [vmem:[#allocation2 + $0x10] sm:$0xff] %v440
    %681 = vst [vmem:[#allocation2 + $0x18] sm:$0xff] %v457
    %682 = vst [vmem:[#allocation2 + $0x20] sm:$0xff] %v474
    %683 = vst [vmem:[#allocation2 + $0x28] sm:$0xff] %v491
    %684 = vst [vmem:[#allocation2 + $0x30] sm:$0xff] %v508
    %685 = vst [vmem:[#allocation2 + $0x38] sm:$0xff] %v525
    %686 = vst [vmem:[#allocation2 + $0x40] sm:$0xff] %v542
    %687 = vst [vmem:[#allocation2 + $0x48] sm:$0xff] %v559
    %688 = vst [vmem:[#allocation2 + $0x50] sm:$0xff] %v576
    %689 = vst [vmem:[#allocation2 + $0x58] sm:$0xff] %v593
    %690 = vst [vmem:[#allocation2 + $0x60] sm:$0xff] %v610
    %691 = vst [vmem:[#allocation2 + $0x68] sm:$0xff] %v627
    %692 = vst [vmem:[#allocation2 + $0x70] sm:$0xff] %v644
    %693 = vst [vmem:[#allocation2 + $0x78] sm:$0xff] %v661
    %v694 = vld [vmem:[#allocation4] sm:$0xff]
    %v695 = vld [vmem:[#allocation4 + $0x8] sm:$0xff]
    %v696 = vld [vmem:[#allocation4 + $0x10] sm:$0xff]
    %v697 = vld [vmem:[#allocation4 + $0x18] sm:$0xff]
    %v698 = vld [vmem:[#allocation4 + $0x20] sm:$0xff]
    %v699 = vld [vmem:[#allocation4 + $0x28] sm:$0xff]
    %v700 = vld [vmem:[#allocation4 + $0x30] sm:$0xff]
    %v701 = vld [vmem:[#allocation4 + $0x38] sm:$0xff]
    %v702 = vld [vmem:[#allocation4 + $0x40] sm:$0xff]
    %v703 = vld [vmem:[#allocation4 + $0x48] sm:$0xff]
    %v704 = vld [vmem:[#allocation4 + $0x50] sm:$0xff]
    %v705 = vld [vmem:[#allocation4 + $0x58] sm:$0xff]
    %v706 = vld [vmem:[#allocation4 + $0x60] sm:$0xff]
    %v707 = vld [vmem:[#allocation4 + $0x68] sm:$0xff]
    %v708 = vld [vmem:[#allocation4 + $0x70] sm:$0xff]
    %v709 = vld [vmem:[#allocation4 + $0x78] sm:$0xff]
    %v710 = vld [vmem:[#allocation4 + $0x80] sm:$0xff]
    %v711 = vld [vmem:[#allocation4 + $0x88] sm:$0xff]
    %v712 = vld [vmem:[#allocation4 + $0x90] sm:$0xff]
    %v713 = vld [vmem:[#allocation4 + $0x98] sm:$0xff]
    %v714 = vld [vmem:[#allocation4 + $0xa0] sm:$0xff]
    %v715 = vld [vmem:[#allocation4 + $0xa8] sm:$0xff]
    %v716 = vld [vmem:[#allocation4 + $0xb0] sm:$0xff]
    %v717 = vld [vmem:[#allocation4 + $0xb8] sm:$0xff]
    %v718 = vld [vmem:[#allocation4 + $0xc0] sm:$0xff]
    %v719 = vld [vmem:[#allocation4 + $0xc8] sm:$0xff]
    %v720 = vld [vmem:[#allocation4 + $0xd0] sm:$0xff]
    %v721 = vld [vmem:[#allocation4 + $0xd8] sm:$0xff]
    %v722 = vld [vmem:[#allocation4 + $0xe0] sm:$0xff]
    %v723 = vld [vmem:[#allocation4 + $0xe8] sm:$0xff]
    %v724 = vld [vmem:[#allocation4 + $0xf0] sm:$0xff]
    %v725 = vld [vmem:[#allocation4 + $0xf8] sm:$0xff]
    %v726 = vld [vmem:[#allocation4 + $0x100] sm:$0xff]
    %v727 = vld [vmem:[#allocation4 + $0x108] sm:$0xff]
    %v728 = vld [vmem:[#allocation4 + $0x110] sm:$0xff]
    %v729 = vld [vmem:[#allocation4 + $0x118] sm:$0xff]
    %v730 = vld [vmem:[#allocation4 + $0x120] sm:$0xff]
    %v731 = vld [vmem:[#allocation4 + $0x128] sm:$0xff]
    %v732 = vld [vmem:[#allocation4 + $0x130] sm:$0xff]
    %v733 = vld [vmem:[#allocation4 + $0x138] sm:$0xff]
    %v734 = vld [vmem:[#allocation4 + $0x140] sm:$0xff]
    %v735 = vld [vmem:[#allocation4 + $0x148] sm:$0xff]
    %v736 = vld [vmem:[#allocation4 + $0x150] sm:$0xff]
    %v737 = vld [vmem:[#allocation4 + $0x158] sm:$0xff]
    %v738 = vld [vmem:[#allocation4 + $0x160] sm:$0xff]
    %v739 = vld [vmem:[#allocation4 + $0x168] sm:$0xff]
    %v740 = vld [vmem:[#allocation4 + $0x170] sm:$0xff]
    %v741 = vld [vmem:[#allocation4 + $0x178] sm:$0xff]
    %v742 = vld [vmem:[#allocation4 + $0x180] sm:$0xff]
    %v743 = vld [vmem:[#allocation4 + $0x188] sm:$0xff]
    %v744 = vld [vmem:[#allocation4 + $0x190] sm:$0xff]
    %v745 = vld [vmem:[#allocation4 + $0x198] sm:$0xff]
    %v746 = vld [vmem:[#allocation4 + $0x1a0] sm:$0xff]
    %v747 = vld [vmem:[#allocation4 + $0x1a8] sm:$0xff]
    %v748 = vld [vmem:[#allocation4 + $0x1b0] sm:$0xff]
    %v749 = vld [vmem:[#allocation4 + $0x1b8] sm:$0xff]
    %v750 = vld [vmem:[#allocation4 + $0x1c0] sm:$0xff]
    %v751 = vld [vmem:[#allocation4 + $0x1c8] sm:$0xff]
    %v752 = vld [vmem:[#allocation4 + $0x1d0] sm:$0xff]
    %v753 = vld [vmem:[#allocation4 + $0x1d8] sm:$0xff]
    %v754 = vld [vmem:[#allocation4 + $0x1e0] sm:$0xff]
    %v755 = vld [vmem:[#allocation4 + $0x1e8] sm:$0xff]
    %v756 = vld [vmem:[#allocation4 + $0x1f0] sm:$0xff]
    %v757 = vld [vmem:[#allocation4 + $0x1f8] sm:$0xff]
    %v758 = vld [vmem:[#allocation4 + $0x200] sm:$0xff]
    %v759 = vld [vmem:[#allocation4 + $0x208] sm:$0xff]
    %v760 = vld [vmem:[#allocation4 + $0x210] sm:$0xff]
    %v761 = vld [vmem:[#allocation4 + $0x218] sm:$0xff]
    %v762 = vld [vmem:[#allocation4 + $0x220] sm:$0xff]
    %v763 = vld [vmem:[#allocation4 + $0x228] sm:$0xff]
    %v764 = vld [vmem:[#allocation4 + $0x230] sm:$0xff]
    %v765 = vld [vmem:[#allocation4 + $0x238] sm:$0xff]
    %v766 = vld [vmem:[#allocation4 + $0x240] sm:$0xff]
    %v767 = vld [vmem:[#allocation4 + $0x248] sm:$0xff]
    %v768 = vld [vmem:[#allocation4 + $0x250] sm:$0xff]
    %v769 = vld [vmem:[#allocation4 + $0x258] sm:$0xff]
    %v770 = vld [vmem:[#allocation4 + $0x260] sm:$0xff]
    %v771 = vld [vmem:[#allocation4 + $0x268] sm:$0xff]
    %v772 = vld [vmem:[#allocation4 + $0x270] sm:$0xff]
    %v773 = vld [vmem:[#allocation4 + $0x278] sm:$0xff]
    %v774 = vld [vmem:[#allocation4 + $0x280] sm:$0xff]
    %v775 = vld [vmem:[#allocation4 + $0x288] sm:$0xff]
    %v776 = vld [vmem:[#allocation4 + $0x290] sm:$0xff]
    %v777 = vld [vmem:[#allocation4 + $0x298] sm:$0xff]
    %v778 = vld [vmem:[#allocation4 + $0x2a0] sm:$0xff]
    %v779 = vld [vmem:[#allocation4 + $0x2a8] sm:$0xff]
    %v780 = vld [vmem:[#allocation4 + $0x2b0] sm:$0xff]
    %v781 = vld [vmem:[#allocation4 + $0x2b8] sm:$0xff]
    %v782 = vld [vmem:[#allocation4 + $0x2c0] sm:$0xff]
    %v783 = vld [vmem:[#allocation4 + $0x2c8] sm:$0xff]
    %v784 = vld [vmem:[#allocation4 + $0x2d0] sm:$0xff]
    %v785 = vld [vmem:[#allocation4 + $0x2d8] sm:$0xff]
    %v786 = vld [vmem:[#allocation4 + $0x2e0] sm:$0xff]
    %v787 = vld [vmem:[#allocation4 + $0x2e8] sm:$0xff]
    %v788 = vld [vmem:[#allocation4 + $0x2f0] sm:$0xff]
    %v789 = vld [vmem:[#allocation4 + $0x2f8] sm:$0xff]
    %v790 = vld [vmem:[#allocation4 + $0x300] sm:$0xff]
    %v791 = vld [vmem:[#allocation4 + $0x308] sm:$0xff]
    %v792 = vld [vmem:[#allocation4 + $0x310] sm:$0xff]
    %v793 = vld [vmem:[#allocation4 + $0x318] sm:$0xff]
    %v794 = vld [vmem:[#allocation4 + $0x320] sm:$0xff]
    %v795 = vld [vmem:[#allocation4 + $0x328] sm:$0xff]
    %v796 = vld [vmem:[#allocation4 + $0x330] sm:$0xff]
    %v797 = vld [vmem:[#allocation4 + $0x338] sm:$0xff]
    %v798 = vld [vmem:[#allocation4 + $0x340] sm:$0xff]
    %v799 = vld [vmem:[#allocation4 + $0x348] sm:$0xff]
    %v800 = vld [vmem:[#allocation4 + $0x350] sm:$0xff]
    %v801 = vld [vmem:[#allocation4 + $0x358] sm:$0xff]
    %v802 = vld [vmem:[#allocation4 + $0x360] sm:$0xff]
    %v803 = vld [vmem:[#allocation4 + $0x368] sm:$0xff]
    %v804 = vld [vmem:[#allocation4 + $0x370] sm:$0xff]
    %v805 = vld [vmem:[#allocation4 + $0x378] sm:$0xff]
    %v806 = vld [vmem:[#allocation4 + $0x380] sm:$0xff]
    %v807 = vld [vmem:[#allocation4 + $0x388] sm:$0xff]
    %v808 = vld [vmem:[#allocation4 + $0x390] sm:$0xff]
    %v809 = vld [vmem:[#allocation4 + $0x398] sm:$0xff]
    %v810 = vld [vmem:[#allocation4 + $0x3a0] sm:$0xff]
    %v811 = vld [vmem:[#allocation4 + $0x3a8] sm:$0xff]
    %v812 = vld [vmem:[#allocation4 + $0x3b0] sm:$0xff]
    %v813 = vld [vmem:[#allocation4 + $0x3b8] sm:$0xff]
    %v814 = vld [vmem:[#allocation4 + $0x3c0] sm:$0xff]
    %v815 = vld [vmem:[#allocation4 + $0x3c8] sm:$0xff]
    %v816 = vld [vmem:[#allocation4 + $0x3d0] sm:$0xff]
    %v817 = vld [vmem:[#allocation4 + $0x3d8] sm:$0xff]
    %v818 = vld [vmem:[#allocation4 + $0x3e0] sm:$0xff]
    %v819 = vld [vmem:[#allocation4 + $0x3e8] sm:$0xff]
    %v820 = vld [vmem:[#allocation4 + $0x3f0] sm:$0xff]
    %v821 = vld [vmem:[#allocation4 + $0x3f8] sm:$0xff]
    %v822 = vld [vmem:[#allocation6] sm:$0xff]
    %v823 = vld [vmem:[#allocation6 + $0x8] sm:$0xff]
    %v824 = vld [vmem:[#allocation6 + $0x10] sm:$0xff]
    %v825 = vld [vmem:[#allocation6 + $0x18] sm:$0xff]
    %v826 = vld [vmem:[#allocation6 + $0x20] sm:$0xff]
    %v827 = vld [vmem:[#allocation6 + $0x28] sm:$0xff]
    %v828 = vld [vmem:[#allocation6 + $0x30] sm:$0xff]
    %v829 = vld [vmem:[#allocation6 + $0x38] sm:$0xff]
    %v830 = vld [vmem:[#allocation6 + $0x40] sm:$0xff]
    %v831 = vld [vmem:[#allocation6 + $0x48] sm:$0xff]
    %v832 = vld [vmem:[#allocation6 + $0x50] sm:$0xff]
    %v833 = vld [vmem:[#allocation6 + $0x58] sm:$0xff]
    %v834 = vld [vmem:[#allocation6 + $0x60] sm:$0xff]
    %v835 = vld [vmem:[#allocation6 + $0x68] sm:$0xff]
    %v836 = vld [vmem:[#allocation6 + $0x70] sm:$0xff]
    %v837 = vld [vmem:[#allocation6 + $0x78] sm:$0xff]
    %v838 = vld [vmem:[#allocation6 + $0x80] sm:$0xff]
    %v839 = vld [vmem:[#allocation6 + $0x88] sm:$0xff]
    %v840 = vld [vmem:[#allocation6 + $0x90] sm:$0xff]
    %v841 = vld [vmem:[#allocation6 + $0x98] sm:$0xff]
    %v842 = vld [vmem:[#allocation6 + $0xa0] sm:$0xff]
    %v843 = vld [vmem:[#allocation6 + $0xa8] sm:$0xff]
    %v844 = vld [vmem:[#allocation6 + $0xb0] sm:$0xff]
    %v845 = vld [vmem:[#allocation6 + $0xb8] sm:$0xff]
    %v846 = vld [vmem:[#allocation6 + $0xc0] sm:$0xff]
    %v847 = vld [vmem:[#allocation6 + $0xc8] sm:$0xff]
    %v848 = vld [vmem:[#allocation6 + $0xd0] sm:$0xff]
    %v849 = vld [vmem:[#allocation6 + $0xd8] sm:$0xff]
    %v850 = vld [vmem:[#allocation6 + $0xe0] sm:$0xff]
    %v851 = vld [vmem:[#allocation6 + $0xe8] sm:$0xff]
    %v852 = vld [vmem:[#allocation6 + $0xf0] sm:$0xff]
    %v853 = vld [vmem:[#allocation6 + $0xf8] sm:$0xff]
    %v854 = vld [vmem:[#allocation6 + $0x100] sm:$0xff]
    %v855 = vld [vmem:[#allocation6 + $0x108] sm:$0xff]
    %v856 = vld [vmem:[#allocation6 + $0x110] sm:$0xff]
    %v857 = vld [vmem:[#allocation6 + $0x118] sm:$0xff]
    %v858 = vld [vmem:[#allocation6 + $0x120] sm:$0xff]
    %v859 = vld [vmem:[#allocation6 + $0x128] sm:$0xff]
    %v860 = vld [vmem:[#allocation6 + $0x130] sm:$0xff]
    %v861 = vld [vmem:[#allocation6 + $0x138] sm:$0xff]
    %v862 = vld [vmem:[#allocation6 + $0x140] sm:$0xff]
    %v863 = vld [vmem:[#allocation6 + $0x148] sm:$0xff]
    %v864 = vld [vmem:[#allocation6 + $0x150] sm:$0xff]
    %v865 = vld [vmem:[#allocation6 + $0x158] sm:$0xff]
    %v866 = vld [vmem:[#allocation6 + $0x160] sm:$0xff]
    %v867 = vld [vmem:[#allocation6 + $0x168] sm:$0xff]
    %v868 = vld [vmem:[#allocation6 + $0x170] sm:$0xff]
    %v869 = vld [vmem:[#allocation6 + $0x178] sm:$0xff]
    %v870 = vld [vmem:[#allocation6 + $0x180] sm:$0xff]
    %v871 = vld [vmem:[#allocation6 + $0x188] sm:$0xff]
    %v872 = vld [vmem:[#allocation6 + $0x190] sm:$0xff]
    %v873 = vld [vmem:[#allocation6 + $0x198] sm:$0xff]
    %v874 = vld [vmem:[#allocation6 + $0x1a0] sm:$0xff]
    %v875 = vld [vmem:[#allocation6 + $0x1a8] sm:$0xff]
    %v876 = vld [vmem:[#allocation6 + $0x1b0] sm:$0xff]
    %v877 = vld [vmem:[#allocation6 + $0x1b8] sm:$0xff]
    %v878 = vld [vmem:[#allocation6 + $0x1c0] sm:$0xff]
    %v879 = vld [vmem:[#allocation6 + $0x1c8] sm:$0xff]
    %v880 = vld [vmem:[#allocation6 + $0x1d0] sm:$0xff]
    %v881 = vld [vmem:[#allocation6 + $0x1d8] sm:$0xff]
    %v882 = vld [vmem:[#allocation6 + $0x1e0] sm:$0xff]
    %v883 = vld [vmem:[#allocation6 + $0x1e8] sm:$0xff]
    %v884 = vld [vmem:[#allocation6 + $0x1f0] sm:$0xff]
    %v885 = vld [vmem:[#allocation6 + $0x1f8] sm:$0xff]
    %v886 = vld [vmem:[#allocation6 + $0x200] sm:$0xff]
    %v887 = vld [vmem:[#allocation6 + $0x208] sm:$0xff]
    %v888 = vld [vmem:[#allocation6 + $0x210] sm:$0xff]
    %v889 = vld [vmem:[#allocation6 + $0x218] sm:$0xff]
    %v890 = vld [vmem:[#allocation6 + $0x220] sm:$0xff]
    %v891 = vld [vmem:[#allocation6 + $0x228] sm:$0xff]
    %v892 = vld [vmem:[#allocation6 + $0x230] sm:$0xff]
    %v893 = vld [vmem:[#allocation6 + $0x238] sm:$0xff]
    %v894 = vld [vmem:[#allocation6 + $0x240] sm:$0xff]
    %v895 = vld [vmem:[#allocation6 + $0x248] sm:$0xff]
    %v896 = vld [vmem:[#allocation6 + $0x250] sm:$0xff]
    %v897 = vld [vmem:[#allocation6 + $0x258] sm:$0xff]
    %v898 = vld [vmem:[#allocation6 + $0x260] sm:$0xff]
    %v899 = vld [vmem:[#allocation6 + $0x268] sm:$0xff]
    %v900 = vld [vmem:[#allocation6 + $0x270] sm:$0xff]
    %v901 = vld [vmem:[#allocation6 + $0x278] sm:$0xff]
    %v902 = vld [vmem:[#allocation6 + $0x280] sm:$0xff]
    %v903 = vld [vmem:[#allocation6 + $0x288] sm:$0xff]
    %v904 = vld [vmem:[#allocation6 + $0x290] sm:$0xff]
    %v905 = vld [vmem:[#allocation6 + $0x298] sm:$0xff]
    %v906 = vld [vmem:[#allocation6 + $0x2a0] sm:$0xff]
    %v907 = vld [vmem:[#allocation6 + $0x2a8] sm:$0xff]
    %v908 = vld [vmem:[#allocation6 + $0x2b0] sm:$0xff]
    %v909 = vld [vmem:[#allocation6 + $0x2b8] sm:$0xff]
    %v910 = vld [vmem:[#allocation6 + $0x2c0] sm:$0xff]
    %v911 = vld [vmem:[#allocation6 + $0x2c8] sm:$0xff]
    %v912 = vld [vmem:[#allocation6 + $0x2d0] sm:$0xff]
    %v913 = vld [vmem:[#allocation6 + $0x2d8] sm:$0xff]
    %v914 = vld [vmem:[#allocation6 + $0x2e0] sm:$0xff]
    %v915 = vld [vmem:[#allocation6 + $0x2e8] sm:$0xff]
    %v916 = vld [vmem:[#allocation6 + $0x2f0] sm:$0xff]
    %v917 = vld [vmem:[#allocation6 + $0x2f8] sm:$0xff]
    %v918 = vld [vmem:[#allocation6 + $0x300] sm:$0xff]
    %v919 = vld [vmem:[#allocation6 + $0x308] sm:$0xff]
    %v920 = vld [vmem:[#allocation6 + $0x310] sm:$0xff]
    %v921 = vld [vmem:[#allocation6 + $0x318] sm:$0xff]
    %v922 = vld [vmem:[#allocation6 + $0x320] sm:$0xff]
    %v923 = vld [vmem:[#allocation6 + $0x328] sm:$0xff]
    %v924 = vld [vmem:[#allocation6 + $0x330] sm:$0xff]
    %v925 = vld [vmem:[#allocation6 + $0x338] sm:$0xff]
    %v926 = vld [vmem:[#allocation6 + $0x340] sm:$0xff]
    %v927 = vld [vmem:[#allocation6 + $0x348] sm:$0xff]
    %v928 = vld [vmem:[#allocation6 + $0x350] sm:$0xff]
    %v929 = vld [vmem:[#allocation6 + $0x358] sm:$0xff]
    %v930 = vld [vmem:[#allocation6 + $0x360] sm:$0xff]
    %v931 = vld [vmem:[#allocation6 + $0x368] sm:$0xff]
    %v932 = vld [vmem:[#allocation6 + $0x370] sm:$0xff]
    %v933 = vld [vmem:[#allocation6 + $0x378] sm:$0xff]
    %v934 = vld [vmem:[#allocation6 + $0x380] sm:$0xff]
    %v935 = vld [vmem:[#allocation6 + $0x388] sm:$0xff]
    %v936 = vld [vmem:[#allocation6 + $0x390] sm:$0xff]
    %v937 = vld [vmem:[#allocation6 + $0x398] sm:$0xff]
    %v938 = vld [vmem:[#allocation6 + $0x3a0] sm:$0xff]
    %v939 = vld [vmem:[#allocation6 + $0x3a8] sm:$0xff]
    %v940 = vld [vmem:[#allocation6 + $0x3b0] sm:$0xff]
    %v941 = vld [vmem:[#allocation6 + $0x3b8] sm:$0xff]
    %v942 = vld [vmem:[#allocation6 + $0x3c0] sm:$0xff]
    %v943 = vld [vmem:[#allocation6 + $0x3c8] sm:$0xff]
    %v944 = vld [vmem:[#allocation6 + $0x3d0] sm:$0xff]
    %v945 = vld [vmem:[#allocation6 + $0x3d8] sm:$0xff]
    %v946 = vld [vmem:[#allocation6 + $0x3e0] sm:$0xff]
    %v947 = vld [vmem:[#allocation6 + $0x3e8] sm:$0xff]
    %v948 = vld [vmem:[#allocation6 + $0x3f0] sm:$0xff]
    %v949 = vld [vmem:[#allocation6 + $0x3f8] sm:$0xff]
    %v950 = vld [vmem:[#allocation6 + $0x400] sm:$0xff]
    %v951 = vld [vmem:[#allocation6 + $0x408] sm:$0xff]
    %v952 = vld [vmem:[#allocation6 + $0x410] sm:$0xff]
    %v953 = vld [vmem:[#allocation6 + $0x418] sm:$0xff]
    %v954 = vld [vmem:[#allocation6 + $0x420] sm:$0xff]
    %v955 = vld [vmem:[#allocation6 + $0x428] sm:$0xff]
    %v956 = vld [vmem:[#allocation6 + $0x430] sm:$0xff]
    %v957 = vld [vmem:[#allocation6 + $0x438] sm:$0xff]
    %v958 = vld [vmem:[#allocation6 + $0x440] sm:$0xff]
    %v959 = vld [vmem:[#allocation6 + $0x448] sm:$0xff]
    %v960 = vld [vmem:[#allocation6 + $0x450] sm:$0xff]
    %v961 = vld [vmem:[#allocation6 + $0x458] sm:$0xff]
    %v962 = vld [vmem:[#allocation6 + $0x460] sm:$0xff]
    %v963 = vld [vmem:[#allocation6 + $0x468] sm:$0xff]
    %v964 = vld [vmem:[#allocation6 + $0x470] sm:$0xff]
    %v965 = vld [vmem:[#allocation6 + $0x478] sm:$0xff]
    %v966 = vld [vmem:[#allocation6 + $0x480] sm:$0xff]
    %v967 = vld [vmem:[#allocation6 + $0x488] sm:$0xff]
    %v968 = vld [vmem:[#allocation6 + $0x490] sm:$0xff]
    %v969 = vld [vmem:[#allocation6 + $0x498] sm:$0xff]
    %v970 = vld [vmem:[#allocation6 + $0x4a0] sm:$0xff]
    %v971 = vld [vmem:[#allocation6 + $0x4a8] sm:$0xff]
    %v972 = vld [vmem:[#allocation6 + $0x4b0] sm:$0xff]
    %v973 = vld [vmem:[#allocation6 + $0x4b8] sm:$0xff]
    %v974 = vld [vmem:[#allocation6 + $0x4c0] sm:$0xff]
    %v975 = vld [vmem:[#allocation6 + $0x4c8] sm:$0xff]
    %v976 = vld [vmem:[#allocation6 + $0x4d0] sm:$0xff]
    %v977 = vld [vmem:[#allocation6 + $0x4d8] sm:$0xff]
    %v978 = vld [vmem:[#allocation6 + $0x4e0] sm:$0xff]
    %v979 = vld [vmem:[#allocation6 + $0x4e8] sm:$0xff]
    %v980 = vld [vmem:[#allocation6 + $0x4f0] sm:$0xff]
    %v981 = vld [vmem:[#allocation6 + $0x4f8] sm:$0xff]
    %v982 = vld [vmem:[#allocation6 + $0x500] sm:$0xff]
    %v983 = vld [vmem:[#allocation6 + $0x508] sm:$0xff]
    %v984 = vld [vmem:[#allocation6 + $0x510] sm:$0xff]
    %v985 = vld [vmem:[#allocation6 + $0x518] sm:$0xff]
    %v986 = vld [vmem:[#allocation6 + $0x520] sm:$0xff]
    %v987 = vld [vmem:[#allocation6 + $0x528] sm:$0xff]
    %v988 = vld [vmem:[#allocation6 + $0x530] sm:$0xff]
    %v989 = vld [vmem:[#allocation6 + $0x538] sm:$0xff]
    %v990 = vld [vmem:[#allocation6 + $0x540] sm:$0xff]
    %v991 = vld [vmem:[#allocation6 + $0x548] sm:$0xff]
    %v992 = vld [vmem:[#allocation6 + $0x550] sm:$0xff]
    %v993 = vld [vmem:[#allocation6 + $0x558] sm:$0xff]
    %v994 = vld [vmem:[#allocation6 + $0x560] sm:$0xff]
    %v995 = vld [vmem:[#allocation6 + $0x568] sm:$0xff]
    %v996 = vld [vmem:[#allocation6 + $0x570] sm:$0xff]
    %v997 = vld [vmem:[#allocation6 + $0x578] sm:$0xff]
    %v998 = vld [vmem:[#allocation6 + $0x580] sm:$0xff]
    %v999 = vld [vmem:[#allocation6 + $0x588] sm:$0xff]
    %v1000 = vld [vmem:[#allocation6 + $0x590] sm:$0xff]
    %v1001 = vld [vmem:[#allocation6 + $0x598] sm:$0xff]
    %v1002 = vld [vmem:[#allocation6 + $0x5a0] sm:$0xff]
    %v1003 = vld [vmem:[#allocation6 + $0x5a8] sm:$0xff]
    %v1004 = vld [vmem:[#allocation6 + $0x5b0] sm:$0xff]
    %v1005 = vld [vmem:[#allocation6 + $0x5b8] sm:$0xff]
    %v1006 = vld [vmem:[#allocation6 + $0x5c0] sm:$0xff]
    %v1007 = vld [vmem:[#allocation6 + $0x5c8] sm:$0xff]
    %v1008 = vld [vmem:[#allocation6 + $0x5d0] sm:$0xff]
    %v1009 = vld [vmem:[#allocation6 + $0x5d8] sm:$0xff]
    %v1010 = vld [vmem:[#allocation6 + $0x5e0] sm:$0xff]
    %v1011 = vld [vmem:[#allocation6 + $0x5e8] sm:$0xff]
    %v1012 = vld [vmem:[#allocation6 + $0x5f0] sm:$0xff]
    %v1013 = vld [vmem:[#allocation6 + $0x5f8] sm:$0xff]
    %v1014 = vld [vmem:[#allocation6 + $0x600] sm:$0xff]
    %v1015 = vld [vmem:[#allocation6 + $0x608] sm:$0xff]
    %v1016 = vld [vmem:[#allocation6 + $0x610] sm:$0xff]
    %v1017 = vld [vmem:[#allocation6 + $0x618] sm:$0xff]
    %v1018 = vld [vmem:[#allocation6 + $0x620] sm:$0xff]
    %v1019 = vld [vmem:[#allocation6 + $0x628] sm:$0xff]
    %v1020 = vld [vmem:[#allocation6 + $0x630] sm:$0xff]
    %v1021 = vld [vmem:[#allocation6 + $0x638] sm:$0xff]
    %v1022 = vld [vmem:[#allocation6 + $0x640] sm:$0xff]
    %v1023 = vld [vmem:[#allocation6 + $0x648] sm:$0xff]
    %v1024 = vld [vmem:[#allocation6 + $0x650] sm:$0xff]
    %v1025 = vld [vmem:[#allocation6 + $0x658] sm:$0xff]
    %v1026 = vld [vmem:[#allocation6 + $0x660] sm:$0xff]
    %v1027 = vld [vmem:[#allocation6 + $0x668] sm:$0xff]
    %v1028 = vld [vmem:[#allocation6 + $0x670] sm:$0xff]
    %v1029 = vld [vmem:[#allocation6 + $0x678] sm:$0xff]
    %v1030 = vld [vmem:[#allocation6 + $0x680] sm:$0xff]
    %v1031 = vld [vmem:[#allocation6 + $0x688] sm:$0xff]
    %v1032 = vld [vmem:[#allocation6 + $0x690] sm:$0xff]
    %v1033 = vld [vmem:[#allocation6 + $0x698] sm:$0xff]
    %v1034 = vld [vmem:[#allocation6 + $0x6a0] sm:$0xff]
    %v1035 = vld [vmem:[#allocation6 + $0x6a8] sm:$0xff]
    %v1036 = vld [vmem:[#allocation6 + $0x6b0] sm:$0xff]
    %v1037 = vld [vmem:[#allocation6 + $0x6b8] sm:$0xff]
    %v1038 = vld [vmem:[#allocation6 + $0x6c0] sm:$0xff]
    %v1039 = vld [vmem:[#allocation6 + $0x6c8] sm:$0xff]
    %v1040 = vld [vmem:[#allocation6 + $0x6d0] sm:$0xff]
    %v1041 = vld [vmem:[#allocation6 + $0x6d8] sm:$0xff]
    %v1042 = vld [vmem:[#allocation6 + $0x6e0] sm:$0xff]
    %v1043 = vld [vmem:[#allocation6 + $0x6e8] sm:$0xff]
    %v1044 = vld [vmem:[#allocation6 + $0x6f0] sm:$0xff]
    %v1045 = vld [vmem:[#allocation6 + $0x6f8] sm:$0xff]
    %v1046 = vld [vmem:[#allocation6 + $0x700] sm:$0xff]
    %v1047 = vld [vmem:[#allocation6 + $0x708] sm:$0xff]
    %v1048 = vld [vmem:[#allocation6 + $0x710] sm:$0xff]
    %v1049 = vld [vmem:[#allocation6 + $0x718] sm:$0xff]
    %v1050 = vld [vmem:[#allocation6 + $0x720] sm:$0xff]
    %v1051 = vld [vmem:[#allocation6 + $0x728] sm:$0xff]
    %v1052 = vld [vmem:[#allocation6 + $0x730] sm:$0xff]
    %v1053 = vld [vmem:[#allocation6 + $0x738] sm:$0xff]
    %v1054 = vld [vmem:[#allocation6 + $0x740] sm:$0xff]
    %v1055 = vld [vmem:[#allocation6 + $0x748] sm:$0xff]
    %v1056 = vld [vmem:[#allocation6 + $0x750] sm:$0xff]
    %v1057 = vld [vmem:[#allocation6 + $0x758] sm:$0xff]
    %v1058 = vld [vmem:[#allocation6 + $0x760] sm:$0xff]
    %v1059 = vld [vmem:[#allocation6 + $0x768] sm:$0xff]
    %v1060 = vld [vmem:[#allocation6 + $0x770] sm:$0xff]
    %v1061 = vld [vmem:[#allocation6 + $0x778] sm:$0xff]
    %v1062 = vld [vmem:[#allocation6 + $0x780] sm:$0xff]
    %v1063 = vld [vmem:[#allocation6 + $0x788] sm:$0xff]
    %v1064 = vld [vmem:[#allocation6 + $0x790] sm:$0xff]
    %v1065 = vld [vmem:[#allocation6 + $0x798] sm:$0xff]
    %v1066 = vld [vmem:[#allocation6 + $0x7a0] sm:$0xff]
    %v1067 = vld [vmem:[#allocation6 + $0x7a8] sm:$0xff]
    %v1068 = vld [vmem:[#allocation6 + $0x7b0] sm:$0xff]
    %v1069 = vld [vmem:[#allocation6 + $0x7b8] sm:$0xff]
    %v1070 = vld [vmem:[#allocation6 + $0x7c0] sm:$0xff]
    %v1071 = vld [vmem:[#allocation6 + $0x7c8] sm:$0xff]
    %v1072 = vld [vmem:[#allocation6 + $0x7d0] sm:$0xff]
    %v1073 = vld [vmem:[#allocation6 + $0x7d8] sm:$0xff]
    %v1074 = vld [vmem:[#allocation6 + $0x7e0] sm:$0xff]
    %v1075 = vld [vmem:[#allocation6 + $0x7e8] sm:$0xff]
    %v1076 = vld [vmem:[#allocation6 + $0x7f0] sm:$0xff]
    %v1077 = vld [vmem:[#allocation6 + $0x7f8] sm:$0xff]
    %v1078 = vld [vmem:[%s5] sm:$0xff]
    %v1079 = vld [vmem:[#allocation2] sm:$0xff]
    %v1080 = vld [vmem:[#allocation2 + $0x8] sm:$0xff]
    %v1209 = vunpack.c.l.b16 %v694
    %v1210 = vunpack.c.h.b16 %v694
    %v1211 = vunpack.c.l.b16 %v695
    %v1212 = vunpack.c.h.b16 %v695
    %v1213 = vunpack.c.l.b16 %v696
    %v1214 = vunpack.c.h.b16 %v696
    %v1215 = vunpack.c.l.b16 %v697
    %v1216 = vunpack.c.h.b16 %v697
    %v1217 = vunpack.c.l.b16 %v698
    %v1218 = vunpack.c.h.b16 %v698
    %v1219 = vunpack.c.l.b16 %v699
    %v1220 = vunpack.c.h.b16 %v699
    %v1221 = vunpack.c.l.b16 %v700
    %v1222 = vunpack.c.h.b16 %v700
    %v1223 = vunpack.c.l.b16 %v701
    %v1224 = vunpack.c.h.b16 %v701
    %v1225 = vunpack.c.l.b16 %v702
    %v1226 = vunpack.c.h.b16 %v702
    %v1227 = vunpack.c.l.b16 %v703
    %v1228 = vunpack.c.h.b16 %v703
    %v1229 = vunpack.c.l.b16 %v704
    %v1230 = vunpack.c.h.b16 %v704
    %v1231 = vunpack.c.l.b16 %v705
    %v1232 = vunpack.c.h.b16 %v705
    %v1233 = vunpack.c.l.b16 %v706
    %v1234 = vunpack.c.h.b16 %v706
    %v1235 = vunpack.c.l.b16 %v707
    %v1236 = vunpack.c.h.b16 %v707
    %v1237 = vunpack.c.l.b16 %v708
    %v1238 = vunpack.c.h.b16 %v708
    %v1239 = vunpack.c.l.b16 %v709
    %v1240 = vunpack.c.h.b16 %v709
    %v1241 = vunpack.c.l.b16 %v710
    %v1242 = vunpack.c.h.b16 %v710
    %v1243 = vunpack.c.l.b16 %v711
    %v1244 = vunpack.c.h.b16 %v711
    %v1245 = vunpack.c.l.b16 %v712
    %v1246 = vunpack.c.h.b16 %v712
    %v1247 = vunpack.c.l.b16 %v713
    %v1248 = vunpack.c.h.b16 %v713
    %v1249 = vunpack.c.l.b16 %v714
    %v1250 = vunpack.c.h.b16 %v714
    %v1251 = vunpack.c.l.b16 %v715
    %v1252 = vunpack.c.h.b16 %v715
    %v1253 = vunpack.c.l.b16 %v716
    %v1254 = vunpack.c.h.b16 %v716
    %v1255 = vunpack.c.l.b16 %v717
    %v1256 = vunpack.c.h.b16 %v717
    %v1257 = vunpack.c.l.b16 %v718
    %v1258 = vunpack.c.h.b16 %v718
    %v1259 = vunpack.c.l.b16 %v719
    %v1260 = vunpack.c.h.b16 %v719
    %v1261 = vunpack.c.l.b16 %v720
    %v1262 = vunpack.c.h.b16 %v720
    %v1263 = vunpack.c.l.b16 %v721
    %v1264 = vunpack.c.h.b16 %v721
    %v1265 = vunpack.c.l.b16 %v722
    %v1266 = vunpack.c.h.b16 %v722
    %v1267 = vunpack.c.l.b16 %v723
    %v1268 = vunpack.c.h.b16 %v723
    %v1269 = vunpack.c.l.b16 %v724
    %v1270 = vunpack.c.h.b16 %v724
    %v1271 = vunpack.c.l.b16 %v725
    %v1272 = vunpack.c.h.b16 %v725
    %v1273 = vunpack.c.l.b16 %v726
    %v1274 = vunpack.c.h.b16 %v726
    %v1275 = vunpack.c.l.b16 %v727
    %v1276 = vunpack.c.h.b16 %v727
    %v1277 = vunpack.c.l.b16 %v728
    %v1278 = vunpack.c.h.b16 %v728
    %v1279 = vunpack.c.l.b16 %v729
    %v1280 = vunpack.c.h.b16 %v729
    %v1281 = vunpack.c.l.b16 %v730
    %v1282 = vunpack.c.h.b16 %v730
    %v1283 = vunpack.c.l.b16 %v731
    %v1284 = vunpack.c.h.b16 %v731
    %v1285 = vunpack.c.l.b16 %v732
    %v1286 = vunpack.c.h.b16 %v732
    %v1287 = vunpack.c.l.b16 %v733
    %v1288 = vunpack.c.h.b16 %v733
    %v1289 = vunpack.c.l.b16 %v734
    %v1290 = vunpack.c.h.b16 %v734
    %v1291 = vunpack.c.l.b16 %v735
    %v1292 = vunpack.c.h.b16 %v735
    %v1293 = vunpack.c.l.b16 %v736
    %v1294 = vunpack.c.h.b16 %v736
    %v1295 = vunpack.c.l.b16 %v737
    %v1296 = vunpack.c.h.b16 %v737
    %v1297 = vunpack.c.l.b16 %v738
    %v1298 = vunpack.c.h.b16 %v738
    %v1299 = vunpack.c.l.b16 %v739
    %v1300 = vunpack.c.h.b16 %v739
    %v1301 = vunpack.c.l.b16 %v740
    %v1302 = vunpack.c.h.b16 %v740
    %v1303 = vunpack.c.l.b16 %v741
    %v1304 = vunpack.c.h.b16 %v741
    %v1305 = vunpack.c.l.b16 %v742
    %v1306 = vunpack.c.h.b16 %v742
    %v1307 = vunpack.c.l.b16 %v743
    %v1308 = vunpack.c.h.b16 %v743
    %v1309 = vunpack.c.l.b16 %v744
    %v1310 = vunpack.c.h.b16 %v744
    %v1311 = vunpack.c.l.b16 %v745
    %v1312 = vunpack.c.h.b16 %v745
    %v1313 = vunpack.c.l.b16 %v746
    %v1314 = vunpack.c.h.b16 %v746
    %v1315 = vunpack.c.l.b16 %v747
    %v1316 = vunpack.c.h.b16 %v747
    %v1317 = vunpack.c.l.b16 %v748
    %v1318 = vunpack.c.h.b16 %v748
    %v1319 = vunpack.c.l.b16 %v749
    %v1320 = vunpack.c.h.b16 %v749
    %v1321 = vunpack.c.l.b16 %v750
    %v1322 = vunpack.c.h.b16 %v750
    %v1323 = vunpack.c.l.b16 %v751
    %v1324 = vunpack.c.h.b16 %v751
    %v1325 = vunpack.c.l.b16 %v752
    %v1326 = vunpack.c.h.b16 %v752
    %v1327 = vunpack.c.l.b16 %v753
    %v1328 = vunpack.c.h.b16 %v753
    %v1329 = vunpack.c.l.b16 %v754
    %v1330 = vunpack.c.h.b16 %v754
    %v1331 = vunpack.c.l.b16 %v755
    %v1332 = vunpack.c.h.b16 %v755
    %v1333 = vunpack.c.l.b16 %v756
    %v1334 = vunpack.c.h.b16 %v756
    %v1335 = vunpack.c.l.b16 %v757
    %v1336 = vunpack.c.h.b16 %v757
    %v1337 = vunpack.c.l.b16 %v758
    %v1338 = vunpack.c.h.b16 %v758
    %v1339 = vunpack.c.l.b16 %v759
    %v1340 = vunpack.c.h.b16 %v759
    %v1341 = vunpack.c.l.b16 %v760
    %v1342 = vunpack.c.h.b16 %v760
    %v1343 = vunpack.c.l.b16 %v761
    %v1344 = vunpack.c.h.b16 %v761
    %v1345 = vunpack.c.l.b16 %v762
    %v1346 = vunpack.c.h.b16 %v762
    %v1347 = vunpack.c.l.b16 %v763
    %v1348 = vunpack.c.h.b16 %v763
    %v1349 = vunpack.c.l.b16 %v764
    %v1350 = vunpack.c.h.b16 %v764
    %v1351 = vunpack.c.l.b16 %v765
    %v1352 = vunpack.c.h.b16 %v765
    %v1353 = vunpack.c.l.b16 %v766
    %v1354 = vunpack.c.h.b16 %v766
    %v1355 = vunpack.c.l.b16 %v767
    %v1356 = vunpack.c.h.b16 %v767
    %v1357 = vunpack.c.l.b16 %v768
    %v1358 = vunpack.c.h.b16 %v768
    %v1359 = vunpack.c.l.b16 %v769
    %v1360 = vunpack.c.h.b16 %v769
    %v1361 = vunpack.c.l.b16 %v770
    %v1362 = vunpack.c.h.b16 %v770
    %v1363 = vunpack.c.l.b16 %v771
    %v1364 = vunpack.c.h.b16 %v771
    %v1365 = vunpack.c.l.b16 %v772
    %v1366 = vunpack.c.h.b16 %v772
    %v1367 = vunpack.c.l.b16 %v773
    %v1368 = vunpack.c.h.b16 %v773
    %v1369 = vunpack.c.l.b16 %v774
    %v1370 = vunpack.c.h.b16 %v774
    %v1371 = vunpack.c.l.b16 %v775
    %v1372 = vunpack.c.h.b16 %v775
    %v1373 = vunpack.c.l.b16 %v776
    %v1374 = vunpack.c.h.b16 %v776
    %v1375 = vunpack.c.l.b16 %v777
    %v1376 = vunpack.c.h.b16 %v777
    %v1377 = vunpack.c.l.b16 %v778
    %v1378 = vunpack.c.h.b16 %v778
    %v1379 = vunpack.c.l.b16 %v779
    %v1380 = vunpack.c.h.b16 %v779
    %v1381 = vunpack.c.l.b16 %v780
    %v1382 = vunpack.c.h.b16 %v780
    %v1383 = vunpack.c.l.b16 %v781
    %v1384 = vunpack.c.h.b16 %v781
    %v1385 = vunpack.c.l.b16 %v782
    %v1386 = vunpack.c.h.b16 %v782
    %v1387 = vunpack.c.l.b16 %v783
    %v1388 = vunpack.c.h.b16 %v783
    %v1389 = vunpack.c.l.b16 %v784
    %v1390 = vunpack.c.h.b16 %v784
    %v1391 = vunpack.c.l.b16 %v785
    %v1392 = vunpack.c.h.b16 %v785
    %v1393 = vunpack.c.l.b16 %v786
    %v1394 = vunpack.c.h.b16 %v786
    %v1395 = vunpack.c.l.b16 %v787
    %v1396 = vunpack.c.h.b16 %v787
    %v1397 = vunpack.c.l.b16 %v788
    %v1398 = vunpack.c.h.b16 %v788
    %v1399 = vunpack.c.l.b16 %v789
    %v1400 = vunpack.c.h.b16 %v789
    %v1401 = vunpack.c.l.b16 %v790
    %v1402 = vunpack.c.h.b16 %v790
    %v1403 = vunpack.c.l.b16 %v791
    %v1404 = vunpack.c.h.b16 %v791
    %v1405 = vunpack.c.l.b16 %v792
    %v1406 = vunpack.c.h.b16 %v792
    %v1407 = vunpack.c.l.b16 %v793
    %v1408 = vunpack.c.h.b16 %v793
    %v1409 = vunpack.c.l.b16 %v794
    %v1410 = vunpack.c.h.b16 %v794
    %v1411 = vunpack.c.l.b16 %v795
    %v1412 = vunpack.c.h.b16 %v795
    %v1413 = vunpack.c.l.b16 %v796
    %v1414 = vunpack.c.h.b16 %v796
    %v1415 = vunpack.c.l.b16 %v797
    %v1416 = vunpack.c.h.b16 %v797
    %v1417 = vunpack.c.l.b16 %v798
    %v1418 = vunpack.c.h.b16 %v798
    %v1419 = vunpack.c.l.b16 %v799
    %v1420 = vunpack.c.h.b16 %v799
    %v1421 = vunpack.c.l.b16 %v800
    %v1422 = vunpack.c.h.b16 %v800
    %v1423 = vunpack.c.l.b16 %v801
    %v1424 = vunpack.c.h.b16 %v801
    %v1425 = vunpack.c.l.b16 %v802
    %v1426 = vunpack.c.h.b16 %v802
    %v1427 = vunpack.c.l.b16 %v803
    %v1428 = vunpack.c.h.b16 %v803
    %v1429 = vunpack.c.l.b16 %v804
    %v1430 = vunpack.c.h.b16 %v804
    %v1431 = vunpack.c.l.b16 %v805
    %v1432 = vunpack.c.h.b16 %v805
    %v1433 = vunpack.c.l.b16 %v806
    %v1434 = vunpack.c.h.b16 %v806
    %v1435 = vunpack.c.l.b16 %v807
    %v1436 = vunpack.c.h.b16 %v807
    %v1437 = vunpack.c.l.b16 %v808
    %v1438 = vunpack.c.h.b16 %v808
    %v1439 = vunpack.c.l.b16 %v809
    %v1440 = vunpack.c.h.b16 %v809
    %v1441 = vunpack.c.l.b16 %v810
    %v1442 = vunpack.c.h.b16 %v810
    %v1443 = vunpack.c.l.b16 %v811
    %v1444 = vunpack.c.h.b16 %v811
    %v1445 = vunpack.c.l.b16 %v812
    %v1446 = vunpack.c.h.b16 %v812
    %v1447 = vunpack.c.l.b16 %v813
    %v1448 = vunpack.c.h.b16 %v813
    %v1449 = vunpack.c.l.b16 %v814
    %v1450 = vunpack.c.h.b16 %v814
    %v1451 = vunpack.c.l.b16 %v815
    %v1452 = vunpack.c.h.b16 %v815
    %v1453 = vunpack.c.l.b16 %v816
    %v1454 = vunpack.c.h.b16 %v816
    %v1455 = vunpack.c.l.b16 %v817
    %v1456 = vunpack.c.h.b16 %v817
    %v1457 = vunpack.c.l.b16 %v818
    %v1458 = vunpack.c.h.b16 %v818
    %v1459 = vunpack.c.l.b16 %v819
    %v1460 = vunpack.c.h.b16 %v819
    %v1461 = vunpack.c.l.b16 %v820
    %v1462 = vunpack.c.h.b16 %v820
    %v1463 = vunpack.c.l.b16 %v821
    %v1464 = vunpack.c.h.b16 %v821
    %v1465 = vpack.c.b16 %v1217, %v1209
    %v1466 = vpack.c.b16 %v1218, %v1210
    %v1467 = vpack.c.b16 %v1219, %v1211
    %v1468 = vpack.c.b16 %v1220, %v1212
    %v1469 = vpack.c.b16 %v1221, %v1213
    %v1470 = vpack.c.b16 %v1222, %v1214
    %v1471 = vpack.c.b16 %v1223, %v1215
    %v1472 = vpack.c.b16 %v1224, %v1216
    %v1473 = vpack.c.b16 %v1233, %v1225
    %v1474 = vpack.c.b16 %v1234, %v1226
    %v1475 = vpack.c.b16 %v1235, %v1227
    %v1476 = vpack.c.b16 %v1236, %v1228
    %v1477 = vpack.c.b16 %v1237, %v1229
    %v1478 = vpack.c.b16 %v1238, %v1230
    %v1479 = vpack.c.b16 %v1239, %v1231
    %v1480 = vpack.c.b16 %v1240, %v1232
    %v1481 = vpack.c.b16 %v1249, %v1241
    %v1482 = vpack.c.b16 %v1250, %v1242
    %v1483 = vpack.c.b16 %v1251, %v1243
    %v1484 = vpack.c.b16 %v1252, %v1244
    %v1485 = vpack.c.b16 %v1253, %v1245
    %v1486 = vpack.c.b16 %v1254, %v1246
    %v1487 = vpack.c.b16 %v1255, %v1247
    %v1488 = vpack.c.b16 %v1256, %v1248
    %v1489 = vpack.c.b16 %v1265, %v1257
    %v1490 = vpack.c.b16 %v1266, %v1258
    %v1491 = vpack.c.b16 %v1267, %v1259
    %v1492 = vpack.c.b16 %v1268, %v1260
    %v1493 = vpack.c.b16 %v1269, %v1261
    %v1494 = vpack.c.b16 %v1270, %v1262
    %v1495 = vpack.c.b16 %v1271, %v1263
    %v1496 = vpack.c.b16 %v1272, %v1264
    %v1497 = vpack.c.b16 %v1281, %v1273
    %v1498 = vpack.c.b16 %v1282, %v1274
    %v1499 = vpack.c.b16 %v1283, %v1275
    %v1500 = vpack.c.b16 %v1284, %v1276
    %v1501 = vpack.c.b16 %v1285, %v1277
    %v1502 = vpack.c.b16 %v1286, %v1278
    %v1503 = vpack.c.b16 %v1287, %v1279
    %v1504 = vpack.c.b16 %v1288, %v1280
    %v1505 = vpack.c.b16 %v1297, %v1289
    %v1506 = vpack.c.b16 %v1298, %v1290
    %v1507 = vpack.c.b16 %v1299, %v1291
    %v1508 = vpack.c.b16 %v1300, %v1292
    %v1509 = vpack.c.b16 %v1301, %v1293
    %v1510 = vpack.c.b16 %v1302, %v1294
    %v1511 = vpack.c.b16 %v1303, %v1295
    %v1512 = vpack.c.b16 %v1304, %v1296
    %v1513 = vpack.c.b16 %v1313, %v1305
    %v1514 = vpack.c.b16 %v1314, %v1306
    %v1515 = vpack.c.b16 %v1315, %v1307
    %v1516 = vpack.c.b16 %v1316, %v1308
    %v1517 = vpack.c.b16 %v1317, %v1309
    %v1518 = vpack.c.b16 %v1318, %v1310
    %v1519 = vpack.c.b16 %v1319, %v1311
    %v1520 = vpack.c.b16 %v1320, %v1312
    %v1521 = vpack.c.b16 %v1329, %v1321
    %v1522 = vpack.c.b16 %v1330, %v1322
    %v1523 = vpack.c.b16 %v1331, %v1323
    %v1524 = vpack.c.b16 %v1332, %v1324
    %v1525 = vpack.c.b16 %v1333, %v1325
    %v1526 = vpack.c.b16 %v1334, %v1326
    %v1527 = vpack.c.b16 %v1335, %v1327
    %v1528 = vpack.c.b16 %v1336, %v1328
    %v1529 = vpack.c.b16 %v1345, %v1337
    %v1530 = vpack.c.b16 %v1346, %v1338
    %v1531 = vpack.c.b16 %v1347, %v1339
    %v1532 = vpack.c.b16 %v1348, %v1340
    %v1533 = vpack.c.b16 %v1349, %v1341
    %v1534 = vpack.c.b16 %v1350, %v1342
    %v1535 = vpack.c.b16 %v1351, %v1343
    %v1536 = vpack.c.b16 %v1352, %v1344
    %v1537 = vpack.c.b16 %v1361, %v1353
    %v1538 = vpack.c.b16 %v1362, %v1354
    %v1539 = vpack.c.b16 %v1363, %v1355
    %v1540 = vpack.c.b16 %v1364, %v1356
    %v1541 = vpack.c.b16 %v1365, %v1357
    %v1542 = vpack.c.b16 %v1366, %v1358
    %v1543 = vpack.c.b16 %v1367, %v1359
    %v1544 = vpack.c.b16 %v1368, %v1360
    %v1545 = vpack.c.b16 %v1377, %v1369
    %v1546 = vpack.c.b16 %v1378, %v1370
    %v1547 = vpack.c.b16 %v1379, %v1371
    %v1548 = vpack.c.b16 %v1380, %v1372
    %v1549 = vpack.c.b16 %v1381, %v1373
    %v1550 = vpack.c.b16 %v1382, %v1374
    %v1551 = vpack.c.b16 %v1383, %v1375
    %v1552 = vpack.c.b16 %v1384, %v1376
    %v1553 = vpack.c.b16 %v1393, %v1385
    %v1554 = vpack.c.b16 %v1394, %v1386
    %v1555 = vpack.c.b16 %v1395, %v1387
    %v1556 = vpack.c.b16 %v1396, %v1388
    %v1557 = vpack.c.b16 %v1397, %v1389
    %v1558 = vpack.c.b16 %v1398, %v1390
    %v1559 = vpack.c.b16 %v1399, %v1391
    %v1560 = vpack.c.b16 %v1400, %v1392
    %v1561 = vpack.c.b16 %v1409, %v1401
    %v1562 = vpack.c.b16 %v1410, %v1402
    %v1563 = vpack.c.b16 %v1411, %v1403
    %v1564 = vpack.c.b16 %v1412, %v1404
    %v1565 = vpack.c.b16 %v1413, %v1405
    %v1566 = vpack.c.b16 %v1414, %v1406
    %v1567 = vpack.c.b16 %v1415, %v1407
    %v1568 = vpack.c.b16 %v1416, %v1408
    %v1569 = vpack.c.b16 %v1425, %v1417
    %v1570 = vpack.c.b16 %v1426, %v1418
    %v1571 = vpack.c.b16 %v1427, %v1419
    %v1572 = vpack.c.b16 %v1428, %v1420
    %v1573 = vpack.c.b16 %v1429, %v1421
    %v1574 = vpack.c.b16 %v1430, %v1422
    %v1575 = vpack.c.b16 %v1431, %v1423
    %v1576 = vpack.c.b16 %v1432, %v1424
    %v1577 = vpack.c.b16 %v1441, %v1433
    %v1578 = vpack.c.b16 %v1442, %v1434
    %v1579 = vpack.c.b16 %v1443, %v1435
    %v1580 = vpack.c.b16 %v1444, %v1436
    %v1581 = vpack.c.b16 %v1445, %v1437
    %v1582 = vpack.c.b16 %v1446, %v1438
    %v1583 = vpack.c.b16 %v1447, %v1439
    %v1584 = vpack.c.b16 %v1448, %v1440
    %v1585 = vpack.c.b16 %v1457, %v1449
    %v1586 = vpack.c.b16 %v1458, %v1450
    %v1587 = vpack.c.b16 %v1459, %v1451
    %v1588 = vpack.c.b16 %v1460, %v1452
    %v1589 = vpack.c.b16 %v1461, %v1453
    %v1590 = vpack.c.b16 %v1462, %v1454
    %v1591 = vpack.c.b16 %v1463, %v1455
    %v1592 = vpack.c.b16 %v1464, %v1456
    %1721 = vmatprep.subr.bf16.mxu0 %v1466
    %1722 = vmatpush1.bf16.msra.mxu0 %v1465
    %1723 = vmatprep.subr.bf16.mxu0 %v1474
    %1724 = vmatpush1.bf16.msra.mxu0 %v1473
    %1725 = vmatprep.subr.bf16.mxu0 %v1482
    %1726 = vmatpush1.bf16.msra.mxu0 %v1481
    %1727 = vmatprep.subr.bf16.mxu0 %v1490
    %1728 = vmatpush1.bf16.msra.mxu0 %v1489
    %1729 = vmatprep.subr.bf16.mxu0 %v1498
    %1730 = vmatpush1.bf16.msra.mxu0 %v1497
    %1731 = vmatprep.subr.bf16.mxu0 %v1506
    %1732 = vmatpush1.bf16.msra.mxu0 %v1505
    %1733 = vmatprep.subr.bf16.mxu0 %v1514
    %1734 = vmatpush1.bf16.msra.mxu0 %v1513
    %1735 = vmatprep.subr.bf16.mxu0 %v1522
    %1736 = vmatpush1.bf16.msra.mxu0 %v1521
    %1737 = vmatprep.subr.bf16.mxu0 %v1530
    %1738 = vmatpush1.bf16.msra.mxu0 %v1529
    %1739 = vmatprep.subr.bf16.mxu0 %v1538
    %1740 = vmatpush1.bf16.msra.mxu0 %v1537
    %1741 = vmatprep.subr.bf16.mxu0 %v1546
    %1742 = vmatpush1.bf16.msra.mxu0 %v1545
    %1743 = vmatprep.subr.bf16.mxu0 %v1554
    %1744 = vmatpush1.bf16.msra.mxu0 %v1553
    %1745 = vmatprep.subr.bf16.mxu0 %v1562
    %1746 = vmatpush1.bf16.msra.mxu0 %v1561
    %1747 = vmatprep.subr.bf16.mxu0 %v1570
    %1748 = vmatpush1.bf16.msra.mxu0 %v1569
    %1749 = vmatprep.subr.bf16.mxu0 %v1578
    %1750 = vmatpush1.bf16.msra.mxu0 %v1577
    %1751 = vmatprep.subr.bf16.mxu0 %v1586
    %1752 = vmatpush1.bf16.msra.mxu0 %v1585
    %1753 = vmatprep.mubr.bf16.mxu0 0
    %1754 = vmatmul.mubr.bf16.gmra.mrb[0].mxu0 0
    %v1755 = vpop.f32.mrb[0].mxu0
    %v1756 = vadd.f32 0.0, %v1755
    %v1757 = vpop.f32.mrb[0].mxu0
    %v1758 = vadd.f32 0.0, %v1757
    %v1759 = vpop.f32.mrb[0].mxu0
    %v1760 = vpop.f32.mrb[0].mxu0
    %1761 = vdwg.mxu0
    %1762 = vmatprep.subr.bf16.mxu0 %v1468
    %1763 = vmatpush1.bf16.msra.mxu0 %v1467
    %1764 = vmatprep.subr.bf16.mxu0 %v1476
    %1765 = vmatpush1.bf16.msra.mxu0 %v1475
    %1766 = vmatprep.subr.bf16.mxu0 %v1484
    %1767 = vmatpush1.bf16.msra.mxu0 %v1483
    %1768 = vmatprep.subr.bf16.mxu0 %v1492
    %1769 = vmatpush1.bf16.msra.mxu0 %v1491
    %1770 = vmatprep.subr.bf16.mxu0 %v1500
    %1771 = vmatpush1.bf16.msra.mxu0 %v1499
    %1772 = vmatprep.subr.bf16.mxu0 %v1508
    %1773 = vmatpush1.bf16.msra.mxu0 %v1507
    %1774 = vmatprep.subr.bf16.mxu0 %v1516
    %1775 = vmatpush1.bf16.msra.mxu0 %v1515
    %1776 = vmatprep.subr.bf16.mxu0 %v1524
    %1777 = vmatpush1.bf16.msra.mxu0 %v1523
    %1778 = vmatprep.subr.bf16.mxu0 %v1532
    %1779 = vmatpush1.bf16.msra.mxu0 %v1531
    %1780 = vmatprep.subr.bf16.mxu0 %v1540
    %1781 = vmatpush1.bf16.msra.mxu0 %v1539
    %1782 = vmatprep.subr.bf16.mxu0 %v1548
    %1783 = vmatpush1.bf16.msra.mxu0 %v1547
    %1784 = vmatprep.subr.bf16.mxu0 %v1556
    %1785 = vmatpush1.bf16.msra.mxu0 %v1555
    %1786 = vmatprep.subr.bf16.mxu0 %v1564
    %1787 = vmatpush1.bf16.msra.mxu0 %v1563
    %1788 = vmatprep.subr.bf16.mxu0 %v1572
    %1789 = vmatpush1.bf16.msra.mxu0 %v1571
    %1790 = vmatprep.subr.bf16.mxu0 %v1580
    %1791 = vmatpush1.bf16.msra.mxu0 %v1579
    %1792 = vmatprep.subr.bf16.mxu0 %v1588
    %1793 = vmatpush1.bf16.msra.mxu0 %v1587
    %1794 = vmatprep.mubr.bf16.mxu0 0
    %1795 = vmatmul.mubr.bf16.gmra.mrb[0].mxu0 0
    %v1796 = vpop.f32.mrb[0].mxu0
    %v1797 = vadd.f32 0.0, %v1796
    %v1798 = vpop.f32.mrb[0].mxu0
    %v1799 = vadd.f32 0.0, %v1798
    %v1800 = vpop.f32.mrb[0].mxu0
    %v1801 = vpop.f32.mrb[0].mxu0
    %1802 = vdwg.mxu0
    %1803 = vmatprep.subr.bf16.mxu0 %v1470
    %1804 = vmatpush1.bf16.msra.mxu0 %v1469
    %1805 = vmatprep.subr.bf16.mxu0 %v1478
    %1806 = vmatpush1.bf16.msra.mxu0 %v1477
    %1807 = vmatprep.subr.bf16.mxu0 %v1486
    %1808 = vmatpush1.bf16.msra.mxu0 %v1485
    %1809 = vmatprep.subr.bf16.mxu0 %v1494
    %1810 = vmatpush1.bf16.msra.mxu0 %v1493
    %1811 = vmatprep.subr.bf16.mxu0 %v1502
    %1812 = vmatpush1.bf16.msra.mxu0 %v1501
    %1813 = vmatprep.subr.bf16.mxu0 %v1510
    %1814 = vmatpush1.bf16.msra.mxu0 %v1509
    %1815 = vmatprep.subr.bf16.mxu0 %v1518
    %1816 = vmatpush1.bf16.msra.mxu0 %v1517
    %1817 = vmatprep.subr.bf16.mxu0 %v1526
    %1818 = vmatpush1.bf16.msra.mxu0 %v1525
    %1819 = vmatprep.subr.bf16.mxu0 %v1534
    %1820 = vmatpush1.bf16.msra.mxu0 %v1533
    %1821 = vmatprep.subr.bf16.mxu0 %v1542
    %1822 = vmatpush1.bf16.msra.mxu0 %v1541
    %1823 = vmatprep.subr.bf16.mxu0 %v1550
    %1824 = vmatpush1.bf16.msra.mxu0 %v1549
    %1825 = vmatprep.subr.bf16.mxu0 %v1558
    %1826 = vmatpush1.bf16.msra.mxu0 %v1557
    %1827 = vmatprep.subr.bf16.mxu0 %v1566
    %1828 = vmatpush1.bf16.msra.mxu0 %v1565
    %1829 = vmatprep.subr.bf16.mxu0 %v1574
    %1830 = vmatpush1.bf16.msra.mxu0 %v1573
    %1831 = vmatprep.subr.bf16.mxu0 %v1582
    %1832 = vmatpush1.bf16.msra.mxu0 %v1581
    %1833 = vmatprep.subr.bf16.mxu0 %v1590
    %1834 = vmatpush1.bf16.msra.mxu0 %v1589
    %1835 = vmatprep.mubr.bf16.mxu0 0
    %1836 = vmatmul.mubr.bf16.gmra.mrb[0].mxu0 0
    %v1837 = vpop.f32.mrb[0].mxu0
    %v1838 = vadd.f32 0.0, %v1837
    %v1839 = vpop.f32.mrb[0].mxu0
    %v1840 = vadd.f32 0.0, %v1839
    %v1841 = vpop.f32.mrb[0].mxu0
    %v1842 = vpop.f32.mrb[0].mxu0
    %1843 = vdwg.mxu0
    %1844 = vmatprep.subr.bf16.mxu0 %v1472
    %1845 = vmatpush1.bf16.msra.mxu0 %v1471
    %1846 = vmatprep.subr.bf16.mxu0 %v1480
    %1847 = vmatpush1.bf16.msra.mxu0 %v1479
    %1848 = vmatprep.subr.bf16.mxu0 %v1488
    %1849 = vmatpush1.bf16.msra.mxu0 %v1487
    %1850 = vmatprep.subr.bf16.mxu0 %v1496
    %1851 = vmatpush1.bf16.msra.mxu0 %v1495
    %1852 = vmatprep.subr.bf16.mxu0 %v1504
    %1853 = vmatpush1.bf16.msra.mxu0 %v1503
    %1854 = vmatprep.subr.bf16.mxu0 %v1512
    %1855 = vmatpush1.bf16.msra.mxu0 %v1511
    %1856 = vmatprep.subr.bf16.mxu0 %v1520
    %1857 = vmatpush1.bf16.msra.mxu0 %v1519
    %1858 = vmatprep.subr.bf16.mxu0 %v1528
    %1859 = vmatpush1.bf16.msra.mxu0 %v1527
    %1860 = vmatprep.subr.bf16.mxu0 %v1536
    %1861 = vmatpush1.bf16.msra.mxu0 %v1535
    %1862 = vmatprep.subr.bf16.mxu0 %v1544
    %1863 = vmatpush1.bf16.msra.mxu0 %v1543
    %1864 = vmatprep.subr.bf16.mxu0 %v1552
    %1865 = vmatpush1.bf16.msra.mxu0 %v1551
    %1866 = vmatprep.subr.bf16.mxu0 %v1560
    %1867 = vmatpush1.bf16.msra.mxu0 %v1559
    %1868 = vmatprep.subr.bf16.mxu0 %v1568
    %1869 = vmatpush1.bf16.msra.mxu0 %v1567
    %1870 = vmatprep.subr.bf16.mxu0 %v1576
    %1871 = vmatpush1.bf16.msra.mxu0 %v1575
    %1872 = vmatprep.subr.bf16.mxu0 %v1584
    %1873 = vmatpush1.bf16.msra.mxu0 %v1583
    %1874 = vmatprep.subr.bf16.mxu0 %v1592
    %1875 = vmatpush1.bf16.msra.mxu0 %v1591
    %1876 = vmatprep.mubr.bf16.mxu0 0
    %1877 = vmatmul.mubr.bf16.gmra.mrb[0].mxu0 0
    %v1878 = vpop.f32.mrb[0].mxu0
    %v1879 = vadd.f32 0.0, %v1878
    %v1880 = vpop.f32.mrb[0].mxu0
    %v1881 = vadd.f32 0.0, %v1880
    %v1882 = vpop.f32.mrb[0].mxu0
    %v1883 = vpop.f32.mrb[0].mxu0
    %1884 = vdwg.mxu0
    %v1893 = vcombine.low %v1756, %v1758
    %v1894 = vcombine.low %v1797, %v1799
    %v1896 = vunpack.c.l.s4 1983009808
    %v1897 = vunpack.c.0.s8 %v1896
    %v1898 = vlaneseq
    %v1899 = vshrl.u32 %v1898, 7
    %v1900 = vsub.s32 %v1897, %v1899
    %v1901 = vrot.slane %v1893, %v1900
    %v1903 = vunpack.c.l.s4 1983009808
    %v1904 = vunpack.c.0.s8 %v1903
    %v1905 = vlaneseq
    %v1906 = vshrl.u32 %v1905, 7
    %v1907 = vsub.s32 %v1904, %v1906
    %v1908 = vrot.slane %v1894, %v1907
    %v1909 = vcombine.low %v1901, %v1908
    %v1910 = vcombine.low %v1838, %v1840
    %v1911 = vcombine.low %v1879, %v1881
    %v1913 = vunpack.c.l.s4 1983009808
    %v1914 = vunpack.c.0.s8 %v1913
    %v1915 = vlaneseq
    %v1916 = vshrl.u32 %v1915, 7
    %v1917 = vsub.s32 %v1914, %v1916
    %v1918 = vrot.slane %v1910, %v1917
    %v1920 = vunpack.c.l.s4 1983009808
    %v1921 = vunpack.c.0.s8 %v1920
    %v1922 = vlaneseq
    %v1923 = vshrl.u32 %v1922, 7
    %v1924 = vsub.s32 %v1921, %v1923
    %v1925 = vrot.slane %v1911, %v1924
    %v1926 = vcombine.low %v1918, %v1925
    %v1929 = vadd.f32 %v1079, %v1909
    %v1930 = vadd.f32 %v1080, %v1926
    %v1931 = vxor.u32 %v1929, 2147483648
    %v1932 = vmul.f32 %v1931, 1.442695
    %v1933 = vpow.pop %v1932
    %v1934 = vadd.f32 %v1933, 1.0
    %v1935 = vrcp.pop %v1934
    %v1936 = vmul.f32 1.0, %v1935
    %v1938 = vrot.slane %v1929, 4
    %v1940 = vxor.u32 %v1938, 2147483648
    %v1941 = vmul.f32 %v1940, 1.442695
    %v1942 = vpow.pop %v1941
    %v1943 = vadd.f32 %v1942, 1.0
    %v1944 = vrcp.pop %v1943
    %v1945 = vmul.f32 1.0, %v1944
    %v1946 = vtanh.pop %v1930
    %v1948 = vrot.slane %v1930, 4
    %v1950 = vxor.u32 %v1948, 2147483648
    %v1951 = vmul.f32 %v1950, 1.442695
    %v1952 = vpow.pop %v1951
    %v1953 = vadd.f32 %v1952, 1.0
    %v1954 = vrcp.pop %v1953
    %v1955 = vmul.f32 1.0, %v1954
    %v1956 = vmul.f32 %v1945, 0.0
    %v1957 = vmul.f32 %v1936, %v1946
    %v1958 = vadd.f32 %v1956, %v1957
    %v1959 = vtanh.pop %v1958
    %v1960 = vmul.f32 %v1955, %v1959
    %v1963 = vunpack.c.l.s4 1983009808
    %v1964 = vunpack.c.0.s8 %v1963
    %v1965 = vlaneseq
    %v1966 = vshrl.u32 %v1965, 7
    %v1967 = vsub.s32 %v1964, %v1966
    %v1968 = vrot.slane %v1960, %v1967
    %v1969 = vcombine.high %v1968, %v1968
    %v1972 = vpack.c.bf16 %v1968, %v1968
    %v1973 = vpack.c.bf16 %v1969, %v1969
    %v1975 = vlaneseq
    %v1976 = vshrl.u32 %v1975, 7
    %v1977 = vsub.s32 0, %v1976
    %v1978 = vrot.slane %v1078, %v1977
    %v1979 = vlaneseq
    %v1980 = vshrl.u32 %v1979, 7
    %v1981 = vsub.s32 1, %v1980
    %v1982 = vrot.slane %v1078, %v1981
    %v1983 = vlaneseq
    %v1984 = vshrl.u32 %v1983, 7
    %v1985 = vsub.s32 2, %v1984
    %v1986 = vrot.slane %v1078, %v1985
    %v1987 = vlaneseq
    %v1988 = vshrl.u32 %v1987, 7
    %v1989 = vsub.s32 3, %v1988
    %v1990 = vrot.slane %v1078, %v1989
    %v1991 = vlaneseq
    %v1992 = vshrl.u32 %v1991, 7
    %v1993 = vsub.s32 4, %v1992
    %v1994 = vrot.slane %v1078, %v1993
    %v1995 = vlaneseq
    %v1996 = vshrl.u32 %v1995, 7
    %v1997 = vsub.s32 5, %v1996
    %v1998 = vrot.slane %v1078, %v1997
    %v1999 = vlaneseq
    %v2000 = vshrl.u32 %v1999, 7
    %v2001 = vsub.s32 6, %v2000
    %v2002 = vrot.slane %v1078, %v2001
    %v2003 = vlaneseq
    %v2004 = vshrl.u32 %v2003, 7
    %v2005 = vsub.s32 7, %v2004
    %v2006 = vrot.slane %v1078, %v2005
    %v2271 = vunpack.c.l.b16 %v822
    %v2272 = vunpack.c.h.b16 %v822
    %v2273 = vunpack.c.l.b16 %v823
    %v2274 = vunpack.c.h.b16 %v823
    %v2275 = vunpack.c.l.b16 %v824
    %v2276 = vunpack.c.h.b16 %v824
    %v2277 = vunpack.c.l.b16 %v825
    %v2278 = vunpack.c.h.b16 %v825
    %v2279 = vunpack.c.l.b16 %v826
    %v2280 = vunpack.c.h.b16 %v826
    %v2281 = vunpack.c.l.b16 %v827
    %v2282 = vunpack.c.h.b16 %v827
    %v2283 = vunpack.c.l.b16 %v828
    %v2284 = vunpack.c.h.b16 %v828
    %v2285 = vunpack.c.l.b16 %v829
    %v2286 = vunpack.c.h.b16 %v829
    %v2287 = vunpack.c.l.b16 %v830
    %v2288 = vunpack.c.h.b16 %v830
    %v2289 = vunpack.c.l.b16 %v831
    %v2290 = vunpack.c.h.b16 %v831
    %v2291 = vunpack.c.l.b16 %v832
    %v2292 = vunpack.c.h.b16 %v832
    %v2293 = vunpack.c.l.b16 %v833
    %v2294 = vunpack.c.h.b16 %v833
    %v2295 = vunpack.c.l.b16 %v834
    %v2296 = vunpack.c.h.b16 %v834
    %v2297 = vunpack.c.l.b16 %v835
    %v2298 = vunpack.c.h.b16 %v835
    %v2299 = vunpack.c.l.b16 %v836
    %v2300 = vunpack.c.h.b16 %v836
    %v2301 = vunpack.c.l.b16 %v837
    %v2302 = vunpack.c.h.b16 %v837
    %v2303 = vunpack.c.l.b16 %v838
    %v2304 = vunpack.c.h.b16 %v838
    %v2305 = vunpack.c.l.b16 %v839
    %v2306 = vunpack.c.h.b16 %v839
    %v2307 = vunpack.c.l.b16 %v840
    %v2308 = vunpack.c.h.b16 %v840
    %v2309 = vunpack.c.l.b16 %v841
    %v2310 = vunpack.c.h.b16 %v841
    %v2311 = vunpack.c.l.b16 %v842
    %v2312 = vunpack.c.h.b16 %v842
    %v2313 = vunpack.c.l.b16 %v843
    %v2314 = vunpack.c.h.b16 %v843
    %v2315 = vunpack.c.l.b16 %v844
    %v2316 = vunpack.c.h.b16 %v844
    %v2317 = vunpack.c.l.b16 %v845
    %v2318 = vunpack.c.h.b16 %v845
    %v2319 = vunpack.c.l.b16 %v846
    %v2320 = vunpack.c.h.b16 %v846
    %v2321 = vunpack.c.l.b16 %v847
    %v2322 = vunpack.c.h.b16 %v847
    %v2323 = vunpack.c.l.b16 %v848
    %v2324 = vunpack.c.h.b16 %v848
    %v2325 = vunpack.c.l.b16 %v849
    %v2326 = vunpack.c.h.b16 %v849
    %v2327 = vunpack.c.l.b16 %v850
    %v2328 = vunpack.c.h.b16 %v850
    %v2329 = vunpack.c.l.b16 %v851
    %v2330 = vunpack.c.h.b16 %v851
    %v2331 = vunpack.c.l.b16 %v852
    %v2332 = vunpack.c.h.b16 %v852
    %v2333 = vunpack.c.l.b16 %v853
    %v2334 = vunpack.c.h.b16 %v853
    %v2335 = vunpack.c.l.b16 %v854
    %v2336 = vunpack.c.h.b16 %v854
    %v2337 = vunpack.c.l.b16 %v855
    %v2338 = vunpack.c.h.b16 %v855
    %v2339 = vunpack.c.l.b16 %v856
    %v2340 = vunpack.c.h.b16 %v856
    %v2341 = vunpack.c.l.b16 %v857
    %v2342 = vunpack.c.h.b16 %v857
    %v2343 = vunpack.c.l.b16 %v858
    %v2344 = vunpack.c.h.b16 %v858
    %v2345 = vunpack.c.l.b16 %v859
    %v2346 = vunpack.c.h.b16 %v859
    %v2347 = vunpack.c.l.b16 %v860
    %v2348 = vunpack.c.h.b16 %v860
    %v2349 = vunpack.c.l.b16 %v861
    %v2350 = vunpack.c.h.b16 %v861
    %v2351 = vunpack.c.l.b16 %v862
    %v2352 = vunpack.c.h.b16 %v862
    %v2353 = vunpack.c.l.b16 %v863
    %v2354 = vunpack.c.h.b16 %v863
    %v2355 = vunpack.c.l.b16 %v864
    %v2356 = vunpack.c.h.b16 %v864
    %v2357 = vunpack.c.l.b16 %v865
    %v2358 = vunpack.c.h.b16 %v865
    %v2359 = vunpack.c.l.b16 %v866
    %v2360 = vunpack.c.h.b16 %v866
    %v2361 = vunpack.c.l.b16 %v867
    %v2362 = vunpack.c.h.b16 %v867
    %v2363 = vunpack.c.l.b16 %v868
    %v2364 = vunpack.c.h.b16 %v868
    %v2365 = vunpack.c.l.b16 %v869
    %v2366 = vunpack.c.h.b16 %v869
    %v2367 = vunpack.c.l.b16 %v870
    %v2368 = vunpack.c.h.b16 %v870
    %v2369 = vunpack.c.l.b16 %v871
    %v2370 = vunpack.c.h.b16 %v871
    %v2371 = vunpack.c.l.b16 %v872
    %v2372 = vunpack.c.h.b16 %v872
    %v2373 = vunpack.c.l.b16 %v873
    %v2374 = vunpack.c.h.b16 %v873
    %v2375 = vunpack.c.l.b16 %v874
    %v2376 = vunpack.c.h.b16 %v874
    %v2377 = vunpack.c.l.b16 %v875
    %v2378 = vunpack.c.h.b16 %v875
    %v2379 = vunpack.c.l.b16 %v876
    %v2380 = vunpack.c.h.b16 %v876
    %v2381 = vunpack.c.l.b16 %v877
    %v2382 = vunpack.c.h.b16 %v877
    %v2383 = vunpack.c.l.b16 %v878
    %v2384 = vunpack.c.h.b16 %v878
    %v2385 = vunpack.c.l.b16 %v879
    %v2386 = vunpack.c.h.b16 %v879
    %v2387 = vunpack.c.l.b16 %v880
    %v2388 = vunpack.c.h.b16 %v880
    %v2389 = vunpack.c.l.b16 %v881
    %v2390 = vunpack.c.h.b16 %v881
    %v2391 = vunpack.c.l.b16 %v882
    %v2392 = vunpack.c.h.b16 %v882
    %v2393 = vunpack.c.l.b16 %v883
    %v2394 = vunpack.c.h.b16 %v883
    %v2395 = vunpack.c.l.b16 %v884
    %v2396 = vunpack.c.h.b16 %v884
    %v2397 = vunpack.c.l.b16 %v885
    %v2398 = vunpack.c.h.b16 %v885
    %v2399 = vunpack.c.l.b16 %v886
    %v2400 = vunpack.c.h.b16 %v886
    %v2401 = vunpack.c.l.b16 %v887
    %v2402 = vunpack.c.h.b16 %v887
    %v2403 = vunpack.c.l.b16 %v888
    %v2404 = vunpack.c.h.b16 %v888
    %v2405 = vunpack.c.l.b16 %v889
    %v2406 = vunpack.c.h.b16 %v889
    %v2407 = vunpack.c.l.b16 %v890
    %v2408 = vunpack.c.h.b16 %v890
    %v2409 = vunpack.c.l.b16 %v891
    %v2410 = vunpack.c.h.b16 %v891
    %v2411 = vunpack.c.l.b16 %v892
    %v2412 = vunpack.c.h.b16 %v892
    %v2413 = vunpack.c.l.b16 %v893
    %v2414 = vunpack.c.h.b16 %v893
    %v2415 = vunpack.c.l.b16 %v894
    %v2416 = vunpack.c.h.b16 %v894
    %v2417 = vunpack.c.l.b16 %v895
    %v2418 = vunpack.c.h.b16 %v895
    %v2419 = vunpack.c.l.b16 %v896
    %v2420 = vunpack.c.h.b16 %v896
    %v2421 = vunpack.c.l.b16 %v897
    %v2422 = vunpack.c.h.b16 %v897
    %v2423 = vunpack.c.l.b16 %v898
    %v2424 = vunpack.c.h.b16 %v898
    %v2425 = vunpack.c.l.b16 %v899
    %v2426 = vunpack.c.h.b16 %v899
    %v2427 = vunpack.c.l.b16 %v900
    %v2428 = vunpack.c.h.b16 %v900
    %v2429 = vunpack.c.l.b16 %v901
    %v2430 = vunpack.c.h.b16 %v901
    %v2431 = vunpack.c.l.b16 %v902
    %v2432 = vunpack.c.h.b16 %v902
    %v2433 = vunpack.c.l.b16 %v903
    %v2434 = vunpack.c.h.b16 %v903
    %v2435 = vunpack.c.l.b16 %v904
    %v2436 = vunpack.c.h.b16 %v904
    %v2437 = vunpack.c.l.b16 %v905
    %v2438 = vunpack.c.h.b16 %v905
    %v2439 = vunpack.c.l.b16 %v906
    %v2440 = vunpack.c.h.b16 %v906
    %v2441 = vunpack.c.l.b16 %v907
    %v2442 = vunpack.c.h.b16 %v907
    %v2443 = vunpack.c.l.b16 %v908
    %v2444 = vunpack.c.h.b16 %v908
    %v2445 = vunpack.c.l.b16 %v909
    %v2446 = vunpack.c.h.b16 %v909
    %v2447 = vunpack.c.l.b16 %v910
    %v2448 = vunpack.c.h.b16 %v910
    %v2449 = vunpack.c.l.b16 %v911
    %v2450 = vunpack.c.h.b16 %v911
    %v2451 = vunpack.c.l.b16 %v912
    %v2452 = vunpack.c.h.b16 %v912
    %v2453 = vunpack.c.l.b16 %v913
    %v2454 = vunpack.c.h.b16 %v913
    %v2455 = vunpack.c.l.b16 %v914
    %v2456 = vunpack.c.h.b16 %v914
    %v2457 = vunpack.c.l.b16 %v915
    %v2458 = vunpack.c.h.b16 %v915
    %v2459 = vunpack.c.l.b16 %v916
    %v2460 = vunpack.c.h.b16 %v916
    %v2461 = vunpack.c.l.b16 %v917
    %v2462 = vunpack.c.h.b16 %v917
    %v2463 = vunpack.c.l.b16 %v918
    %v2464 = vunpack.c.h.b16 %v918
    %v2465 = vunpack.c.l.b16 %v919
    %v2466 = vunpack.c.h.b16 %v919
    %v2467 = vunpack.c.l.b16 %v920
    %v2468 = vunpack.c.h.b16 %v920
    %v2469 = vunpack.c.l.b16 %v921
    %v2470 = vunpack.c.h.b16 %v921
    %v2471 = vunpack.c.l.b16 %v922
    %v2472 = vunpack.c.h.b16 %v922
    %v2473 = vunpack.c.l.b16 %v923
    %v2474 = vunpack.c.h.b16 %v923
    %v2475 = vunpack.c.l.b16 %v924
    %v2476 = vunpack.c.h.b16 %v924
    %v2477 = vunpack.c.l.b16 %v925
    %v2478 = vunpack.c.h.b16 %v925
    %v2479 = vunpack.c.l.b16 %v926
    %v2480 = vunpack.c.h.b16 %v926
    %v2481 = vunpack.c.l.b16 %v927
    %v2482 = vunpack.c.h.b16 %v927
    %v2483 = vunpack.c.l.b16 %v928
    %v2484 = vunpack.c.h.b16 %v928
    %v2485 = vunpack.c.l.b16 %v929
    %v2486 = vunpack.c.h.b16 %v929
    %v2487 = vunpack.c.l.b16 %v930
    %v2488 = vunpack.c.h.b16 %v930
    %v2489 = vunpack.c.l.b16 %v931
    %v2490 = vunpack.c.h.b16 %v931
    %v2491 = vunpack.c.l.b16 %v932
    %v2492 = vunpack.c.h.b16 %v932
    %v2493 = vunpack.c.l.b16 %v933
    %v2494 = vunpack.c.h.b16 %v933
    %v2495 = vunpack.c.l.b16 %v934
    %v2496 = vunpack.c.h.b16 %v934
    %v2497 = vunpack.c.l.b16 %v935
    %v2498 = vunpack.c.h.b16 %v935
    %v2499 = vunpack.c.l.b16 %v936
    %v2500 = vunpack.c.h.b16 %v936
    %v2501 = vunpack.c.l.b16 %v937
    %v2502 = vunpack.c.h.b16 %v937
    %v2503 = vunpack.c.l.b16 %v938
    %v2504 = vunpack.c.h.b16 %v938
    %v2505 = vunpack.c.l.b16 %v939
    %v2506 = vunpack.c.h.b16 %v939
    %v2507 = vunpack.c.l.b16 %v940
    %v2508 = vunpack.c.h.b16 %v940
    %v2509 = vunpack.c.l.b16 %v941
    %v2510 = vunpack.c.h.b16 %v941
    %v2511 = vunpack.c.l.b16 %v942
    %v2512 = vunpack.c.h.b16 %v942
    %v2513 = vunpack.c.l.b16 %v943
    %v2514 = vunpack.c.h.b16 %v943
    %v2515 = vunpack.c.l.b16 %v944
    %v2516 = vunpack.c.h.b16 %v944
    %v2517 = vunpack.c.l.b16 %v945
    %v2518 = vunpack.c.h.b16 %v945
    %v2519 = vunpack.c.l.b16 %v946
    %v2520 = vunpack.c.h.b16 %v946
    %v2521 = vunpack.c.l.b16 %v947
    %v2522 = vunpack.c.h.b16 %v947
    %v2523 = vunpack.c.l.b16 %v948
    %v2524 = vunpack.c.h.b16 %v948
    %v2525 = vunpack.c.l.b16 %v949
    %v2526 = vunpack.c.h.b16 %v949
    %v2527 = vunpack.c.l.b16 %v950
    %v2528 = vunpack.c.h.b16 %v950
    %v2529 = vunpack.c.l.b16 %v951
    %v2530 = vunpack.c.h.b16 %v951
    %v2531 = vunpack.c.l.b16 %v952
    %v2532 = vunpack.c.h.b16 %v952
    %v2533 = vunpack.c.l.b16 %v953
    %v2534 = vunpack.c.h.b16 %v953
    %v2535 = vunpack.c.l.b16 %v954
    %v2536 = vunpack.c.h.b16 %v954
    %v2537 = vunpack.c.l.b16 %v955
    %v2538 = vunpack.c.h.b16 %v955
    %v2539 = vunpack.c.l.b16 %v956
    %v2540 = vunpack.c.h.b16 %v956
    %v2541 = vunpack.c.l.b16 %v957
    %v2542 = vunpack.c.h.b16 %v957
    %v2543 = vunpack.c.l.b16 %v958
    %v2544 = vunpack.c.h.b16 %v958
    %v2545 = vunpack.c.l.b16 %v959
    %v2546 = vunpack.c.h.b16 %v959
    %v2547 = vunpack.c.l.b16 %v960
    %v2548 = vunpack.c.h.b16 %v960
    %v2549 = vunpack.c.l.b16 %v961
    %v2550 = vunpack.c.h.b16 %v961
    %v2551 = vunpack.c.l.b16 %v962
    %v2552 = vunpack.c.h.b16 %v962
    %v2553 = vunpack.c.l.b16 %v963
    %v2554 = vunpack.c.h.b16 %v963
    %v2555 = vunpack.c.l.b16 %v964
    %v2556 = vunpack.c.h.b16 %v964
    %v2557 = vunpack.c.l.b16 %v965
    %v2558 = vunpack.c.h.b16 %v965
    %v2559 = vunpack.c.l.b16 %v966
    %v2560 = vunpack.c.h.b16 %v966
    %v2561 = vunpack.c.l.b16 %v967
    %v2562 = vunpack.c.h.b16 %v967
    %v2563 = vunpack.c.l.b16 %v968
    %v2564 = vunpack.c.h.b16 %v968
    %v2565 = vunpack.c.l.b16 %v969
    %v2566 = vunpack.c.h.b16 %v969
    %v2567 = vunpack.c.l.b16 %v970
    %v2568 = vunpack.c.h.b16 %v970
    %v2569 = vunpack.c.l.b16 %v971
    %v2570 = vunpack.c.h.b16 %v971
    %v2571 = vunpack.c.l.b16 %v972
    %v2572 = vunpack.c.h.b16 %v972
    %v2573 = vunpack.c.l.b16 %v973
    %v2574 = vunpack.c.h.b16 %v973
    %v2575 = vunpack.c.l.b16 %v974
    %v2576 = vunpack.c.h.b16 %v974
    %v2577 = vunpack.c.l.b16 %v975
    %v2578 = vunpack.c.h.b16 %v975
    %v2579 = vunpack.c.l.b16 %v976
    %v2580 = vunpack.c.h.b16 %v976
    %v2581 = vunpack.c.l.b16 %v977
    %v2582 = vunpack.c.h.b16 %v977
    %v2583 = vunpack.c.l.b16 %v978
    %v2584 = vunpack.c.h.b16 %v978
    %v2585 = vunpack.c.l.b16 %v979
    %v2586 = vunpack.c.h.b16 %v979
    %v2587 = vunpack.c.l.b16 %v980
    %v2588 = vunpack.c.h.b16 %v980
    %v2589 = vunpack.c.l.b16 %v981
    %v2590 = vunpack.c.h.b16 %v981
    %v2591 = vunpack.c.l.b16 %v982
    %v2592 = vunpack.c.h.b16 %v982
    %v2593 = vunpack.c.l.b16 %v983
    %v2594 = vunpack.c.h.b16 %v983
    %v2595 = vunpack.c.l.b16 %v984
    %v2596 = vunpack.c.h.b16 %v984
    %v2597 = vunpack.c.l.b16 %v985
    %v2598 = vunpack.c.h.b16 %v985
    %v2599 = vunpack.c.l.b16 %v986
    %v2600 = vunpack.c.h.b16 %v986
    %v2601 = vunpack.c.l.b16 %v987
    %v2602 = vunpack.c.h.b16 %v987
    %v2603 = vunpack.c.l.b16 %v988
    %v2604 = vunpack.c.h.b16 %v988
    %v2605 = vunpack.c.l.b16 %v989
    %v2606 = vunpack.c.h.b16 %v989
    %v2607 = vunpack.c.l.b16 %v990
    %v2608 = vunpack.c.h.b16 %v990
    %v2609 = vunpack.c.l.b16 %v991
    %v2610 = vunpack.c.h.b16 %v991
    %v2611 = vunpack.c.l.b16 %v992
    %v2612 = vunpack.c.h.b16 %v992
    %v2613 = vunpack.c.l.b16 %v993
    %v2614 = vunpack.c.h.b16 %v993
    %v2615 = vunpack.c.l.b16 %v994
    %v2616 = vunpack.c.h.b16 %v994
    %v2617 = vunpack.c.l.b16 %v995
    %v2618 = vunpack.c.h.b16 %v995
    %v2619 = vunpack.c.l.b16 %v996
    %v2620 = vunpack.c.h.b16 %v996
    %v2621 = vunpack.c.l.b16 %v997
    %v2622 = vunpack.c.h.b16 %v997
    %v2623 = vunpack.c.l.b16 %v998
    %v2624 = vunpack.c.h.b16 %v998
    %v2625 = vunpack.c.l.b16 %v999
    %v2626 = vunpack.c.h.b16 %v999
    %v2627 = vunpack.c.l.b16 %v1000
    %v2628 = vunpack.c.h.b16 %v1000
    %v2629 = vunpack.c.l.b16 %v1001
    %v2630 = vunpack.c.h.b16 %v1001
    %v2631 = vunpack.c.l.b16 %v1002
    %v2632 = vunpack.c.h.b16 %v1002
    %v2633 = vunpack.c.l.b16 %v1003
    %v2634 = vunpack.c.h.b16 %v1003
    %v2635 = vunpack.c.l.b16 %v1004
    %v2636 = vunpack.c.h.b16 %v1004
    %v2637 = vunpack.c.l.b16 %v1005
    %v2638 = vunpack.c.h.b16 %v1005
    %v2639 = vunpack.c.l.b16 %v1006
    %v2640 = vunpack.c.h.b16 %v1006
    %v2641 = vunpack.c.l.b16 %v1007
    %v2642 = vunpack.c.h.b16 %v1007
    %v2643 = vunpack.c.l.b16 %v1008
    %v2644 = vunpack.c.h.b16 %v1008
    %v2645 = vunpack.c.l.b16 %v1009
    %v2646 = vunpack.c.h.b16 %v1009
    %v2647 = vunpack.c.l.b16 %v1010
    %v2648 = vunpack.c.h.b16 %v1010
    %v2649 = vunpack.c.l.b16 %v1011
    %v2650 = vunpack.c.h.b16 %v1011
    %v2651 = vunpack.c.l.b16 %v1012
    %v2652 = vunpack.c.h.b16 %v1012
    %v2653 = vunpack.c.l.b16 %v1013
    %v2654 = vunpack.c.h.b16 %v1013
    %v2655 = vunpack.c.l.b16 %v1014
    %v2656 = vunpack.c.h.b16 %v1014
    %v2657 = vunpack.c.l.b16 %v1015
    %v2658 = vunpack.c.h.b16 %v1015
    %v2659 = vunpack.c.l.b16 %v1016
    %v2660 = vunpack.c.h.b16 %v1016
    %v2661 = vunpack.c.l.b16 %v1017
    %v2662 = vunpack.c.h.b16 %v1017
    %v2663 = vunpack.c.l.b16 %v1018
    %v2664 = vunpack.c.h.b16 %v1018
    %v2665 = vunpack.c.l.b16 %v1019
    %v2666 = vunpack.c.h.b16 %v1019
    %v2667 = vunpack.c.l.b16 %v1020
    %v2668 = vunpack.c.h.b16 %v1020
    %v2669 = vunpack.c.l.b16 %v1021
    %v2670 = vunpack.c.h.b16 %v1021
    %v2671 = vunpack.c.l.b16 %v1022
    %v2672 = vunpack.c.h.b16 %v1022
    %v2673 = vunpack.c.l.b16 %v1023
    %v2674 = vunpack.c.h.b16 %v1023
    %v2675 = vunpack.c.l.b16 %v1024
    %v2676 = vunpack.c.h.b16 %v1024
    %v2677 = vunpack.c.l.b16 %v1025
    %v2678 = vunpack.c.h.b16 %v1025
    %v2679 = vunpack.c.l.b16 %v1026
    %v2680 = vunpack.c.h.b16 %v1026
    %v2681 = vunpack.c.l.b16 %v1027
    %v2682 = vunpack.c.h.b16 %v1027
    %v2683 = vunpack.c.l.b16 %v1028
    %v2684 = vunpack.c.h.b16 %v1028
    %v2685 = vunpack.c.l.b16 %v1029
    %v2686 = vunpack.c.h.b16 %v1029
    %v2687 = vunpack.c.l.b16 %v1030
    %v2688 = vunpack.c.h.b16 %v1030
    %v2689 = vunpack.c.l.b16 %v1031
    %v2690 = vunpack.c.h.b16 %v1031
    %v2691 = vunpack.c.l.b16 %v1032
    %v2692 = vunpack.c.h.b16 %v1032
    %v2693 = vunpack.c.l.b16 %v1033
    %v2694 = vunpack.c.h.b16 %v1033
    %v2695 = vunpack.c.l.b16 %v1034
    %v2696 = vunpack.c.h.b16 %v1034
    %v2697 = vunpack.c.l.b16 %v1035
    %v2698 = vunpack.c.h.b16 %v1035
    %v2699 = vunpack.c.l.b16 %v1036
    %v2700 = vunpack.c.h.b16 %v1036
    %v2701 = vunpack.c.l.b16 %v1037
    %v2702 = vunpack.c.h.b16 %v1037
    %v2703 = vunpack.c.l.b16 %v1038
    %v2704 = vunpack.c.h.b16 %v1038
    %v2705 = vunpack.c.l.b16 %v1039
    %v2706 = vunpack.c.h.b16 %v1039
    %v2707 = vunpack.c.l.b16 %v1040
    %v2708 = vunpack.c.h.b16 %v1040
    %v2709 = vunpack.c.l.b16 %v1041
    %v2710 = vunpack.c.h.b16 %v1041
    %v2711 = vunpack.c.l.b16 %v1042
    %v2712 = vunpack.c.h.b16 %v1042
    %v2713 = vunpack.c.l.b16 %v1043
    %v2714 = vunpack.c.h.b16 %v1043
    %v2715 = vunpack.c.l.b16 %v1044
    %v2716 = vunpack.c.h.b16 %v1044
    %v2717 = vunpack.c.l.b16 %v1045
    %v2718 = vunpack.c.h.b16 %v1045
    %v2719 = vunpack.c.l.b16 %v1046
    %v2720 = vunpack.c.h.b16 %v1046
    %v2721 = vunpack.c.l.b16 %v1047
    %v2722 = vunpack.c.h.b16 %v1047
    %v2723 = vunpack.c.l.b16 %v1048
    %v2724 = vunpack.c.h.b16 %v1048
    %v2725 = vunpack.c.l.b16 %v1049
    %v2726 = vunpack.c.h.b16 %v1049
    %v2727 = vunpack.c.l.b16 %v1050
    %v2728 = vunpack.c.h.b16 %v1050
    %v2729 = vunpack.c.l.b16 %v1051
    %v2730 = vunpack.c.h.b16 %v1051
    %v2731 = vunpack.c.l.b16 %v1052
    %v2732 = vunpack.c.h.b16 %v1052
    %v2733 = vunpack.c.l.b16 %v1053
    %v2734 = vunpack.c.h.b16 %v1053
    %v2735 = vunpack.c.l.b16 %v1054
    %v2736 = vunpack.c.h.b16 %v1054
    %v2737 = vunpack.c.l.b16 %v1055
    %v2738 = vunpack.c.h.b16 %v1055
    %v2739 = vunpack.c.l.b16 %v1056
    %v2740 = vunpack.c.h.b16 %v1056
    %v2741 = vunpack.c.l.b16 %v1057
    %v2742 = vunpack.c.h.b16 %v1057
    %v2743 = vunpack.c.l.b16 %v1058
    %v2744 = vunpack.c.h.b16 %v1058
    %v2745 = vunpack.c.l.b16 %v1059
    %v2746 = vunpack.c.h.b16 %v1059
    %v2747 = vunpack.c.l.b16 %v1060
    %v2748 = vunpack.c.h.b16 %v1060
    %v2749 = vunpack.c.l.b16 %v1061
    %v2750 = vunpack.c.h.b16 %v1061
    %v2751 = vunpack.c.l.b16 %v1062
    %v2752 = vunpack.c.h.b16 %v1062
    %v2753 = vunpack.c.l.b16 %v1063
    %v2754 = vunpack.c.h.b16 %v1063
    %v2755 = vunpack.c.l.b16 %v1064
    %v2756 = vunpack.c.h.b16 %v1064
    %v2757 = vunpack.c.l.b16 %v1065
    %v2758 = vunpack.c.h.b16 %v1065
    %v2759 = vunpack.c.l.b16 %v1066
    %v2760 = vunpack.c.h.b16 %v1066
    %v2761 = vunpack.c.l.b16 %v1067
    %v2762 = vunpack.c.h.b16 %v1067
    %v2763 = vunpack.c.l.b16 %v1068
    %v2764 = vunpack.c.h.b16 %v1068
    %v2765 = vunpack.c.l.b16 %v1069
    %v2766 = vunpack.c.h.b16 %v1069
    %v2767 = vunpack.c.l.b16 %v1070
    %v2768 = vunpack.c.h.b16 %v1070
    %v2769 = vunpack.c.l.b16 %v1071
    %v2770 = vunpack.c.h.b16 %v1071
    %v2771 = vunpack.c.l.b16 %v1072
    %v2772 = vunpack.c.h.b16 %v1072
    %v2773 = vunpack.c.l.b16 %v1073
    %v2774 = vunpack.c.h.b16 %v1073
    %v2775 = vunpack.c.l.b16 %v1074
    %v2776 = vunpack.c.h.b16 %v1074
    %v2777 = vunpack.c.l.b16 %v1075
    %v2778 = vunpack.c.h.b16 %v1075
    %v2779 = vunpack.c.l.b16 %v1076
    %v2780 = vunpack.c.h.b16 %v1076
    %v2781 = vunpack.c.l.b16 %v1077
    %v2782 = vunpack.c.h.b16 %v1077
    %v2783 = vpack.c.b16 %v2279, %v2271
    %v2784 = vpack.c.b16 %v2280, %v2272
    %v2785 = vpack.c.b16 %v2281, %v2273
    %v2786 = vpack.c.b16 %v2282, %v2274
    %v2787 = vpack.c.b16 %v2283, %v2275
    %v2788 = vpack.c.b16 %v2284, %v2276
    %v2789 = vpack.c.b16 %v2285, %v2277
    %v2790 = vpack.c.b16 %v2286, %v2278
    %v2791 = vpack.c.b16 %v2295, %v2287
    %v2792 = vpack.c.b16 %v2296, %v2288
    %v2793 = vpack.c.b16 %v2297, %v2289
    %v2794 = vpack.c.b16 %v2298, %v2290
    %v2795 = vpack.c.b16 %v2299, %v2291
    %v2796 = vpack.c.b16 %v2300, %v2292
    %v2797 = vpack.c.b16 %v2301, %v2293
    %v2798 = vpack.c.b16 %v2302, %v2294
    %v2799 = vpack.c.b16 %v2311, %v2303
    %v2800 = vpack.c.b16 %v2312, %v2304
    %v2801 = vpack.c.b16 %v2313, %v2305
    %v2802 = vpack.c.b16 %v2314, %v2306
    %v2803 = vpack.c.b16 %v2315, %v2307
    %v2804 = vpack.c.b16 %v2316, %v2308
    %v2805 = vpack.c.b16 %v2317, %v2309
    %v2806 = vpack.c.b16 %v2318, %v2310
    %v2807 = vpack.c.b16 %v2327, %v2319
    %v2808 = vpack.c.b16 %v2328, %v2320
    %v2809 = vpack.c.b16 %v2329, %v2321
    %v2810 = vpack.c.b16 %v2330, %v2322
    %v2811 = vpack.c.b16 %v2331, %v2323
    %v2812 = vpack.c.b16 %v2332, %v2324
    %v2813 = vpack.c.b16 %v2333, %v2325
    %v2814 = vpack.c.b16 %v2334, %v2326
    %v2815 = vpack.c.b16 %v2343, %v2335
    %v2816 = vpack.c.b16 %v2344, %v2336
    %v2817 = vpack.c.b16 %v2345, %v2337
    %v2818 = vpack.c.b16 %v2346, %v2338
    %v2819 = vpack.c.b16 %v2347, %v2339
    %v2820 = vpack.c.b16 %v2348, %v2340
    %v2821 = vpack.c.b16 %v2349, %v2341
    %v2822 = vpack.c.b16 %v2350, %v2342
    %v2823 = vpack.c.b16 %v2359, %v2351
    %v2824 = vpack.c.b16 %v2360, %v2352
    %v2825 = vpack.c.b16 %v2361, %v2353
    %v2826 = vpack.c.b16 %v2362, %v2354
    %v2827 = vpack.c.b16 %v2363, %v2355
    %v2828 = vpack.c.b16 %v2364, %v2356
    %v2829 = vpack.c.b16 %v2365, %v2357
    %v2830 = vpack.c.b16 %v2366, %v2358
    %v2831 = vpack.c.b16 %v2375, %v2367
    %v2832 = vpack.c.b16 %v2376, %v2368
    %v2833 = vpack.c.b16 %v2377, %v2369
    %v2834 = vpack.c.b16 %v2378, %v2370
    %v2835 = vpack.c.b16 %v2379, %v2371
    %v2836 = vpack.c.b16 %v2380, %v2372
    %v2837 = vpack.c.b16 %v2381, %v2373
    %v2838 = vpack.c.b16 %v2382, %v2374
    %v2839 = vpack.c.b16 %v2391, %v2383
    %v2840 = vpack.c.b16 %v2392, %v2384
    %v2841 = vpack.c.b16 %v2393, %v2385
    %v2842 = vpack.c.b16 %v2394, %v2386
    %v2843 = vpack.c.b16 %v2395, %v2387
    %v2844 = vpack.c.b16 %v2396, %v2388
    %v2845 = vpack.c.b16 %v2397, %v2389
    %v2846 = vpack.c.b16 %v2398, %v2390
    %v2847 = vpack.c.b16 %v2407, %v2399
    %v2848 = vpack.c.b16 %v2408, %v2400
    %v2849 = vpack.c.b16 %v2409, %v2401
    %v2850 = vpack.c.b16 %v2410, %v2402
    %v2851 = vpack.c.b16 %v2411, %v2403
    %v2852 = vpack.c.b16 %v2412, %v2404
    %v2853 = vpack.c.b16 %v2413, %v2405
    %v2854 = vpack.c.b16 %v2414, %v2406
    %v2855 = vpack.c.b16 %v2423, %v2415
    %v2856 = vpack.c.b16 %v2424, %v2416
    %v2857 = vpack.c.b16 %v2425, %v2417
    %v2858 = vpack.c.b16 %v2426, %v2418
    %v2859 = vpack.c.b16 %v2427, %v2419
    %v2860 = vpack.c.b16 %v2428, %v2420
    %v2861 = vpack.c.b16 %v2429, %v2421
    %v2862 = vpack.c.b16 %v2430, %v2422
    %v2863 = vpack.c.b16 %v2439, %v2431
    %v2864 = vpack.c.b16 %v2440, %v2432
    %v2865 = vpack.c.b16 %v2441, %v2433
    %v2866 = vpack.c.b16 %v2442, %v2434
    %v2867 = vpack.c.b16 %v2443, %v2435
    %v2868 = vpack.c.b16 %v2444, %v2436
    %v2869 = vpack.c.b16 %v2445, %v2437
    %v2870 = vpack.c.b16 %v2446, %v2438
    %v2871 = vpack.c.b16 %v2455, %v2447
    %v2872 = vpack.c.b16 %v2456, %v2448
    %v2873 = vpack.c.b16 %v2457, %v2449
    %v2874 = vpack.c.b16 %v2458, %v2450
    %v2875 = vpack.c.b16 %v2459, %v2451
    %v2876 = vpack.c.b16 %v2460, %v2452
    %v2877 = vpack.c.b16 %v2461, %v2453
    %v2878 = vpack.c.b16 %v2462, %v2454
    %v2879 = vpack.c.b16 %v2471, %v2463
    %v2880 = vpack.c.b16 %v2472, %v2464
    %v2881 = vpack.c.b16 %v2473, %v2465
    %v2882 = vpack.c.b16 %v2474, %v2466
    %v2883 = vpack.c.b16 %v2475, %v2467
    %v2884 = vpack.c.b16 %v2476, %v2468
    %v2885 = vpack.c.b16 %v2477, %v2469
    %v2886 = vpack.c.b16 %v2478, %v2470
    %v2887 = vpack.c.b16 %v2487, %v2479
    %v2888 = vpack.c.b16 %v2488, %v2480
    %v2889 = vpack.c.b16 %v2489, %v2481
    %v2890 = vpack.c.b16 %v2490, %v2482
    %v2891 = vpack.c.b16 %v2491, %v2483
    %v2892 = vpack.c.b16 %v2492, %v2484
    %v2893 = vpack.c.b16 %v2493, %v2485
    %v2894 = vpack.c.b16 %v2494, %v2486
    %v2895 = vpack.c.b16 %v2503, %v2495
    %v2896 = vpack.c.b16 %v2504, %v2496
    %v2897 = vpack.c.b16 %v2505, %v2497
    %v2898 = vpack.c.b16 %v2506, %v2498
    %v2899 = vpack.c.b16 %v2507, %v2499
    %v2900 = vpack.c.b16 %v2508, %v2500
    %v2901 = vpack.c.b16 %v2509, %v2501
    %v2902 = vpack.c.b16 %v2510, %v2502
    %v2903 = vpack.c.b16 %v2519, %v2511
    %v2904 = vpack.c.b16 %v2520, %v2512
    %v2905 = vpack.c.b16 %v2521, %v2513
    %v2906 = vpack.c.b16 %v2522, %v2514
    %v2907 = vpack.c.b16 %v2523, %v2515
    %v2908 = vpack.c.b16 %v2524, %v2516
    %v2909 = vpack.c.b16 %v2525, %v2517
    %v2910 = vpack.c.b16 %v2526, %v2518
    %v2911 = vpack.c.b16 %v2535, %v2527
    %v2912 = vpack.c.b16 %v2536, %v2528
    %v2913 = vpack.c.b16 %v2537, %v2529
    %v2914 = vpack.c.b16 %v2538, %v2530
    %v2915 = vpack.c.b16 %v2539, %v2531
    %v2916 = vpack.c.b16 %v2540, %v2532
    %v2917 = vpack.c.b16 %v2541, %v2533
    %v2918 = vpack.c.b16 %v2542, %v2534
    %v2919 = vpack.c.b16 %v2551, %v2543
    %v2920 = vpack.c.b16 %v2552, %v2544
    %v2921 = vpack.c.b16 %v2553, %v2545
    %v2922 = vpack.c.b16 %v2554, %v2546
    %v2923 = vpack.c.b16 %v2555, %v2547
    %v2924 = vpack.c.b16 %v2556, %v2548
    %v2925 = vpack.c.b16 %v2557, %v2549
    %v2926 = vpack.c.b16 %v2558, %v2550
    %v2927 = vpack.c.b16 %v2567, %v2559
    %v2928 = vpack.c.b16 %v2568, %v2560
    %v2929 = vpack.c.b16 %v2569, %v2561
    %v2930 = vpack.c.b16 %v2570, %v2562
    %v2931 = vpack.c.b16 %v2571, %v2563
    %v2932 = vpack.c.b16 %v2572, %v2564
    %v2933 = vpack.c.b16 %v2573, %v2565
    %v2934 = vpack.c.b16 %v2574, %v2566
    %v2935 = vpack.c.b16 %v2583, %v2575
    %v2936 = vpack.c.b16 %v2584, %v2576
    %v2937 = vpack.c.b16 %v2585, %v2577
    %v2938 = vpack.c.b16 %v2586, %v2578
    %v2939 = vpack.c.b16 %v2587, %v2579
    %v2940 = vpack.c.b16 %v2588, %v2580
    %v2941 = vpack.c.b16 %v2589, %v2581
    %v2942 = vpack.c.b16 %v2590, %v2582
    %v2943 = vpack.c.b16 %v2599, %v2591
    %v2944 = vpack.c.b16 %v2600, %v2592
    %v2945 = vpack.c.b16 %v2601, %v2593
    %v2946 = vpack.c.b16 %v2602, %v2594
    %v2947 = vpack.c.b16 %v2603, %v2595
    %v2948 = vpack.c.b16 %v2604, %v2596
    %v2949 = vpack.c.b16 %v2605, %v2597
    %v2950 = vpack.c.b16 %v2606, %v2598
    %v2951 = vpack.c.b16 %v2615, %v2607
    %v2952 = vpack.c.b16 %v2616, %v2608
    %v2953 = vpack.c.b16 %v2617, %v2609
    %v2954 = vpack.c.b16 %v2618, %v2610
    %v2955 = vpack.c.b16 %v2619, %v2611
    %v2956 = vpack.c.b16 %v2620, %v2612
    %v2957 = vpack.c.b16 %v2621, %v2613
    %v2958 = vpack.c.b16 %v2622, %v2614
    %v2959 = vpack.c.b16 %v2631, %v2623
    %v2960 = vpack.c.b16 %v2632, %v2624
    %v2961 = vpack.c.b16 %v2633, %v2625
    %v2962 = vpack.c.b16 %v2634, %v2626
    %v2963 = vpack.c.b16 %v2635, %v2627
    %v2964 = vpack.c.b16 %v2636, %v2628
    %v2965 = vpack.c.b16 %v2637, %v2629
    %v2966 = vpack.c.b16 %v2638, %v2630
    %v2967 = vpack.c.b16 %v2647, %v2639
    %v2968 = vpack.c.b16 %v2648, %v2640
    %v2969 = vpack.c.b16 %v2649, %v2641
    %v2970 = vpack.c.b16 %v2650, %v2642
    %v2971 = vpack.c.b16 %v2651, %v2643
    %v2972 = vpack.c.b16 %v2652, %v2644
    %v2973 = vpack.c.b16 %v2653, %v2645
    %v2974 = vpack.c.b16 %v2654, %v2646
    %v2975 = vpack.c.b16 %v2663, %v2655
    %v2976 = vpack.c.b16 %v2664, %v2656
    %v2977 = vpack.c.b16 %v2665, %v2657
    %v2978 = vpack.c.b16 %v2666, %v2658
    %v2979 = vpack.c.b16 %v2667, %v2659
    %v2980 = vpack.c.b16 %v2668, %v2660
    %v2981 = vpack.c.b16 %v2669, %v2661
    %v2982 = vpack.c.b16 %v2670, %v2662
    %v2983 = vpack.c.b16 %v2679, %v2671
    %v2984 = vpack.c.b16 %v2680, %v2672
    %v2985 = vpack.c.b16 %v2681, %v2673
    %v2986 = vpack.c.b16 %v2682, %v2674
    %v2987 = vpack.c.b16 %v2683, %v2675
    %v2988 = vpack.c.b16 %v2684, %v2676
    %v2989 = vpack.c.b16 %v2685, %v2677
    %v2990 = vpack.c.b16 %v2686, %v2678
    %v2991 = vpack.c.b16 %v2695, %v2687
    %v2992 = vpack.c.b16 %v2696, %v2688
    %v2993 = vpack.c.b16 %v2697, %v2689
    %v2994 = vpack.c.b16 %v2698, %v2690
    %v2995 = vpack.c.b16 %v2699, %v2691
    %v2996 = vpack.c.b16 %v2700, %v2692
    %v2997 = vpack.c.b16 %v2701, %v2693
    %v2998 = vpack.c.b16 %v2702, %v2694
    %v2999 = vpack.c.b16 %v2711, %v2703
    %v3000 = vpack.c.b16 %v2712, %v2704
    %v3001 = vpack.c.b16 %v2713, %v2705
    %v3002 = vpack.c.b16 %v2714, %v2706
    %v3003 = vpack.c.b16 %v2715, %v2707
    %v3004 = vpack.c.b16 %v2716, %v2708
    %v3005 = vpack.c.b16 %v2717, %v2709
    %v3006 = vpack.c.b16 %v2718, %v2710
    %v3007 = vpack.c.b16 %v2727, %v2719
    %v3008 = vpack.c.b16 %v2728, %v2720
    %v3009 = vpack.c.b16 %v2729, %v2721
    %v3010 = vpack.c.b16 %v2730, %v2722
    %v3011 = vpack.c.b16 %v2731, %v2723
    %v3012 = vpack.c.b16 %v2732, %v2724
    %v3013 = vpack.c.b16 %v2733, %v2725
    %v3014 = vpack.c.b16 %v2734, %v2726
    %v3015 = vpack.c.b16 %v2743, %v2735
    %v3016 = vpack.c.b16 %v2744, %v2736
    %v3017 = vpack.c.b16 %v2745, %v2737
    %v3018 = vpack.c.b16 %v2746, %v2738
    %v3019 = vpack.c.b16 %v2747, %v2739
    %v3020 = vpack.c.b16 %v2748, %v2740
    %v3021 = vpack.c.b16 %v2749, %v2741
    %v3022 = vpack.c.b16 %v2750, %v2742
    %v3023 = vpack.c.b16 %v2759, %v2751
    %v3024 = vpack.c.b16 %v2760, %v2752
    %v3025 = vpack.c.b16 %v2761, %v2753
    %v3026 = vpack.c.b16 %v2762, %v2754
    %v3027 = vpack.c.b16 %v2763, %v2755
    %v3028 = vpack.c.b16 %v2764, %v2756
    %v3029 = vpack.c.b16 %v2765, %v2757
    %v3030 = vpack.c.b16 %v2766, %v2758
    %v3031 = vpack.c.b16 %v2775, %v2767
    %v3032 = vpack.c.b16 %v2776, %v2768
    %v3033 = vpack.c.b16 %v2777, %v2769
    %v3034 = vpack.c.b16 %v2778, %v2770
    %v3035 = vpack.c.b16 %v2779, %v2771
    %v3036 = vpack.c.b16 %v2780, %v2772
    %v3037 = vpack.c.b16 %v2781, %v2773
    %v3038 = vpack.c.b16 %v2782, %v2774
    %3295 = vmatprep.subr.bf16.mxu0 %v2784
    %3296 = vmatpush1.bf16.msra.mxu0 %v2783
    %3297 = vmatprep.subr.bf16.mxu0 %v2792
    %3298 = vmatpush1.bf16.msra.mxu0 %v2791
    %3299 = vmatprep.subr.bf16.mxu0 %v2800
    %3300 = vmatpush1.bf16.msra.mxu0 %v2799
    %3301 = vmatprep.subr.bf16.mxu0 %v2808
    %3302 = vmatpush1.bf16.msra.mxu0 %v2807
    %3303 = vmatprep.subr.bf16.mxu0 %v2816
    %3304 = vmatpush1.bf16.msra.mxu0 %v2815
    %3305 = vmatprep.subr.bf16.mxu0 %v2824
    %3306 = vmatpush1.bf16.msra.mxu0 %v2823
    %3307 = vmatprep.subr.bf16.mxu0 %v2832
    %3308 = vmatpush1.bf16.msra.mxu0 %v2831
    %3309 = vmatprep.subr.bf16.mxu0 %v2840
    %3310 = vmatpush1.bf16.msra.mxu0 %v2839
    %3311 = vmatprep.subr.bf16.mxu0 %v2848
    %3312 = vmatpush1.bf16.msra.mxu0 %v2847
    %3313 = vmatprep.subr.bf16.mxu0 %v2856
    %3314 = vmatpush1.bf16.msra.mxu0 %v2855
    %3315 = vmatprep.subr.bf16.mxu0 %v2864
    %3316 = vmatpush1.bf16.msra.mxu0 %v2863
    %3317 = vmatprep.subr.bf16.mxu0 %v2872
    %3318 = vmatpush1.bf16.msra.mxu0 %v2871
    %3319 = vmatprep.subr.bf16.mxu0 %v2880
    %3320 = vmatpush1.bf16.msra.mxu0 %v2879
    %3321 = vmatprep.subr.bf16.mxu0 %v2888
    %3322 = vmatpush1.bf16.msra.mxu0 %v2887
    %3323 = vmatprep.subr.bf16.mxu0 %v2896
    %3324 = vmatpush1.bf16.msra.mxu0 %v2895
    %3325 = vmatprep.subr.bf16.mxu0 %v2904
    %3326 = vmatpush1.bf16.msra.mxu0 %v2903
    %3327 = vmatprep.mubr.bf16.mxu0 %v1973
    %3328 = vmatmul.mubr.bf16.gmra.mrb[0].mxu0 %v1972
    %v3329 = vpop.f32.mrb[0].mxu0
    %v3330 = vadd.f32 %v1978, %v3329
    %v3331 = vpop.f32.mrb[0].mxu0
    %v3332 = vadd.f32 %v1982, %v3331
    %v3333 = vpop.f32.mrb[0].mxu0
    %v3334 = vpop.f32.mrb[0].mxu0
    %3335 = vdwg.mxu0
    %3336 = vmatprep.subr.bf16.mxu0 %v2912
    %3337 = vmatpush1.bf16.msra.mxu0 %v2911
    %3338 = vmatprep.subr.bf16.mxu0 %v2920
    %3339 = vmatpush1.bf16.msra.mxu0 %v2919
    %3340 = vmatprep.subr.bf16.mxu0 %v2928
    %3341 = vmatpush1.bf16.msra.mxu0 %v2927
    %3342 = vmatprep.subr.bf16.mxu0 %v2936
    %3343 = vmatpush1.bf16.msra.mxu0 %v2935
    %3344 = vmatprep.subr.bf16.mxu0 %v2944
    %3345 = vmatpush1.bf16.msra.mxu0 %v2943
    %3346 = vmatprep.subr.bf16.mxu0 %v2952
    %3347 = vmatpush1.bf16.msra.mxu0 %v2951
    %3348 = vmatprep.subr.bf16.mxu0 %v2960
    %3349 = vmatpush1.bf16.msra.mxu0 %v2959
    %3350 = vmatprep.subr.bf16.mxu0 %v2968
    %3351 = vmatpush1.bf16.msra.mxu0 %v2967
    %3352 = vmatprep.subr.bf16.mxu0 %v2976
    %3353 = vmatpush1.bf16.msra.mxu0 %v2975
    %3354 = vmatprep.subr.bf16.mxu0 %v2984
    %3355 = vmatpush1.bf16.msra.mxu0 %v2983
    %3356 = vmatprep.subr.bf16.mxu0 %v2992
    %3357 = vmatpush1.bf16.msra.mxu0 %v2991
    %3358 = vmatprep.subr.bf16.mxu0 %v3000
    %3359 = vmatpush1.bf16.msra.mxu0 %v2999
    %3360 = vmatprep.subr.bf16.mxu0 %v3008
    %3361 = vmatpush1.bf16.msra.mxu0 %v3007
    %3362 = vmatprep.subr.bf16.mxu0 %v3016
    %3363 = vmatpush1.bf16.msra.mxu0 %v3015
    %3364 = vmatprep.subr.bf16.mxu0 %v3024
    %3365 = vmatpush1.bf16.msra.mxu0 %v3023
    %3366 = vmatprep.subr.bf16.mxu0 %v3032
    %3367 = vmatpush1.bf16.msra.mxu0 %v3031
    %3368 = vmatprep.mubr.bf16.mxu0 0
    %3369 = vmatmul.mubr.bf16.gmra.mrb[0].mxu0 0
    %v3370 = vpop.f32.mrb[0].mxu0
    %v3371 = vadd.f32 %v3330, %v3370
    %v3372 = vpop.f32.mrb[0].mxu0
    %v3373 = vadd.f32 %v3332, %v3372
    %v3374 = vpop.f32.mrb[0].mxu0
    %v3375 = vpop.f32.mrb[0].mxu0
    %3376 = vdwg.mxu0
    %3377 = vmatprep.subr.bf16.mxu0 %v2786
    %3378 = vmatpush1.bf16.msra.mxu0 %v2785
    %3379 = vmatprep.subr.bf16.mxu0 %v2794
    %3380 = vmatpush1.bf16.msra.mxu0 %v2793
    %3381 = vmatprep.subr.bf16.mxu0 %v2802
    %3382 = vmatpush1.bf16.msra.mxu0 %v2801
    %3383 = vmatprep.subr.bf16.mxu0 %v2810
    %3384 = vmatpush1.bf16.msra.mxu0 %v2809
    %3385 = vmatprep.subr.bf16.mxu0 %v2818
    %3386 = vmatpush1.bf16.msra.mxu0 %v2817
    %3387 = vmatprep.subr.bf16.mxu0 %v2826
    %3388 = vmatpush1.bf16.msra.mxu0 %v2825
    %3389 = vmatprep.subr.bf16.mxu0 %v2834
    %3390 = vmatpush1.bf16.msra.mxu0 %v2833
    %3391 = vmatprep.subr.bf16.mxu0 %v2842
    %3392 = vmatpush1.bf16.msra.mxu0 %v2841
    %3393 = vmatprep.subr.bf16.mxu0 %v2850
    %3394 = vmatpush1.bf16.msra.mxu0 %v2849
    %3395 = vmatprep.subr.bf16.mxu0 %v2858
    %3396 = vmatpush1.bf16.msra.mxu0 %v2857
    %3397 = vmatprep.subr.bf16.mxu0 %v2866
    %3398 = vmatpush1.bf16.msra.mxu0 %v2865
    %3399 = vmatprep.subr.bf16.mxu0 %v2874
    %3400 = vmatpush1.bf16.msra.mxu0 %v2873
    %3401 = vmatprep.subr.bf16.mxu0 %v2882
    %3402 = vmatpush1.bf16.msra.mxu0 %v2881
    %3403 = vmatprep.subr.bf16.mxu0 %v2890
    %3404 = vmatpush1.bf16.msra.mxu0 %v2889
    %3405 = vmatprep.subr.bf16.mxu0 %v2898
    %3406 = vmatpush1.bf16.msra.mxu0 %v2897
    %3407 = vmatprep.subr.bf16.mxu0 %v2906
    %3408 = vmatpush1.bf16.msra.mxu0 %v2905
    %3409 = vmatprep.mubr.bf16.mxu0 %v1973
    %3410 = vmatmul.mubr.bf16.gmra.mrb[0].mxu0 %v1972
    %v3411 = vpop.f32.mrb[0].mxu0
    %v3412 = vadd.f32 %v1986, %v3411
    %v3413 = vpop.f32.mrb[0].mxu0
    %v3414 = vadd.f32 %v1990, %v3413
    %v3415 = vpop.f32.mrb[0].mxu0
    %v3416 = vpop.f32.mrb[0].mxu0
    %3417 = vdwg.mxu0
    %3418 = vmatprep.subr.bf16.mxu0 %v2914
    %3419 = vmatpush1.bf16.msra.mxu0 %v2913
    %3420 = vmatprep.subr.bf16.mxu0 %v2922
    %3421 = vmatpush1.bf16.msra.mxu0 %v2921
    %3422 = vmatprep.subr.bf16.mxu0 %v2930
    %3423 = vmatpush1.bf16.msra.mxu0 %v2929
    %3424 = vmatprep.subr.bf16.mxu0 %v2938
    %3425 = vmatpush1.bf16.msra.mxu0 %v2937
    %3426 = vmatprep.subr.bf16.mxu0 %v2946
    %3427 = vmatpush1.bf16.msra.mxu0 %v2945
    %3428 = vmatprep.subr.bf16.mxu0 %v2954
    %3429 = vmatpush1.bf16.msra.mxu0 %v2953
    %3430 = vmatprep.subr.bf16.mxu0 %v2962
    %3431 = vmatpush1.bf16.msra.mxu0 %v2961
    %3432 = vmatprep.subr.bf16.mxu0 %v2970
    %3433 = vmatpush1.bf16.msra.mxu0 %v2969
    %3434 = vmatprep.subr.bf16.mxu0 %v2978
    %3435 = vmatpush1.bf16.msra.mxu0 %v2977
    %3436 = vmatprep.subr.bf16.mxu0 %v2986
    %3437 = vmatpush1.bf16.msra.mxu0 %v2985
    %3438 = vmatprep.subr.bf16.mxu0 %v2994
    %3439 = vmatpush1.bf16.msra.mxu0 %v2993
    %3440 = vmatprep.subr.bf16.mxu0 %v3002
    %3441 = vmatpush1.bf16.msra.mxu0 %v3001
    %3442 = vmatprep.subr.bf16.mxu0 %v3010
    %3443 = vmatpush1.bf16.msra.mxu0 %v3009
    %3444 = vmatprep.subr.bf16.mxu0 %v3018
    %3445 = vmatpush1.bf16.msra.mxu0 %v3017
    %3446 = vmatprep.subr.bf16.mxu0 %v3026
    %3447 = vmatpush1.bf16.msra.mxu0 %v3025
    %3448 = vmatprep.subr.bf16.mxu0 %v3034
    %3449 = vmatpush1.bf16.msra.mxu0 %v3033
    %3450 = vmatprep.mubr.bf16.mxu0 0
    %3451 = vmatmul.mubr.bf16.gmra.mrb[0].mxu0 0
    %v3452 = vpop.f32.mrb[0].mxu0
    %v3453 = vadd.f32 %v3412, %v3452
    %v3454 = vpop.f32.mrb[0].mxu0
    %v3455 = vadd.f32 %v3414, %v3454
    %v3456 = vpop.f32.mrb[0].mxu0
    %v3457 = vpop.f32.mrb[0].mxu0
    %3458 = vdwg.mxu0
    %3459 = vmatprep.subr.bf16.mxu0 %v2788
    %3460 = vmatpush1.bf16.msra.mxu0 %v2787
    %3461 = vmatprep.subr.bf16.mxu0 %v2796
    %3462 = vmatpush1.bf16.msra.mxu0 %v2795
    %3463 = vmatprep.subr.bf16.mxu0 %v2804
    %3464 = vmatpush1.bf16.msra.mxu0 %v2803
    %3465 = vmatprep.subr.bf16.mxu0 %v2812
    %3466 = vmatpush1.bf16.msra.mxu0 %v2811
    %3467 = vmatprep.subr.bf16.mxu0 %v2820
    %3468 = vmatpush1.bf16.msra.mxu0 %v2819
    %3469 = vmatprep.subr.bf16.mxu0 %v2828
    %3470 = vmatpush1.bf16.msra.mxu0 %v2827
    %3471 = vmatprep.subr.bf16.mxu0 %v2836
    %3472 = vmatpush1.bf16.msra.mxu0 %v2835
    %3473 = vmatprep.subr.bf16.mxu0 %v2844
    %3474 = vmatpush1.bf16.msra.mxu0 %v2843
    %3475 = vmatprep.subr.bf16.mxu0 %v2852
    %3476 = vmatpush1.bf16.msra.mxu0 %v2851
    %3477 = vmatprep.subr.bf16.mxu0 %v2860
    %3478 = vmatpush1.bf16.msra.mxu0 %v2859
    %3479 = vmatprep.subr.bf16.mxu0 %v2868
    %3480 = vmatpush1.bf16.msra.mxu0 %v2867
    %3481 = vmatprep.subr.bf16.mxu0 %v2876
    %3482 = vmatpush1.bf16.msra.mxu0 %v2875
    %3483 = vmatprep.subr.bf16.mxu0 %v2884
    %3484 = vmatpush1.bf16.msra.mxu0 %v2883
    %3485 = vmatprep.subr.bf16.mxu0 %v2892
    %3486 = vmatpush1.bf16.msra.mxu0 %v2891
    %3487 = vmatprep.subr.bf16.mxu0 %v2900
    %3488 = vmatpush1.bf16.msra.mxu0 %v2899
    %3489 = vmatprep.subr.bf16.mxu0 %v2908
    %3490 = vmatpush1.bf16.msra.mxu0 %v2907
    %3491 = vmatprep.mubr.bf16.mxu0 %v1973
    %3492 = vmatmul.mubr.bf16.gmra.mrb[0].mxu0 %v1972
    %v3493 = vpop.f32.mrb[0].mxu0
    %v3494 = vadd.f32 %v1994, %v3493
    %v3495 = vpop.f32.mrb[0].mxu0
    %v3496 = vadd.f32 %v1998, %v3495
    %v3497 = vpop.f32.mrb[0].mxu0
    %v3498 = vpop.f32.mrb[0].mxu0
    %3499 = vdwg.mxu0
    %3500 = vmatprep.subr.bf16.mxu0 %v2916
    %3501 = vmatpush1.bf16.msra.mxu0 %v2915
    %3502 = vmatprep.subr.bf16.mxu0 %v2924
    %3503 = vmatpush1.bf16.msra.mxu0 %v2923
    %3504 = vmatprep.subr.bf16.mxu0 %v2932
    %3505 = vmatpush1.bf16.msra.mxu0 %v2931
    %3506 = vmatprep.subr.bf16.mxu0 %v2940
    %3507 = vmatpush1.bf16.msra.mxu0 %v2939
    %3508 = vmatprep.subr.bf16.mxu0 %v2948
    %3509 = vmatpush1.bf16.msra.mxu0 %v2947
    %3510 = vmatprep.subr.bf16.mxu0 %v2956
    %3511 = vmatpush1.bf16.msra.mxu0 %v2955
    %3512 = vmatprep.subr.bf16.mxu0 %v2964
    %3513 = vmatpush1.bf16.msra.mxu0 %v2963
    %3514 = vmatprep.subr.bf16.mxu0 %v2972
    %3515 = vmatpush1.bf16.msra.mxu0 %v2971
    %3516 = vmatprep.subr.bf16.mxu0 %v2980
    %3517 = vmatpush1.bf16.msra.mxu0 %v2979
    %3518 = vmatprep.subr.bf16.mxu0 %v2988
    %3519 = vmatpush1.bf16.msra.mxu0 %v2987
    %3520 = vmatprep.subr.bf16.mxu0 %v2996
    %3521 = vmatpush1.bf16.msra.mxu0 %v2995
    %3522 = vmatprep.subr.bf16.mxu0 %v3004
    %3523 = vmatpush1.bf16.msra.mxu0 %v3003
    %3524 = vmatprep.subr.bf16.mxu0 %v3012
    %3525 = vmatpush1.bf16.msra.mxu0 %v3011
    %3526 = vmatprep.subr.bf16.mxu0 %v3020
    %3527 = vmatpush1.bf16.msra.mxu0 %v3019
    %3528 = vmatprep.subr.bf16.mxu0 %v3028
    %3529 = vmatpush1.bf16.msra.mxu0 %v3027
    %3530 = vmatprep.subr.bf16.mxu0 %v3036
    %3531 = vmatpush1.bf16.msra.mxu0 %v3035
    %3532 = vmatprep.mubr.bf16.mxu0 0
    %3533 = vmatmul.mubr.bf16.gmra.mrb[0].mxu0 0
    %v3534 = vpop.f32.mrb[0].mxu0
    %v3535 = vadd.f32 %v3494, %v3534
    %v3536 = vpop.f32.mrb[0].mxu0
    %v3537 = vadd.f32 %v3496, %v3536
    %v3538 = vpop.f32.mrb[0].mxu0
    %v3539 = vpop.f32.mrb[0].mxu0
    %3540 = vdwg.mxu0
    %3541 = vmatprep.subr.bf16.mxu0 %v2790
    %3542 = vmatpush1.bf16.msra.mxu0 %v2789
    %3543 = vmatprep.subr.bf16.mxu0 %v2798
    %3544 = vmatpush1.bf16.msra.mxu0 %v2797
    %3545 = vmatprep.subr.bf16.mxu0 %v2806
    %3546 = vmatpush1.bf16.msra.mxu0 %v2805
    %3547 = vmatprep.subr.bf16.mxu0 %v2814
    %3548 = vmatpush1.bf16.msra.mxu0 %v2813
    %3549 = vmatprep.subr.bf16.mxu0 %v2822
    %3550 = vmatpush1.bf16.msra.mxu0 %v2821
    %3551 = vmatprep.subr.bf16.mxu0 %v2830
    %3552 = vmatpush1.bf16.msra.mxu0 %v2829
    %3553 = vmatprep.subr.bf16.mxu0 %v2838
    %3554 = vmatpush1.bf16.msra.mxu0 %v2837
    %3555 = vmatprep.subr.bf16.mxu0 %v2846
    %3556 = vmatpush1.bf16.msra.mxu0 %v2845
    %3557 = vmatprep.subr.bf16.mxu0 %v2854
    %3558 = vmatpush1.bf16.msra.mxu0 %v2853
    %3559 = vmatprep.subr.bf16.mxu0 %v2862
    %3560 = vmatpush1.bf16.msra.mxu0 %v2861
    %3561 = vmatprep.subr.bf16.mxu0 %v2870
    %3562 = vmatpush1.bf16.msra.mxu0 %v2869
    %3563 = vmatprep.subr.bf16.mxu0 %v2878
    %3564 = vmatpush1.bf16.msra.mxu0 %v2877
    %3565 = vmatprep.subr.bf16.mxu0 %v2886
    %3566 = vmatpush1.bf16.msra.mxu0 %v2885
    %3567 = vmatprep.subr.bf16.mxu0 %v2894
    %3568 = vmatpush1.bf16.msra.mxu0 %v2893
    %3569 = vmatprep.subr.bf16.mxu0 %v2902
    %3570 = vmatpush1.bf16.msra.mxu0 %v2901
    %3571 = vmatprep.subr.bf16.mxu0 %v2910
    %3572 = vmatpush1.bf16.msra.mxu0 %v2909
    %3573 = vmatprep.mubr.bf16.mxu0 %v1973
    %3574 = vmatmul.mubr.bf16.gmra.mrb[0].mxu0 %v1972
    %v3575 = vpop.f32.mrb[0].mxu0
    %v3576 = vadd.f32 %v2002, %v3575
    %v3577 = vpop.f32.mrb[0].mxu0
    %v3578 = vadd.f32 %v2006, %v3577
    %v3579 = vpop.f32.mrb[0].mxu0
    %v3580 = vpop.f32.mrb[0].mxu0
    %3581 = vdwg.mxu0
    %3582 = vmatprep.subr.bf16.mxu0 %v2918
    %3583 = vmatpush1.bf16.msra.mxu0 %v2917
    %3584 = vmatprep.subr.bf16.mxu0 %v2926
    %3585 = vmatpush1.bf16.msra.mxu0 %v2925
    %3586 = vmatprep.subr.bf16.mxu0 %v2934
    %3587 = vmatpush1.bf16.msra.mxu0 %v2933
    %3588 = vmatprep.subr.bf16.mxu0 %v2942
    %3589 = vmatpush1.bf16.msra.mxu0 %v2941
    %3590 = vmatprep.subr.bf16.mxu0 %v2950
    %3591 = vmatpush1.bf16.msra.mxu0 %v2949
    %3592 = vmatprep.subr.bf16.mxu0 %v2958
    %3593 = vmatpush1.bf16.msra.mxu0 %v2957
    %3594 = vmatprep.subr.bf16.mxu0 %v2966
    %3595 = vmatpush1.bf16.msra.mxu0 %v2965
    %3596 = vmatprep.subr.bf16.mxu0 %v2974
    %3597 = vmatpush1.bf16.msra.mxu0 %v2973
    %3598 = vmatprep.subr.bf16.mxu0 %v2982
    %3599 = vmatpush1.bf16.msra.mxu0 %v2981
    %3600 = vmatprep.subr.bf16.mxu0 %v2990
    %3601 = vmatpush1.bf16.msra.mxu0 %v2989
    %3602 = vmatprep.subr.bf16.mxu0 %v2998
    %3603 = vmatpush1.bf16.msra.mxu0 %v2997
    %3604 = vmatprep.subr.bf16.mxu0 %v3006
    %3605 = vmatpush1.bf16.msra.mxu0 %v3005
    %3606 = vmatprep.subr.bf16.mxu0 %v3014
    %3607 = vmatpush1.bf16.msra.mxu0 %v3013
    %3608 = vmatprep.subr.bf16.mxu0 %v3022
    %3609 = vmatpush1.bf16.msra.mxu0 %v3021
    %3610 = vmatprep.subr.bf16.mxu0 %v3030
    %3611 = vmatpush1.bf16.msra.mxu0 %v3029
    %3612 = vmatprep.subr.bf16.mxu0 %v3038
    %3613 = vmatpush1.bf16.msra.mxu0 %v3037
    %3614 = vmatprep.mubr.bf16.mxu0 0
    %3615 = vmatmul.mubr.bf16.gmra.mrb[0].mxu0 0
    %v3616 = vpop.f32.mrb[0].mxu0
    %v3617 = vadd.f32 %v3576, %v3616
    %v3618 = vpop.f32.mrb[0].mxu0
    %v3619 = vadd.f32 %v3578, %v3618
    %v3620 = vpop.f32.mrb[0].mxu0
    %v3621 = vpop.f32.mrb[0].mxu0
    %3622 = vdwg.mxu0
    %v3623 = vxor.u32 %v3371, 2147483648
    %v3624 = vxor.u32 %v3373, 2147483648
    %v3625 = vmul.f32 %v3623, 1.442695
    %v3626 = vpow.pop %v3625
    %v3627 = vmul.f32 %v3624, 1.442695
    %v3628 = vpow.pop %v3627
    %v3629 = vadd.f32 %v3626, 1.0
    %v3630 = vadd.f32 %v3628, 1.0
    %v3631 = vrcp.pop %v3629
    %v3632 = vmul.f32 1.0, %v3631
    %v3633 = vrcp.pop %v3630
    %v3634 = vmul.f32 1.0, %v3633
    %v3635 = vxor.u32 %v3453, 2147483648
    %v3636 = vxor.u32 %v3455, 2147483648
    %v3637 = vmul.f32 %v3635, 1.442695
    %v3638 = vpow.pop %v3637
    %v3639 = vmul.f32 %v3636, 1.442695
    %v3640 = vpow.pop %v3639
    %v3641 = vadd.f32 %v3638, 1.0
    %v3642 = vadd.f32 %v3640, 1.0
    %v3643 = vrcp.pop %v3641
    %v3644 = vmul.f32 1.0, %v3643
    %v3645 = vrcp.pop %v3642
    %v3646 = vmul.f32 1.0, %v3645
    %v3647 = vtanh.pop %v3535
    %v3648 = vtanh.pop %v3537
    %v3649 = vxor.u32 %v3617, 2147483648
    %v3650 = vxor.u32 %v3619, 2147483648
    %v3651 = vmul.f32 %v3649, 1.442695
    %v3652 = vpow.pop %v3651
    %v3653 = vmul.f32 %v3650, 1.442695
    %v3654 = vpow.pop %v3653
    %v3655 = vadd.f32 %v3652, 1.0
    %v3656 = vadd.f32 %v3654, 1.0
    %v3657 = vrcp.pop %v3655
    %v3658 = vmul.f32 1.0, %v3657
    %v3659 = vrcp.pop %v3656
    %v3660 = vmul.f32 1.0, %v3659
    %v3661 = vmul.f32 %v3644, 0.0
    %v3662 = vmul.f32 %v3646, 0.0
    %v3663 = vmul.f32 %v3632, %v3647
    %v3664 = vmul.f32 %v3634, %v3648
    %v3665 = vadd.f32 %v3661, %v3663
    %v3666 = vadd.f32 %v3662, %v3664
    %v3667 = vtanh.pop %v3665
    %v3668 = vtanh.pop %v3666
    %v3669 = vmul.f32 %v3658, %v3667
    %v3670 = vmul.f32 %v3660, %v3668
    %s3671 = scalar_lea.vmem [#allocation2], 16
    %v3672 = vld [vmem:[%s3671] sm:$0xff]
    %v3673 = vld [vmem:[%s3671 + $0x8] sm:$0xff]
    %3674 = vmatprep.subr.bf16.mxu0 %v1466
    %3675 = vmatpush1.bf16.msra.mxu0 %v1465
    %3676 = vmatprep.subr.bf16.mxu0 %v1474
    %3677 = vmatpush1.bf16.msra.mxu0 %v1473
    %3678 = vmatprep.subr.bf16.mxu0 %v1482
    %3679 = vmatpush1.bf16.msra.mxu0 %v1481
    %3680 = vmatprep.subr.bf16.mxu0 %v1490
    %3681 = vmatpush1.bf16.msra.mxu0 %v1489
    %3682 = vmatprep.subr.bf16.mxu0 %v1498
    %3683 = vmatpush1.bf16.msra.mxu0 %v1497
    %3684 = vmatprep.subr.bf16.mxu0 %v1506
    %3685 = vmatpush1.bf16.msra.mxu0 %v1505
    %3686 = vmatprep.subr.bf16.mxu0 %v1514
    %3687 = vmatpush1.bf16.msra.mxu0 %v1513
    %3688 = vmatprep.subr.bf16.mxu0 %v1522
    %3689 = vmatpush1.bf16.msra.mxu0 %v1521
    %3690 = vmatprep.subr.bf16.mxu0 %v1530
    %3691 = vmatpush1.bf16.msra.mxu0 %v1529
    %3692 = vmatprep.subr.bf16.mxu0 %v1538
    %3693 = vmatpush1.bf16.msra.mxu0 %v1537
    %3694 = vmatprep.subr.bf16.mxu0 %v1546
    %3695 = vmatpush1.bf16.msra.mxu0 %v1545
    %3696 = vmatprep.subr.bf16.mxu0 %v1554
    %3697 = vmatpush1.bf16.msra.mxu0 %v1553
    %3698 = vmatprep.subr.bf16.mxu0 %v1562
    %3699 = vmatpush1.bf16.msra.mxu0 %v1561
    %3700 = vmatprep.subr.bf16.mxu0 %v1570
    %3701 = vmatpush1.bf16.msra.mxu0 %v1569
    %3702 = vmatprep.subr.bf16.mxu0 %v1578
    %3703 = vmatpush1.bf16.msra.mxu0 %v1577
    %3704 = vmatprep.subr.bf16.mxu0 %v1586
    %3705 = vmatpush1.bf16.msra.mxu0 %v1585
    %3706 = vmatprep.mubr.bf16.mxu0 %v1973
    %3707 = vmatmul.mubr.bf16.gmra.mrb[0].mxu0 %v1972
    %v3708 = vpop.f32.mrb[0].mxu0
    %v3709 = vadd.f32 0.0, %v3708
    %v3710 = vpop.f32.mrb[0].mxu0
    %v3711 = vadd.f32 0.0, %v3710
    %v3712 = vpop.f32.mrb[0].mxu0
    %v3713 = vpop.f32.mrb[0].mxu0
    %3714 = vdwg.mxu0
    %3715 = vmatprep.subr.bf16.mxu0 %v1468
    %3716 = vmatpush1.bf16.msra.mxu0 %v1467
    %3717 = vmatprep.subr.bf16.mxu0 %v1476
    %3718 = vmatpush1.bf16.msra.mxu0 %v1475
    %3719 = vmatprep.subr.bf16.mxu0 %v1484
    %3720 = vmatpush1.bf16.msra.mxu0 %v1483
    %3721 = vmatprep.subr.bf16.mxu0 %v1492
    %3722 = vmatpush1.bf16.msra.mxu0 %v1491
    %3723 = vmatprep.subr.bf16.mxu0 %v1500
    %3724 = vmatpush1.bf16.msra.mxu0 %v1499
    %3725 = vmatprep.subr.bf16.mxu0 %v1508
    %3726 = vmatpush1.bf16.msra.mxu0 %v1507
    %3727 = vmatprep.subr.bf16.mxu0 %v1516
    %3728 = vmatpush1.bf16.msra.mxu0 %v1515
    %3729 = vmatprep.subr.bf16.mxu0 %v1524
    %3730 = vmatpush1.bf16.msra.mxu0 %v1523
    %3731 = vmatprep.subr.bf16.mxu0 %v1532
    %3732 = vmatpush1.bf16.msra.mxu0 %v1531
    %3733 = vmatprep.subr.bf16.mxu0 %v1540
    %3734 = vmatpush1.bf16.msra.mxu0 %v1539
    %3735 = vmatprep.subr.bf16.mxu0 %v1548
    %3736 = vmatpush1.bf16.msra.mxu0 %v1547
    %3737 = vmatprep.subr.bf16.mxu0 %v1556
    %3738 = vmatpush1.bf16.msra.mxu0 %v1555
    %3739 = vmatprep.subr.bf16.mxu0 %v1564
    %3740 = vmatpush1.bf16.msra.mxu0 %v1563
    %3741 = vmatprep.subr.bf16.mxu0 %v1572
    %3742 = vmatpush1.bf16.msra.mxu0 %v1571
    %3743 = vmatprep.subr.bf16.mxu0 %v1580
    %3744 = vmatpush1.bf16.msra.mxu0 %v1579
    %3745 = vmatprep.subr.bf16.mxu0 %v1588
    %3746 = vmatpush1.bf16.msra.mxu0 %v1587
    %3747 = vmatprep.mubr.bf16.mxu0 %v1973
    %3748 = vmatmul.mubr.bf16.gmra.mrb[0].mxu0 %v1972
    %v3749 = vpop.f32.mrb[0].mxu0
    %v3750 = vadd.f32 0.0, %v3749
    %v3751 = vpop.f32.mrb[0].mxu0
    %v3752 = vadd.f32 0.0, %v3751
    %v3753 = vpop.f32.mrb[0].mxu0
    %v3754 = vpop.f32.mrb[0].mxu0
    %3755 = vdwg.mxu0
    %3756 = vmatprep.subr.bf16.mxu0 %v1470
    %3757 = vmatpush1.bf16.msra.mxu0 %v1469
    %3758 = vmatprep.subr.bf16.mxu0 %v1478
    %3759 = vmatpush1.bf16.msra.mxu0 %v1477
    %3760 = vmatprep.subr.bf16.mxu0 %v1486
    %3761 = vmatpush1.bf16.msra.mxu0 %v1485
    %3762 = vmatprep.subr.bf16.mxu0 %v1494
    %3763 = vmatpush1.bf16.msra.mxu0 %v1493
    %3764 = vmatprep.subr.bf16.mxu0 %v1502
    %3765 = vmatpush1.bf16.msra.mxu0 %v1501
    %3766 = vmatprep.subr.bf16.mxu0 %v1510
    %3767 = vmatpush1.bf16.msra.mxu0 %v1509
    %3768 = vmatprep.subr.bf16.mxu0 %v1518
    %3769 = vmatpush1.bf16.msra.mxu0 %v1517
    %3770 = vmatprep.subr.bf16.mxu0 %v1526
    %3771 = vmatpush1.bf16.msra.mxu0 %v1525
    %3772 = vmatprep.subr.bf16.mxu0 %v1534
    %3773 = vmatpush1.bf16.msra.mxu0 %v1533
    %3774 = vmatprep.subr.bf16.mxu0 %v1542
    %3775 = vmatpush1.bf16.msra.mxu0 %v1541
    %3776 = vmatprep.subr.bf16.mxu0 %v1550
    %3777 = vmatpush1.bf16.msra.mxu0 %v1549
    %3778 = vmatprep.subr.bf16.mxu0 %v1558
    %3779 = vmatpush1.bf16.msra.mxu0 %v1557
    %3780 = vmatprep.subr.bf16.mxu0 %v1566
    %3781 = vmatpush1.bf16.msra.mxu0 %v1565
    %3782 = vmatprep.subr.bf16.mxu0 %v1574
    %3783 = vmatpush1.bf16.msra.mxu0 %v1573
    %3784 = vmatprep.subr.bf16.mxu0 %v1582
    %3785 = vmatpush1.bf16.msra.mxu0 %v1581
    %3786 = vmatprep.subr.bf16.mxu0 %v1590
    %3787 = vmatpush1.bf16.msra.mxu0 %v1589
    %3788 = vmatprep.mubr.bf16.mxu0 %v1973
    %3789 = vmatmul.mubr.bf16.gmra.mrb[0].mxu0 %v1972
    %v3790 = vpop.f32.mrb[0].mxu0
    %v3791 = vadd.f32 0.0, %v3790
    %v3792 = vpop.f32.mrb[0].mxu0
    %v3793 = vadd.f32 0.0, %v3792
    %v3794 = vpop.f32.mrb[0].mxu0
    %v3795 = vpop.f32.mrb[0].mxu0
    %3796 = vdwg.mxu0
    %3797 = vmatprep.subr.bf16.mxu0 %v1472
    %3798 = vmatpush1.bf16.msra.mxu0 %v1471
    %3799 = vmatprep.subr.bf16.mxu0 %v1480
    %3800 = vmatpush1.bf16.msra.mxu0 %v1479
    %3801 = vmatprep.subr.bf16.mxu0 %v1488
    %3802 = vmatpush1.bf16.msra.mxu0 %v1487
    %3803 = vmatprep.subr.bf16.mxu0 %v1496
    %3804 = vmatpush1.bf16.msra.mxu0 %v1495
    %3805 = vmatprep.subr.bf16.mxu0 %v1504
    %3806 = vmatpush1.bf16.msra.mxu0 %v1503
    %3807 = vmatprep.subr.bf16.mxu0 %v1512
    %3808 = vmatpush1.bf16.msra.mxu0 %v1511
    %3809 = vmatprep.subr.bf16.mxu0 %v1520
    %3810 = vmatpush1.bf16.msra.mxu0 %v1519
    %3811 = vmatprep.subr.bf16.mxu0 %v1528
    %3812 = vmatpush1.bf16.msra.mxu0 %v1527
    %3813 = vmatprep.subr.bf16.mxu0 %v1536
    %3814 = vmatpush1.bf16.msra.mxu0 %v1535
    %3815 = vmatprep.subr.bf16.mxu0 %v1544
    %3816 = vmatpush1.bf16.msra.mxu0 %v1543
    %3817 = vmatprep.subr.bf16.mxu0 %v1552
    %3818 = vmatpush1.bf16.msra.mxu0 %v1551
    %3819 = vmatprep.subr.bf16.mxu0 %v1560
    %3820 = vmatpush1.bf16.msra.mxu0 %v1559
    %3821 = vmatprep.subr.bf16.mxu0 %v1568
    %3822 = vmatpush1.bf16.msra.mxu0 %v1567
    %3823 = vmatprep.subr.bf16.mxu0 %v1576
    %3824 = vmatpush1.bf16.msra.mxu0 %v1575
    %3825 = vmatprep.subr.bf16.mxu0 %v1584
    %3826 = vmatpush1.bf16.msra.mxu0 %v1583
    %3827 = vmatprep.subr.bf16.mxu0 %v1592
    %3828 = vmatpush1.bf16.msra.mxu0 %v1591
    %3829 = vmatprep.mubr.bf16.mxu0 %v1973
    %3830 = vmatmul.mubr.bf16.gmra.mrb[0].mxu0 %v1972
    %v3831 = vpop.f32.mrb[0].mxu0
    %v3832 = vadd.f32 0.0, %v3831
    %v3833 = vpop.f32.mrb[0].mxu0
    %v3834 = vadd.f32 0.0, %v3833
    %v3835 = vpop.f32.mrb[0].mxu0
    %v3836 = vpop.f32.mrb[0].mxu0
    %3837 = vdwg.mxu0
    %v3846 = vcombine.low %v3709, %v3711
    %v3847 = vcombine.low %v3750, %v3752
    %v3849 = vunpack.c.l.s4 1983009808
    %v3850 = vunpack.c.0.s8 %v3849
    %v3851 = vlaneseq
    %v3852 = vshrl.u32 %v3851, 7
    %v3853 = vsub.s32 %v3850, %v3852
    %v3854 = vrot.slane %v3846, %v3853
    %v3856 = vunpack.c.l.s4 1983009808
    %v3857 = vunpack.c.0.s8 %v3856
    %v3858 = vlaneseq
    %v3859 = vshrl.u32 %v3858, 7
    %v3860 = vsub.s32 %v3857, %v3859
    %v3861 = vrot.slane %v3847, %v3860
    %v3862 = vcombine.low %v3854, %v3861
    %v3863 = vcombine.low %v3791, %v3793
    %v3864 = vcombine.low %v3832, %v3834
    %v3866 = vunpack.c.l.s4 1983009808
    %v3867 = vunpack.c.0.s8 %v3866
    %v3868 = vlaneseq
    %v3869 = vshrl.u32 %v3868, 7
    %v3870 = vsub.s32 %v3867, %v3869
    %v3871 = vrot.slane %v3863, %v3870
    %v3873 = vunpack.c.l.s4 1983009808
    %v3874 = vunpack.c.0.s8 %v3873
    %v3875 = vlaneseq
    %v3876 = vshrl.u32 %v3875, 7
    %v3877 = vsub.s32 %v3874, %v3876
    %v3878 = vrot.slane %v3864, %v3877
    %v3879 = vcombine.low %v3871, %v3878
    %v3882 = vadd.f32 %v3672, %v3862
    %v3883 = vadd.f32 %v3673, %v3879
    %v3884 = vxor.u32 %v3882, 2147483648
    %v3885 = vmul.f32 %v3884, 1.442695
    %v3886 = vpow.pop %v3885
    %v3887 = vadd.f32 %v3886, 1.0
    %v3888 = vrcp.pop %v3887
    %v3889 = vmul.f32 1.0, %v3888
    %v3891 = vrot.slane %v3882, 4
    %v3893 = vxor.u32 %v3891, 2147483648
    %v3894 = vmul.f32 %v3893, 1.442695
    %v3895 = vpow.pop %v3894
    %v3896 = vadd.f32 %v3895, 1.0
    %v3897 = vrcp.pop %v3896
    %v3898 = vmul.f32 1.0, %v3897
    %v3899 = vtanh.pop %v3883
    %v3901 = vrot.slane %v3883, 4
    %v3903 = vxor.u32 %v3901, 2147483648
    %v3904 = vmul.f32 %v3903, 1.442695
    %v3905 = vpow.pop %v3904
    %v3906 = vadd.f32 %v3905, 1.0
    %v3907 = vrcp.pop %v3906
    %v3908 = vmul.f32 1.0, %v3907
    %v3909 = vmul.f32 %v3898, %v1958
    %v3910 = vmul.f32 %v3889, %v3899
    %v3911 = vadd.f32 %v3909, %v3910
    %v3912 = vtanh.pop %v3911
    %v3913 = vmul.f32 %v3908, %v3912
    %v3916 = vunpack.c.l.s4 1983009808
    %v3917 = vunpack.c.0.s8 %v3916
    %v3918 = vlaneseq
    %v3919 = vshrl.u32 %v3918, 7
    %v3920 = vsub.s32 %v3917, %v3919
    %v3921 = vrot.slane %v3913, %v3920
    %v3922 = vcombine.high %v3921, %v3921
    %v3925 = vpack.c.bf16 %v3921, %v3921
    %v3926 = vpack.c.bf16 %v3922, %v3922
    %v3927 = vpack.c.bf16 %v3669, %v3669
    %v3928 = vpack.c.bf16 %v3670, %v3670
    %3929 = vmatprep.subr.bf16.mxu0 %v2784
    %3930 = vmatpush1.bf16.msra.mxu0 %v2783
    %3931 = vmatprep.subr.bf16.mxu0 %v2792
    %3932 = vmatpush1.bf16.msra.mxu0 %v2791
    %3933 = vmatprep.subr.bf16.mxu0 %v2800
    %3934 = vmatpush1.bf16.msra.mxu0 %v2799
    %3935 = vmatprep.subr.bf16.mxu0 %v2808
    %3936 = vmatpush1.bf16.msra.mxu0 %v2807
    %3937 = vmatprep.subr.bf16.mxu0 %v2816
    %3938 = vmatpush1.bf16.msra.mxu0 %v2815
    %3939 = vmatprep.subr.bf16.mxu0 %v2824
    %3940 = vmatpush1.bf16.msra.mxu0 %v2823
    %3941 = vmatprep.subr.bf16.mxu0 %v2832
    %3942 = vmatpush1.bf16.msra.mxu0 %v2831
    %3943 = vmatprep.subr.bf16.mxu0 %v2840
    %3944 = vmatpush1.bf16.msra.mxu0 %v2839
    %3945 = vmatprep.subr.bf16.mxu0 %v2848
    %3946 = vmatpush1.bf16.msra.mxu0 %v2847
    %3947 = vmatprep.subr.bf16.mxu0 %v2856
    %3948 = vmatpush1.bf16.msra.mxu0 %v2855
    %3949 = vmatprep.subr.bf16.mxu0 %v2864
    %3950 = vmatpush1.bf16.msra.mxu0 %v2863
    %3951 = vmatprep.subr.bf16.mxu0 %v2872
    %3952 = vmatpush1.bf16.msra.mxu0 %v2871
    %3953 = vmatprep.subr.bf16.mxu0 %v2880
    %3954 = vmatpush1.bf16.msra.mxu0 %v2879
    %3955 = vmatprep.subr.bf16.mxu0 %v2888
    %3956 = vmatpush1.bf16.msra.mxu0 %v2887
    %3957 = vmatprep.subr.bf16.mxu0 %v2896
    %3958 = vmatpush1.bf16.msra.mxu0 %v2895
    %3959 = vmatprep.subr.bf16.mxu0 %v2904
    %3960 = vmatpush1.bf16.msra.mxu0 %v2903
    %3961 = vmatprep.mubr.bf16.mxu0 %v3926
    %3962 = vmatmul.mubr.bf16.gmra.mrb[0].mxu0 %v3925
    %v3963 = vpop.f32.mrb[0].mxu0
    %v3964 = vadd.f32 %v1978, %v3963
    %v3965 = vpop.f32.mrb[0].mxu0
    %v3966 = vadd.f32 %v1982, %v3965
    %v3967 = vpop.f32.mrb[0].mxu0
    %v3968 = vpop.f32.mrb[0].mxu0
    %3969 = vdwg.mxu0
    %3970 = vmatprep.subr.bf16.mxu0 %v2912
    %3971 = vmatpush1.bf16.msra.mxu0 %v2911
    %3972 = vmatprep.subr.bf16.mxu0 %v2920
    %3973 = vmatpush1.bf16.msra.mxu0 %v2919
    %3974 = vmatprep.subr.bf16.mxu0 %v2928
    %3975 = vmatpush1.bf16.msra.mxu0 %v2927
    %3976 = vmatprep.subr.bf16.mxu0 %v2936
    %3977 = vmatpush1.bf16.msra.mxu0 %v2935
    %3978 = vmatprep.subr.bf16.mxu0 %v2944
    %3979 = vmatpush1.bf16.msra.mxu0 %v2943
    %3980 = vmatprep.subr.bf16.mxu0 %v2952
    %3981 = vmatpush1.bf16.msra.mxu0 %v2951
    %3982 = vmatprep.subr.bf16.mxu0 %v2960
    %3983 = vmatpush1.bf16.msra.mxu0 %v2959
    %3984 = vmatprep.subr.bf16.mxu0 %v2968
    %3985 = vmatpush1.bf16.msra.mxu0 %v2967
    %3986 = vmatprep.subr.bf16.mxu0 %v2976
    %3987 = vmatpush1.bf16.msra.mxu0 %v2975
    %3988 = vmatprep.subr.bf16.mxu0 %v2984
    %3989 = vmatpush1.bf16.msra.mxu0 %v2983
    %3990 = vmatprep.subr.bf16.mxu0 %v2992
    %3991 = vmatpush1.bf16.msra.mxu0 %v2991
    %3992 = vmatprep.subr.bf16.mxu0 %v3000
    %3993 = vmatpush1.bf16.msra.mxu0 %v2999
    %3994 = vmatprep.subr.bf16.mxu0 %v3008
    %3995 = vmatpush1.bf16.msra.mxu0 %v3007
    %3996 = vmatprep.subr.bf16.mxu0 %v3016
    %3997 = vmatpush1.bf16.msra.mxu0 %v3015
    %3998 = vmatprep.subr.bf16.mxu0 %v3024
    %3999 = vmatpush1.bf16.msra.mxu0 %v3023
    %4000 = vmatprep.subr.bf16.mxu0 %v3032
    %4001 = vmatpush1.bf16.msra.mxu0 %v3031
    %4002 = vmatprep.mubr.bf16.mxu0 %v3928
    %4003 = vmatmul.mubr.bf16.gmra.mrb[0].mxu0 %v3927
    %v4004 = vpop.f32.mrb[0].mxu0
    %v4005 = vadd.f32 %v3964, %v4004
    %v4006 = vpop.f32.mrb[0].mxu0
    %v4007 = vadd.f32 %v3966, %v4006
    %v4008 = vpop.f32.mrb[0].mxu0
    %v4009 = vpop.f32.mrb[0].mxu0
    %4010 = vdwg.mxu0
    %4011 = vmatprep.subr.bf16.mxu0 %v2786
    %4012 = vmatpush1.bf16.msra.mxu0 %v2785
    %4013 = vmatprep.subr.bf16.mxu0 %v2794
    %4014 = vmatpush1.bf16.msra.mxu0 %v2793
    %4015 = vmatprep.subr.bf16.mxu0 %v2802
    %4016 = vmatpush1.bf16.msra.mxu0 %v2801
    %4017 = vmatprep.subr.bf16.mxu0 %v2810
    %4018 = vmatpush1.bf16.msra.mxu0 %v2809
    %4019 = vmatprep.subr.bf16.mxu0 %v2818
    %4020 = vmatpush1.bf16.msra.mxu0 %v2817
    %4021 = vmatprep.subr.bf16.mxu0 %v2826
    %4022 = vmatpush1.bf16.msra.mxu0 %v2825
    %4023 = vmatprep.subr.bf16.mxu0 %v2834
    %4024 = vmatpush1.bf16.msra.mxu0 %v2833
    %4025 = vmatprep.subr.bf16.mxu0 %v2842
    %4026 = vmatpush1.bf16.msra.mxu0 %v2841
    %4027 = vmatprep.subr.bf16.mxu0 %v2850
    %4028 = vmatpush1.bf16.msra.mxu0 %v2849
    %4029 = vmatprep.subr.bf16.mxu0 %v2858
    %4030 = vmatpush1.bf16.msra.mxu0 %v2857
    %4031 = vmatprep.subr.bf16.mxu0 %v2866
    %4032 = vmatpush1.bf16.msra.mxu0 %v2865
    %4033 = vmatprep.subr.bf16.mxu0 %v2874
    %4034 = vmatpush1.bf16.msra.mxu0 %v2873
    %4035 = vmatprep.subr.bf16.mxu0 %v2882
    %4036 = vmatpush1.bf16.msra.mxu0 %v2881
    %4037 = vmatprep.subr.bf16.mxu0 %v2890
    %4038 = vmatpush1.bf16.msra.mxu0 %v2889
    %4039 = vmatprep.subr.bf16.mxu0 %v2898
    %4040 = vmatpush1.bf16.msra.mxu0 %v2897
    %4041 = vmatprep.subr.bf16.mxu0 %v2906
    %4042 = vmatpush1.bf16.msra.mxu0 %v2905
    %4043 = vmatprep.mubr.bf16.mxu0 %v3926
    %4044 = vmatmul.mubr.bf16.gmra.mrb[0].mxu0 %v3925
    %v4045 = vpop.f32.mrb[0].mxu0
    %v4046 = vadd.f32 %v1986, %v4045
    %v4047 = vpop.f32.mrb[0].mxu0
    %v4048 = vadd.f32 %v1990, %v4047
    %v4049 = vpop.f32.mrb[0].mxu0
    %v4050 = vpop.f32.mrb[0].mxu0
    %4051 = vdwg.mxu0
    %4052 = vmatprep.subr.bf16.mxu0 %v2914
    %4053 = vmatpush1.bf16.msra.mxu0 %v2913
    %4054 = vmatprep.subr.bf16.mxu0 %v2922
    %4055 = vmatpush1.bf16.msra.mxu0 %v2921
    %4056 = vmatprep.subr.bf16.mxu0 %v2930
    %4057 = vmatpush1.bf16.msra.mxu0 %v2929
    %4058 = vmatprep.subr.bf16.mxu0 %v2938
    %4059 = vmatpush1.bf16.msra.mxu0 %v2937
    %4060 = vmatprep.subr.bf16.mxu0 %v2946
    %4061 = vmatpush1.bf16.msra.mxu0 %v2945
    %4062 = vmatprep.subr.bf16.mxu0 %v2954
    %4063 = vmatpush1.bf16.msra.mxu0 %v2953
    %4064 = vmatprep.subr.bf16.mxu0 %v2962
    %4065 = vmatpush1.bf16.msra.mxu0 %v2961
    %4066 = vmatprep.subr.bf16.mxu0 %v2970
    %4067 = vmatpush1.bf16.msra.mxu0 %v2969
    %4068 = vmatprep.subr.bf16.mxu0 %v2978
    %4069 = vmatpush1.bf16.msra.mxu0 %v2977
    %4070 = vmatprep.subr.bf16.mxu0 %v2986
    %4071 = vmatpush1.bf16.msra.mxu0 %v2985
    %4072 = vmatprep.subr.bf16.mxu0 %v2994
    %4073 = vmatpush1.bf16.msra.mxu0 %v2993
    %4074 = vmatprep.subr.bf16.mxu0 %v3002
    %4075 = vmatpush1.bf16.msra.mxu0 %v3001
    %4076 = vmatprep.subr.bf16.mxu0 %v3010
    %4077 = vmatpush1.bf16.msra.mxu0 %v3009
    %4078 = vmatprep.subr.bf16.mxu0 %v3018
    %4079 = vmatpush1.bf16.msra.mxu0 %v3017
    %4080 = vmatprep.subr.bf16.mxu0 %v3026
    %4081 = vmatpush1.bf16.msra.mxu0 %v3025
    %4082 = vmatprep.subr.bf16.mxu0 %v3034
    %4083 = vmatpush1.bf16.msra.mxu0 %v3033
    %4084 = vmatprep.mubr.bf16.mxu0 %v3928
    %4085 = vmatmul.mubr.bf16.gmra.mrb[0].mxu0 %v3927
    %v4086 = vpop.f32.mrb[0].mxu0
    %v4087 = vadd.f32 %v4046, %v4086
    %v4088 = vpop.f32.mrb[0].mxu0
    %v4089 = vadd.f32 %v4048, %v4088
    %v4090 = vpop.f32.mrb[0].mxu0
    %v4091 = vpop.f32.mrb[0].mxu0
    %4092 = vdwg.mxu0
    %4093 = vmatprep.subr.bf16.mxu0 %v2788
    %4094 = vmatpush1.bf16.msra.mxu0 %v2787
    %4095 = vmatprep.subr.bf16.mxu0 %v2796
    %4096 = vmatpush1.bf16.msra.mxu0 %v2795
    %4097 = vmatprep.subr.bf16.mxu0 %v2804
    %4098 = vmatpush1.bf16.msra.mxu0 %v2803
    %4099 = vmatprep.subr.bf16.mxu0 %v2812
    %4100 = vmatpush1.bf16.msra.mxu0 %v2811
    %4101 = vmatprep.subr.bf16.mxu0 %v2820
    %4102 = vmatpush1.bf16.msra.mxu0 %v2819
    %4103 = vmatprep.subr.bf16.mxu0 %v2828
    %4104 = vmatpush1.bf16.msra.mxu0 %v2827
    %4105 = vmatprep.subr.bf16.mxu0 %v2836
    %4106 = vmatpush1.bf16.msra.mxu0 %v2835
    %4107 = vmatprep.subr.bf16.mxu0 %v2844
    %4108 = vmatpush1.bf16.msra.mxu0 %v2843
    %4109 = vmatprep.subr.bf16.mxu0 %v2852
    %4110 = vmatpush1.bf16.msra.mxu0 %v2851
    %4111 = vmatprep.subr.bf16.mxu0 %v2860
    %4112 = vmatpush1.bf16.msra.mxu0 %v2859
    %4113 = vmatprep.subr.bf16.mxu0 %v2868
    %4114 = vmatpush1.bf16.msra.mxu0 %v2867
    %4115 = vmatprep.subr.bf16.mxu0 %v2876
    %4116 = vmatpush1.bf16.msra.mxu0 %v2875
    %4117 = vmatprep.subr.bf16.mxu0 %v2884
    %4118 = vmatpush1.bf16.msra.mxu0 %v2883
    %4119 = vmatprep.subr.bf16.mxu0 %v2892
    %4120 = vmatpush1.bf16.msra.mxu0 %v2891
    %4121 = vmatprep.subr.bf16.mxu0 %v2900
    %4122 = vmatpush1.bf16.msra.mxu0 %v2899
    %4123 = vmatprep.subr.bf16.mxu0 %v2908
    %4124 = vmatpush1.bf16.msra.mxu0 %v2907
    %4125 = vmatprep.mubr.bf16.mxu0 %v3926
    %4126 = vmatmul.mubr.bf16.gmra.mrb[0].mxu0 %v3925
    %v4127 = vpop.f32.mrb[0].mxu0
    %v4128 = vadd.f32 %v1994, %v4127
    %v4129 = vpop.f32.mrb[0].mxu0
    %v4130 = vadd.f32 %v1998, %v4129
    %v4131 = vpop.f32.mrb[0].mxu0
    %v4132 = vpop.f32.mrb[0].mxu0
    %4133 = vdwg.mxu0
    %4134 = vmatprep.subr.bf16.mxu0 %v2916
    %4135 = vmatpush1.bf16.msra.mxu0 %v2915
    %4136 = vmatprep.subr.bf16.mxu0 %v2924
    %4137 = vmatpush1.bf16.msra.mxu0 %v2923
    %4138 = vmatprep.subr.bf16.mxu0 %v2932
    %4139 = vmatpush1.bf16.msra.mxu0 %v2931
    %4140 = vmatprep.subr.bf16.mxu0 %v2940
    %4141 = vmatpush1.bf16.msra.mxu0 %v2939
    %4142 = vmatprep.subr.bf16.mxu0 %v2948
    %4143 = vmatpush1.bf16.msra.mxu0 %v2947
    %4144 = vmatprep.subr.bf16.mxu0 %v2956
    %4145 = vmatpush1.bf16.msra.mxu0 %v2955
    %4146 = vmatprep.subr.bf16.mxu0 %v2964
    %4147 = vmatpush1.bf16.msra.mxu0 %v2963
    %4148 = vmatprep.subr.bf16.mxu0 %v2972
    %4149 = vmatpush1.bf16.msra.mxu0 %v2971
    %4150 = vmatprep.subr.bf16.mxu0 %v2980
    %4151 = vmatpush1.bf16.msra.mxu0 %v2979
    %4152 = vmatprep.subr.bf16.mxu0 %v2988
    %4153 = vmatpush1.bf16.msra.mxu0 %v2987
    %4154 = vmatprep.subr.bf16.mxu0 %v2996
    %4155 = vmatpush1.bf16.msra.mxu0 %v2995
    %4156 = vmatprep.subr.bf16.mxu0 %v3004
    %4157 = vmatpush1.bf16.msra.mxu0 %v3003
    %4158 = vmatprep.subr.bf16.mxu0 %v3012
    %4159 = vmatpush1.bf16.msra.mxu0 %v3011
    %4160 = vmatprep.subr.bf16.mxu0 %v3020
    %4161 = vmatpush1.bf16.msra.mxu0 %v3019
    %4162 = vmatprep.subr.bf16.mxu0 %v3028
    %4163 = vmatpush1.bf16.msra.mxu0 %v3027
    %4164 = vmatprep.subr.bf16.mxu0 %v3036
    %4165 = vmatpush1.bf16.msra.mxu0 %v3035
    %4166 = vmatprep.mubr.bf16.mxu0 %v3928
    %4167 = vmatmul.mubr.bf16.gmra.mrb[0].mxu0 %v3927
    %v4168 = vpop.f32.mrb[0].mxu0
    %v4169 = vadd.f32 %v4128, %v4168
    %v4170 = vpop.f32.mrb[0].mxu0
    %v4171 = vadd.f32 %v4130, %v4170
    %v4172 = vpop.f32.mrb[0].mxu0
    %v4173 = vpop.f32.mrb[0].mxu0
    %4174 = vdwg.mxu0
    %4175 = vmatprep.subr.bf16.mxu0 %v2790
    %4176 = vmatpush1.bf16.msra.mxu0 %v2789
    %4177 = vmatprep.subr.bf16.mxu0 %v2798
    %4178 = vmatpush1.bf16.msra.mxu0 %v2797
    %4179 = vmatprep.subr.bf16.mxu0 %v2806
    %4180 = vmatpush1.bf16.msra.mxu0 %v2805
    %4181 = vmatprep.subr.bf16.mxu0 %v2814
    %4182 = vmatpush1.bf16.msra.mxu0 %v2813
    %4183 = vmatprep.subr.bf16.mxu0 %v2822
    %4184 = vmatpush1.bf16.msra.mxu0 %v2821
    %4185 = vmatprep.subr.bf16.mxu0 %v2830
    %4186 = vmatpush1.bf16.msra.mxu0 %v2829
    %4187 = vmatprep.subr.bf16.mxu0 %v2838
    %4188 = vmatpush1.bf16.msra.mxu0 %v2837
    %4189 = vmatprep.subr.bf16.mxu0 %v2846
    %4190 = vmatpush1.bf16.msra.mxu0 %v2845
    %4191 = vmatprep.subr.bf16.mxu0 %v2854
    %4192 = vmatpush1.bf16.msra.mxu0 %v2853
    %4193 = vmatprep.subr.bf16.mxu0 %v2862
    %4194 = vmatpush1.bf16.msra.mxu0 %v2861
    %4195 = vmatprep.subr.bf16.mxu0 %v2870
    %4196 = vmatpush1.bf16.msra.mxu0 %v2869
    %4197 = vmatprep.subr.bf16.mxu0 %v2878
    %4198 = vmatpush1.bf16.msra.mxu0 %v2877
    %4199 = vmatprep.subr.bf16.mxu0 %v2886
    %4200 = vmatpush1.bf16.msra.mxu0 %v2885
    %4201 = vmatprep.subr.bf16.mxu0 %v2894
    %4202 = vmatpush1.bf16.msra.mxu0 %v2893
    %4203 = vmatprep.subr.bf16.mxu0 %v2902
    %4204 = vmatpush1.bf16.msra.mxu0 %v2901
    %4205 = vmatprep.subr.bf16.mxu0 %v2910
    %4206 = vmatpush1.bf16.msra.mxu0 %v2909
    %4207 = vmatprep.mubr.bf16.mxu0 %v3926
    %4208 = vmatmul.mubr.bf16.gmra.mrb[0].mxu0 %v3925
    %v4209 = vpop.f32.mrb[0].mxu0
    %v4210 = vadd.f32 %v2002, %v4209
    %v4211 = vpop.f32.mrb[0].mxu0
    %v4212 = vadd.f32 %v2006, %v4211
    %v4213 = vpop.f32.mrb[0].mxu0
    %v4214 = vpop.f32.mrb[0].mxu0
    %4215 = vdwg.mxu0
    %4216 = vmatprep.subr.bf16.mxu0 %v2918
    %4217 = vmatpush1.bf16.msra.mxu0 %v2917
    %4218 = vmatprep.subr.bf16.mxu0 %v2926
    %4219 = vmatpush1.bf16.msra.mxu0 %v2925
    %4220 = vmatprep.subr.bf16.mxu0 %v2934
    %4221 = vmatpush1.bf16.msra.mxu0 %v2933
    %4222 = vmatprep.subr.bf16.mxu0 %v2942
    %4223 = vmatpush1.bf16.msra.mxu0 %v2941
    %4224 = vmatprep.subr.bf16.mxu0 %v2950
    %4225 = vmatpush1.bf16.msra.mxu0 %v2949
    %4226 = vmatprep.subr.bf16.mxu0 %v2958
    %4227 = vmatpush1.bf16.msra.mxu0 %v2957
    %4228 = vmatprep.subr.bf16.mxu0 %v2966
    %4229 = vmatpush1.bf16.msra.mxu0 %v2965
    %4230 = vmatprep.subr.bf16.mxu0 %v2974
    %4231 = vmatpush1.bf16.msra.mxu0 %v2973
    %4232 = vmatprep.subr.bf16.mxu0 %v2982
    %4233 = vmatpush1.bf16.msra.mxu0 %v2981
    %4234 = vmatprep.subr.bf16.mxu0 %v2990
    %4235 = vmatpush1.bf16.msra.mxu0 %v2989
    %4236 = vmatprep.subr.bf16.mxu0 %v2998
    %4237 = vmatpush1.bf16.msra.mxu0 %v2997
    %4238 = vmatprep.subr.bf16.mxu0 %v3006
    %4239 = vmatpush1.bf16.msra.mxu0 %v3005
    %4240 = vmatprep.subr.bf16.mxu0 %v3014
    %4241 = vmatpush1.bf16.msra.mxu0 %v3013
    %4242 = vmatprep.subr.bf16.mxu0 %v3022
    %4243 = vmatpush1.bf16.msra.mxu0 %v3021
    %4244 = vmatprep.subr.bf16.mxu0 %v3030
    %4245 = vmatpush1.bf16.msra.mxu0 %v3029
    %4246 = vmatprep.subr.bf16.mxu0 %v3038
    %4247 = vmatpush1.bf16.msra.mxu0 %v3037
    %4248 = vmatprep.mubr.bf16.mxu0 %v3928
    %4249 = vmatmul.mubr.bf16.gmra.mrb[0].mxu0 %v3927
    %v4250 = vpop.f32.mrb[0].mxu0
    %v4251 = vadd.f32 %v4210, %v4250
    %v4252 = vpop.f32.mrb[0].mxu0
    %v4253 = vadd.f32 %v4212, %v4252
    %v4254 = vpop.f32.mrb[0].mxu0
    %v4255 = vpop.f32.mrb[0].mxu0
    %4256 = vdwg.mxu0
    %v4257 = vxor.u32 %v4005, 2147483648
    %v4258 = vxor.u32 %v4007, 2147483648
    %v4259 = vmul.f32 %v4257, 1.442695
    %v4260 = vpow.pop %v4259
    %v4261 = vmul.f32 %v4258, 1.442695
    %v4262 = vpow.pop %v4261
    %v4263 = vadd.f32 %v4260, 1.0
    %v4264 = vadd.f32 %v4262, 1.0
    %v4265 = vrcp.pop %v4263
    %v4266 = vmul.f32 1.0, %v4265
    %v4267 = vrcp.pop %v4264
    %v4268 = vmul.f32 1.0, %v4267
    %v4269 = vxor.u32 %v4087, 2147483648
    %v4270 = vxor.u32 %v4089, 2147483648
    %v4271 = vmul.f32 %v4269, 1.442695
    %v4272 = vpow.pop %v4271
    %v4273 = vmul.f32 %v4270, 1.442695
    %v4274 = vpow.pop %v4273
    %v4275 = vadd.f32 %v4272, 1.0
    %v4276 = vadd.f32 %v4274, 1.0
    %v4277 = vrcp.pop %v4275
    %v4278 = vmul.f32 1.0, %v4277
    %v4279 = vrcp.pop %v4276
    %v4280 = vmul.f32 1.0, %v4279
    %v4281 = vtanh.pop %v4169
    %v4282 = vtanh.pop %v4171
    %v4283 = vxor.u32 %v4251, 2147483648
    %v4284 = vxor.u32 %v4253, 2147483648
    %v4285 = vmul.f32 %v4283, 1.442695
    %v4286 = vpow.pop %v4285
    %v4287 = vmul.f32 %v4284, 1.442695
    %v4288 = vpow.pop %v4287
    %v4289 = vadd.f32 %v4286, 1.0
    %v4290 = vadd.f32 %v4288, 1.0
    %v4291 = vrcp.pop %v4289
    %v4292 = vmul.f32 1.0, %v4291
    %v4293 = vrcp.pop %v4290
    %v4294 = vmul.f32 1.0, %v4293
    %v4295 = vmul.f32 %v4278, %v3665
    %v4296 = vmul.f32 %v4280, %v3666
    %v4297 = vmul.f32 %v4266, %v4281
    %v4298 = vmul.f32 %v4268, %v4282
    %v4299 = vadd.f32 %v4295, %v4297
    %v4300 = vadd.f32 %v4296, %v4298
    %v4301 = vtanh.pop %v4299
    %v4302 = vtanh.pop %v4300
    %v4303 = vmul.f32 %v4292, %v4301
    %v4304 = vmul.f32 %v4294, %v4302
    %s4305 = scalar_lea.vmem [#allocation2], 32
    %v4306 = vld [vmem:[%s4305] sm:$0xff]
    %v4307 = vld [vmem:[%s4305 + $0x8] sm:$0xff]
    %4308 = vmatprep.subr.bf16.mxu0 %v1466
    %4309 = vmatpush1.bf16.msra.mxu0 %v1465
    %4310 = vmatprep.subr.bf16.mxu0 %v1474
    %4311 = vmatpush1.bf16.msra.mxu0 %v1473
    %4312 = vmatprep.subr.bf16.mxu0 %v1482
    %4313 = vmatpush1.bf16.msra.mxu0 %v1481
    %4314 = vmatprep.subr.bf16.mxu0 %v1490
    %4315 = vmatpush1.bf16.msra.mxu0 %v1489
    %4316 = vmatprep.subr.bf16.mxu0 %v1498
    %4317 = vmatpush1.bf16.msra.mxu0 %v1497
    %4318 = vmatprep.subr.bf16.mxu0 %v1506
    %4319 = vmatpush1.bf16.msra.mxu0 %v1505
    %4320 = vmatprep.subr.bf16.mxu0 %v1514
    %4321 = vmatpush1.bf16.msra.mxu0 %v1513
    %4322 = vmatprep.subr.bf16.mxu0 %v1522
    %4323 = vmatpush1.bf16.msra.mxu0 %v1521
    %4324 = vmatprep.subr.bf16.mxu0 %v1530
    %4325 = vmatpush1.bf16.msra.mxu0 %v1529
    %4326 = vmatprep.subr.bf16.mxu0 %v1538
    %4327 = vmatpush1.bf16.msra.mxu0 %v1537
    %4328 = vmatprep.subr.bf16.mxu0 %v1546
    %4329 = vmatpush1.bf16.msra.mxu0 %v1545
    %4330 = vmatprep.subr.bf16.mxu0 %v1554
    %4331 = vmatpush1.bf16.msra.mxu0 %v1553
    %4332 = vmatprep.subr.bf16.mxu0 %v1562
    %4333 = vmatpush1.bf16.msra.mxu0 %v1561
    %4334 = vmatprep.subr.bf16.mxu0 %v1570
    %4335 = vmatpush1.bf16.msra.mxu0 %v1569
    %4336 = vmatprep.subr.bf16.mxu0 %v1578
    %4337 = vmatpush1.bf16.msra.mxu0 %v1577
    %4338 = vmatprep.subr.bf16.mxu0 %v1586
    %4339 = vmatpush1.bf16.msra.mxu0 %v1585
    %4340 = vmatprep.mubr.bf16.mxu0 %v3926
    %4341 = vmatmul.mubr.bf16.gmra.mrb[0].mxu0 %v3925
    %v4342 = vpop.f32.mrb[0].mxu0
    %v4343 = vadd.f32 0.0, %v4342
    %v4344 = vpop.f32.mrb[0].mxu0
    %v4345 = vadd.f32 0.0, %v4344
    %v4346 = vpop.f32.mrb[0].mxu0
    %v4347 = vpop.f32.mrb[0].mxu0
    %4348 = vdwg.mxu0
    %4349 = vmatprep.subr.bf16.mxu0 %v1468
    %4350 = vmatpush1.bf16.msra.mxu0 %v1467
    %4351 = vmatprep.subr.bf16.mxu0 %v1476
    %4352 = vmatpush1.bf16.msra.mxu0 %v1475
    %4353 = vmatprep.subr.bf16.mxu0 %v1484
    %4354 = vmatpush1.bf16.msra.mxu0 %v1483
    %4355 = vmatprep.subr.bf16.mxu0 %v1492
    %4356 = vmatpush1.bf16.msra.mxu0 %v1491
    %4357 = vmatprep.subr.bf16.mxu0 %v1500
    %4358 = vmatpush1.bf16.msra.mxu0 %v1499
    %4359 = vmatprep.subr.bf16.mxu0 %v1508
    %4360 = vmatpush1.bf16.msra.mxu0 %v1507
    %4361 = vmatprep.subr.bf16.mxu0 %v1516
    %4362 = vmatpush1.bf16.msra.mxu0 %v1515
    %4363 = vmatprep.subr.bf16.mxu0 %v1524
    %4364 = vmatpush1.bf16.msra.mxu0 %v1523
    %4365 = vmatprep.subr.bf16.mxu0 %v1532
    %4366 = vmatpush1.bf16.msra.mxu0 %v1531
    %4367 = vmatprep.subr.bf16.mxu0 %v1540
    %4368 = vmatpush1.bf16.msra.mxu0 %v1539
    %4369 = vmatprep.subr.bf16.mxu0 %v1548
    %4370 = vmatpush1.bf16.msra.mxu0 %v1547
    %4371 = vmatprep.subr.bf16.mxu0 %v1556
    %4372 = vmatpush1.bf16.msra.mxu0 %v1555
    %4373 = vmatprep.subr.bf16.mxu0 %v1564
    %4374 = vmatpush1.bf16.msra.mxu0 %v1563
    %4375 = vmatprep.subr.bf16.mxu0 %v1572
    %4376 = vmatpush1.bf16.msra.mxu0 %v1571
    %4377 = vmatprep.subr.bf16.mxu0 %v1580
    %4378 = vmatpush1.bf16.msra.mxu0 %v1579
    %4379 = vmatprep.subr.bf16.mxu0 %v1588
    %4380 = vmatpush1.bf16.msra.mxu0 %v1587
    %4381 = vmatprep.mubr.bf16.mxu0 %v3926
    %4382 = vmatmul.mubr.bf16.gmra.mrb[0].mxu0 %v3925
    %v4383 = vpop.f32.mrb[0].mxu0
    %v4384 = vadd.f32 0.0, %v4383
    %v4385 = vpop.f32.mrb[0].mxu0
    %v4386 = vadd.f32 0.0, %v4385
    %v4387 = vpop.f32.mrb[0].mxu0
    %v4388 = vpop.f32.mrb[0].mxu0
    %4389 = vdwg.mxu0
    %4390 = vmatprep.subr.bf16.mxu0 %v1470
    %4391 = vmatpush1.bf16.msra.mxu0 %v1469
    %4392 = vmatprep.subr.bf16.mxu0 %v1478
    %4393 = vmatpush1.bf16.msra.mxu0 %v1477
    %4394 = vmatprep.subr.bf16.mxu0 %v1486
    %4395 = vmatpush1.bf16.msra.mxu0 %v1485
    %4396 = vmatprep.subr.bf16.mxu0 %v1494
    %4397 = vmatpush1.bf16.msra.mxu0 %v1493
    %4398 = vmatprep.subr.bf16.mxu0 %v1502
    %4399 = vmatpush1.bf16.msra.mxu0 %v1501
    %4400 = vmatprep.subr.bf16.mxu0 %v1510
    %4401 = vmatpush1.bf16.msra.mxu0 %v1509
    %4402 = vmatprep.subr.bf16.mxu0 %v1518
    %4403 = vmatpush1.bf16.msra.mxu0 %v1517
    %4404 = vmatprep.subr.bf16.mxu0 %v1526
    %4405 = vmatpush1.bf16.msra.mxu0 %v1525
    %4406 = vmatprep.subr.bf16.mxu0 %v1534
    %4407 = vmatpush1.bf16.msra.mxu0 %v1533
    %4408 = vmatprep.subr.bf16.mxu0 %v1542
    %4409 = vmatpush1.bf16.msra.mxu0 %v1541
    %4410 = vmatprep.subr.bf16.mxu0 %v1550
    %4411 = vmatpush1.bf16.msra.mxu0 %v1549
    %4412 = vmatprep.subr.bf16.mxu0 %v1558
    %4413 = vmatpush1.bf16.msra.mxu0 %v1557
    %4414 = vmatprep.subr.bf16.mxu0 %v1566
    %4415 = vmatpush1.bf16.msra.mxu0 %v1565
    %4416 = vmatprep.subr.bf16.mxu0 %v1574
    %4417 = vmatpush1.bf16.msra.mxu0 %v1573
    %4418 = vmatprep.subr.bf16.mxu0 %v1582
    %4419 = vmatpush1.bf16.msra.mxu0 %v1581
    %4420 = vmatprep.subr.bf16.mxu0 %v1590
    %4421 = vmatpush1.bf16.msra.mxu0 %v1589
    %4422 = vmatprep.mubr.bf16.mxu0 %v3926
    %4423 = vmatmul.mubr.bf16.gmra.mrb[0].mxu0 %v3925
    %v4424 = vpop.f32.mrb[0].mxu0
    %v4425 = vadd.f32 0.0, %v4424
    %v4426 = vpop.f32.mrb[0].mxu0
    %v4427 = vadd.f32 0.0, %v4426
    %v4428 = vpop.f32.mrb[0].mxu0
    %v4429 = vpop.f32.mrb[0].mxu0
    %4430 = vdwg.mxu0
    %4431 = vmatprep.subr.bf16.mxu0 %v1472
    %4432 = vmatpush1.bf16.msra.mxu0 %v1471
    %4433 = vmatprep.subr.bf16.mxu0 %v1480
    %4434 = vmatpush1.bf16.msra.mxu0 %v1479
    %4435 = vmatprep.subr.bf16.mxu0 %v1488
    %4436 = vmatpush1.bf16.msra.mxu0 %v1487
    %4437 = vmatprep.subr.bf16.mxu0 %v1496
    %4438 = vmatpush1.bf16.msra.mxu0 %v1495
    %4439 = vmatprep.subr.bf16.mxu0 %v1504
    %4440 = vmatpush1.bf16.msra.mxu0 %v1503
    %4441 = vmatprep.subr.bf16.mxu0 %v1512
    %4442 = vmatpush1.bf16.msra.mxu0 %v1511
    %4443 = vmatprep.subr.bf16.mxu0 %v1520
    %4444 = vmatpush1.bf16.msra.mxu0 %v1519
    %4445 = vmatprep.subr.bf16.mxu0 %v1528
    %4446 = vmatpush1.bf16.msra.mxu0 %v1527
    %4447 = vmatprep.subr.bf16.mxu0 %v1536
    %4448 = vmatpush1.bf16.msra.mxu0 %v1535
    %4449 = vmatprep.subr.bf16.mxu0 %v1544
    %4450 = vmatpush1.bf16.msra.mxu0 %v1543
    %4451 = vmatprep.subr.bf16.mxu0 %v1552
    %4452 = vmatpush1.bf16.msra.mxu0 %v1551
    %4453 = vmatprep.subr.bf16.mxu0 %v1560
    %4454 = vmatpush1.bf16.msra.mxu0 %v1559
    %4455 = vmatprep.subr.bf16.mxu0 %v1568
    %4456 = vmatpush1.bf16.msra.mxu0 %v1567
    %4457 = vmatprep.subr.bf16.mxu0 %v1576
    %4458 = vmatpush1.bf16.msra.mxu0 %v1575
    %4459 = vmatprep.subr.bf16.mxu0 %v1584
    %4460 = vmatpush1.bf16.msra.mxu0 %v1583
    %4461 = vmatprep.subr.bf16.mxu0 %v1592
    %4462 = vmatpush1.bf16.msra.mxu0 %v1591
    %4463 = vmatprep.mubr.bf16.mxu0 %v3926
    %4464 = vmatmul.mubr.bf16.gmra.mrb[0].mxu0 %v3925
    %v4465 = vpop.f32.mrb[0].mxu0
    %v4466 = vadd.f32 0.0, %v4465
    %v4467 = vpop.f32.mrb[0].mxu0
    %v4468 = vadd.f32 0.0, %v4467
    %v4469 = vpop.f32.mrb[0].mxu0
    %v4470 = vpop.f32.mrb[0].mxu0
    %4471 = vdwg.mxu0
    %v4480 = vcombine.low %v4343, %v4345
    %v4481 = vcombine.low %v4384, %v4386
    %v4483 = vunpack.c.l.s4 1983009808
    %v4484 = vunpack.c.0.s8 %v4483
    %v4485 = vlaneseq
    %v4486 = vshrl.u32 %v4485, 7
    %v4487 = vsub.s32 %v4484, %v4486
    %v4488 = vrot.slane %v4480, %v4487
    %v4490 = vunpack.c.l.s4 1983009808
    %v4491 = vunpack.c.0.s8 %v4490
    %v4492 = vlaneseq
    %v4493 = vshrl.u32 %v4492, 7
    %v4494 = vsub.s32 %v4491, %v4493
    %v4495 = vrot.slane %v4481, %v4494
    %v4496 = vcombine.low %v4488, %v4495
    %v4497 = vcombine.low %v4425, %v4427
    %v4498 = vcombine.low %v4466, %v4468
    %v4500 = vunpack.c.l.s4 1983009808
    %v4501 = vunpack.c.0.s8 %v4500
    %v4502 = vlaneseq
    %v4503 = vshrl.u32 %v4502, 7
    %v4504 = vsub.s32 %v4501, %v4503
    %v4505 = vrot.slane %v4497, %v4504
    %v4507 = vunpack.c.l.s4 1983009808
    %v4508 = vunpack.c.0.s8 %v4507
    %v4509 = vlaneseq
    %v4510 = vshrl.u32 %v4509, 7
    %v4511 = vsub.s32 %v4508, %v4510
    %v4512 = vrot.slane %v4498, %v4511
    %v4513 = vcombine.low %v4505, %v4512
    %v4516 = vadd.f32 %v4306, %v4496
    %v4517 = vadd.f32 %v4307, %v4513
    %v4518 = vxor.u32 %v4516, 2147483648
    %v4519 = vmul.f32 %v4518, 1.442695
    %v4520 = vpow.pop %v4519
    %v4521 = vadd.f32 %v4520, 1.0
    %v4522 = vrcp.pop %v4521
    %v4523 = vmul.f32 1.0, %v4522
    %v4525 = vrot.slane %v4516, 4
    %v4527 = vxor.u32 %v4525, 2147483648
    %v4528 = vmul.f32 %v4527, 1.442695
    %v4529 = vpow.pop %v4528
    %v4530 = vadd.f32 %v4529, 1.0
    %v4531 = vrcp.pop %v4530
    %v4532 = vmul.f32 1.0, %v4531
    %v4533 = vtanh.pop %v4517
    %v4535 = vrot.slane %v4517, 4
    %v4537 = vxor.u32 %v4535, 2147483648
    %v4538 = vmul.f32 %v4537, 1.442695
    %v4539 = vpow.pop %v4538
    %v4540 = vadd.f32 %v4539, 1.0
    %v4541 = vrcp.pop %v4540
    %v4542 = vmul.f32 1.0, %v4541
    %v4543 = vmul.f32 %v4532, %v3911
    %v4544 = vmul.f32 %v4523, %v4533
    %v4545 = vadd.f32 %v4543, %v4544
    %v4546 = vtanh.pop %v4545
    %v4547 = vmul.f32 %v4542, %v4546
    %v4550 = vunpack.c.l.s4 1983009808
    %v4551 = vunpack.c.0.s8 %v4550
    %v4552 = vlaneseq
    %v4553 = vshrl.u32 %v4552, 7
    %v4554 = vsub.s32 %v4551, %v4553
    %v4555 = vrot.slane %v4547, %v4554
    %v4556 = vcombine.high %v4555, %v4555
    %v4559 = vpack.c.bf16 %v4555, %v4555
    %v4560 = vpack.c.bf16 %v4556, %v4556
    %v4561 = vpack.c.bf16 %v4303, %v4303
    %v4562 = vpack.c.bf16 %v4304, %v4304
    %4563 = vmatprep.subr.bf16.mxu0 %v2784
    %4564 = vmatpush1.bf16.msra.mxu0 %v2783
    %4565 = vmatprep.subr.bf16.mxu0 %v2792
    %4566 = vmatpush1.bf16.msra.mxu0 %v2791
    %4567 = vmatprep.subr.bf16.mxu0 %v2800
    %4568 = vmatpush1.bf16.msra.mxu0 %v2799
    %4569 = vmatprep.subr.bf16.mxu0 %v2808
    %4570 = vmatpush1.bf16.msra.mxu0 %v2807
    %4571 = vmatprep.subr.bf16.mxu0 %v2816
    %4572 = vmatpush1.bf16.msra.mxu0 %v2815
    %4573 = vmatprep.subr.bf16.mxu0 %v2824
    %4574 = vmatpush1.bf16.msra.mxu0 %v2823
    %4575 = vmatprep.subr.bf16.mxu0 %v2832
    %4576 = vmatpush1.bf16.msra.mxu0 %v2831
    %4577 = vmatprep.subr.bf16.mxu0 %v2840
    %4578 = vmatpush1.bf16.msra.mxu0 %v2839
    %4579 = vmatprep.subr.bf16.mxu0 %v2848
    %4580 = vmatpush1.bf16.msra.mxu0 %v2847
    %4581 = vmatprep.subr.bf16.mxu0 %v2856
    %4582 = vmatpush1.bf16.msra.mxu0 %v2855
    %4583 = vmatprep.subr.bf16.mxu0 %v2864
    %4584 = vmatpush1.bf16.msra.mxu0 %v2863
    %4585 = vmatprep.subr.bf16.mxu0 %v2872
    %4586 = vmatpush1.bf16.msra.mxu0 %v2871
    %4587 = vmatprep.subr.bf16.mxu0 %v2880
    %4588 = vmatpush1.bf16.msra.mxu0 %v2879
    %4589 = vmatprep.subr.bf16.mxu0 %v2888
    %4590 = vmatpush1.bf16.msra.mxu0 %v2887
    %4591 = vmatprep.subr.bf16.mxu0 %v2896
    %4592 = vmatpush1.bf16.msra.mxu0 %v2895
    %4593 = vmatprep.subr.bf16.mxu0 %v2904
    %4594 = vmatpush1.bf16.msra.mxu0 %v2903
    %4595 = vmatprep.mubr.bf16.mxu0 %v4560
    %4596 = vmatmul.mubr.bf16.gmra.mrb[0].mxu0 %v4559
    %v4597 = vpop.f32.mrb[0].mxu0
    %v4598 = vadd.f32 %v1978, %v4597
    %v4599 = vpop.f32.mrb[0].mxu0
    %v4600 = vadd.f32 %v1982, %v4599
    %v4601 = vpop.f32.mrb[0].mxu0
    %v4602 = vpop.f32.mrb[0].mxu0
    %4603 = vdwg.mxu0
    %4604 = vmatprep.subr.bf16.mxu0 %v2912
    %4605 = vmatpush1.bf16.msra.mxu0 %v2911
    %4606 = vmatprep.subr.bf16.mxu0 %v2920
    %4607 = vmatpush1.bf16.msra.mxu0 %v2919
    %4608 = vmatprep.subr.bf16.mxu0 %v2928
    %4609 = vmatpush1.bf16.msra.mxu0 %v2927
    %4610 = vmatprep.subr.bf16.mxu0 %v2936
    %4611 = vmatpush1.bf16.msra.mxu0 %v2935
    %4612 = vmatprep.subr.bf16.mxu0 %v2944
    %4613 = vmatpush1.bf16.msra.mxu0 %v2943
    %4614 = vmatprep.subr.bf16.mxu0 %v2952
    %4615 = vmatpush1.bf16.msra.mxu0 %v2951
    %4616 = vmatprep.subr.bf16.mxu0 %v2960
    %4617 = vmatpush1.bf16.msra.mxu0 %v2959
    %4618 = vmatprep.subr.bf16.mxu0 %v2968
    %4619 = vmatpush1.bf16.msra.mxu0 %v2967
    %4620 = vmatprep.subr.bf16.mxu0 %v2976
    %4621 = vmatpush1.bf16.msra.mxu0 %v2975
    %4622 = vmatprep.subr.bf16.mxu0 %v2984
    %4623 = vmatpush1.bf16.msra.mxu0 %v2983
    %4624 = vmatprep.subr.bf16.mxu0 %v2992
    %4625 = vmatpush1.bf16.msra.mxu0 %v2991
    %4626 = vmatprep.subr.bf16.mxu0 %v3000
    %4627 = vmatpush1.bf16.msra.mxu0 %v2999
    %4628 = vmatprep.subr.bf16.mxu0 %v3008
    %4629 = vmatpush1.bf16.msra.mxu0 %v3007
    %4630 = vmatprep.subr.bf16.mxu0 %v3016
    %4631 = vmatpush1.bf16.msra.mxu0 %v3015
    %4632 = vmatprep.subr.bf16.mxu0 %v3024
    %4633 = vmatpush1.bf16.msra.mxu0 %v3023
    %4634 = vmatprep.subr.bf16.mxu0 %v3032
    %4635 = vmatpush1.bf16.msra.mxu0 %v3031
    %4636 = vmatprep.mubr.bf16.mxu0 %v4562
    %4637 = vmatmul.mubr.bf16.gmra.mrb[0].mxu0 %v4561
    %v4638 = vpop.f32.mrb[0].mxu0
    %v4639 = vadd.f32 %v4598, %v4638
    %v4640 = vpop.f32.mrb[0].mxu0
    %v4641 = vadd.f32 %v4600, %v4640
    %v4642 = vpop.f32.mrb[0].mxu0
    %v4643 = vpop.f32.mrb[0].mxu0
    %4644 = vdwg.mxu0
    %4645 = vmatprep.subr.bf16.mxu0 %v2786
    %4646 = vmatpush1.bf16.msra.mxu0 %v2785
    %4647 = vmatprep.subr.bf16.mxu0 %v2794
    %4648 = vmatpush1.bf16.msra.mxu0 %v2793
    %4649 = vmatprep.subr.bf16.mxu0 %v2802
    %4650 = vmatpush1.bf16.msra.mxu0 %v2801
    %4651 = vmatprep.subr.bf16.mxu0 %v2810
    %4652 = vmatpush1.bf16.msra.mxu0 %v2809
    %4653 = vmatprep.subr.bf16.mxu0 %v2818
    %4654 = vmatpush1.bf16.msra.mxu0 %v2817
    %4655 = vmatprep.subr.bf16.mxu0 %v2826
    %4656 = vmatpush1.bf16.msra.mxu0 %v2825
    %4657 = vmatprep.subr.bf16.mxu0 %v2834
    %4658 = vmatpush1.bf16.msra.mxu0 %v2833
    %4659 = vmatprep.subr.bf16.mxu0 %v2842
    %4660 = vmatpush1.bf16.msra.mxu0 %v2841
    %4661 = vmatprep.subr.bf16.mxu0 %v2850
    %4662 = vmatpush1.bf16.msra.mxu0 %v2849
    %4663 = vmatprep.subr.bf16.mxu0 %v2858
    %4664 = vmatpush1.bf16.msra.mxu0 %v2857
    %4665 = vmatprep.subr.bf16.mxu0 %v2866
    %4666 = vmatpush1.bf16.msra.mxu0 %v2865
    %4667 = vmatprep.subr.bf16.mxu0 %v2874
    %4668 = vmatpush1.bf16.msra.mxu0 %v2873
    %4669 = vmatprep.subr.bf16.mxu0 %v2882
    %4670 = vmatpush1.bf16.msra.mxu0 %v2881
    %4671 = vmatprep.subr.bf16.mxu0 %v2890
    %4672 = vmatpush1.bf16.msra.mxu0 %v2889
    %4673 = vmatprep.subr.bf16.mxu0 %v2898
    %4674 = vmatpush1.bf16.msra.mxu0 %v2897
    %4675 = vmatprep.subr.bf16.mxu0 %v2906
    %4676 = vmatpush1.bf16.msra.mxu0 %v2905
    %4677 = vmatprep.mubr.bf16.mxu0 %v4560
    %4678 = vmatmul.mubr.bf16.gmra.mrb[0].mxu0 %v4559
    %v4679 = vpop.f32.mrb[0].mxu0
    %v4680 = vadd.f32 %v1986, %v4679
    %v4681 = vpop.f32.mrb[0].mxu0
    %v4682 = vadd.f32 %v1990, %v4681
    %v4683 = vpop.f32.mrb[0].mxu0
    %v4684 = vpop.f32.mrb[0].mxu0
    %4685 = vdwg.mxu0
    %4686 = vmatprep.subr.bf16.mxu0 %v2914
    %4687 = vmatpush1.bf16.msra.mxu0 %v2913
    %4688 = vmatprep.subr.bf16.mxu0 %v2922
    %4689 = vmatpush1.bf16.msra.mxu0 %v2921
    %4690 = vmatprep.subr.bf16.mxu0 %v2930
    %4691 = vmatpush1.bf16.msra.mxu0 %v2929
    %4692 = vmatprep.subr.bf16.mxu0 %v2938
    %4693 = vmatpush1.bf16.msra.mxu0 %v2937
    %4694 = vmatprep.subr.bf16.mxu0 %v2946
    %4695 = vmatpush1.bf16.msra.mxu0 %v2945
    %4696 = vmatprep.subr.bf16.mxu0 %v2954
    %4697 = vmatpush1.bf16.msra.mxu0 %v2953
    %4698 = vmatprep.subr.bf16.mxu0 %v2962
    %4699 = vmatpush1.bf16.msra.mxu0 %v2961
    %4700 = vmatprep.subr.bf16.mxu0 %v2970
    %4701 = vmatpush1.bf16.msra.mxu0 %v2969
    %4702 = vmatprep.subr.bf16.mxu0 %v2978
    %4703 = vmatpush1.bf16.msra.mxu0 %v2977
    %4704 = vmatprep.subr.bf16.mxu0 %v2986
    %4705 = vmatpush1.bf16.msra.mxu0 %v2985
    %4706 = vmatprep.subr.bf16.mxu0 %v2994
    %4707 = vmatpush1.bf16.msra.mxu0 %v2993
    %4708 = vmatprep.subr.bf16.mxu0 %v3002
    %4709 = vmatpush1.bf16.msra.mxu0 %v3001
    %4710 = vmatprep.subr.bf16.mxu0 %v3010
    %4711 = vmatpush1.bf16.msra.mxu0 %v3009
    %4712 = vmatprep.subr.bf16.mxu0 %v3018
    %4713 = vmatpush1.bf16.msra.mxu0 %v3017
    %4714 = vmatprep.subr.bf16.mxu0 %v3026
    %4715 = vmatpush1.bf16.msra.mxu0 %v3025
    %4716 = vmatprep.subr.bf16.mxu0 %v3034
    %4717 = vmatpush1.bf16.msra.mxu0 %v3033
    %4718 = vmatprep.mubr.bf16.mxu0 %v4562
    %4719 = vmatmul.mubr.bf16.gmra.mrb[0].mxu0 %v4561
    %v4720 = vpop.f32.mrb[0].mxu0
    %v4721 = vadd.f32 %v4680, %v4720
    %v4722 = vpop.f32.mrb[0].mxu0
    %v4723 = vadd.f32 %v4682, %v4722
    %v4724 = vpop.f32.mrb[0].mxu0
    %v4725 = vpop.f32.mrb[0].mxu0
    %4726 = vdwg.mxu0
    %4727 = vmatprep.subr.bf16.mxu0 %v2788
    %4728 = vmatpush1.bf16.msra.mxu0 %v2787
    %4729 = vmatprep.subr.bf16.mxu0 %v2796
    %4730 = vmatpush1.bf16.msra.mxu0 %v2795
    %4731 = vmatprep.subr.bf16.mxu0 %v2804
    %4732 = vmatpush1.bf16.msra.mxu0 %v2803
    %4733 = vmatprep.subr.bf16.mxu0 %v2812
    %4734 = vmatpush1.bf16.msra.mxu0 %v2811
    %4735 = vmatprep.subr.bf16.mxu0 %v2820
    %4736 = vmatpush1.bf16.msra.mxu0 %v2819
    %4737 = vmatprep.subr.bf16.mxu0 %v2828
    %4738 = vmatpush1.bf16.msra.mxu0 %v2827
    %4739 = vmatprep.subr.bf16.mxu0 %v2836
    %4740 = vmatpush1.bf16.msra.mxu0 %v2835
    %4741 = vmatprep.subr.bf16.mxu0 %v2844
    %4742 = vmatpush1.bf16.msra.mxu0 %v2843
    %4743 = vmatprep.subr.bf16.mxu0 %v2852
    %4744 = vmatpush1.bf16.msra.mxu0 %v2851
    %4745 = vmatprep.subr.bf16.mxu0 %v2860
    %4746 = vmatpush1.bf16.msra.mxu0 %v2859
    %4747 = vmatprep.subr.bf16.mxu0 %v2868
    %4748 = vmatpush1.bf16.msra.mxu0 %v2867
    %4749 = vmatprep.subr.bf16.mxu0 %v2876
    %4750 = vmatpush1.bf16.msra.mxu0 %v2875
    %4751 = vmatprep.subr.bf16.mxu0 %v2884
    %4752 = vmatpush1.bf16.msra.mxu0 %v2883
    %4753 = vmatprep.subr.bf16.mxu0 %v2892
    %4754 = vmatpush1.bf16.msra.mxu0 %v2891
    %4755 = vmatprep.subr.bf16.mxu0 %v2900
    %4756 = vmatpush1.bf16.msra.mxu0 %v2899
    %4757 = vmatprep.subr.bf16.mxu0 %v2908
    %4758 = vmatpush1.bf16.msra.mxu0 %v2907
    %4759 = vmatprep.mubr.bf16.mxu0 %v4560
    %4760 = vmatmul.mubr.bf16.gmra.mrb[0].mxu0 %v4559
    %v4761 = vpop.f32.mrb[0].mxu0
    %v4762 = vadd.f32 %v1994, %v4761
    %v4763 = vpop.f32.mrb[0].mxu0
    %v4764 = vadd.f32 %v1998, %v4763
    %v4765 = vpop.f32.mrb[0].mxu0
    %v4766 = vpop.f32.mrb[0].mxu0
    %4767 = vdwg.mxu0
    %4768 = vmatprep.subr.bf16.mxu0 %v2916
    %4769 = vmatpush1.bf16.msra.mxu0 %v2915
    %4770 = vmatprep.subr.bf16.mxu0 %v2924
    %4771 = vmatpush1.bf16.msra.mxu0 %v2923
    %4772 = vmatprep.subr.bf16.mxu0 %v2932
    %4773 = vmatpush1.bf16.msra.mxu0 %v2931
    %4774 = vmatprep.subr.bf16.mxu0 %v2940
    %4775 = vmatpush1.bf16.msra.mxu0 %v2939
    %4776 = vmatprep.subr.bf16.mxu0 %v2948
    %4777 = vmatpush1.bf16.msra.mxu0 %v2947
    %4778 = vmatprep.subr.bf16.mxu0 %v2956
    %4779 = vmatpush1.bf16.msra.mxu0 %v2955
    %4780 = vmatprep.subr.bf16.mxu0 %v2964
    %4781 = vmatpush1.bf16.msra.mxu0 %v2963
    %4782 = vmatprep.subr.bf16.mxu0 %v2972
    %4783 = vmatpush1.bf16.msra.mxu0 %v2971
    %4784 = vmatprep.subr.bf16.mxu0 %v2980
    %4785 = vmatpush1.bf16.msra.mxu0 %v2979
    %4786 = vmatprep.subr.bf16.mxu0 %v2988
    %4787 = vmatpush1.bf16.msra.mxu0 %v2987
    %4788 = vmatprep.subr.bf16.mxu0 %v2996
    %4789 = vmatpush1.bf16.msra.mxu0 %v2995
    %4790 = vmatprep.subr.bf16.mxu0 %v3004
    %4791 = vmatpush1.bf16.msra.mxu0 %v3003
    %4792 = vmatprep.subr.bf16.mxu0 %v3012
    %4793 = vmatpush1.bf16.msra.mxu0 %v3011
    %4794 = vmatprep.subr.bf16.mxu0 %v3020
    %4795 = vmatpush1.bf16.msra.mxu0 %v3019
    %4796 = vmatprep.subr.bf16.mxu0 %v3028
    %4797 = vmatpush1.bf16.msra.mxu0 %v3027
    %4798 = vmatprep.subr.bf16.mxu0 %v3036
    %4799 = vmatpush1.bf16.msra.mxu0 %v3035
    %4800 = vmatprep.mubr.bf16.mxu0 %v4562
    %4801 = vmatmul.mubr.bf16.gmra.mrb[0].mxu0 %v4561
    %v4802 = vpop.f32.mrb[0].mxu0
    %v4803 = vadd.f32 %v4762, %v4802
    %v4804 = vpop.f32.mrb[0].mxu0
    %v4805 = vadd.f32 %v4764, %v4804
    %v4806 = vpop.f32.mrb[0].mxu0
    %v4807 = vpop.f32.mrb[0].mxu0
    %4808 = vdwg.mxu0
    %4809 = vmatprep.subr.bf16.mxu0 %v2790
    %4810 = vmatpush1.bf16.msra.mxu0 %v2789
    %4811 = vmatprep.subr.bf16.mxu0 %v2798
    %4812 = vmatpush1.bf16.msra.mxu0 %v2797
    %4813 = vmatprep.subr.bf16.mxu0 %v2806
    %4814 = vmatpush1.bf16.msra.mxu0 %v2805
    %4815 = vmatprep.subr.bf16.mxu0 %v2814
    %4816 = vmatpush1.bf16.msra.mxu0 %v2813
    %4817 = vmatprep.subr.bf16.mxu0 %v2822
    %4818 = vmatpush1.bf16.msra.mxu0 %v2821
    %4819 = vmatprep.subr.bf16.mxu0 %v2830
    %4820 = vmatpush1.bf16.msra.mxu0 %v2829
    %4821 = vmatprep.subr.bf16.mxu0 %v2838
    %4822 = vmatpush1.bf16.msra.mxu0 %v2837
    %4823 = vmatprep.subr.bf16.mxu0 %v2846
    %4824 = vmatpush1.bf16.msra.mxu0 %v2845
    %4825 = vmatprep.subr.bf16.mxu0 %v2854
    %4826 = vmatpush1.bf16.msra.mxu0 %v2853
    %4827 = vmatprep.subr.bf16.mxu0 %v2862
    %4828 = vmatpush1.bf16.msra.mxu0 %v2861
    %4829 = vmatprep.subr.bf16.mxu0 %v2870
    %4830 = vmatpush1.bf16.msra.mxu0 %v2869
    %4831 = vmatprep.subr.bf16.mxu0 %v2878
    %4832 = vmatpush1.bf16.msra.mxu0 %v2877
    %4833 = vmatprep.subr.bf16.mxu0 %v2886
    %4834 = vmatpush1.bf16.msra.mxu0 %v2885
    %4835 = vmatprep.subr.bf16.mxu0 %v2894
    %4836 = vmatpush1.bf16.msra.mxu0 %v2893
    %4837 = vmatprep.subr.bf16.mxu0 %v2902
    %4838 = vmatpush1.bf16.msra.mxu0 %v2901
    %4839 = vmatprep.subr.bf16.mxu0 %v2910
    %4840 = vmatpush1.bf16.msra.mxu0 %v2909
    %4841 = vmatprep.mubr.bf16.mxu0 %v4560
    %4842 = vmatmul.mubr.bf16.gmra.mrb[0].mxu0 %v4559
    %v4843 = vpop.f32.mrb[0].mxu0
    %v4844 = vadd.f32 %v2002, %v4843
    %v4845 = vpop.f32.mrb[0].mxu0
    %v4846 = vadd.f32 %v2006, %v4845
    %v4847 = vpop.f32.mrb[0].mxu0
    %v4848 = vpop.f32.mrb[0].mxu0
    %4849 = vdwg.mxu0
    %4850 = vmatprep.subr.bf16.mxu0 %v2918
    %4851 = vmatpush1.bf16.msra.mxu0 %v2917
    %4852 = vmatprep.subr.bf16.mxu0 %v2926
    %4853 = vmatpush1.bf16.msra.mxu0 %v2925
    %4854 = vmatprep.subr.bf16.mxu0 %v2934
    %4855 = vmatpush1.bf16.msra.mxu0 %v2933
    %4856 = vmatprep.subr.bf16.mxu0 %v2942
    %4857 = vmatpush1.bf16.msra.mxu0 %v2941
    %4858 = vmatprep.subr.bf16.mxu0 %v2950
    %4859 = vmatpush1.bf16.msra.mxu0 %v2949
    %4860 = vmatprep.subr.bf16.mxu0 %v2958
    %4861 = vmatpush1.bf16.msra.mxu0 %v2957
    %4862 = vmatprep.subr.bf16.mxu0 %v2966
    %4863 = vmatpush1.bf16.msra.mxu0 %v2965
    %4864 = vmatprep.subr.bf16.mxu0 %v2974
    %4865 = vmatpush1.bf16.msra.mxu0 %v2973
    %4866 = vmatprep.subr.bf16.mxu0 %v2982
    %4867 = vmatpush1.bf16.msra.mxu0 %v2981
    %4868 = vmatprep.subr.bf16.mxu0 %v2990
    %4869 = vmatpush1.bf16.msra.mxu0 %v2989
    %4870 = vmatprep.subr.bf16.mxu0 %v2998
    %4871 = vmatpush1.bf16.msra.mxu0 %v2997
    %4872 = vmatprep.subr.bf16.mxu0 %v3006
    %4873 = vmatpush1.bf16.msra.mxu0 %v3005
    %4874 = vmatprep.subr.bf16.mxu0 %v3014
    %4875 = vmatpush1.bf16.msra.mxu0 %v3013
    %4876 = vmatprep.subr.bf16.mxu0 %v3022
    %4877 = vmatpush1.bf16.msra.mxu0 %v3021
    %4878 = vmatprep.subr.bf16.mxu0 %v3030
    %4879 = vmatpush1.bf16.msra.mxu0 %v3029
    %4880 = vmatprep.subr.bf16.mxu0 %v3038
    %4881 = vmatpush1.bf16.msra.mxu0 %v3037
    %4882 = vmatprep.mubr.bf16.mxu0 %v4562
    %4883 = vmatmul.mubr.bf16.gmra.mrb[0].mxu0 %v4561
    %v4884 = vpop.f32.mrb[0].mxu0
    %v4885 = vadd.f32 %v4844, %v4884
    %v4886 = vpop.f32.mrb[0].mxu0
    %v4887 = vadd.f32 %v4846, %v4886
    %v4888 = vpop.f32.mrb[0].mxu0
    %v4889 = vpop.f32.mrb[0].mxu0
    %4890 = vdwg.mxu0
    %v4891 = vxor.u32 %v4639, 2147483648
    %v4892 = vxor.u32 %v4641, 2147483648
    %v4893 = vmul.f32 %v4891, 1.442695
    %v4894 = vpow.pop %v4893
    %v4895 = vmul.f32 %v4892, 1.442695
    %v4896 = vpow.pop %v4895
    %v4897 = vadd.f32 %v4894, 1.0
    %v4898 = vadd.f32 %v4896, 1.0
    %v4899 = vrcp.pop %v4897
    %v4900 = vmul.f32 1.0, %v4899
    %v4901 = vrcp.pop %v4898
    %v4902 = vmul.f32 1.0, %v4901
    %v4903 = vxor.u32 %v4721, 2147483648
    %v4904 = vxor.u32 %v4723, 2147483648
    %v4905 = vmul.f32 %v4903, 1.442695
    %v4906 = vpow.pop %v4905
    %v4907 = vmul.f32 %v4904, 1.442695
    %v4908 = vpow.pop %v4907
    %v4909 = vadd.f32 %v4906, 1.0
    %v4910 = vadd.f32 %v4908, 1.0
    %v4911 = vrcp.pop %v4909
    %v4912 = vmul.f32 1.0, %v4911
    %v4913 = vrcp.pop %v4910
    %v4914 = vmul.f32 1.0, %v4913
    %v4915 = vtanh.pop %v4803
    %v4916 = vtanh.pop %v4805
    %v4917 = vxor.u32 %v4885, 2147483648
    %v4918 = vxor.u32 %v4887, 2147483648
    %v4919 = vmul.f32 %v4917, 1.442695
    %v4920 = vpow.pop %v4919
    %v4921 = vmul.f32 %v4918, 1.442695
    %v4922 = vpow.pop %v4921
    %v4923 = vadd.f32 %v4920, 1.0
    %v4924 = vadd.f32 %v4922, 1.0
    %v4925 = vrcp.pop %v4923
    %v4926 = vmul.f32 1.0, %v4925
    %v4927 = vrcp.pop %v4924
    %v4928 = vmul.f32 1.0, %v4927
    %v4929 = vmul.f32 %v4912, %v4299
    %v4930 = vmul.f32 %v4914, %v4300
    %v4931 = vmul.f32 %v4900, %v4915
    %v4932 = vmul.f32 %v4902, %v4916
    %v4933 = vadd.f32 %v4929, %v4931
    %v4934 = vadd.f32 %v4930, %v4932
    %v4935 = vtanh.pop %v4933
    %v4936 = vtanh.pop %v4934
    %v4937 = vmul.f32 %v4926, %v4935
    %v4938 = vmul.f32 %v4928, %v4936
    %s4939 = scalar_lea.vmem [#allocation2], 48
    %v4940 = vld [vmem:[%s4939] sm:$0xff]
    %v4941 = vld [vmem:[%s4939 + $0x8] sm:$0xff]
    %4942 = vmatprep.subr.bf16.mxu0 %v1466
    %4943 = vmatpush1.bf16.msra.mxu0 %v1465
    %4944 = vmatprep.subr.bf16.mxu0 %v1474
    %4945 = vmatpush1.bf16.msra.mxu0 %v1473
    %4946 = vmatprep.subr.bf16.mxu0 %v1482
    %4947 = vmatpush1.bf16.msra.mxu0 %v1481
    %4948 = vmatprep.subr.bf16.mxu0 %v1490
    %4949 = vmatpush1.bf16.msra.mxu0 %v1489
    %4950 = vmatprep.subr.bf16.mxu0 %v1498
    %4951 = vmatpush1.bf16.msra.mxu0 %v1497
    %4952 = vmatprep.subr.bf16.mxu0 %v1506
    %4953 = vmatpush1.bf16.msra.mxu0 %v1505
    %4954 = vmatprep.subr.bf16.mxu0 %v1514
    %4955 = vmatpush1.bf16.msra.mxu0 %v1513
    %4956 = vmatprep.subr.bf16.mxu0 %v1522
    %4957 = vmatpush1.bf16.msra.mxu0 %v1521
    %4958 = vmatprep.subr.bf16.mxu0 %v1530
    %4959 = vmatpush1.bf16.msra.mxu0 %v1529
    %4960 = vmatprep.subr.bf16.mxu0 %v1538
    %4961 = vmatpush1.bf16.msra.mxu0 %v1537
    %4962 = vmatprep.subr.bf16.mxu0 %v1546
    %4963 = vmatpush1.bf16.msra.mxu0 %v1545
    %4964 = vmatprep.subr.bf16.mxu0 %v1554
    %4965 = vmatpush1.bf16.msra.mxu0 %v1553
    %4966 = vmatprep.subr.bf16.mxu0 %v1562
    %4967 = vmatpush1.bf16.msra.mxu0 %v1561
    %4968 = vmatprep.subr.bf16.mxu0 %v1570
    %4969 = vmatpush1.bf16.msra.mxu0 %v1569
    %4970 = vmatprep.subr.bf16.mxu0 %v1578
    %4971 = vmatpush1.bf16.msra.mxu0 %v1577
    %4972 = vmatprep.subr.bf16.mxu0 %v1586
    %4973 = vmatpush1.bf16.msra.mxu0 %v1585
    %4974 = vmatprep.mubr.bf16.mxu0 %v4560
    %4975 = vmatmul.mubr.bf16.gmra.mrb[0].mxu0 %v4559
    %v4976 = vpop.f32.mrb[0].mxu0
    %v4977 = vadd.f32 0.0, %v4976
    %v4978 = vpop.f32.mrb[0].mxu0
    %v4979 = vadd.f32 0.0, %v4978
    %v4980 = vpop.f32.mrb[0].mxu0
    %v4981 = vpop.f32.mrb[0].mxu0
    %4982 = vdwg.mxu0
    %4983 = vmatprep.subr.bf16.mxu0 %v1468
    %4984 = vmatpush1.bf16.msra.mxu0 %v1467
    %4985 = vmatprep.subr.bf16.mxu0 %v1476
    %4986 = vmatpush1.bf16.msra.mxu0 %v1475
    %4987 = vmatprep.subr.bf16.mxu0 %v1484
    %4988 = vmatpush1.bf16.msra.mxu0 %v1483
    %4989 = vmatprep.subr.bf16.mxu0 %v1492
    %4990 = vmatpush1.bf16.msra.mxu0 %v1491
    %4991 = vmatprep.subr.bf16.mxu0 %v1500
    %4992 = vmatpush1.bf16.msra.mxu0 %v1499
    %4993 = vmatprep.subr.bf16.mxu0 %v1508
    %4994 = vmatpush1.bf16.msra.mxu0 %v1507
    %4995 = vmatprep.subr.bf16.mxu0 %v1516
    %4996 = vmatpush1.bf16.msra.mxu0 %v1515
    %4997 = vmatprep.subr.bf16.mxu0 %v1524
    %4998 = vmatpush1.bf16.msra.mxu0 %v1523
    %4999 = vmatprep.subr.bf16.mxu0 %v1532
    %5000 = vmatpush1.bf16.msra.mxu0 %v1531
    %5001 = vmatprep.subr.bf16.mxu0 %v1540
    %5002 = vmatpush1.bf16.msra.mxu0 %v1539
    %5003 = vmatprep.subr.bf16.mxu0 %v1548
    %5004 = vmatpush1.bf16.msra.mxu0 %v1547
    %5005 = vmatprep.subr.bf16.mxu0 %v1556
    %5006 = vmatpush1.bf16.msra.mxu0 %v1555
    %5007 = vmatprep.subr.bf16.mxu0 %v1564
    %5008 = vmatpush1.bf16.msra.mxu0 %v1563
    %5009 = vmatprep.subr.bf16.mxu0 %v1572
    %5010 = vmatpush1.bf16.msra.mxu0 %v1571
    %5011 = vmatprep.subr.bf16.mxu0 %v1580
    %5012 = vmatpush1.bf16.msra.mxu0 %v1579
    %5013 = vmatprep.subr.bf16.mxu0 %v1588
    %5014 = vmatpush1.bf16.msra.mxu0 %v1587
    %5015 = vmatprep.mubr.bf16.mxu0 %v4560
    %5016 = vmatmul.mubr.bf16.gmra.mrb[0].mxu0 %v4559
    %v5017 = vpop.f32.mrb[0].mxu0
    %v5018 = vadd.f32 0.0, %v5017
    %v5019 = vpop.f32.mrb[0].mxu0
    %v5020 = vadd.f32 0.0, %v5019
    %v5021 = vpop.f32.mrb[0].mxu0
    %v5022 = vpop.f32.mrb[0].mxu0
    %5023 = vdwg.mxu0
    %5024 = vmatprep.subr.bf16.mxu0 %v1470
    %5025 = vmatpush1.bf16.msra.mxu0 %v1469
    %5026 = vmatprep.subr.bf16.mxu0 %v1478
    %5027 = vmatpush1.bf16.msra.mxu0 %v1477
    %5028 = vmatprep.subr.bf16.mxu0 %v1486
    %5029 = vmatpush1.bf16.msra.mxu0 %v1485
    %5030 = vmatprep.subr.bf16.mxu0 %v1494
    %5031 = vmatpush1.bf16.msra.mxu0 %v1493
    %5032 = vmatprep.subr.bf16.mxu0 %v1502
    %5033 = vmatpush1.bf16.msra.mxu0 %v1501
    %5034 = vmatprep.subr.bf16.mxu0 %v1510
    %5035 = vmatpush1.bf16.msra.mxu0 %v1509
    %5036 = vmatprep.subr.bf16.mxu0 %v1518
    %5037 = vmatpush1.bf16.msra.mxu0 %v1517
    %5038 = vmatprep.subr.bf16.mxu0 %v1526
    %5039 = vmatpush1.bf16.msra.mxu0 %v1525
    %5040 = vmatprep.subr.bf16.mxu0 %v1534
    %5041 = vmatpush1.bf16.msra.mxu0 %v1533
    %5042 = vmatprep.subr.bf16.mxu0 %v1542
    %5043 = vmatpush1.bf16.msra.mxu0 %v1541
    %5044 = vmatprep.subr.bf16.mxu0 %v1550
    %5045 = vmatpush1.bf16.msra.mxu0 %v1549
    %5046 = vmatprep.subr.bf16.mxu0 %v1558
    %5047 = vmatpush1.bf16.msra.mxu0 %v1557
    %5048 = vmatprep.subr.bf16.mxu0 %v1566
    %5049 = vmatpush1.bf16.msra.mxu0 %v1565
    %5050 = vmatprep.subr.bf16.mxu0 %v1574
    %5051 = vmatpush1.bf16.msra.mxu0 %v1573
    %5052 = vmatprep.subr.bf16.mxu0 %v1582
    %5053 = vmatpush1.bf16.msra.mxu0 %v1581
    %5054 = vmatprep.subr.bf16.mxu0 %v1590
    %5055 = vmatpush1.bf16.msra.mxu0 %v1589
    %5056 = vmatprep.mubr.bf16.mxu0 %v4560
    %5057 = vmatmul.mubr.bf16.gmra.mrb[0].mxu0 %v4559
    %v5058 = vpop.f32.mrb[0].mxu0
    %v5059 = vadd.f32 0.0, %v5058
    %v5060 = vpop.f32.mrb[0].mxu0
    %v5061 = vadd.f32 0.0, %v5060
    %v5062 = vpop.f32.mrb[0].mxu0
    %v5063 = vpop.f32.mrb[0].mxu0
    %5064 = vdwg.mxu0
    %5065 = vmatprep.subr.bf16.mxu0 %v1472
    %5066 = vmatpush1.bf16.msra.mxu0 %v1471
    %5067 = vmatprep.subr.bf16.mxu0 %v1480
    %5068 = vmatpush1.bf16.msra.mxu0 %v1479
    %5069 = vmatprep.subr.bf16.mxu0 %v1488
    %5070 = vmatpush1.bf16.msra.mxu0 %v1487
    %5071 = vmatprep.subr.bf16.mxu0 %v1496
    %5072 = vmatpush1.bf16.msra.mxu0 %v1495
    %5073 = vmatprep.subr.bf16.mxu0 %v1504
    %5074 = vmatpush1.bf16.msra.mxu0 %v1503
    %5075 = vmatprep.subr.bf16.mxu0 %v1512
    %5076 = vmatpush1.bf16.msra.mxu0 %v1511
    %5077 = vmatprep.subr.bf16.mxu0 %v1520
    %5078 = vmatpush1.bf16.msra.mxu0 %v1519
    %5079 = vmatprep.subr.bf16.mxu0 %v1528
    %5080 = vmatpush1.bf16.msra.mxu0 %v1527
    %5081 = vmatprep.subr.bf16.mxu0 %v1536
    %5082 = vmatpush1.bf16.msra.mxu0 %v1535
    %5083 = vmatprep.subr.bf16.mxu0 %v1544
    %5084 = vmatpush1.bf16.msra.mxu0 %v1543
    %5085 = vmatprep.subr.bf16.mxu0 %v1552
    %5086 = vmatpush1.bf16.msra.mxu0 %v1551
    %5087 = vmatprep.subr.bf16.mxu0 %v1560
    %5088 = vmatpush1.bf16.msra.mxu0 %v1559
    %5089 = vmatprep.subr.bf16.mxu0 %v1568
    %5090 = vmatpush1.bf16.msra.mxu0 %v1567
    %5091 = vmatprep.subr.bf16.mxu0 %v1576
    %5092 = vmatpush1.bf16.msra.mxu0 %v1575
    %5093 = vmatprep.subr.bf16.mxu0 %v1584
    %5094 = vmatpush1.bf16.msra.mxu0 %v1583
    %5095 = vmatprep.subr.bf16.mxu0 %v1592
    %5096 = vmatpush1.bf16.msra.mxu0 %v1591
    %5097 = vmatprep.mubr.bf16.mxu0 %v4560
    %5098 = vmatmul.mubr.bf16.gmra.mrb[0].mxu0 %v4559
    %v5099 = vpop.f32.mrb[0].mxu0
    %v5100 = vadd.f32 0.0, %v5099
    %v5101 = vpop.f32.mrb[0].mxu0
    %v5102 = vadd.f32 0.0, %v5101
    %v5103 = vpop.f32.mrb[0].mxu0
    %v5104 = vpop.f32.mrb[0].mxu0
    %5105 = vdwg.mxu0
    %v5114 = vcombine.low %v4977, %v4979
    %v5115 = vcombine.low %v5018, %v5020
    %v5117 = vunpack.c.l.s4 1983009808
    %v5118 = vunpack.c.0.s8 %v5117
    %v5119 = vlaneseq
    %v5120 = vshrl.u32 %v5119, 7
    %v5121 = vsub.s32 %v5118, %v5120
    %v5122 = vrot.slane %v5114, %v5121
    %v5124 = vunpack.c.l.s4 1983009808
    %v5125 = vunpack.c.0.s8 %v5124
    %v5126 = vlaneseq
    %v5127 = vshrl.u32 %v5126, 7
    %v5128 = vsub.s32 %v5125, %v5127
    %v5129 = vrot.slane %v5115, %v5128
    %v5130 = vcombine.low %v5122, %v5129
    %v5131 = vcombine.low %v5059, %v5061
    %v5132 = vcombine.low %v5100, %v5102
    %v5134 = vunpack.c.l.s4 1983009808
    %v5135 = vunpack.c.0.s8 %v5134
    %v5136 = vlaneseq
    %v5137 = vshrl.u32 %v5136, 7
    %v5138 = vsub.s32 %v5135, %v5137
    %v5139 = vrot.slane %v5131, %v5138
    %v5141 = vunpack.c.l.s4 1983009808
    %v5142 = vunpack.c.0.s8 %v5141
    %v5143 = vlaneseq
    %v5144 = vshrl.u32 %v5143, 7
    %v5145 = vsub.s32 %v5142, %v5144
    %v5146 = vrot.slane %v5132, %v5145
    %v5147 = vcombine.low %v5139, %v5146
    %v5150 = vadd.f32 %v4940, %v5130
    %v5151 = vadd.f32 %v4941, %v5147
    %v5152 = vxor.u32 %v5150, 2147483648
    %v5153 = vmul.f32 %v5152, 1.442695
    %v5154 = vpow.pop %v5153
    %v5155 = vadd.f32 %v5154, 1.0
    %v5156 = vrcp.pop %v5155
    %v5157 = vmul.f32 1.0, %v5156
    %v5159 = vrot.slane %v5150, 4
    %v5161 = vxor.u32 %v5159, 2147483648
    %v5162 = vmul.f32 %v5161, 1.442695
    %v5163 = vpow.pop %v5162
    %v5164 = vadd.f32 %v5163, 1.0
    %v5165 = vrcp.pop %v5164
    %v5166 = vmul.f32 1.0, %v5165
    %v5167 = vtanh.pop %v5151
    %v5169 = vrot.slane %v5151, 4
    %v5171 = vxor.u32 %v5169, 2147483648
    %v5172 = vmul.f32 %v5171, 1.442695
    %v5173 = vpow.pop %v5172
    %v5174 = vadd.f32 %v5173, 1.0
    %v5175 = vrcp.pop %v5174
    %v5176 = vmul.f32 1.0, %v5175
    %v5177 = vmul.f32 %v5166, %v4545
    %v5178 = vmul.f32 %v5157, %v5167
    %v5179 = vadd.f32 %v5177, %v5178
    %v5180 = vtanh.pop %v5179
    %v5181 = vmul.f32 %v5176, %v5180
    %v5184 = vunpack.c.l.s4 1983009808
    %v5185 = vunpack.c.0.s8 %v5184
    %v5186 = vlaneseq
    %v5187 = vshrl.u32 %v5186, 7
    %v5188 = vsub.s32 %v5185, %v5187
    %v5189 = vrot.slane %v5181, %v5188
    %v5190 = vcombine.high %v5189, %v5189
    %v5193 = vpack.c.bf16 %v5189, %v5189
    %v5194 = vpack.c.bf16 %v5190, %v5190
    %v5195 = vpack.c.bf16 %v4937, %v4937
    %v5196 = vpack.c.bf16 %v4938, %v4938
    %5197 = vmatprep.subr.bf16.mxu0 %v2784
    %5198 = vmatpush1.bf16.msra.mxu0 %v2783
    %5199 = vmatprep.subr.bf16.mxu0 %v2792
    %5200 = vmatpush1.bf16.msra.mxu0 %v2791
    %5201 = vmatprep.subr.bf16.mxu0 %v2800
    %5202 = vmatpush1.bf16.msra.mxu0 %v2799
    %5203 = vmatprep.subr.bf16.mxu0 %v2808
    %5204 = vmatpush1.bf16.msra.mxu0 %v2807
    %5205 = vmatprep.subr.bf16.mxu0 %v2816
    %5206 = vmatpush1.bf16.msra.mxu0 %v2815
    %5207 = vmatprep.subr.bf16.mxu0 %v2824
    %5208 = vmatpush1.bf16.msra.mxu0 %v2823
    %5209 = vmatprep.subr.bf16.mxu0 %v2832
    %5210 = vmatpush1.bf16.msra.mxu0 %v2831
    %5211 = vmatprep.subr.bf16.mxu0 %v2840
    %5212 = vmatpush1.bf16.msra.mxu0 %v2839
    %5213 = vmatprep.subr.bf16.mxu0 %v2848
    %5214 = vmatpush1.bf16.msra.mxu0 %v2847
    %5215 = vmatprep.subr.bf16.mxu0 %v2856
    %5216 = vmatpush1.bf16.msra.mxu0 %v2855
    %5217 = vmatprep.subr.bf16.mxu0 %v2864
    %5218 = vmatpush1.bf16.msra.mxu0 %v2863
    %5219 = vmatprep.subr.bf16.mxu0 %v2872
    %5220 = vmatpush1.bf16.msra.mxu0 %v2871
    %5221 = vmatprep.subr.bf16.mxu0 %v2880
    %5222 = vmatpush1.bf16.msra.mxu0 %v2879
    %5223 = vmatprep.subr.bf16.mxu0 %v2888
    %5224 = vmatpush1.bf16.msra.mxu0 %v2887
    %5225 = vmatprep.subr.bf16.mxu0 %v2896
    %5226 = vmatpush1.bf16.msra.mxu0 %v2895
    %5227 = vmatprep.subr.bf16.mxu0 %v2904
    %5228 = vmatpush1.bf16.msra.mxu0 %v2903
    %5229 = vmatprep.mubr.bf16.mxu0 %v5194
    %5230 = vmatmul.mubr.bf16.gmra.mrb[0].mxu0 %v5193
    %v5231 = vpop.f32.mrb[0].mxu0
    %v5232 = vadd.f32 %v1978, %v5231
    %v5233 = vpop.f32.mrb[0].mxu0
    %v5234 = vadd.f32 %v1982, %v5233
    %v5235 = vpop.f32.mrb[0].mxu0
    %v5236 = vpop.f32.mrb[0].mxu0
    %5237 = vdwg.mxu0
    %5238 = vmatprep.subr.bf16.mxu0 %v2912
    %5239 = vmatpush1.bf16.msra.mxu0 %v2911
    %5240 = vmatprep.subr.bf16.mxu0 %v2920
    %5241 = vmatpush1.bf16.msra.mxu0 %v2919
    %5242 = vmatprep.subr.bf16.mxu0 %v2928
    %5243 = vmatpush1.bf16.msra.mxu0 %v2927
    %5244 = vmatprep.subr.bf16.mxu0 %v2936
    %5245 = vmatpush1.bf16.msra.mxu0 %v2935
    %5246 = vmatprep.subr.bf16.mxu0 %v2944
    %5247 = vmatpush1.bf16.msra.mxu0 %v2943
    %5248 = vmatprep.subr.bf16.mxu0 %v2952
    %5249 = vmatpush1.bf16.msra.mxu0 %v2951
    %5250 = vmatprep.subr.bf16.mxu0 %v2960
    %5251 = vmatpush1.bf16.msra.mxu0 %v2959
    %5252 = vmatprep.subr.bf16.mxu0 %v2968
    %5253 = vmatpush1.bf16.msra.mxu0 %v2967
    %5254 = vmatprep.subr.bf16.mxu0 %v2976
    %5255 = vmatpush1.bf16.msra.mxu0 %v2975
    %5256 = vmatprep.subr.bf16.mxu0 %v2984
    %5257 = vmatpush1.bf16.msra.mxu0 %v2983
    %5258 = vmatprep.subr.bf16.mxu0 %v2992
    %5259 = vmatpush1.bf16.msra.mxu0 %v2991
    %5260 = vmatprep.subr.bf16.mxu0 %v3000
    %5261 = vmatpush1.bf16.msra.mxu0 %v2999
    %5262 = vmatprep.subr.bf16.mxu0 %v3008
    %5263 = vmatpush1.bf16.msra.mxu0 %v3007
    %5264 = vmatprep.subr.bf16.mxu0 %v3016
    %5265 = vmatpush1.bf16.msra.mxu0 %v3015
    %5266 = vmatprep.subr.bf16.mxu0 %v3024
    %5267 = vmatpush1.bf16.msra.mxu0 %v3023
    %5268 = vmatprep.subr.bf16.mxu0 %v3032
    %5269 = vmatpush1.bf16.msra.mxu0 %v3031
    %5270 = vmatprep.mubr.bf16.mxu0 %v5196
    %5271 = vmatmul.mubr.bf16.gmra.mrb[0].mxu0 %v5195
    %v5272 = vpop.f32.mrb[0].mxu0
    %v5273 = vadd.f32 %v5232, %v5272
    %v5274 = vpop.f32.mrb[0].mxu0
    %v5275 = vadd.f32 %v5234, %v5274
    %v5276 = vpop.f32.mrb[0].mxu0
    %v5277 = vpop.f32.mrb[0].mxu0
    %5278 = vdwg.mxu0
    %5279 = vmatprep.subr.bf16.mxu0 %v2786
    %5280 = vmatpush1.bf16.msra.mxu0 %v2785
    %5281 = vmatprep.subr.bf16.mxu0 %v2794
    %5282 = vmatpush1.bf16.msra.mxu0 %v2793
    %5283 = vmatprep.subr.bf16.mxu0 %v2802
    %5284 = vmatpush1.bf16.msra.mxu0 %v2801
    %5285 = vmatprep.subr.bf16.mxu0 %v2810
    %5286 = vmatpush1.bf16.msra.mxu0 %v2809
    %5287 = vmatprep.subr.bf16.mxu0 %v2818
    %5288 = vmatpush1.bf16.msra.mxu0 %v2817
    %5289 = vmatprep.subr.bf16.mxu0 %v2826
    %5290 = vmatpush1.bf16.msra.mxu0 %v2825
    %5291 = vmatprep.subr.bf16.mxu0 %v2834
    %5292 = vmatpush1.bf16.msra.mxu0 %v2833
    %5293 = vmatprep.subr.bf16.mxu0 %v2842
    %5294 = vmatpush1.bf16.msra.mxu0 %v2841
    %5295 = vmatprep.subr.bf16.mxu0 %v2850
    %5296 = vmatpush1.bf16.msra.mxu0 %v2849
    %5297 = vmatprep.subr.bf16.mxu0 %v2858
    %5298 = vmatpush1.bf16.msra.mxu0 %v2857
    %5299 = vmatprep.subr.bf16.mxu0 %v2866
    %5300 = vmatpush1.bf16.msra.mxu0 %v2865
    %5301 = vmatprep.subr.bf16.mxu0 %v2874
    %5302 = vmatpush1.bf16.msra.mxu0 %v2873
    %5303 = vmatprep.subr.bf16.mxu0 %v2882
    %5304 = vmatpush1.bf16.msra.mxu0 %v2881
    %5305 = vmatprep.subr.bf16.mxu0 %v2890
    %5306 = vmatpush1.bf16.msra.mxu0 %v2889
    %5307 = vmatprep.subr.bf16.mxu0 %v2898
    %5308 = vmatpush1.bf16.msra.mxu0 %v2897
    %5309 = vmatprep.subr.bf16.mxu0 %v2906
    %5310 = vmatpush1.bf16.msra.mxu0 %v2905
    %5311 = vmatprep.mubr.bf16.mxu0 %v5194
    %5312 = vmatmul.mubr.bf16.gmra.mrb[0].mxu0 %v5193
    %v5313 = vpop.f32.mrb[0].mxu0
    %v5314 = vadd.f32 %v1986, %v5313
    %v5315 = vpop.f32.mrb[0].mxu0
    %v5316 = vadd.f32 %v1990, %v5315
    %v5317 = vpop.f32.mrb[0].mxu0
    %v5318 = vpop.f32.mrb[0].mxu0
    %5319 = vdwg.mxu0
    %5320 = vmatprep.subr.bf16.mxu0 %v2914
    %5321 = vmatpush1.bf16.msra.mxu0 %v2913
    %5322 = vmatprep.subr.bf16.mxu0 %v2922
    %5323 = vmatpush1.bf16.msra.mxu0 %v2921
    %5324 = vmatprep.subr.bf16.mxu0 %v2930
    %5325 = vmatpush1.bf16.msra.mxu0 %v2929
    %5326 = vmatprep.subr.bf16.mxu0 %v2938
    %5327 = vmatpush1.bf16.msra.mxu0 %v2937
    %5328 = vmatprep.subr.bf16.mxu0 %v2946
    %5329 = vmatpush1.bf16.msra.mxu0 %v2945
    %5330 = vmatprep.subr.bf16.mxu0 %v2954
    %5331 = vmatpush1.bf16.msra.mxu0 %v2953
    %5332 = vmatprep.subr.bf16.mxu0 %v2962
    %5333 = vmatpush1.bf16.msra.mxu0 %v2961
    %5334 = vmatprep.subr.bf16.mxu0 %v2970
    %5335 = vmatpush1.bf16.msra.mxu0 %v2969
    %5336 = vmatprep.subr.bf16.mxu0 %v2978
    %5337 = vmatpush1.bf16.msra.mxu0 %v2977
    %5338 = vmatprep.subr.bf16.mxu0 %v2986
    %5339 = vmatpush1.bf16.msra.mxu0 %v2985
    %5340 = vmatprep.subr.bf16.mxu0 %v2994
    %5341 = vmatpush1.bf16.msra.mxu0 %v2993
    %5342 = vmatprep.subr.bf16.mxu0 %v3002
    %5343 = vmatpush1.bf16.msra.mxu0 %v3001
    %5344 = vmatprep.subr.bf16.mxu0 %v3010
    %5345 = vmatpush1.bf16.msra.mxu0 %v3009
    %5346 = vmatprep.subr.bf16.mxu0 %v3018
    %5347 = vmatpush1.bf16.msra.mxu0 %v3017
    %5348 = vmatprep.subr.bf16.mxu0 %v3026
    %5349 = vmatpush1.bf16.msra.mxu0 %v3025
    %5350 = vmatprep.subr.bf16.mxu0 %v3034
    %5351 = vmatpush1.bf16.msra.mxu0 %v3033
    %5352 = vmatprep.mubr.bf16.mxu0 %v5196
    %5353 = vmatmul.mubr.bf16.gmra.mrb[0].mxu0 %v5195
    %v5354 = vpop.f32.mrb[0].mxu0
    %v5355 = vadd.f32 %v5314, %v5354
    %v5356 = vpop.f32.mrb[0].mxu0
    %v5357 = vadd.f32 %v5316, %v5356
    %v5358 = vpop.f32.mrb[0].mxu0
    %v5359 = vpop.f32.mrb[0].mxu0
    %5360 = vdwg.mxu0
    %5361 = vmatprep.subr.bf16.mxu0 %v2788
    %5362 = vmatpush1.bf16.msra.mxu0 %v2787
    %5363 = vmatprep.subr.bf16.mxu0 %v2796
    %5364 = vmatpush1.bf16.msra.mxu0 %v2795
    %5365 = vmatprep.subr.bf16.mxu0 %v2804
    %5366 = vmatpush1.bf16.msra.mxu0 %v2803
    %5367 = vmatprep.subr.bf16.mxu0 %v2812
    %5368 = vmatpush1.bf16.msra.mxu0 %v2811
    %5369 = vmatprep.subr.bf16.mxu0 %v2820
    %5370 = vmatpush1.bf16.msra.mxu0 %v2819
    %5371 = vmatprep.subr.bf16.mxu0 %v2828
    %5372 = vmatpush1.bf16.msra.mxu0 %v2827
    %5373 = vmatprep.subr.bf16.mxu0 %v2836
    %5374 = vmatpush1.bf16.msra.mxu0 %v2835
    %5375 = vmatprep.subr.bf16.mxu0 %v2844
    %5376 = vmatpush1.bf16.msra.mxu0 %v2843
    %5377 = vmatprep.subr.bf16.mxu0 %v2852
    %5378 = vmatpush1.bf16.msra.mxu0 %v2851
    %5379 = vmatprep.subr.bf16.mxu0 %v2860
    %5380 = vmatpush1.bf16.msra.mxu0 %v2859
    %5381 = vmatprep.subr.bf16.mxu0 %v2868
    %5382 = vmatpush1.bf16.msra.mxu0 %v2867
    %5383 = vmatprep.subr.bf16.mxu0 %v2876
    %5384 = vmatpush1.bf16.msra.mxu0 %v2875
    %5385 = vmatprep.subr.bf16.mxu0 %v2884
    %5386 = vmatpush1.bf16.msra.mxu0 %v2883
    %5387 = vmatprep.subr.bf16.mxu0 %v2892
    %5388 = vmatpush1.bf16.msra.mxu0 %v2891
    %5389 = vmatprep.subr.bf16.mxu0 %v2900
    %5390 = vmatpush1.bf16.msra.mxu0 %v2899
    %5391 = vmatprep.subr.bf16.mxu0 %v2908
    %5392 = vmatpush1.bf16.msra.mxu0 %v2907
    %5393 = vmatprep.mubr.bf16.mxu0 %v5194
    %5394 = vmatmul.mubr.bf16.gmra.mrb[0].mxu0 %v5193
    %v5395 = vpop.f32.mrb[0].mxu0
    %v5396 = vadd.f32 %v1994, %v5395
    %v5397 = vpop.f32.mrb[0].mxu0
    %v5398 = vadd.f32 %v1998, %v5397
    %v5399 = vpop.f32.mrb[0].mxu0
    %v5400 = vpop.f32.mrb[0].mxu0
    %5401 = vdwg.mxu0
    %5402 = vmatprep.subr.bf16.mxu0 %v2916
    %5403 = vmatpush1.bf16.msra.mxu0 %v2915
    %5404 = vmatprep.subr.bf16.mxu0 %v2924
    %5405 = vmatpush1.bf16.msra.mxu0 %v2923
    %5406 = vmatprep.subr.bf16.mxu0 %v2932
    %5407 = vmatpush1.bf16.msra.mxu0 %v2931
    %5408 = vmatprep.subr.bf16.mxu0 %v2940
    %5409 = vmatpush1.bf16.msra.mxu0 %v2939
    %5410 = vmatprep.subr.bf16.mxu0 %v2948
    %5411 = vmatpush1.bf16.msra.mxu0 %v2947
    %5412 = vmatprep.subr.bf16.mxu0 %v2956
    %5413 = vmatpush1.bf16.msra.mxu0 %v2955
    %5414 = vmatprep.subr.bf16.mxu0 %v2964
    %5415 = vmatpush1.bf16.msra.mxu0 %v2963
    %5416 = vmatprep.subr.bf16.mxu0 %v2972
    %5417 = vmatpush1.bf16.msra.mxu0 %v2971
    %5418 = vmatprep.subr.bf16.mxu0 %v2980
    %5419 = vmatpush1.bf16.msra.mxu0 %v2979
    %5420 = vmatprep.subr.bf16.mxu0 %v2988
    %5421 = vmatpush1.bf16.msra.mxu0 %v2987
    %5422 = vmatprep.subr.bf16.mxu0 %v2996
    %5423 = vmatpush1.bf16.msra.mxu0 %v2995
    %5424 = vmatprep.subr.bf16.mxu0 %v3004
    %5425 = vmatpush1.bf16.msra.mxu0 %v3003
    %5426 = vmatprep.subr.bf16.mxu0 %v3012
    %5427 = vmatpush1.bf16.msra.mxu0 %v3011
    %5428 = vmatprep.subr.bf16.mxu0 %v3020
    %5429 = vmatpush1.bf16.msra.mxu0 %v3019
    %5430 = vmatprep.subr.bf16.mxu0 %v3028
    %5431 = vmatpush1.bf16.msra.mxu0 %v3027
    %5432 = vmatprep.subr.bf16.mxu0 %v3036
    %5433 = vmatpush1.bf16.msra.mxu0 %v3035
    %5434 = vmatprep.mubr.bf16.mxu0 %v5196
    %5435 = vmatmul.mubr.bf16.gmra.mrb[0].mxu0 %v5195
    %v5436 = vpop.f32.mrb[0].mxu0
    %v5437 = vadd.f32 %v5396, %v5436
    %v5438 = vpop.f32.mrb[0].mxu0
    %v5439 = vadd.f32 %v5398, %v5438
    %v5440 = vpop.f32.mrb[0].mxu0
    %v5441 = vpop.f32.mrb[0].mxu0
    %5442 = vdwg.mxu0
    %5443 = vmatprep.subr.bf16.mxu0 %v2790
    %5444 = vmatpush1.bf16.msra.mxu0 %v2789
    %5445 = vmatprep.subr.bf16.mxu0 %v2798
    %5446 = vmatpush1.bf16.msra.mxu0 %v2797
    %5447 = vmatprep.subr.bf16.mxu0 %v2806
    %5448 = vmatpush1.bf16.msra.mxu0 %v2805
    %5449 = vmatprep.subr.bf16.mxu0 %v2814
    %5450 = vmatpush1.bf16.msra.mxu0 %v2813
    %5451 = vmatprep.subr.bf16.mxu0 %v2822
    %5452 = vmatpush1.bf16.msra.mxu0 %v2821
    %5453 = vmatprep.subr.bf16.mxu0 %v2830
    %5454 = vmatpush1.bf16.msra.mxu0 %v2829
    %5455 = vmatprep.subr.bf16.mxu0 %v2838
    %5456 = vmatpush1.bf16.msra.mxu0 %v2837
    %5457 = vmatprep.subr.bf16.mxu0 %v2846
    %5458 = vmatpush1.bf16.msra.mxu0 %v2845
    %5459 = vmatprep.subr.bf16.mxu0 %v2854
    %5460 = vmatpush1.bf16.msra.mxu0 %v2853
    %5461 = vmatprep.subr.bf16.mxu0 %v2862
    %5462 = vmatpush1.bf16.msra.mxu0 %v2861
    %5463 = vmatprep.subr.bf16.mxu0 %v2870
    %5464 = vmatpush1.bf16.msra.mxu0 %v2869
    %5465 = vmatprep.subr.bf16.mxu0 %v2878
    %5466 = vmatpush1.bf16.msra.mxu0 %v2877
    %5467 = vmatprep.subr.bf16.mxu0 %v2886
    %5468 = vmatpush1.bf16.msra.mxu0 %v2885
    %5469 = vmatprep.subr.bf16.mxu0 %v2894
    %5470 = vmatpush1.bf16.msra.mxu0 %v2893
    %5471 = vmatprep.subr.bf16.mxu0 %v2902
    %5472 = vmatpush1.bf16.msra.mxu0 %v2901
    %5473 = vmatprep.subr.bf16.mxu0 %v2910
    %5474 = vmatpush1.bf16.msra.mxu0 %v2909
    %5475 = vmatprep.mubr.bf16.mxu0 %v5194
    %5476 = vmatmul.mubr.bf16.gmra.mrb[0].mxu0 %v5193
    %v5477 = vpop.f32.mrb[0].mxu0
    %v5478 = vadd.f32 %v2002, %v5477
    %v5479 = vpop.f32.mrb[0].mxu0
    %v5480 = vadd.f32 %v2006, %v5479
    %v5481 = vpop.f32.mrb[0].mxu0
    %v5482 = vpop.f32.mrb[0].mxu0
    %5483 = vdwg.mxu0
    %5484 = vmatprep.subr.bf16.mxu0 %v2918
    %5485 = vmatpush1.bf16.msra.mxu0 %v2917
    %5486 = vmatprep.subr.bf16.mxu0 %v2926
    %5487 = vmatpush1.bf16.msra.mxu0 %v2925
    %5488 = vmatprep.subr.bf16.mxu0 %v2934
    %5489 = vmatpush1.bf16.msra.mxu0 %v2933
    %5490 = vmatprep.subr.bf16.mxu0 %v2942
    %5491 = vmatpush1.bf16.msra.mxu0 %v2941
    %5492 = vmatprep.subr.bf16.mxu0 %v2950
    %5493 = vmatpush1.bf16.msra.mxu0 %v2949
    %5494 = vmatprep.subr.bf16.mxu0 %v2958
    %5495 = vmatpush1.bf16.msra.mxu0 %v2957
    %5496 = vmatprep.subr.bf16.mxu0 %v2966
    %5497 = vmatpush1.bf16.msra.mxu0 %v2965
    %5498 = vmatprep.subr.bf16.mxu0 %v2974
    %5499 = vmatpush1.bf16.msra.mxu0 %v2973
    %5500 = vmatprep.subr.bf16.mxu0 %v2982
    %5501 = vmatpush1.bf16.msra.mxu0 %v2981
    %5502 = vmatprep.subr.bf16.mxu0 %v2990
    %5503 = vmatpush1.bf16.msra.mxu0 %v2989
    %5504 = vmatprep.subr.bf16.mxu0 %v2998
    %5505 = vmatpush1.bf16.msra.mxu0 %v2997
    %5506 = vmatprep.subr.bf16.mxu0 %v3006
    %5507 = vmatpush1.bf16.msra.mxu0 %v3005
    %5508 = vmatprep.subr.bf16.mxu0 %v3014
    %5509 = vmatpush1.bf16.msra.mxu0 %v3013
    %5510 = vmatprep.subr.bf16.mxu0 %v3022
    %5511 = vmatpush1.bf16.msra.mxu0 %v3021
    %5512 = vmatprep.subr.bf16.mxu0 %v3030
    %5513 = vmatpush1.bf16.msra.mxu0 %v3029
    %5514 = vmatprep.subr.bf16.mxu0 %v3038
    %5515 = vmatpush1.bf16.msra.mxu0 %v3037
    %5516 = vmatprep.mubr.bf16.mxu0 %v5196
    %5517 = vmatmul.mubr.bf16.gmra.mrb[0].mxu0 %v5195
    %v5518 = vpop.f32.mrb[0].mxu0
    %v5519 = vadd.f32 %v5478, %v5518
    %v5520 = vpop.f32.mrb[0].mxu0
    %v5521 = vadd.f32 %v5480, %v5520
    %v5522 = vpop.f32.mrb[0].mxu0
    %v5523 = vpop.f32.mrb[0].mxu0
    %5524 = vdwg.mxu0
    %v5525 = vxor.u32 %v5273, 2147483648
    %v5526 = vxor.u32 %v5275, 2147483648
    %v5527 = vmul.f32 %v5525, 1.442695
    %v5528 = vpow.pop %v5527
    %v5529 = vmul.f32 %v5526, 1.442695
    %v5530 = vpow.pop %v5529
    %v5531 = vadd.f32 %v5528, 1.0
    %v5532 = vadd.f32 %v5530, 1.0
    %v5533 = vrcp.pop %v5531
    %v5534 = vmul.f32 1.0, %v5533
    %v5535 = vrcp.pop %v5532
    %v5536 = vmul.f32 1.0, %v5535
    %v5537 = vxor.u32 %v5355, 2147483648
    %v5538 = vxor.u32 %v5357, 2147483648
    %v5539 = vmul.f32 %v5537, 1.442695
    %v5540 = vpow.pop %v5539
    %v5541 = vmul.f32 %v5538, 1.442695
    %v5542 = vpow.pop %v5541
    %v5543 = vadd.f32 %v5540, 1.0
    %v5544 = vadd.f32 %v5542, 1.0
    %v5545 = vrcp.pop %v5543
    %v5546 = vmul.f32 1.0, %v5545
    %v5547 = vrcp.pop %v5544
    %v5548 = vmul.f32 1.0, %v5547
    %v5549 = vtanh.pop %v5437
    %v5550 = vtanh.pop %v5439
    %v5551 = vxor.u32 %v5519, 2147483648
    %v5552 = vxor.u32 %v5521, 2147483648
    %v5553 = vmul.f32 %v5551, 1.442695
    %v5554 = vpow.pop %v5553
    %v5555 = vmul.f32 %v5552, 1.442695
    %v5556 = vpow.pop %v5555
    %v5557 = vadd.f32 %v5554, 1.0
    %v5558 = vadd.f32 %v5556, 1.0
    %v5559 = vrcp.pop %v5557
    %v5560 = vmul.f32 1.0, %v5559
    %v5561 = vrcp.pop %v5558
    %v5562 = vmul.f32 1.0, %v5561
    %v5563 = vmul.f32 %v5546, %v4933
    %v5564 = vmul.f32 %v5548, %v4934
    %v5565 = vmul.f32 %v5534, %v5549
    %v5566 = vmul.f32 %v5536, %v5550
    %v5567 = vadd.f32 %v5563, %v5565
    %v5568 = vadd.f32 %v5564, %v5566
    %v5569 = vtanh.pop %v5567
    %v5570 = vtanh.pop %v5568
    %v5571 = vmul.f32 %v5560, %v5569
    %v5572 = vmul.f32 %v5562, %v5570
    %s5573 = scalar_lea.vmem [#allocation2], 64
    %v5574 = vld [vmem:[%s5573] sm:$0xff]
    %v5575 = vld [vmem:[%s5573 + $0x8] sm:$0xff]
    %5576 = vmatprep.subr.bf16.mxu0 %v1466
    %5577 = vmatpush1.bf16.msra.mxu0 %v1465
    %5578 = vmatprep.subr.bf16.mxu0 %v1474
    %5579 = vmatpush1.bf16.msra.mxu0 %v1473
    %5580 = vmatprep.subr.bf16.mxu0 %v1482
    %5581 = vmatpush1.bf16.msra.mxu0 %v1481
    %5582 = vmatprep.subr.bf16.mxu0 %v1490
    %5583 = vmatpush1.bf16.msra.mxu0 %v1489
    %5584 = vmatprep.subr.bf16.mxu0 %v1498
    %5585 = vmatpush1.bf16.msra.mxu0 %v1497
    %5586 = vmatprep.subr.bf16.mxu0 %v1506
    %5587 = vmatpush1.bf16.msra.mxu0 %v1505
    %5588 = vmatprep.subr.bf16.mxu0 %v1514
    %5589 = vmatpush1.bf16.msra.mxu0 %v1513
    %5590 = vmatprep.subr.bf16.mxu0 %v1522
    %5591 = vmatpush1.bf16.msra.mxu0 %v1521
    %5592 = vmatprep.subr.bf16.mxu0 %v1530
    %5593 = vmatpush1.bf16.msra.mxu0 %v1529
    %5594 = vmatprep.subr.bf16.mxu0 %v1538
    %5595 = vmatpush1.bf16.msra.mxu0 %v1537
    %5596 = vmatprep.subr.bf16.mxu0 %v1546
    %5597 = vmatpush1.bf16.msra.mxu0 %v1545
    %5598 = vmatprep.subr.bf16.mxu0 %v1554
    %5599 = vmatpush1.bf16.msra.mxu0 %v1553
    %5600 = vmatprep.subr.bf16.mxu0 %v1562
    %5601 = vmatpush1.bf16.msra.mxu0 %v1561
    %5602 = vmatprep.subr.bf16.mxu0 %v1570
    %5603 = vmatpush1.bf16.msra.mxu0 %v1569
    %5604 = vmatprep.subr.bf16.mxu0 %v1578
    %5605 = vmatpush1.bf16.msra.mxu0 %v1577
    %5606 = vmatprep.subr.bf16.mxu0 %v1586
    %5607 = vmatpush1.bf16.msra.mxu0 %v1585
    %5608 = vmatprep.mubr.bf16.mxu0 %v5194
    %5609 = vmatmul.mubr.bf16.gmra.mrb[0].mxu0 %v5193
    %v5610 = vpop.f32.mrb[0].mxu0
    %v5611 = vadd.f32 0.0, %v5610
    %v5612 = vpop.f32.mrb[0].mxu0
    %v5613 = vadd.f32 0.0, %v5612
    %v5614 = vpop.f32.mrb[0].mxu0
    %v5615 = vpop.f32.mrb[0].mxu0
    %5616 = vdwg.mxu0
    %5617 = vmatprep.subr.bf16.mxu0 %v1468
    %5618 = vmatpush1.bf16.msra.mxu0 %v1467
    %5619 = vmatprep.subr.bf16.mxu0 %v1476
    %5620 = vmatpush1.bf16.msra.mxu0 %v1475
    %5621 = vmatprep.subr.bf16.mxu0 %v1484
    %5622 = vmatpush1.bf16.msra.mxu0 %v1483
    %5623 = vmatprep.subr.bf16.mxu0 %v1492
    %5624 = vmatpush1.bf16.msra.mxu0 %v1491
    %5625 = vmatprep.subr.bf16.mxu0 %v1500
    %5626 = vmatpush1.bf16.msra.mxu0 %v1499
    %5627 = vmatprep.subr.bf16.mxu0 %v1508
    %5628 = vmatpush1.bf16.msra.mxu0 %v1507
    %5629 = vmatprep.subr.bf16.mxu0 %v1516
    %5630 = vmatpush1.bf16.msra.mxu0 %v1515
    %5631 = vmatprep.subr.bf16.mxu0 %v1524
    %5632 = vmatpush1.bf16.msra.mxu0 %v1523
    %5633 = vmatprep.subr.bf16.mxu0 %v1532
    %5634 = vmatpush1.bf16.msra.mxu0 %v1531
    %5635 = vmatprep.subr.bf16.mxu0 %v1540
    %5636 = vmatpush1.bf16.msra.mxu0 %v1539
    %5637 = vmatprep.subr.bf16.mxu0 %v1548
    %5638 = vmatpush1.bf16.msra.mxu0 %v1547
    %5639 = vmatprep.subr.bf16.mxu0 %v1556
    %5640 = vmatpush1.bf16.msra.mxu0 %v1555
    %5641 = vmatprep.subr.bf16.mxu0 %v1564
    %5642 = vmatpush1.bf16.msra.mxu0 %v1563
    %5643 = vmatprep.subr.bf16.mxu0 %v1572
    %5644 = vmatpush1.bf16.msra.mxu0 %v1571
    %5645 = vmatprep.subr.bf16.mxu0 %v1580
    %5646 = vmatpush1.bf16.msra.mxu0 %v1579
    %5647 = vmatprep.subr.bf16.mxu0 %v1588
    %5648 = vmatpush1.bf16.msra.mxu0 %v1587
    %5649 = vmatprep.mubr.bf16.mxu0 %v5194
    %5650 = vmatmul.mubr.bf16.gmra.mrb[0].mxu0 %v5193
    %v5651 = vpop.f32.mrb[0].mxu0
    %v5652 = vadd.f32 0.0, %v5651
    %v5653 = vpop.f32.mrb[0].mxu0
    %v5654 = vadd.f32 0.0, %v5653
    %v5655 = vpop.f32.mrb[0].mxu0
    %v5656 = vpop.f32.mrb[0].mxu0
    %5657 = vdwg.mxu0
    %5658 = vmatprep.subr.bf16.mxu0 %v1470
    %5659 = vmatpush1.bf16.msra.mxu0 %v1469
    %5660 = vmatprep.subr.bf16.mxu0 %v1478
    %5661 = vmatpush1.bf16.msra.mxu0 %v1477
    %5662 = vmatprep.subr.bf16.mxu0 %v1486
    %5663 = vmatpush1.bf16.msra.mxu0 %v1485
    %5664 = vmatprep.subr.bf16.mxu0 %v1494
    %5665 = vmatpush1.bf16.msra.mxu0 %v1493
    %5666 = vmatprep.subr.bf16.mxu0 %v1502
    %5667 = vmatpush1.bf16.msra.mxu0 %v1501
    %5668 = vmatprep.subr.bf16.mxu0 %v1510
    %5669 = vmatpush1.bf16.msra.mxu0 %v1509
    %5670 = vmatprep.subr.bf16.mxu0 %v1518
    %5671 = vmatpush1.bf16.msra.mxu0 %v1517
    %5672 = vmatprep.subr.bf16.mxu0 %v1526
    %5673 = vmatpush1.bf16.msra.mxu0 %v1525
    %5674 = vmatprep.subr.bf16.mxu0 %v1534
    %5675 = vmatpush1.bf16.msra.mxu0 %v1533
    %5676 = vmatprep.subr.bf16.mxu0 %v1542
    %5677 = vmatpush1.bf16.msra.mxu0 %v1541
    %5678 = vmatprep.subr.bf16.mxu0 %v1550
    %5679 = vmatpush1.bf16.msra.mxu0 %v1549
    %5680 = vmatprep.subr.bf16.mxu0 %v1558
    %5681 = vmatpush1.bf16.msra.mxu0 %v1557
    %5682 = vmatprep.subr.bf16.mxu0 %v1566
    %5683 = vmatpush1.bf16.msra.mxu0 %v1565
    %5684 = vmatprep.subr.bf16.mxu0 %v1574
    %5685 = vmatpush1.bf16.msra.mxu0 %v1573
    %5686 = vmatprep.subr.bf16.mxu0 %v1582
    %5687 = vmatpush1.bf16.msra.mxu0 %v1581
    %5688 = vmatprep.subr.bf16.mxu0 %v1590
    %5689 = vmatpush1.bf16.msra.mxu0 %v1589
    %5690 = vmatprep.mubr.bf16.mxu0 %v5194
    %5691 = vmatmul.mubr.bf16.gmra.mrb[0].mxu0 %v5193
    %v5692 = vpop.f32.mrb[0].mxu0
    %v5693 = vadd.f32 0.0, %v5692
    %v5694 = vpop.f32.mrb[0].mxu0
    %v5695 = vadd.f32 0.0, %v5694
    %v5696 = vpop.f32.mrb[0].mxu0
    %v5697 = vpop.f32.mrb[0].mxu0
    %5698 = vdwg.mxu0
    %5699 = vmatprep.subr.bf16.mxu0 %v1472
    %5700 = vmatpush1.bf16.msra.mxu0 %v1471
    %5701 = vmatprep.subr.bf16.mxu0 %v1480
    %5702 = vmatpush1.bf16.msra.mxu0 %v1479
    %5703 = vmatprep.subr.bf16.mxu0 %v1488
    %5704 = vmatpush1.bf16.msra.mxu0 %v1487
    %5705 = vmatprep.subr.bf16.mxu0 %v1496
    %5706 = vmatpush1.bf16.msra.mxu0 %v1495
    %5707 = vmatprep.subr.bf16.mxu0 %v1504
    %5708 = vmatpush1.bf16.msra.mxu0 %v1503
    %5709 = vmatprep.subr.bf16.mxu0 %v1512
    %5710 = vmatpush1.bf16.msra.mxu0 %v1511
    %5711 = vmatprep.subr.bf16.mxu0 %v1520
    %5712 = vmatpush1.bf16.msra.mxu0 %v1519
    %5713 = vmatprep.subr.bf16.mxu0 %v1528
    %5714 = vmatpush1.bf16.msra.mxu0 %v1527
    %5715 = vmatprep.subr.bf16.mxu0 %v1536
    %5716 = vmatpush1.bf16.msra.mxu0 %v1535
    %5717 = vmatprep.subr.bf16.mxu0 %v1544
    %5718 = vmatpush1.bf16.msra.mxu0 %v1543
    %5719 = vmatprep.subr.bf16.mxu0 %v1552
    %5720 = vmatpush1.bf16.msra.mxu0 %v1551
    %5721 = vmatprep.subr.bf16.mxu0 %v1560
    %5722 = vmatpush1.bf16.msra.mxu0 %v1559
    %5723 = vmatprep.subr.bf16.mxu0 %v1568
    %5724 = vmatpush1.bf16.msra.mxu0 %v1567
    %5725 = vmatprep.subr.bf16.mxu0 %v1576
    %5726 = vmatpush1.bf16.msra.mxu0 %v1575
    %5727 = vmatprep.subr.bf16.mxu0 %v1584
    %5728 = vmatpush1.bf16.msra.mxu0 %v1583
    %5729 = vmatprep.subr.bf16.mxu0 %v1592
    %5730 = vmatpush1.bf16.msra.mxu0 %v1591
    %5731 = vmatprep.mubr.bf16.mxu0 %v5194
    %5732 = vmatmul.mubr.bf16.gmra.mrb[0].mxu0 %v5193
    %v5733 = vpop.f32.mrb[0].mxu0
    %v5734 = vadd.f32 0.0, %v5733
    %v5735 = vpop.f32.mrb[0].mxu0
    %v5736 = vadd.f32 0.0, %v5735
    %v5737 = vpop.f32.mrb[0].mxu0
    %v5738 = vpop.f32.mrb[0].mxu0
    %5739 = vdwg.mxu0
    %v5748 = vcombine.low %v5611, %v5613
    %v5749 = vcombine.low %v5652, %v5654
    %v5751 = vunpack.c.l.s4 1983009808
    %v5752 = vunpack.c.0.s8 %v5751
    %v5753 = vlaneseq
    %v5754 = vshrl.u32 %v5753, 7
    %v5755 = vsub.s32 %v5752, %v5754
    %v5756 = vrot.slane %v5748, %v5755
    %v5758 = vunpack.c.l.s4 1983009808
    %v5759 = vunpack.c.0.s8 %v5758
    %v5760 = vlaneseq
    %v5761 = vshrl.u32 %v5760, 7
    %v5762 = vsub.s32 %v5759, %v5761
    %v5763 = vrot.slane %v5749, %v5762
    %v5764 = vcombine.low %v5756, %v5763
    %v5765 = vcombine.low %v5693, %v5695
    %v5766 = vcombine.low %v5734, %v5736
    %v5768 = vunpack.c.l.s4 1983009808
    %v5769 = vunpack.c.0.s8 %v5768
    %v5770 = vlaneseq
    %v5771 = vshrl.u32 %v5770, 7
    %v5772 = vsub.s32 %v5769, %v5771
    %v5773 = vrot.slane %v5765, %v5772
    %v5775 = vunpack.c.l.s4 1983009808
    %v5776 = vunpack.c.0.s8 %v5775
    %v5777 = vlaneseq
    %v5778 = vshrl.u32 %v5777, 7
    %v5779 = vsub.s32 %v5776, %v5778
    %v5780 = vrot.slane %v5766, %v5779
    %v5781 = vcombine.low %v5773, %v5780
    %v5784 = vadd.f32 %v5574, %v5764
    %v5785 = vadd.f32 %v5575, %v5781
    %v5786 = vxor.u32 %v5784, 2147483648
    %v5787 = vmul.f32 %v5786, 1.442695
    %v5788 = vpow.pop %v5787
    %v5789 = vadd.f32 %v5788, 1.0
    %v5790 = vrcp.pop %v5789
    %v5791 = vmul.f32 1.0, %v5790
    %v5793 = vrot.slane %v5784, 4
    %v5795 = vxor.u32 %v5793, 2147483648
    %v5796 = vmul.f32 %v5795, 1.442695
    %v5797 = vpow.pop %v5796
    %v5798 = vadd.f32 %v5797, 1.0
    %v5799 = vrcp.pop %v5798
    %v5800 = vmul.f32 1.0, %v5799
    %v5801 = vtanh.pop %v5785
    %v5803 = vrot.slane %v5785, 4
    %v5805 = vxor.u32 %v5803, 2147483648
    %v5806 = vmul.f32 %v5805, 1.442695
    %v5807 = vpow.pop %v5806
    %v5808 = vadd.f32 %v5807, 1.0
    %v5809 = vrcp.pop %v5808
    %v5810 = vmul.f32 1.0, %v5809
    %v5811 = vmul.f32 %v5800, %v5179
    %v5812 = vmul.f32 %v5791, %v5801
    %v5813 = vadd.f32 %v5811, %v5812
    %v5814 = vtanh.pop %v5813
    %v5815 = vmul.f32 %v5810, %v5814
    %v5818 = vunpack.c.l.s4 1983009808
    %v5819 = vunpack.c.0.s8 %v5818
    %v5820 = vlaneseq
    %v5821 = vshrl.u32 %v5820, 7
    %v5822 = vsub.s32 %v5819, %v5821
    %v5823 = vrot.slane %v5815, %v5822
    %v5824 = vcombine.high %v5823, %v5823
    %v5827 = vpack.c.bf16 %v5823, %v5823
    %v5828 = vpack.c.bf16 %v5824, %v5824
    %v5829 = vpack.c.bf16 %v5571, %v5571
    %v5830 = vpack.c.bf16 %v5572, %v5572
    %5831 = vmatprep.subr.bf16.mxu0 %v2784
    %5832 = vmatpush1.bf16.msra.mxu0 %v2783
    %5833 = vmatprep.subr.bf16.mxu0 %v2792
    %5834 = vmatpush1.bf16.msra.mxu0 %v2791
    %5835 = vmatprep.subr.bf16.mxu0 %v2800
    %5836 = vmatpush1.bf16.msra.mxu0 %v2799
    %5837 = vmatprep.subr.bf16.mxu0 %v2808
    %5838 = vmatpush1.bf16.msra.mxu0 %v2807
    %5839 = vmatprep.subr.bf16.mxu0 %v2816
    %5840 = vmatpush1.bf16.msra.mxu0 %v2815
    %5841 = vmatprep.subr.bf16.mxu0 %v2824
    %5842 = vmatpush1.bf16.msra.mxu0 %v2823
    %5843 = vmatprep.subr.bf16.mxu0 %v2832
    %5844 = vmatpush1.bf16.msra.mxu0 %v2831
    %5845 = vmatprep.subr.bf16.mxu0 %v2840
    %5846 = vmatpush1.bf16.msra.mxu0 %v2839
    %5847 = vmatprep.subr.bf16.mxu0 %v2848
    %5848 = vmatpush1.bf16.msra.mxu0 %v2847
    %5849 = vmatprep.subr.bf16.mxu0 %v2856
    %5850 = vmatpush1.bf16.msra.mxu0 %v2855
    %5851 = vmatprep.subr.bf16.mxu0 %v2864
    %5852 = vmatpush1.bf16.msra.mxu0 %v2863
    %5853 = vmatprep.subr.bf16.mxu0 %v2872
    %5854 = vmatpush1.bf16.msra.mxu0 %v2871
    %5855 = vmatprep.subr.bf16.mxu0 %v2880
    %5856 = vmatpush1.bf16.msra.mxu0 %v2879
    %5857 = vmatprep.subr.bf16.mxu0 %v2888
    %5858 = vmatpush1.bf16.msra.mxu0 %v2887
    %5859 = vmatprep.subr.bf16.mxu0 %v2896
    %5860 = vmatpush1.bf16.msra.mxu0 %v2895
    %5861 = vmatprep.subr.bf16.mxu0 %v2904
    %5862 = vmatpush1.bf16.msra.mxu0 %v2903
    %5863 = vmatprep.mubr.bf16.mxu0 %v5828
    %5864 = vmatmul.mubr.bf16.gmra.mrb[0].mxu0 %v5827
    %v5865 = vpop.f32.mrb[0].mxu0
    %v5866 = vadd.f32 %v1978, %v5865
    %v5867 = vpop.f32.mrb[0].mxu0
    %v5868 = vadd.f32 %v1982, %v5867
    %v5869 = vpop.f32.mrb[0].mxu0
    %v5870 = vpop.f32.mrb[0].mxu0
    %5871 = vdwg.mxu0
    %5872 = vmatprep.subr.bf16.mxu0 %v2912
    %5873 = vmatpush1.bf16.msra.mxu0 %v2911
    %5874 = vmatprep.subr.bf16.mxu0 %v2920
    %5875 = vmatpush1.bf16.msra.mxu0 %v2919
    %5876 = vmatprep.subr.bf16.mxu0 %v2928
    %5877 = vmatpush1.bf16.msra.mxu0 %v2927
    %5878 = vmatprep.subr.bf16.mxu0 %v2936
    %5879 = vmatpush1.bf16.msra.mxu0 %v2935
    %5880 = vmatprep.subr.bf16.mxu0 %v2944
    %5881 = vmatpush1.bf16.msra.mxu0 %v2943
    %5882 = vmatprep.subr.bf16.mxu0 %v2952
    %5883 = vmatpush1.bf16.msra.mxu0 %v2951
    %5884 = vmatprep.subr.bf16.mxu0 %v2960
    %5885 = vmatpush1.bf16.msra.mxu0 %v2959
    %5886 = vmatprep.subr.bf16.mxu0 %v2968
    %5887 = vmatpush1.bf16.msra.mxu0 %v2967
    %5888 = vmatprep.subr.bf16.mxu0 %v2976
    %5889 = vmatpush1.bf16.msra.mxu0 %v2975
    %5890 = vmatprep.subr.bf16.mxu0 %v2984
    %5891 = vmatpush1.bf16.msra.mxu0 %v2983
    %5892 = vmatprep.subr.bf16.mxu0 %v2992
    %5893 = vmatpush1.bf16.msra.mxu0 %v2991
    %5894 = vmatprep.subr.bf16.mxu0 %v3000
    %5895 = vmatpush1.bf16.msra.mxu0 %v2999
    %5896 = vmatprep.subr.bf16.mxu0 %v3008
    %5897 = vmatpush1.bf16.msra.mxu0 %v3007
    %5898 = vmatprep.subr.bf16.mxu0 %v3016
    %5899 = vmatpush1.bf16.msra.mxu0 %v3015
    %5900 = vmatprep.subr.bf16.mxu0 %v3024
    %5901 = vmatpush1.bf16.msra.mxu0 %v3023
    %5902 = vmatprep.subr.bf16.mxu0 %v3032
    %5903 = vmatpush1.bf16.msra.mxu0 %v3031
    %5904 = vmatprep.mubr.bf16.mxu0 %v5830
    %5905 = vmatmul.mubr.bf16.gmra.mrb[0].mxu0 %v5829
    %v5906 = vpop.f32.mrb[0].mxu0
    %v5907 = vadd.f32 %v5866, %v5906
    %v5908 = vpop.f32.mrb[0].mxu0
    %v5909 = vadd.f32 %v5868, %v5908
    %v5910 = vpop.f32.mrb[0].mxu0
    %v5911 = vpop.f32.mrb[0].mxu0
    %5912 = vdwg.mxu0
    %5913 = vmatprep.subr.bf16.mxu0 %v2786
    %5914 = vmatpush1.bf16.msra.mxu0 %v2785
    %5915 = vmatprep.subr.bf16.mxu0 %v2794
    %5916 = vmatpush1.bf16.msra.mxu0 %v2793
    %5917 = vmatprep.subr.bf16.mxu0 %v2802
    %5918 = vmatpush1.bf16.msra.mxu0 %v2801
    %5919 = vmatprep.subr.bf16.mxu0 %v2810
    %5920 = vmatpush1.bf16.msra.mxu0 %v2809
    %5921 = vmatprep.subr.bf16.mxu0 %v2818
    %5922 = vmatpush1.bf16.msra.mxu0 %v2817
    %5923 = vmatprep.subr.bf16.mxu0 %v2826
    %5924 = vmatpush1.bf16.msra.mxu0 %v2825
    %5925 = vmatprep.subr.bf16.mxu0 %v2834
    %5926 = vmatpush1.bf16.msra.mxu0 %v2833
    %5927 = vmatprep.subr.bf16.mxu0 %v2842
    %5928 = vmatpush1.bf16.msra.mxu0 %v2841
    %5929 = vmatprep.subr.bf16.mxu0 %v2850
    %5930 = vmatpush1.bf16.msra.mxu0 %v2849
    %5931 = vmatprep.subr.bf16.mxu0 %v2858
    %5932 = vmatpush1.bf16.msra.mxu0 %v2857
    %5933 = vmatprep.subr.bf16.mxu0 %v2866
    %5934 = vmatpush1.bf16.msra.mxu0 %v2865
    %5935 = vmatprep.subr.bf16.mxu0 %v2874
    %5936 = vmatpush1.bf16.msra.mxu0 %v2873
    %5937 = vmatprep.subr.bf16.mxu0 %v2882
    %5938 = vmatpush1.bf16.msra.mxu0 %v2881
    %5939 = vmatprep.subr.bf16.mxu0 %v2890
    %5940 = vmatpush1.bf16.msra.mxu0 %v2889
    %5941 = vmatprep.subr.bf16.mxu0 %v2898
    %5942 = vmatpush1.bf16.msra.mxu0 %v2897
    %5943 = vmatprep.subr.bf16.mxu0 %v2906
    %5944 = vmatpush1.bf16.msra.mxu0 %v2905
    %5945 = vmatprep.mubr.bf16.mxu0 %v5828
    %5946 = vmatmul.mubr.bf16.gmra.mrb[0].mxu0 %v5827
    %v5947 = vpop.f32.mrb[0].mxu0
    %v5948 = vadd.f32 %v1986, %v5947
    %v5949 = vpop.f32.mrb[0].mxu0
    %v5950 = vadd.f32 %v1990, %v5949
    %v5951 = vpop.f32.mrb[0].mxu0
    %v5952 = vpop.f32.mrb[0].mxu0
    %5953 = vdwg.mxu0
    %5954 = vmatprep.subr.bf16.mxu0 %v2914
    %5955 = vmatpush1.bf16.msra.mxu0 %v2913
    %5956 = vmatprep.subr.bf16.mxu0 %v2922
    %5957 = vmatpush1.bf16.msra.mxu0 %v2921
    %5958 = vmatprep.subr.bf16.mxu0 %v2930
    %5959 = vmatpush1.bf16.msra.mxu0 %v2929
    %5960 = vmatprep.subr.bf16.mxu0 %v2938
    %5961 = vmatpush1.bf16.msra.mxu0 %v2937
    %5962 = vmatprep.subr.bf16.mxu0 %v2946
    %5963 = vmatpush1.bf16.msra.mxu0 %v2945
    %5964 = vmatprep.subr.bf16.mxu0 %v2954
    %5965 = vmatpush1.bf16.msra.mxu0 %v2953
    %5966 = vmatprep.subr.bf16.mxu0 %v2962
    %5967 = vmatpush1.bf16.msra.mxu0 %v2961
    %5968 = vmatprep.subr.bf16.mxu0 %v2970
    %5969 = vmatpush1.bf16.msra.mxu0 %v2969
    %5970 = vmatprep.subr.bf16.mxu0 %v2978
    %5971 = vmatpush1.bf16.msra.mxu0 %v2977
    %5972 = vmatprep.subr.bf16.mxu0 %v2986
    %5973 = vmatpush1.bf16.msra.mxu0 %v2985
    %5974 = vmatprep.subr.bf16.mxu0 %v2994
    %5975 = vmatpush1.bf16.msra.mxu0 %v2993
    %5976 = vmatprep.subr.bf16.mxu0 %v3002
    %5977 = vmatpush1.bf16.msra.mxu0 %v3001
    %5978 = vmatprep.subr.bf16.mxu0 %v3010
    %5979 = vmatpush1.bf16.msra.mxu0 %v3009
    %5980 = vmatprep.subr.bf16.mxu0 %v3018
    %5981 = vmatpush1.bf16.msra.mxu0 %v3017
    %5982 = vmatprep.subr.bf16.mxu0 %v3026
    %5983 = vmatpush1.bf16.msra.mxu0 %v3025
    %5984 = vmatprep.subr.bf16.mxu0 %v3034
    %5985 = vmatpush1.bf16.msra.mxu0 %v3033
    %5986 = vmatprep.mubr.bf16.mxu0 %v5830
    %5987 = vmatmul.mubr.bf16.gmra.mrb[0].mxu0 %v5829
    %v5988 = vpop.f32.mrb[0].mxu0
    %v5989 = vadd.f32 %v5948, %v5988
    %v5990 = vpop.f32.mrb[0].mxu0
    %v5991 = vadd.f32 %v5950, %v5990
    %v5992 = vpop.f32.mrb[0].mxu0
    %v5993 = vpop.f32.mrb[0].mxu0
    %5994 = vdwg.mxu0
    %5995 = vmatprep.subr.bf16.mxu0 %v2788
    %5996 = vmatpush1.bf16.msra.mxu0 %v2787
    %5997 = vmatprep.subr.bf16.mxu0 %v2796
    %5998 = vmatpush1.bf16.msra.mxu0 %v2795
    %5999 = vmatprep.subr.bf16.mxu0 %v2804
    %6000 = vmatpush1.bf16.msra.mxu0 %v2803
    %6001 = vmatprep.subr.bf16.mxu0 %v2812
    %6002 = vmatpush1.bf16.msra.mxu0 %v2811
    %6003 = vmatprep.subr.bf16.mxu0 %v2820
    %6004 = vmatpush1.bf16.msra.mxu0 %v2819
    %6005 = vmatprep.subr.bf16.mxu0 %v2828
    %6006 = vmatpush1.bf16.msra.mxu0 %v2827
    %6007 = vmatprep.subr.bf16.mxu0 %v2836
    %6008 = vmatpush1.bf16.msra.mxu0 %v2835
    %6009 = vmatprep.subr.bf16.mxu0 %v2844
    %6010 = vmatpush1.bf16.msra.mxu0 %v2843
    %6011 = vmatprep.subr.bf16.mxu0 %v2852
    %6012 = vmatpush1.bf16.msra.mxu0 %v2851
    %6013 = vmatprep.subr.bf16.mxu0 %v2860
    %6014 = vmatpush1.bf16.msra.mxu0 %v2859
    %6015 = vmatprep.subr.bf16.mxu0 %v2868
    %6016 = vmatpush1.bf16.msra.mxu0 %v2867
    %6017 = vmatprep.subr.bf16.mxu0 %v2876
    %6018 = vmatpush1.bf16.msra.mxu0 %v2875
    %6019 = vmatprep.subr.bf16.mxu0 %v2884
    %6020 = vmatpush1.bf16.msra.mxu0 %v2883
    %6021 = vmatprep.subr.bf16.mxu0 %v2892
    %6022 = vmatpush1.bf16.msra.mxu0 %v2891
    %6023 = vmatprep.subr.bf16.mxu0 %v2900
    %6024 = vmatpush1.bf16.msra.mxu0 %v2899
    %6025 = vmatprep.subr.bf16.mxu0 %v2908
    %6026 = vmatpush1.bf16.msra.mxu0 %v2907
    %6027 = vmatprep.mubr.bf16.mxu0 %v5828
    %6028 = vmatmul.mubr.bf16.gmra.mrb[0].mxu0 %v5827
    %v6029 = vpop.f32.mrb[0].mxu0
    %v6030 = vadd.f32 %v1994, %v6029
    %v6031 = vpop.f32.mrb[0].mxu0
    %v6032 = vadd.f32 %v1998, %v6031
    %v6033 = vpop.f32.mrb[0].mxu0
    %v6034 = vpop.f32.mrb[0].mxu0
    %6035 = vdwg.mxu0
    %6036 = vmatprep.subr.bf16.mxu0 %v2916
    %6037 = vmatpush1.bf16.msra.mxu0 %v2915
    %6038 = vmatprep.subr.bf16.mxu0 %v2924
    %6039 = vmatpush1.bf16.msra.mxu0 %v2923
    %6040 = vmatprep.subr.bf16.mxu0 %v2932
    %6041 = vmatpush1.bf16.msra.mxu0 %v2931
    %6042 = vmatprep.subr.bf16.mxu0 %v2940
    %6043 = vmatpush1.bf16.msra.mxu0 %v2939
    %6044 = vmatprep.subr.bf16.mxu0 %v2948
    %6045 = vmatpush1.bf16.msra.mxu0 %v2947
    %6046 = vmatprep.subr.bf16.mxu0 %v2956
    %6047 = vmatpush1.bf16.msra.mxu0 %v2955
    %6048 = vmatprep.subr.bf16.mxu0 %v2964
    %6049 = vmatpush1.bf16.msra.mxu0 %v2963
    %6050 = vmatprep.subr.bf16.mxu0 %v2972
    %6051 = vmatpush1.bf16.msra.mxu0 %v2971
    %6052 = vmatprep.subr.bf16.mxu0 %v2980
    %6053 = vmatpush1.bf16.msra.mxu0 %v2979
    %6054 = vmatprep.subr.bf16.mxu0 %v2988
    %6055 = vmatpush1.bf16.msra.mxu0 %v2987
    %6056 = vmatprep.subr.bf16.mxu0 %v2996
    %6057 = vmatpush1.bf16.msra.mxu0 %v2995
    %6058 = vmatprep.subr.bf16.mxu0 %v3004
    %6059 = vmatpush1.bf16.msra.mxu0 %v3003
    %6060 = vmatprep.subr.bf16.mxu0 %v3012
    %6061 = vmatpush1.bf16.msra.mxu0 %v3011
    %6062 = vmatprep.subr.bf16.mxu0 %v3020
    %6063 = vmatpush1.bf16.msra.mxu0 %v3019
    %6064 = vmatprep.subr.bf16.mxu0 %v3028
    %6065 = vmatpush1.bf16.msra.mxu0 %v3027
    %6066 = vmatprep.subr.bf16.mxu0 %v3036
    %6067 = vmatpush1.bf16.msra.mxu0 %v3035
    %6068 = vmatprep.mubr.bf16.mxu0 %v5830
    %6069 = vmatmul.mubr.bf16.gmra.mrb[0].mxu0 %v5829
    %v6070 = vpop.f32.mrb[0].mxu0
    %v6071 = vadd.f32 %v6030, %v6070
    %v6072 = vpop.f32.mrb[0].mxu0
    %v6073 = vadd.f32 %v6032, %v6072
    %v6074 = vpop.f32.mrb[0].mxu0
    %v6075 = vpop.f32.mrb[0].mxu0
    %6076 = vdwg.mxu0
    %6077 = vmatprep.subr.bf16.mxu0 %v2790
    %6078 = vmatpush1.bf16.msra.mxu0 %v2789
    %6079 = vmatprep.subr.bf16.mxu0 %v2798
    %6080 = vmatpush1.bf16.msra.mxu0 %v2797
    %6081 = vmatprep.subr.bf16.mxu0 %v2806
    %6082 = vmatpush1.bf16.msra.mxu0 %v2805
    %6083 = vmatprep.subr.bf16.mxu0 %v2814
    %6084 = vmatpush1.bf16.msra.mxu0 %v2813
    %6085 = vmatprep.subr.bf16.mxu0 %v2822
    %6086 = vmatpush1.bf16.msra.mxu0 %v2821
    %6087 = vmatprep.subr.bf16.mxu0 %v2830
    %6088 = vmatpush1.bf16.msra.mxu0 %v2829
    %6089 = vmatprep.subr.bf16.mxu0 %v2838
    %6090 = vmatpush1.bf16.msra.mxu0 %v2837
    %6091 = vmatprep.subr.bf16.mxu0 %v2846
    %6092 = vmatpush1.bf16.msra.mxu0 %v2845
    %6093 = vmatprep.subr.bf16.mxu0 %v2854
    %6094 = vmatpush1.bf16.msra.mxu0 %v2853
    %6095 = vmatprep.subr.bf16.mxu0 %v2862
    %6096 = vmatpush1.bf16.msra.mxu0 %v2861
    %6097 = vmatprep.subr.bf16.mxu0 %v2870
    %6098 = vmatpush1.bf16.msra.mxu0 %v2869
    %6099 = vmatprep.subr.bf16.mxu0 %v2878
    %6100 = vmatpush1.bf16.msra.mxu0 %v2877
    %6101 = vmatprep.subr.bf16.mxu0 %v2886
    %6102 = vmatpush1.bf16.msra.mxu0 %v2885
    %6103 = vmatprep.subr.bf16.mxu0 %v2894
    %6104 = vmatpush1.bf16.msra.mxu0 %v2893
    %6105 = vmatprep.subr.bf16.mxu0 %v2902
    %6106 = vmatpush1.bf16.msra.mxu0 %v2901
    %6107 = vmatprep.subr.bf16.mxu0 %v2910
    %6108 = vmatpush1.bf16.msra.mxu0 %v2909
    %6109 = vmatprep.mubr.bf16.mxu0 %v5828
    %6110 = vmatmul.mubr.bf16.gmra.mrb[0].mxu0 %v5827
    %v6111 = vpop.f32.mrb[0].mxu0
    %v6112 = vadd.f32 %v2002, %v6111
    %v6113 = vpop.f32.mrb[0].mxu0
    %v6114 = vadd.f32 %v2006, %v6113
    %v6115 = vpop.f32.mrb[0].mxu0
    %v6116 = vpop.f32.mrb[0].mxu0
    %6117 = vdwg.mxu0
    %6118 = vmatprep.subr.bf16.mxu0 %v2918
    %6119 = vmatpush1.bf16.msra.mxu0 %v2917
    %6120 = vmatprep.subr.bf16.mxu0 %v2926
    %6121 = vmatpush1.bf16.msra.mxu0 %v2925
    %6122 = vmatprep.subr.bf16.mxu0 %v2934
    %6123 = vmatpush1.bf16.msra.mxu0 %v2933
    %6124 = vmatprep.subr.bf16.mxu0 %v2942
    %6125 = vmatpush1.bf16.msra.mxu0 %v2941
    %6126 = vmatprep.subr.bf16.mxu0 %v2950
    %6127 = vmatpush1.bf16.msra.mxu0 %v2949
    %6128 = vmatprep.subr.bf16.mxu0 %v2958
    %6129 = vmatpush1.bf16.msra.mxu0 %v2957
    %6130 = vmatprep.subr.bf16.mxu0 %v2966
    %6131 = vmatpush1.bf16.msra.mxu0 %v2965
    %6132 = vmatprep.subr.bf16.mxu0 %v2974
    %6133 = vmatpush1.bf16.msra.mxu0 %v2973
    %6134 = vmatprep.subr.bf16.mxu0 %v2982
    %6135 = vmatpush1.bf16.msra.mxu0 %v2981
    %6136 = vmatprep.subr.bf16.mxu0 %v2990
    %6137 = vmatpush1.bf16.msra.mxu0 %v2989
    %6138 = vmatprep.subr.bf16.mxu0 %v2998
    %6139 = vmatpush1.bf16.msra.mxu0 %v2997
    %6140 = vmatprep.subr.bf16.mxu0 %v3006
    %6141 = vmatpush1.bf16.msra.mxu0 %v3005
    %6142 = vmatprep.subr.bf16.mxu0 %v3014
    %6143 = vmatpush1.bf16.msra.mxu0 %v3013
    %6144 = vmatprep.subr.bf16.mxu0 %v3022
    %6145 = vmatpush1.bf16.msra.mxu0 %v3021
    %6146 = vmatprep.subr.bf16.mxu0 %v3030
    %6147 = vmatpush1.bf16.msra.mxu0 %v3029
    %6148 = vmatprep.subr.bf16.mxu0 %v3038
    %6149 = vmatpush1.bf16.msra.mxu0 %v3037
    %6150 = vmatprep.mubr.bf16.mxu0 %v5830
    %6151 = vmatmul.mubr.bf16.gmra.mrb[0].mxu0 %v5829
    %v6152 = vpop.f32.mrb[0].mxu0
    %v6153 = vadd.f32 %v6112, %v6152
    %v6154 = vpop.f32.mrb[0].mxu0
    %v6155 = vadd.f32 %v6114, %v6154
    %v6156 = vpop.f32.mrb[0].mxu0
    %v6157 = vpop.f32.mrb[0].mxu0
    %6158 = vdwg.mxu0
    %v6159 = vxor.u32 %v5907, 2147483648
    %v6160 = vxor.u32 %v5909, 2147483648
    %v6161 = vmul.f32 %v6159, 1.442695
    %v6162 = vpow.pop %v6161
    %v6163 = vmul.f32 %v6160, 1.442695
    %v6164 = vpow.pop %v6163
    %v6165 = vadd.f32 %v6162, 1.0
    %v6166 = vadd.f32 %v6164, 1.0
    %v6167 = vrcp.pop %v6165
    %v6168 = vmul.f32 1.0, %v6167
    %v6169 = vrcp.pop %v6166
    %v6170 = vmul.f32 1.0, %v6169
    %v6171 = vxor.u32 %v5989, 2147483648
    %v6172 = vxor.u32 %v5991, 2147483648
    %v6173 = vmul.f32 %v6171, 1.442695
    %v6174 = vpow.pop %v6173
    %v6175 = vmul.f32 %v6172, 1.442695
    %v6176 = vpow.pop %v6175
    %v6177 = vadd.f32 %v6174, 1.0
    %v6178 = vadd.f32 %v6176, 1.0
    %v6179 = vrcp.pop %v6177
    %v6180 = vmul.f32 1.0, %v6179
    %v6181 = vrcp.pop %v6178
    %v6182 = vmul.f32 1.0, %v6181
    %v6183 = vtanh.pop %v6071
    %v6184 = vtanh.pop %v6073
    %v6185 = vxor.u32 %v6153, 2147483648
    %v6186 = vxor.u32 %v6155, 2147483648
    %v6187 = vmul.f32 %v6185, 1.442695
    %v6188 = vpow.pop %v6187
    %v6189 = vmul.f32 %v6186, 1.442695
    %v6190 = vpow.pop %v6189
    %v6191 = vadd.f32 %v6188, 1.0
    %v6192 = vadd.f32 %v6190, 1.0
    %v6193 = vrcp.pop %v6191
    %v6194 = vmul.f32 1.0, %v6193
    %v6195 = vrcp.pop %v6192
    %v6196 = vmul.f32 1.0, %v6195
    %v6197 = vmul.f32 %v6180, %v5567
    %v6198 = vmul.f32 %v6182, %v5568
    %v6199 = vmul.f32 %v6168, %v6183
    %v6200 = vmul.f32 %v6170, %v6184
    %v6201 = vadd.f32 %v6197, %v6199
    %v6202 = vadd.f32 %v6198, %v6200
    %v6203 = vtanh.pop %v6201
    %v6204 = vtanh.pop %v6202
    %v6205 = vmul.f32 %v6194, %v6203
    %v6206 = vmul.f32 %v6196, %v6204
    %s6207 = scalar_lea.vmem [#allocation2], 80
    %v6208 = vld [vmem:[%s6207] sm:$0xff]
    %v6209 = vld [vmem:[%s6207 + $0x8] sm:$0xff]
    %6210 = vmatprep.subr.bf16.mxu0 %v1466
    %6211 = vmatpush1.bf16.msra.mxu0 %v1465
    %6212 = vmatprep.subr.bf16.mxu0 %v1474
    %6213 = vmatpush1.bf16.msra.mxu0 %v1473
    %6214 = vmatprep.subr.bf16.mxu0 %v1482
    %6215 = vmatpush1.bf16.msra.mxu0 %v1481
    %6216 = vmatprep.subr.bf16.mxu0 %v1490
    %6217 = vmatpush1.bf16.msra.mxu0 %v1489
    %6218 = vmatprep.subr.bf16.mxu0 %v1498
    %6219 = vmatpush1.bf16.msra.mxu0 %v1497
    %6220 = vmatprep.subr.bf16.mxu0 %v1506
    %6221 = vmatpush1.bf16.msra.mxu0 %v1505
    %6222 = vmatprep.subr.bf16.mxu0 %v1514
    %6223 = vmatpush1.bf16.msra.mxu0 %v1513
    %6224 = vmatprep.subr.bf16.mxu0 %v1522
    %6225 = vmatpush1.bf16.msra.mxu0 %v1521
    %6226 = vmatprep.subr.bf16.mxu0 %v1530
    %6227 = vmatpush1.bf16.msra.mxu0 %v1529
    %6228 = vmatprep.subr.bf16.mxu0 %v1538
    %6229 = vmatpush1.bf16.msra.mxu0 %v1537
    %6230 = vmatprep.subr.bf16.mxu0 %v1546
    %6231 = vmatpush1.bf16.msra.mxu0 %v1545
    %6232 = vmatprep.subr.bf16.mxu0 %v1554
    %6233 = vmatpush1.bf16.msra.mxu0 %v1553
    %6234 = vmatprep.subr.bf16.mxu0 %v1562
    %6235 = vmatpush1.bf16.msra.mxu0 %v1561
    %6236 = vmatprep.subr.bf16.mxu0 %v1570
    %6237 = vmatpush1.bf16.msra.mxu0 %v1569
    %6238 = vmatprep.subr.bf16.mxu0 %v1578
    %6239 = vmatpush1.bf16.msra.mxu0 %v1577
    %6240 = vmatprep.subr.bf16.mxu0 %v1586
    %6241 = vmatpush1.bf16.msra.mxu0 %v1585
    %6242 = vmatprep.mubr.bf16.mxu0 %v5828
    %6243 = vmatmul.mubr.bf16.gmra.mrb[0].mxu0 %v5827
    %v6244 = vpop.f32.mrb[0].mxu0
    %v6245 = vadd.f32 0.0, %v6244
    %v6246 = vpop.f32.mrb[0].mxu0
    %v6247 = vadd.f32 0.0, %v6246
    %v6248 = vpop.f32.mrb[0].mxu0
    %v6249 = vpop.f32.mrb[0].mxu0
    %6250 = vdwg.mxu0
    %6251 = vmatprep.subr.bf16.mxu0 %v1468
    %6252 = vmatpush1.bf16.msra.mxu0 %v1467
    %6253 = vmatprep.subr.bf16.mxu0 %v1476
    %6254 = vmatpush1.bf16.msra.mxu0 %v1475
    %6255 = vmatprep.subr.bf16.mxu0 %v1484
    %6256 = vmatpush1.bf16.msra.mxu0 %v1483
    %6257 = vmatprep.subr.bf16.mxu0 %v1492
    %6258 = vmatpush1.bf16.msra.mxu0 %v1491
    %6259 = vmatprep.subr.bf16.mxu0 %v1500
    %6260 = vmatpush1.bf16.msra.mxu0 %v1499
    %6261 = vmatprep.subr.bf16.mxu0 %v1508
    %6262 = vmatpush1.bf16.msra.mxu0 %v1507
    %6263 = vmatprep.subr.bf16.mxu0 %v1516
    %6264 = vmatpush1.bf16.msra.mxu0 %v1515
    %6265 = vmatprep.subr.bf16.mxu0 %v1524
    %6266 = vmatpush1.bf16.msra.mxu0 %v1523
    %6267 = vmatprep.subr.bf16.mxu0 %v1532
    %6268 = vmatpush1.bf16.msra.mxu0 %v1531
    %6269 = vmatprep.subr.bf16.mxu0 %v1540
    %6270 = vmatpush1.bf16.msra.mxu0 %v1539
    %6271 = vmatprep.subr.bf16.mxu0 %v1548
    %6272 = vmatpush1.bf16.msra.mxu0 %v1547
    %6273 = vmatprep.subr.bf16.mxu0 %v1556
    %6274 = vmatpush1.bf16.msra.mxu0 %v1555
    %6275 = vmatprep.subr.bf16.mxu0 %v1564
    %6276 = vmatpush1.bf16.msra.mxu0 %v1563
    %6277 = vmatprep.subr.bf16.mxu0 %v1572
    %6278 = vmatpush1.bf16.msra.mxu0 %v1571
    %6279 = vmatprep.subr.bf16.mxu0 %v1580
    %6280 = vmatpush1.bf16.msra.mxu0 %v1579
    %6281 = vmatprep.subr.bf16.mxu0 %v1588
    %6282 = vmatpush1.bf16.msra.mxu0 %v1587
    %6283 = vmatprep.mubr.bf16.mxu0 %v5828
    %6284 = vmatmul.mubr.bf16.gmra.mrb[0].mxu0 %v5827
    %v6285 = vpop.f32.mrb[0].mxu0
    %v6286 = vadd.f32 0.0, %v6285
    %v6287 = vpop.f32.mrb[0].mxu0
    %v6288 = vadd.f32 0.0, %v6287
    %v6289 = vpop.f32.mrb[0].mxu0
    %v6290 = vpop.f32.mrb[0].mxu0
    %6291 = vdwg.mxu0
    %6292 = vmatprep.subr.bf16.mxu0 %v1470
    %6293 = vmatpush1.bf16.msra.mxu0 %v1469
    %6294 = vmatprep.subr.bf16.mxu0 %v1478
    %6295 = vmatpush1.bf16.msra.mxu0 %v1477
    %6296 = vmatprep.subr.bf16.mxu0 %v1486
    %6297 = vmatpush1.bf16.msra.mxu0 %v1485
    %6298 = vmatprep.subr.bf16.mxu0 %v1494
    %6299 = vmatpush1.bf16.msra.mxu0 %v1493
    %6300 = vmatprep.subr.bf16.mxu0 %v1502
    %6301 = vmatpush1.bf16.msra.mxu0 %v1501
    %6302 = vmatprep.subr.bf16.mxu0 %v1510
    %6303 = vmatpush1.bf16.msra.mxu0 %v1509
    %6304 = vmatprep.subr.bf16.mxu0 %v1518
    %6305 = vmatpush1.bf16.msra.mxu0 %v1517
    %6306 = vmatprep.subr.bf16.mxu0 %v1526
    %6307 = vmatpush1.bf16.msra.mxu0 %v1525
    %6308 = vmatprep.subr.bf16.mxu0 %v1534
    %6309 = vmatpush1.bf16.msra.mxu0 %v1533
    %6310 = vmatprep.subr.bf16.mxu0 %v1542
    %6311 = vmatpush1.bf16.msra.mxu0 %v1541
    %6312 = vmatprep.subr.bf16.mxu0 %v1550
    %6313 = vmatpush1.bf16.msra.mxu0 %v1549
    %6314 = vmatprep.subr.bf16.mxu0 %v1558
    %6315 = vmatpush1.bf16.msra.mxu0 %v1557
    %6316 = vmatprep.subr.bf16.mxu0 %v1566
    %6317 = vmatpush1.bf16.msra.mxu0 %v1565
    %6318 = vmatprep.subr.bf16.mxu0 %v1574
    %6319 = vmatpush1.bf16.msra.mxu0 %v1573
    %6320 = vmatprep.subr.bf16.mxu0 %v1582
    %6321 = vmatpush1.bf16.msra.mxu0 %v1581
    %6322 = vmatprep.subr.bf16.mxu0 %v1590
    %6323 = vmatpush1.bf16.msra.mxu0 %v1589
    %6324 = vmatprep.mubr.bf16.mxu0 %v5828
    %6325 = vmatmul.mubr.bf16.gmra.mrb[0].mxu0 %v5827
    %v6326 = vpop.f32.mrb[0].mxu0
    %v6327 = vadd.f32 0.0, %v6326
    %v6328 = vpop.f32.mrb[0].mxu0
    %v6329 = vadd.f32 0.0, %v6328
    %v6330 = vpop.f32.mrb[0].mxu0
    %v6331 = vpop.f32.mrb[0].mxu0
    %6332 = vdwg.mxu0
    %6333 = vmatprep.subr.bf16.mxu0 %v1472
    %6334 = vmatpush1.bf16.msra.mxu0 %v1471
    %6335 = vmatprep.subr.bf16.mxu0 %v1480
    %6336 = vmatpush1.bf16.msra.mxu0 %v1479
    %6337 = vmatprep.subr.bf16.mxu0 %v1488
    %6338 = vmatpush1.bf16.msra.mxu0 %v1487
    %6339 = vmatprep.subr.bf16.mxu0 %v1496
    %6340 = vmatpush1.bf16.msra.mxu0 %v1495
    %6341 = vmatprep.subr.bf16.mxu0 %v1504
    %6342 = vmatpush1.bf16.msra.mxu0 %v1503
    %6343 = vmatprep.subr.bf16.mxu0 %v1512
    %6344 = vmatpush1.bf16.msra.mxu0 %v1511
    %6345 = vmatprep.subr.bf16.mxu0 %v1520
    %6346 = vmatpush1.bf16.msra.mxu0 %v1519
    %6347 = vmatprep.subr.bf16.mxu0 %v1528
    %6348 = vmatpush1.bf16.msra.mxu0 %v1527
    %6349 = vmatprep.subr.bf16.mxu0 %v1536
    %6350 = vmatpush1.bf16.msra.mxu0 %v1535
    %6351 = vmatprep.subr.bf16.mxu0 %v1544
    %6352 = vmatpush1.bf16.msra.mxu0 %v1543
    %6353 = vmatprep.subr.bf16.mxu0 %v1552
    %6354 = vmatpush1.bf16.msra.mxu0 %v1551
    %6355 = vmatprep.subr.bf16.mxu0 %v1560
    %6356 = vmatpush1.bf16.msra.mxu0 %v1559
    %6357 = vmatprep.subr.bf16.mxu0 %v1568
    %6358 = vmatpush1.bf16.msra.mxu0 %v1567
    %6359 = vmatprep.subr.bf16.mxu0 %v1576
    %6360 = vmatpush1.bf16.msra.mxu0 %v1575
    %6361 = vmatprep.subr.bf16.mxu0 %v1584
    %6362 = vmatpush1.bf16.msra.mxu0 %v1583
    %6363 = vmatprep.subr.bf16.mxu0 %v1592
    %6364 = vmatpush1.bf16.msra.mxu0 %v1591
    %6365 = vmatprep.mubr.bf16.mxu0 %v5828
    %6366 = vmatmul.mubr.bf16.gmra.mrb[0].mxu0 %v5827
    %v6367 = vpop.f32.mrb[0].mxu0
    %v6368 = vadd.f32 0.0, %v6367
    %v6369 = vpop.f32.mrb[0].mxu0
    %v6370 = vadd.f32 0.0, %v6369
    %v6371 = vpop.f32.mrb[0].mxu0
    %v6372 = vpop.f32.mrb[0].mxu0
    %6373 = vdwg.mxu0
    %v6382 = vcombine.low %v6245, %v6247
    %v6383 = vcombine.low %v6286, %v6288
    %v6385 = vunpack.c.l.s4 1983009808
    %v6386 = vunpack.c.0.s8 %v6385
    %v6387 = vlaneseq
    %v6388 = vshrl.u32 %v6387, 7
    %v6389 = vsub.s32 %v6386, %v6388
    %v6390 = vrot.slane %v6382, %v6389
    %v6392 = vunpack.c.l.s4 1983009808
    %v6393 = vunpack.c.0.s8 %v6392
    %v6394 = vlaneseq
    %v6395 = vshrl.u32 %v6394, 7
    %v6396 = vsub.s32 %v6393, %v6395
    %v6397 = vrot.slane %v6383, %v6396
    %v6398 = vcombine.low %v6390, %v6397
    %v6399 = vcombine.low %v6327, %v6329
    %v6400 = vcombine.low %v6368, %v6370
    %v6402 = vunpack.c.l.s4 1983009808
    %v6403 = vunpack.c.0.s8 %v6402
    %v6404 = vlaneseq
    %v6405 = vshrl.u32 %v6404, 7
    %v6406 = vsub.s32 %v6403, %v6405
    %v6407 = vrot.slane %v6399, %v6406
    %v6409 = vunpack.c.l.s4 1983009808
    %v6410 = vunpack.c.0.s8 %v6409
    %v6411 = vlaneseq
    %v6412 = vshrl.u32 %v6411, 7
    %v6413 = vsub.s32 %v6410, %v6412
    %v6414 = vrot.slane %v6400, %v6413
    %v6415 = vcombine.low %v6407, %v6414
    %v6418 = vadd.f32 %v6208, %v6398
    %v6419 = vadd.f32 %v6209, %v6415
    %v6420 = vxor.u32 %v6418, 2147483648
    %v6421 = vmul.f32 %v6420, 1.442695
    %v6422 = vpow.pop %v6421
    %v6423 = vadd.f32 %v6422, 1.0
    %v6424 = vrcp.pop %v6423
    %v6425 = vmul.f32 1.0, %v6424
    %v6427 = vrot.slane %v6418, 4
    %v6429 = vxor.u32 %v6427, 2147483648
    %v6430 = vmul.f32 %v6429, 1.442695
    %v6431 = vpow.pop %v6430
    %v6432 = vadd.f32 %v6431, 1.0
    %v6433 = vrcp.pop %v6432
    %v6434 = vmul.f32 1.0, %v6433
    %v6435 = vtanh.pop %v6419
    %v6437 = vrot.slane %v6419, 4
    %v6439 = vxor.u32 %v6437, 2147483648
    %v6440 = vmul.f32 %v6439, 1.442695
    %v6441 = vpow.pop %v6440
    %v6442 = vadd.f32 %v6441, 1.0
    %v6443 = vrcp.pop %v6442
    %v6444 = vmul.f32 1.0, %v6443
    %v6445 = vmul.f32 %v6434, %v5813
    %v6446 = vmul.f32 %v6425, %v6435
    %v6447 = vadd.f32 %v6445, %v6446
    %v6448 = vtanh.pop %v6447
    %v6449 = vmul.f32 %v6444, %v6448
    %v6452 = vunpack.c.l.s4 1983009808
    %v6453 = vunpack.c.0.s8 %v6452
    %v6454 = vlaneseq
    %v6455 = vshrl.u32 %v6454, 7
    %v6456 = vsub.s32 %v6453, %v6455
    %v6457 = vrot.slane %v6449, %v6456
    %v6458 = vcombine.high %v6457, %v6457
    %v6461 = vpack.c.bf16 %v6457, %v6457
    %v6462 = vpack.c.bf16 %v6458, %v6458
    %v6463 = vpack.c.bf16 %v6205, %v6205
    %v6464 = vpack.c.bf16 %v6206, %v6206
    %6465 = vmatprep.subr.bf16.mxu0 %v2784
    %6466 = vmatpush1.bf16.msra.mxu0 %v2783
    %6467 = vmatprep.subr.bf16.mxu0 %v2792
    %6468 = vmatpush1.bf16.msra.mxu0 %v2791
    %6469 = vmatprep.subr.bf16.mxu0 %v2800
    %6470 = vmatpush1.bf16.msra.mxu0 %v2799
    %6471 = vmatprep.subr.bf16.mxu0 %v2808
    %6472 = vmatpush1.bf16.msra.mxu0 %v2807
    %6473 = vmatprep.subr.bf16.mxu0 %v2816
    %6474 = vmatpush1.bf16.msra.mxu0 %v2815
    %6475 = vmatprep.subr.bf16.mxu0 %v2824
    %6476 = vmatpush1.bf16.msra.mxu0 %v2823
    %6477 = vmatprep.subr.bf16.mxu0 %v2832
    %6478 = vmatpush1.bf16.msra.mxu0 %v2831
    %6479 = vmatprep.subr.bf16.mxu0 %v2840
    %6480 = vmatpush1.bf16.msra.mxu0 %v2839
    %6481 = vmatprep.subr.bf16.mxu0 %v2848
    %6482 = vmatpush1.bf16.msra.mxu0 %v2847
    %6483 = vmatprep.subr.bf16.mxu0 %v2856
    %6484 = vmatpush1.bf16.msra.mxu0 %v2855
    %6485 = vmatprep.subr.bf16.mxu0 %v2864
    %6486 = vmatpush1.bf16.msra.mxu0 %v2863
    %6487 = vmatprep.subr.bf16.mxu0 %v2872
    %6488 = vmatpush1.bf16.msra.mxu0 %v2871
    %6489 = vmatprep.subr.bf16.mxu0 %v2880
    %6490 = vmatpush1.bf16.msra.mxu0 %v2879
    %6491 = vmatprep.subr.bf16.mxu0 %v2888
    %6492 = vmatpush1.bf16.msra.mxu0 %v2887
    %6493 = vmatprep.subr.bf16.mxu0 %v2896
    %6494 = vmatpush1.bf16.msra.mxu0 %v2895
    %6495 = vmatprep.subr.bf16.mxu0 %v2904
    %6496 = vmatpush1.bf16.msra.mxu0 %v2903
    %6497 = vmatprep.mubr.bf16.mxu0 %v6462
    %6498 = vmatmul.mubr.bf16.gmra.mrb[0].mxu0 %v6461
    %v6499 = vpop.f32.mrb[0].mxu0
    %v6500 = vadd.f32 %v1978, %v6499
    %v6501 = vpop.f32.mrb[0].mxu0
    %v6502 = vadd.f32 %v1982, %v6501
    %v6503 = vpop.f32.mrb[0].mxu0
    %v6504 = vpop.f32.mrb[0].mxu0
    %6505 = vdwg.mxu0
    %6506 = vmatprep.subr.bf16.mxu0 %v2912
    %6507 = vmatpush1.bf16.msra.mxu0 %v2911
    %6508 = vmatprep.subr.bf16.mxu0 %v2920
    %6509 = vmatpush1.bf16.msra.mxu0 %v2919
    %6510 = vmatprep.subr.bf16.mxu0 %v2928
    %6511 = vmatpush1.bf16.msra.mxu0 %v2927
    %6512 = vmatprep.subr.bf16.mxu0 %v2936
    %6513 = vmatpush1.bf16.msra.mxu0 %v2935
    %6514 = vmatprep.subr.bf16.mxu0 %v2944
    %6515 = vmatpush1.bf16.msra.mxu0 %v2943
    %6516 = vmatprep.subr.bf16.mxu0 %v2952
    %6517 = vmatpush1.bf16.msra.mxu0 %v2951
    %6518 = vmatprep.subr.bf16.mxu0 %v2960
    %6519 = vmatpush1.bf16.msra.mxu0 %v2959
    %6520 = vmatprep.subr.bf16.mxu0 %v2968
    %6521 = vmatpush1.bf16.msra.mxu0 %v2967
    %6522 = vmatprep.subr.bf16.mxu0 %v2976
    %6523 = vmatpush1.bf16.msra.mxu0 %v2975
    %6524 = vmatprep.subr.bf16.mxu0 %v2984
    %6525 = vmatpush1.bf16.msra.mxu0 %v2983
    %6526 = vmatprep.subr.bf16.mxu0 %v2992
    %6527 = vmatpush1.bf16.msra.mxu0 %v2991
    %6528 = vmatprep.subr.bf16.mxu0 %v3000
    %6529 = vmatpush1.bf16.msra.mxu0 %v2999
    %6530 = vmatprep.subr.bf16.mxu0 %v3008
    %6531 = vmatpush1.bf16.msra.mxu0 %v3007
    %6532 = vmatprep.subr.bf16.mxu0 %v3016
    %6533 = vmatpush1.bf16.msra.mxu0 %v3015
    %6534 = vmatprep.subr.bf16.mxu0 %v3024
    %6535 = vmatpush1.bf16.msra.mxu0 %v3023
    %6536 = vmatprep.subr.bf16.mxu0 %v3032
    %6537 = vmatpush1.bf16.msra.mxu0 %v3031
    %6538 = vmatprep.mubr.bf16.mxu0 %v6464
    %6539 = vmatmul.mubr.bf16.gmra.mrb[0].mxu0 %v6463
    %v6540 = vpop.f32.mrb[0].mxu0
    %v6541 = vadd.f32 %v6500, %v6540
    %v6542 = vpop.f32.mrb[0].mxu0
    %v6543 = vadd.f32 %v6502, %v6542
    %v6544 = vpop.f32.mrb[0].mxu0
    %v6545 = vpop.f32.mrb[0].mxu0
    %6546 = vdwg.mxu0
    %6547 = vmatprep.subr.bf16.mxu0 %v2786
    %6548 = vmatpush1.bf16.msra.mxu0 %v2785
    %6549 = vmatprep.subr.bf16.mxu0 %v2794
    %6550 = vmatpush1.bf16.msra.mxu0 %v2793
    %6551 = vmatprep.subr.bf16.mxu0 %v2802
    %6552 = vmatpush1.bf16.msra.mxu0 %v2801
    %6553 = vmatprep.subr.bf16.mxu0 %v2810
    %6554 = vmatpush1.bf16.msra.mxu0 %v2809
    %6555 = vmatprep.subr.bf16.mxu0 %v2818
    %6556 = vmatpush1.bf16.msra.mxu0 %v2817
    %6557 = vmatprep.subr.bf16.mxu0 %v2826
    %6558 = vmatpush1.bf16.msra.mxu0 %v2825
    %6559 = vmatprep.subr.bf16.mxu0 %v2834
    %6560 = vmatpush1.bf16.msra.mxu0 %v2833
    %6561 = vmatprep.subr.bf16.mxu0 %v2842
    %6562 = vmatpush1.bf16.msra.mxu0 %v2841
    %6563 = vmatprep.subr.bf16.mxu0 %v2850
    %6564 = vmatpush1.bf16.msra.mxu0 %v2849
    %6565 = vmatprep.subr.bf16.mxu0 %v2858
    %6566 = vmatpush1.bf16.msra.mxu0 %v2857
    %6567 = vmatprep.subr.bf16.mxu0 %v2866
    %6568 = vmatpush1.bf16.msra.mxu0 %v2865
    %6569 = vmatprep.subr.bf16.mxu0 %v2874
    %6570 = vmatpush1.bf16.msra.mxu0 %v2873
    %6571 = vmatprep.subr.bf16.mxu0 %v2882
    %6572 = vmatpush1.bf16.msra.mxu0 %v2881
    %6573 = vmatprep.subr.bf16.mxu0 %v2890
    %6574 = vmatpush1.bf16.msra.mxu0 %v2889
    %6575 = vmatprep.subr.bf16.mxu0 %v2898
    %6576 = vmatpush1.bf16.msra.mxu0 %v2897
    %6577 = vmatprep.subr.bf16.mxu0 %v2906
    %6578 = vmatpush1.bf16.msra.mxu0 %v2905
    %6579 = vmatprep.mubr.bf16.mxu0 %v6462
    %6580 = vmatmul.mubr.bf16.gmra.mrb[0].mxu0 %v6461
    %v6581 = vpop.f32.mrb[0].mxu0
    %v6582 = vadd.f32 %v1986, %v6581
    %v6583 = vpop.f32.mrb[0].mxu0
    %v6584 = vadd.f32 %v1990, %v6583
    %v6585 = vpop.f32.mrb[0].mxu0
    %v6586 = vpop.f32.mrb[0].mxu0
    %6587 = vdwg.mxu0
    %6588 = vmatprep.subr.bf16.mxu0 %v2914
    %6589 = vmatpush1.bf16.msra.mxu0 %v2913
    %6590 = vmatprep.subr.bf16.mxu0 %v2922
    %6591 = vmatpush1.bf16.msra.mxu0 %v2921
    %6592 = vmatprep.subr.bf16.mxu0 %v2930
    %6593 = vmatpush1.bf16.msra.mxu0 %v2929
    %6594 = vmatprep.subr.bf16.mxu0 %v2938
    %6595 = vmatpush1.bf16.msra.mxu0 %v2937
    %6596 = vmatprep.subr.bf16.mxu0 %v2946
    %6597 = vmatpush1.bf16.msra.mxu0 %v2945
    %6598 = vmatprep.subr.bf16.mxu0 %v2954
    %6599 = vmatpush1.bf16.msra.mxu0 %v2953
    %6600 = vmatprep.subr.bf16.mxu0 %v2962
    %6601 = vmatpush1.bf16.msra.mxu0 %v2961
    %6602 = vmatprep.subr.bf16.mxu0 %v2970
    %6603 = vmatpush1.bf16.msra.mxu0 %v2969
    %6604 = vmatprep.subr.bf16.mxu0 %v2978
    %6605 = vmatpush1.bf16.msra.mxu0 %v2977
    %6606 = vmatprep.subr.bf16.mxu0 %v2986
    %6607 = vmatpush1.bf16.msra.mxu0 %v2985
    %6608 = vmatprep.subr.bf16.mxu0 %v2994
    %6609 = vmatpush1.bf16.msra.mxu0 %v2993
    %6610 = vmatprep.subr.bf16.mxu0 %v3002
    %6611 = vmatpush1.bf16.msra.mxu0 %v3001
    %6612 = vmatprep.subr.bf16.mxu0 %v3010
    %6613 = vmatpush1.bf16.msra.mxu0 %v3009
    %6614 = vmatprep.subr.bf16.mxu0 %v3018
    %6615 = vmatpush1.bf16.msra.mxu0 %v3017
    %6616 = vmatprep.subr.bf16.mxu0 %v3026
    %6617 = vmatpush1.bf16.msra.mxu0 %v3025
    %6618 = vmatprep.subr.bf16.mxu0 %v3034
    %6619 = vmatpush1.bf16.msra.mxu0 %v3033
    %6620 = vmatprep.mubr.bf16.mxu0 %v6464
    %6621 = vmatmul.mubr.bf16.gmra.mrb[0].mxu0 %v6463
    %v6622 = vpop.f32.mrb[0].mxu0
    %v6623 = vadd.f32 %v6582, %v6622
    %v6624 = vpop.f32.mrb[0].mxu0
    %v6625 = vadd.f32 %v6584, %v6624
    %v6626 = vpop.f32.mrb[0].mxu0
    %v6627 = vpop.f32.mrb[0].mxu0
    %6628 = vdwg.mxu0
    %6629 = vmatprep.subr.bf16.mxu0 %v2788
    %6630 = vmatpush1.bf16.msra.mxu0 %v2787
    %6631 = vmatprep.subr.bf16.mxu0 %v2796
    %6632 = vmatpush1.bf16.msra.mxu0 %v2795
    %6633 = vmatprep.subr.bf16.mxu0 %v2804
    %6634 = vmatpush1.bf16.msra.mxu0 %v2803
    %6635 = vmatprep.subr.bf16.mxu0 %v2812
    %6636 = vmatpush1.bf16.msra.mxu0 %v2811
    %6637 = vmatprep.subr.bf16.mxu0 %v2820
    %6638 = vmatpush1.bf16.msra.mxu0 %v2819
    %6639 = vmatprep.subr.bf16.mxu0 %v2828
    %6640 = vmatpush1.bf16.msra.mxu0 %v2827
    %6641 = vmatprep.subr.bf16.mxu0 %v2836
    %6642 = vmatpush1.bf16.msra.mxu0 %v2835
    %6643 = vmatprep.subr.bf16.mxu0 %v2844
    %6644 = vmatpush1.bf16.msra.mxu0 %v2843
    %6645 = vmatprep.subr.bf16.mxu0 %v2852
    %6646 = vmatpush1.bf16.msra.mxu0 %v2851
    %6647 = vmatprep.subr.bf16.mxu0 %v2860
    %6648 = vmatpush1.bf16.msra.mxu0 %v2859
    %6649 = vmatprep.subr.bf16.mxu0 %v2868
    %6650 = vmatpush1.bf16.msra.mxu0 %v2867
    %6651 = vmatprep.subr.bf16.mxu0 %v2876
    %6652 = vmatpush1.bf16.msra.mxu0 %v2875
    %6653 = vmatprep.subr.bf16.mxu0 %v2884
    %6654 = vmatpush1.bf16.msra.mxu0 %v2883
    %6655 = vmatprep.subr.bf16.mxu0 %v2892
    %6656 = vmatpush1.bf16.msra.mxu0 %v2891
    %6657 = vmatprep.subr.bf16.mxu0 %v2900
    %6658 = vmatpush1.bf16.msra.mxu0 %v2899
    %6659 = vmatprep.subr.bf16.mxu0 %v2908
    %6660 = vmatpush1.bf16.msra.mxu0 %v2907
    %6661 = vmatprep.mubr.bf16.mxu0 %v6462
    %6662 = vmatmul.mubr.bf16.gmra.mrb[0].mxu0 %v6461
    %v6663 = vpop.f32.mrb[0].mxu0
    %v6664 = vadd.f32 %v1994, %v6663
    %v6665 = vpop.f32.mrb[0].mxu0
    %v6666 = vadd.f32 %v1998, %v6665
    %v6667 = vpop.f32.mrb[0].mxu0
    %v6668 = vpop.f32.mrb[0].mxu0
    %6669 = vdwg.mxu0
    %6670 = vmatprep.subr.bf16.mxu0 %v2916
    %6671 = vmatpush1.bf16.msra.mxu0 %v2915
    %6672 = vmatprep.subr.bf16.mxu0 %v2924
    %6673 = vmatpush1.bf16.msra.mxu0 %v2923
    %6674 = vmatprep.subr.bf16.mxu0 %v2932
    %6675 = vmatpush1.bf16.msra.mxu0 %v2931
    %6676 = vmatprep.subr.bf16.mxu0 %v2940
    %6677 = vmatpush1.bf16.msra.mxu0 %v2939
    %6678 = vmatprep.subr.bf16.mxu0 %v2948
    %6679 = vmatpush1.bf16.msra.mxu0 %v2947
    %6680 = vmatprep.subr.bf16.mxu0 %v2956
    %6681 = vmatpush1.bf16.msra.mxu0 %v2955
    %6682 = vmatprep.subr.bf16.mxu0 %v2964
    %6683 = vmatpush1.bf16.msra.mxu0 %v2963
    %6684 = vmatprep.subr.bf16.mxu0 %v2972
    %6685 = vmatpush1.bf16.msra.mxu0 %v2971
    %6686 = vmatprep.subr.bf16.mxu0 %v2980
    %6687 = vmatpush1.bf16.msra.mxu0 %v2979
    %6688 = vmatprep.subr.bf16.mxu0 %v2988
    %6689 = vmatpush1.bf16.msra.mxu0 %v2987
    %6690 = vmatprep.subr.bf16.mxu0 %v2996
    %6691 = vmatpush1.bf16.msra.mxu0 %v2995
    %6692 = vmatprep.subr.bf16.mxu0 %v3004
    %6693 = vmatpush1.bf16.msra.mxu0 %v3003
    %6694 = vmatprep.subr.bf16.mxu0 %v3012
    %6695 = vmatpush1.bf16.msra.mxu0 %v3011
    %6696 = vmatprep.subr.bf16.mxu0 %v3020
    %6697 = vmatpush1.bf16.msra.mxu0 %v3019
    %6698 = vmatprep.subr.bf16.mxu0 %v3028
    %6699 = vmatpush1.bf16.msra.mxu0 %v3027
    %6700 = vmatprep.subr.bf16.mxu0 %v3036
    %6701 = vmatpush1.bf16.msra.mxu0 %v3035
    %6702 = vmatprep.mubr.bf16.mxu0 %v6464
    %6703 = vmatmul.mubr.bf16.gmra.mrb[0].mxu0 %v6463
    %v6704 = vpop.f32.mrb[0].mxu0
    %v6705 = vadd.f32 %v6664, %v6704
    %v6706 = vpop.f32.mrb[0].mxu0
    %v6707 = vadd.f32 %v6666, %v6706
    %v6708 = vpop.f32.mrb[0].mxu0
    %v6709 = vpop.f32.mrb[0].mxu0
    %6710 = vdwg.mxu0
    %6711 = vmatprep.subr.bf16.mxu0 %v2790
    %6712 = vmatpush1.bf16.msra.mxu0 %v2789
    %6713 = vmatprep.subr.bf16.mxu0 %v2798
    %6714 = vmatpush1.bf16.msra.mxu0 %v2797
    %6715 = vmatprep.subr.bf16.mxu0 %v2806
    %6716 = vmatpush1.bf16.msra.mxu0 %v2805
    %6717 = vmatprep.subr.bf16.mxu0 %v2814
    %6718 = vmatpush1.bf16.msra.mxu0 %v2813
    %6719 = vmatprep.subr.bf16.mxu0 %v2822
    %6720 = vmatpush1.bf16.msra.mxu0 %v2821
    %6721 = vmatprep.subr.bf16.mxu0 %v2830
    %6722 = vmatpush1.bf16.msra.mxu0 %v2829
    %6723 = vmatprep.subr.bf16.mxu0 %v2838
    %6724 = vmatpush1.bf16.msra.mxu0 %v2837
    %6725 = vmatprep.subr.bf16.mxu0 %v2846
    %6726 = vmatpush1.bf16.msra.mxu0 %v2845
    %6727 = vmatprep.subr.bf16.mxu0 %v2854
    %6728 = vmatpush1.bf16.msra.mxu0 %v2853
    %6729 = vmatprep.subr.bf16.mxu0 %v2862
    %6730 = vmatpush1.bf16.msra.mxu0 %v2861
    %6731 = vmatprep.subr.bf16.mxu0 %v2870
    %6732 = vmatpush1.bf16.msra.mxu0 %v2869
    %6733 = vmatprep.subr.bf16.mxu0 %v2878
    %6734 = vmatpush1.bf16.msra.mxu0 %v2877
    %6735 = vmatprep.subr.bf16.mxu0 %v2886
    %6736 = vmatpush1.bf16.msra.mxu0 %v2885
    %6737 = vmatprep.subr.bf16.mxu0 %v2894
    %6738 = vmatpush1.bf16.msra.mxu0 %v2893
    %6739 = vmatprep.subr.bf16.mxu0 %v2902
    %6740 = vmatpush1.bf16.msra.mxu0 %v2901
    %6741 = vmatprep.subr.bf16.mxu0 %v2910
    %6742 = vmatpush1.bf16.msra.mxu0 %v2909
    %6743 = vmatprep.mubr.bf16.mxu0 %v6462
    %6744 = vmatmul.mubr.bf16.gmra.mrb[0].mxu0 %v6461
    %v6745 = vpop.f32.mrb[0].mxu0
    %v6746 = vadd.f32 %v2002, %v6745
    %v6747 = vpop.f32.mrb[0].mxu0
    %v6748 = vadd.f32 %v2006, %v6747
    %v6749 = vpop.f32.mrb[0].mxu0
    %v6750 = vpop.f32.mrb[0].mxu0
    %6751 = vdwg.mxu0
    %6752 = vmatprep.subr.bf16.mxu0 %v2918
    %6753 = vmatpush1.bf16.msra.mxu0 %v2917
    %6754 = vmatprep.subr.bf16.mxu0 %v2926
    %6755 = vmatpush1.bf16.msra.mxu0 %v2925
    %6756 = vmatprep.subr.bf16.mxu0 %v2934
    %6757 = vmatpush1.bf16.msra.mxu0 %v2933
    %6758 = vmatprep.subr.bf16.mxu0 %v2942
    %6759 = vmatpush1.bf16.msra.mxu0 %v2941
    %6760 = vmatprep.subr.bf16.mxu0 %v2950
    %6761 = vmatpush1.bf16.msra.mxu0 %v2949
    %6762 = vmatprep.subr.bf16.mxu0 %v2958
    %6763 = vmatpush1.bf16.msra.mxu0 %v2957
    %6764 = vmatprep.subr.bf16.mxu0 %v2966
    %6765 = vmatpush1.bf16.msra.mxu0 %v2965
    %6766 = vmatprep.subr.bf16.mxu0 %v2974
    %6767 = vmatpush1.bf16.msra.mxu0 %v2973
    %6768 = vmatprep.subr.bf16.mxu0 %v2982
    %6769 = vmatpush1.bf16.msra.mxu0 %v2981
    %6770 = vmatprep.subr.bf16.mxu0 %v2990
    %6771 = vmatpush1.bf16.msra.mxu0 %v2989
    %6772 = vmatprep.subr.bf16.mxu0 %v2998
    %6773 = vmatpush1.bf16.msra.mxu0 %v2997
    %6774 = vmatprep.subr.bf16.mxu0 %v3006
    %6775 = vmatpush1.bf16.msra.mxu0 %v3005
    %6776 = vmatprep.subr.bf16.mxu0 %v3014
    %6777 = vmatpush1.bf16.msra.mxu0 %v3013
    %6778 = vmatprep.subr.bf16.mxu0 %v3022
    %6779 = vmatpush1.bf16.msra.mxu0 %v3021
    %6780 = vmatprep.subr.bf16.mxu0 %v3030
    %6781 = vmatpush1.bf16.msra.mxu0 %v3029
    %6782 = vmatprep.subr.bf16.mxu0 %v3038
    %6783 = vmatpush1.bf16.msra.mxu0 %v3037
    %6784 = vmatprep.mubr.bf16.mxu0 %v6464
    %6785 = vmatmul.mubr.bf16.gmra.mrb[0].mxu0 %v6463
    %v6786 = vpop.f32.mrb[0].mxu0
    %v6787 = vadd.f32 %v6746, %v6786
    %v6788 = vpop.f32.mrb[0].mxu0
    %v6789 = vadd.f32 %v6748, %v6788
    %v6790 = vpop.f32.mrb[0].mxu0
    %v6791 = vpop.f32.mrb[0].mxu0
    %6792 = vdwg.mxu0
    %v6793 = vxor.u32 %v6541, 2147483648
    %v6794 = vxor.u32 %v6543, 2147483648
    %v6795 = vmul.f32 %v6793, 1.442695
    %v6796 = vpow.pop %v6795
    %v6797 = vmul.f32 %v6794, 1.442695
    %v6798 = vpow.pop %v6797
    %v6799 = vadd.f32 %v6796, 1.0
    %v6800 = vadd.f32 %v6798, 1.0
    %v6801 = vrcp.pop %v6799
    %v6802 = vmul.f32 1.0, %v6801
    %v6803 = vrcp.pop %v6800
    %v6804 = vmul.f32 1.0, %v6803
    %v6805 = vxor.u32 %v6623, 2147483648
    %v6806 = vxor.u32 %v6625, 2147483648
    %v6807 = vmul.f32 %v6805, 1.442695
    %v6808 = vpow.pop %v6807
    %v6809 = vmul.f32 %v6806, 1.442695
    %v6810 = vpow.pop %v6809
    %v6811 = vadd.f32 %v6808, 1.0
    %v6812 = vadd.f32 %v6810, 1.0
    %v6813 = vrcp.pop %v6811
    %v6814 = vmul.f32 1.0, %v6813
    %v6815 = vrcp.pop %v6812
    %v6816 = vmul.f32 1.0, %v6815
    %v6817 = vtanh.pop %v6705
    %v6818 = vtanh.pop %v6707
    %v6819 = vxor.u32 %v6787, 2147483648
    %v6820 = vxor.u32 %v6789, 2147483648
    %v6821 = vmul.f32 %v6819, 1.442695
    %v6822 = vpow.pop %v6821
    %v6823 = vmul.f32 %v6820, 1.442695
    %v6824 = vpow.pop %v6823
    %v6825 = vadd.f32 %v6822, 1.0
    %v6826 = vadd.f32 %v6824, 1.0
    %v6827 = vrcp.pop %v6825
    %v6828 = vmul.f32 1.0, %v6827
    %v6829 = vrcp.pop %v6826
    %v6830 = vmul.f32 1.0, %v6829
    %v6831 = vmul.f32 %v6814, %v6201
    %v6832 = vmul.f32 %v6816, %v6202
    %v6833 = vmul.f32 %v6802, %v6817
    %v6834 = vmul.f32 %v6804, %v6818
    %v6835 = vadd.f32 %v6831, %v6833
    %v6836 = vadd.f32 %v6832, %v6834
    %v6837 = vtanh.pop %v6835
    %v6838 = vtanh.pop %v6836
    %v6839 = vmul.f32 %v6828, %v6837
    %v6840 = vmul.f32 %v6830, %v6838
    %s6841 = scalar_lea.vmem [#allocation2], 96
    %v6842 = vld [vmem:[%s6841] sm:$0xff]
    %v6843 = vld [vmem:[%s6841 + $0x8] sm:$0xff]
    %6844 = vmatprep.subr.bf16.mxu0 %v1466
    %6845 = vmatpush1.bf16.msra.mxu0 %v1465
    %6846 = vmatprep.subr.bf16.mxu0 %v1474
    %6847 = vmatpush1.bf16.msra.mxu0 %v1473
    %6848 = vmatprep.subr.bf16.mxu0 %v1482
    %6849 = vmatpush1.bf16.msra.mxu0 %v1481
    %6850 = vmatprep.subr.bf16.mxu0 %v1490
    %6851 = vmatpush1.bf16.msra.mxu0 %v1489
    %6852 = vmatprep.subr.bf16.mxu0 %v1498
    %6853 = vmatpush1.bf16.msra.mxu0 %v1497
    %6854 = vmatprep.subr.bf16.mxu0 %v1506
    %6855 = vmatpush1.bf16.msra.mxu0 %v1505
    %6856 = vmatprep.subr.bf16.mxu0 %v1514
    %6857 = vmatpush1.bf16.msra.mxu0 %v1513
    %6858 = vmatprep.subr.bf16.mxu0 %v1522
    %6859 = vmatpush1.bf16.msra.mxu0 %v1521
    %6860 = vmatprep.subr.bf16.mxu0 %v1530
    %6861 = vmatpush1.bf16.msra.mxu0 %v1529
    %6862 = vmatprep.subr.bf16.mxu0 %v1538
    %6863 = vmatpush1.bf16.msra.mxu0 %v1537
    %6864 = vmatprep.subr.bf16.mxu0 %v1546
    %6865 = vmatpush1.bf16.msra.mxu0 %v1545
    %6866 = vmatprep.subr.bf16.mxu0 %v1554
    %6867 = vmatpush1.bf16.msra.mxu0 %v1553
    %6868 = vmatprep.subr.bf16.mxu0 %v1562
    %6869 = vmatpush1.bf16.msra.mxu0 %v1561
    %6870 = vmatprep.subr.bf16.mxu0 %v1570
    %6871 = vmatpush1.bf16.msra.mxu0 %v1569
    %6872 = vmatprep.subr.bf16.mxu0 %v1578
    %6873 = vmatpush1.bf16.msra.mxu0 %v1577
    %6874 = vmatprep.subr.bf16.mxu0 %v1586
    %6875 = vmatpush1.bf16.msra.mxu0 %v1585
    %6876 = vmatprep.mubr.bf16.mxu0 %v6462
    %6877 = vmatmul.mubr.bf16.gmra.mrb[0].mxu0 %v6461
    %v6878 = vpop.f32.mrb[0].mxu0
    %v6879 = vadd.f32 0.0, %v6878
    %v6880 = vpop.f32.mrb[0].mxu0
    %v6881 = vadd.f32 0.0, %v6880
    %v6882 = vpop.f32.mrb[0].mxu0
    %v6883 = vpop.f32.mrb[0].mxu0
    %6884 = vdwg.mxu0
    %6885 = vmatprep.subr.bf16.mxu0 %v1468
    %6886 = vmatpush1.bf16.msra.mxu0 %v1467
    %6887 = vmatprep.subr.bf16.mxu0 %v1476
    %6888 = vmatpush1.bf16.msra.mxu0 %v1475
    %6889 = vmatprep.subr.bf16.mxu0 %v1484
    %6890 = vmatpush1.bf16.msra.mxu0 %v1483
    %6891 = vmatprep.subr.bf16.mxu0 %v1492
    %6892 = vmatpush1.bf16.msra.mxu0 %v1491
    %6893 = vmatprep.subr.bf16.mxu0 %v1500
    %6894 = vmatpush1.bf16.msra.mxu0 %v1499
    %6895 = vmatprep.subr.bf16.mxu0 %v1508
    %6896 = vmatpush1.bf16.msra.mxu0 %v1507
    %6897 = vmatprep.subr.bf16.mxu0 %v1516
    %6898 = vmatpush1.bf16.msra.mxu0 %v1515
    %6899 = vmatprep.subr.bf16.mxu0 %v1524
    %6900 = vmatpush1.bf16.msra.mxu0 %v1523
    %6901 = vmatprep.subr.bf16.mxu0 %v1532
    %6902 = vmatpush1.bf16.msra.mxu0 %v1531
    %6903 = vmatprep.subr.bf16.mxu0 %v1540
    %6904 = vmatpush1.bf16.msra.mxu0 %v1539
    %6905 = vmatprep.subr.bf16.mxu0 %v1548
    %6906 = vmatpush1.bf16.msra.mxu0 %v1547
    %6907 = vmatprep.subr.bf16.mxu0 %v1556
    %6908 = vmatpush1.bf16.msra.mxu0 %v1555
    %6909 = vmatprep.subr.bf16.mxu0 %v1564
    %6910 = vmatpush1.bf16.msra.mxu0 %v1563
    %6911 = vmatprep.subr.bf16.mxu0 %v1572
    %6912 = vmatpush1.bf16.msra.mxu0 %v1571
    %6913 = vmatprep.subr.bf16.mxu0 %v1580
    %6914 = vmatpush1.bf16.msra.mxu0 %v1579
    %6915 = vmatprep.subr.bf16.mxu0 %v1588
    %6916 = vmatpush1.bf16.msra.mxu0 %v1587
    %6917 = vmatprep.mubr.bf16.mxu0 %v6462
    %6918 = vmatmul.mubr.bf16.gmra.mrb[0].mxu0 %v6461
    %v6919 = vpop.f32.mrb[0].mxu0
    %v6920 = vadd.f32 0.0, %v6919
    %v6921 = vpop.f32.mrb[0].mxu0
    %v6922 = vadd.f32 0.0, %v6921
    %v6923 = vpop.f32.mrb[0].mxu0
    %v6924 = vpop.f32.mrb[0].mxu0
    %6925 = vdwg.mxu0
    %6926 = vmatprep.subr.bf16.mxu0 %v1470
    %6927 = vmatpush1.bf16.msra.mxu0 %v1469
    %6928 = vmatprep.subr.bf16.mxu0 %v1478
    %6929 = vmatpush1.bf16.msra.mxu0 %v1477
    %6930 = vmatprep.subr.bf16.mxu0 %v1486
    %6931 = vmatpush1.bf16.msra.mxu0 %v1485
    %6932 = vmatprep.subr.bf16.mxu0 %v1494
    %6933 = vmatpush1.bf16.msra.mxu0 %v1493
    %6934 = vmatprep.subr.bf16.mxu0 %v1502
    %6935 = vmatpush1.bf16.msra.mxu0 %v1501
    %6936 = vmatprep.subr.bf16.mxu0 %v1510
    %6937 = vmatpush1.bf16.msra.mxu0 %v1509
    %6938 = vmatprep.subr.bf16.mxu0 %v1518
    %6939 = vmatpush1.bf16.msra.mxu0 %v1517
    %6940 = vmatprep.subr.bf16.mxu0 %v1526
    %6941 = vmatpush1.bf16.msra.mxu0 %v1525
    %6942 = vmatprep.subr.bf16.mxu0 %v1534
    %6943 = vmatpush1.bf16.msra.mxu0 %v1533
    %6944 = vmatprep.subr.bf16.mxu0 %v1542
    %6945 = vmatpush1.bf16.msra.mxu0 %v1541
    %6946 = vmatprep.subr.bf16.mxu0 %v1550
    %6947 = vmatpush1.bf16.msra.mxu0 %v1549
    %6948 = vmatprep.subr.bf16.mxu0 %v1558
    %6949 = vmatpush1.bf16.msra.mxu0 %v1557
    %6950 = vmatprep.subr.bf16.mxu0 %v1566
    %6951 = vmatpush1.bf16.msra.mxu0 %v1565
    %6952 = vmatprep.subr.bf16.mxu0 %v1574
    %6953 = vmatpush1.bf16.msra.mxu0 %v1573
    %6954 = vmatprep.subr.bf16.mxu0 %v1582
    %6955 = vmatpush1.bf16.msra.mxu0 %v1581
    %6956 = vmatprep.subr.bf16.mxu0 %v1590
    %6957 = vmatpush1.bf16.msra.mxu0 %v1589
    %6958 = vmatprep.mubr.bf16.mxu0 %v6462
    %6959 = vmatmul.mubr.bf16.gmra.mrb[0].mxu0 %v6461
    %v6960 = vpop.f32.mrb[0].mxu0
    %v6961 = vadd.f32 0.0, %v6960
    %v6962 = vpop.f32.mrb[0].mxu0
    %v6963 = vadd.f32 0.0, %v6962
    %v6964 = vpop.f32.mrb[0].mxu0
    %v6965 = vpop.f32.mrb[0].mxu0
    %6966 = vdwg.mxu0
    %6967 = vmatprep.subr.bf16.mxu0 %v1472
    %6968 = vmatpush1.bf16.msra.mxu0 %v1471
    %6969 = vmatprep.subr.bf16.mxu0 %v1480
    %6970 = vmatpush1.bf16.msra.mxu0 %v1479
    %6971 = vmatprep.subr.bf16.mxu0 %v1488
    %6972 = vmatpush1.bf16.msra.mxu0 %v1487
    %6973 = vmatprep.subr.bf16.mxu0 %v1496
    %6974 = vmatpush1.bf16.msra.mxu0 %v1495
    %6975 = vmatprep.subr.bf16.mxu0 %v1504
    %6976 = vmatpush1.bf16.msra.mxu0 %v1503
    %6977 = vmatprep.subr.bf16.mxu0 %v1512
    %6978 = vmatpush1.bf16.msra.mxu0 %v1511
    %6979 = vmatprep.subr.bf16.mxu0 %v1520
    %6980 = vmatpush1.bf16.msra.mxu0 %v1519
    %6981 = vmatprep.subr.bf16.mxu0 %v1528
    %6982 = vmatpush1.bf16.msra.mxu0 %v1527
    %6983 = vmatprep.subr.bf16.mxu0 %v1536
    %6984 = vmatpush1.bf16.msra.mxu0 %v1535
    %6985 = vmatprep.subr.bf16.mxu0 %v1544
    %6986 = vmatpush1.bf16.msra.mxu0 %v1543
    %6987 = vmatprep.subr.bf16.mxu0 %v1552
    %6988 = vmatpush1.bf16.msra.mxu0 %v1551
    %6989 = vmatprep.subr.bf16.mxu0 %v1560
    %6990 = vmatpush1.bf16.msra.mxu0 %v1559
    %6991 = vmatprep.subr.bf16.mxu0 %v1568
    %6992 = vmatpush1.bf16.msra.mxu0 %v1567
    %6993 = vmatprep.subr.bf16.mxu0 %v1576
    %6994 = vmatpush1.bf16.msra.mxu0 %v1575
    %6995 = vmatprep.subr.bf16.mxu0 %v1584
    %6996 = vmatpush1.bf16.msra.mxu0 %v1583
    %6997 = vmatprep.subr.bf16.mxu0 %v1592
    %6998 = vmatpush1.bf16.msra.mxu0 %v1591
    %6999 = vmatprep.mubr.bf16.mxu0 %v6462
    %7000 = vmatmul.mubr.bf16.gmra.mrb[0].mxu0 %v6461
    %v7001 = vpop.f32.mrb[0].mxu0
    %v7002 = vadd.f32 0.0, %v7001
    %v7003 = vpop.f32.mrb[0].mxu0
    %v7004 = vadd.f32 0.0, %v7003
    %v7005 = vpop.f32.mrb[0].mxu0
    %v7006 = vpop.f32.mrb[0].mxu0
    %7007 = vdwg.mxu0
    %v7016 = vcombine.low %v6879, %v6881
    %v7017 = vcombine.low %v6920, %v6922
    %v7019 = vunpack.c.l.s4 1983009808
    %v7020 = vunpack.c.0.s8 %v7019
    %v7021 = vlaneseq
    %v7022 = vshrl.u32 %v7021, 7
    %v7023 = vsub.s32 %v7020, %v7022
    %v7024 = vrot.slane %v7016, %v7023
    %v7026 = vunpack.c.l.s4 1983009808
    %v7027 = vunpack.c.0.s8 %v7026
    %v7028 = vlaneseq
    %v7029 = vshrl.u32 %v7028, 7
    %v7030 = vsub.s32 %v7027, %v7029
    %v7031 = vrot.slane %v7017, %v7030
    %v7032 = vcombine.low %v7024, %v7031
    %v7033 = vcombine.low %v6961, %v6963
    %v7034 = vcombine.low %v7002, %v7004
    %v7036 = vunpack.c.l.s4 1983009808
    %v7037 = vunpack.c.0.s8 %v7036
    %v7038 = vlaneseq
    %v7039 = vshrl.u32 %v7038, 7
    %v7040 = vsub.s32 %v7037, %v7039
    %v7041 = vrot.slane %v7033, %v7040
    %v7043 = vunpack.c.l.s4 1983009808
    %v7044 = vunpack.c.0.s8 %v7043
    %v7045 = vlaneseq
    %v7046 = vshrl.u32 %v7045, 7
    %v7047 = vsub.s32 %v7044, %v7046
    %v7048 = vrot.slane %v7034, %v7047
    %v7049 = vcombine.low %v7041, %v7048
    %v7052 = vadd.f32 %v6842, %v7032
    %v7053 = vadd.f32 %v6843, %v7049
    %v7054 = vxor.u32 %v7052, 2147483648
    %v7055 = vmul.f32 %v7054, 1.442695
    %v7056 = vpow.pop %v7055
    %v7057 = vadd.f32 %v7056, 1.0
    %v7058 = vrcp.pop %v7057
    %v7059 = vmul.f32 1.0, %v7058
    %v7061 = vrot.slane %v7052, 4
    %v7063 = vxor.u32 %v7061, 2147483648
    %v7064 = vmul.f32 %v7063, 1.442695
    %v7065 = vpow.pop %v7064
    %v7066 = vadd.f32 %v7065, 1.0
    %v7067 = vrcp.pop %v7066
    %v7068 = vmul.f32 1.0, %v7067
    %v7069 = vtanh.pop %v7053
    %v7071 = vrot.slane %v7053, 4
    %v7073 = vxor.u32 %v7071, 2147483648
    %v7074 = vmul.f32 %v7073, 1.442695
    %v7075 = vpow.pop %v7074
    %v7076 = vadd.f32 %v7075, 1.0
    %v7077 = vrcp.pop %v7076
    %v7078 = vmul.f32 1.0, %v7077
    %v7079 = vmul.f32 %v7068, %v6447
    %v7080 = vmul.f32 %v7059, %v7069
    %v7081 = vadd.f32 %v7079, %v7080
    %v7082 = vtanh.pop %v7081
    %v7083 = vmul.f32 %v7078, %v7082
    %v7086 = vunpack.c.l.s4 1983009808
    %v7087 = vunpack.c.0.s8 %v7086
    %v7088 = vlaneseq
    %v7089 = vshrl.u32 %v7088, 7
    %v7090 = vsub.s32 %v7087, %v7089
    %v7091 = vrot.slane %v7083, %v7090
    %v7092 = vcombine.high %v7091, %v7091
    %v7095 = vpack.c.bf16 %v7091, %v7091
    %v7096 = vpack.c.bf16 %v7092, %v7092
    %v7097 = vpack.c.bf16 %v6839, %v6839
    %v7098 = vpack.c.bf16 %v6840, %v6840
    %7099 = vmatprep.subr.bf16.mxu0 %v2784
    %7100 = vmatpush1.bf16.msra.mxu0 %v2783
    %7101 = vmatprep.subr.bf16.mxu0 %v2792
    %7102 = vmatpush1.bf16.msra.mxu0 %v2791
    %7103 = vmatprep.subr.bf16.mxu0 %v2800
    %7104 = vmatpush1.bf16.msra.mxu0 %v2799
    %7105 = vmatprep.subr.bf16.mxu0 %v2808
    %7106 = vmatpush1.bf16.msra.mxu0 %v2807
    %7107 = vmatprep.subr.bf16.mxu0 %v2816
    %7108 = vmatpush1.bf16.msra.mxu0 %v2815
    %7109 = vmatprep.subr.bf16.mxu0 %v2824
    %7110 = vmatpush1.bf16.msra.mxu0 %v2823
    %7111 = vmatprep.subr.bf16.mxu0 %v2832
    %7112 = vmatpush1.bf16.msra.mxu0 %v2831
    %7113 = vmatprep.subr.bf16.mxu0 %v2840
    %7114 = vmatpush1.bf16.msra.mxu0 %v2839
    %7115 = vmatprep.subr.bf16.mxu0 %v2848
    %7116 = vmatpush1.bf16.msra.mxu0 %v2847
    %7117 = vmatprep.subr.bf16.mxu0 %v2856
    %7118 = vmatpush1.bf16.msra.mxu0 %v2855
    %7119 = vmatprep.subr.bf16.mxu0 %v2864
    %7120 = vmatpush1.bf16.msra.mxu0 %v2863
    %7121 = vmatprep.subr.bf16.mxu0 %v2872
    %7122 = vmatpush1.bf16.msra.mxu0 %v2871
    %7123 = vmatprep.subr.bf16.mxu0 %v2880
    %7124 = vmatpush1.bf16.msra.mxu0 %v2879
    %7125 = vmatprep.subr.bf16.mxu0 %v2888
    %7126 = vmatpush1.bf16.msra.mxu0 %v2887
    %7127 = vmatprep.subr.bf16.mxu0 %v2896
    %7128 = vmatpush1.bf16.msra.mxu0 %v2895
    %7129 = vmatprep.subr.bf16.mxu0 %v2904
    %7130 = vmatpush1.bf16.msra.mxu0 %v2903
    %7131 = vmatprep.mubr.bf16.mxu0 %v7096
    %7132 = vmatmul.mubr.bf16.gmra.mrb[0].mxu0 %v7095
    %v7133 = vpop.f32.mrb[0].mxu0
    %v7134 = vadd.f32 %v1978, %v7133
    %v7135 = vpop.f32.mrb[0].mxu0
    %v7136 = vadd.f32 %v1982, %v7135
    %v7137 = vpop.f32.mrb[0].mxu0
    %v7138 = vpop.f32.mrb[0].mxu0
    %7139 = vdwg.mxu0
    %7140 = vmatprep.subr.bf16.mxu0 %v2912
    %7141 = vmatpush1.bf16.msra.mxu0 %v2911
    %7142 = vmatprep.subr.bf16.mxu0 %v2920
    %7143 = vmatpush1.bf16.msra.mxu0 %v2919
    %7144 = vmatprep.subr.bf16.mxu0 %v2928
    %7145 = vmatpush1.bf16.msra.mxu0 %v2927
    %7146 = vmatprep.subr.bf16.mxu0 %v2936
    %7147 = vmatpush1.bf16.msra.mxu0 %v2935
    %7148 = vmatprep.subr.bf16.mxu0 %v2944
    %7149 = vmatpush1.bf16.msra.mxu0 %v2943
    %7150 = vmatprep.subr.bf16.mxu0 %v2952
    %7151 = vmatpush1.bf16.msra.mxu0 %v2951
    %7152 = vmatprep.subr.bf16.mxu0 %v2960
    %7153 = vmatpush1.bf16.msra.mxu0 %v2959
    %7154 = vmatprep.subr.bf16.mxu0 %v2968
    %7155 = vmatpush1.bf16.msra.mxu0 %v2967
    %7156 = vmatprep.subr.bf16.mxu0 %v2976
    %7157 = vmatpush1.bf16.msra.mxu0 %v2975
    %7158 = vmatprep.subr.bf16.mxu0 %v2984
    %7159 = vmatpush1.bf16.msra.mxu0 %v2983
    %7160 = vmatprep.subr.bf16.mxu0 %v2992
    %7161 = vmatpush1.bf16.msra.mxu0 %v2991
    %7162 = vmatprep.subr.bf16.mxu0 %v3000
    %7163 = vmatpush1.bf16.msra.mxu0 %v2999
    %7164 = vmatprep.subr.bf16.mxu0 %v3008
    %7165 = vmatpush1.bf16.msra.mxu0 %v3007
    %7166 = vmatprep.subr.bf16.mxu0 %v3016
    %7167 = vmatpush1.bf16.msra.mxu0 %v3015
    %7168 = vmatprep.subr.bf16.mxu0 %v3024
    %7169 = vmatpush1.bf16.msra.mxu0 %v3023
    %7170 = vmatprep.subr.bf16.mxu0 %v3032
    %7171 = vmatpush1.bf16.msra.mxu0 %v3031
    %7172 = vmatprep.mubr.bf16.mxu0 %v7098
    %7173 = vmatmul.mubr.bf16.gmra.mrb[0].mxu0 %v7097
    %v7174 = vpop.f32.mrb[0].mxu0
    %v7175 = vadd.f32 %v7134, %v7174
    %v7176 = vpop.f32.mrb[0].mxu0
    %v7177 = vadd.f32 %v7136, %v7176
    %v7178 = vpop.f32.mrb[0].mxu0
    %v7179 = vpop.f32.mrb[0].mxu0
    %7180 = vdwg.mxu0
    %7181 = vmatprep.subr.bf16.mxu0 %v2786
    %7182 = vmatpush1.bf16.msra.mxu0 %v2785
    %7183 = vmatprep.subr.bf16.mxu0 %v2794
    %7184 = vmatpush1.bf16.msra.mxu0 %v2793
    %7185 = vmatprep.subr.bf16.mxu0 %v2802
    %7186 = vmatpush1.bf16.msra.mxu0 %v2801
    %7187 = vmatprep.subr.bf16.mxu0 %v2810
    %7188 = vmatpush1.bf16.msra.mxu0 %v2809
    %7189 = vmatprep.subr.bf16.mxu0 %v2818
    %7190 = vmatpush1.bf16.msra.mxu0 %v2817
    %7191 = vmatprep.subr.bf16.mxu0 %v2826
    %7192 = vmatpush1.bf16.msra.mxu0 %v2825
    %7193 = vmatprep.subr.bf16.mxu0 %v2834
    %7194 = vmatpush1.bf16.msra.mxu0 %v2833
    %7195 = vmatprep.subr.bf16.mxu0 %v2842
    %7196 = vmatpush1.bf16.msra.mxu0 %v2841
    %7197 = vmatprep.subr.bf16.mxu0 %v2850
    %7198 = vmatpush1.bf16.msra.mxu0 %v2849
    %7199 = vmatprep.subr.bf16.mxu0 %v2858
    %7200 = vmatpush1.bf16.msra.mxu0 %v2857
    %7201 = vmatprep.subr.bf16.mxu0 %v2866
    %7202 = vmatpush1.bf16.msra.mxu0 %v2865
    %7203 = vmatprep.subr.bf16.mxu0 %v2874
    %7204 = vmatpush1.bf16.msra.mxu0 %v2873
    %7205 = vmatprep.subr.bf16.mxu0 %v2882
    %7206 = vmatpush1.bf16.msra.mxu0 %v2881
    %7207 = vmatprep.subr.bf16.mxu0 %v2890
    %7208 = vmatpush1.bf16.msra.mxu0 %v2889
    %7209 = vmatprep.subr.bf16.mxu0 %v2898
    %7210 = vmatpush1.bf16.msra.mxu0 %v2897
    %7211 = vmatprep.subr.bf16.mxu0 %v2906
    %7212 = vmatpush1.bf16.msra.mxu0 %v2905
    %7213 = vmatprep.mubr.bf16.mxu0 %v7096
    %7214 = vmatmul.mubr.bf16.gmra.mrb[0].mxu0 %v7095
    %v7215 = vpop.f32.mrb[0].mxu0
    %v7216 = vadd.f32 %v1986, %v7215
    %v7217 = vpop.f32.mrb[0].mxu0
    %v7218 = vadd.f32 %v1990, %v7217
    %v7219 = vpop.f32.mrb[0].mxu0
    %v7220 = vpop.f32.mrb[0].mxu0
    %7221 = vdwg.mxu0
    %7222 = vmatprep.subr.bf16.mxu0 %v2914
    %7223 = vmatpush1.bf16.msra.mxu0 %v2913
    %7224 = vmatprep.subr.bf16.mxu0 %v2922
    %7225 = vmatpush1.bf16.msra.mxu0 %v2921
    %7226 = vmatprep.subr.bf16.mxu0 %v2930
    %7227 = vmatpush1.bf16.msra.mxu0 %v2929
    %7228 = vmatprep.subr.bf16.mxu0 %v2938
    %7229 = vmatpush1.bf16.msra.mxu0 %v2937
    %7230 = vmatprep.subr.bf16.mxu0 %v2946
    %7231 = vmatpush1.bf16.msra.mxu0 %v2945
    %7232 = vmatprep.subr.bf16.mxu0 %v2954
    %7233 = vmatpush1.bf16.msra.mxu0 %v2953
    %7234 = vmatprep.subr.bf16.mxu0 %v2962
    %7235 = vmatpush1.bf16.msra.mxu0 %v2961
    %7236 = vmatprep.subr.bf16.mxu0 %v2970
    %7237 = vmatpush1.bf16.msra.mxu0 %v2969
    %7238 = vmatprep.subr.bf16.mxu0 %v2978
    %7239 = vmatpush1.bf16.msra.mxu0 %v2977
    %7240 = vmatprep.subr.bf16.mxu0 %v2986
    %7241 = vmatpush1.bf16.msra.mxu0 %v2985
    %7242 = vmatprep.subr.bf16.mxu0 %v2994
    %7243 = vmatpush1.bf16.msra.mxu0 %v2993
    %7244 = vmatprep.subr.bf16.mxu0 %v3002
    %7245 = vmatpush1.bf16.msra.mxu0 %v3001
    %7246 = vmatprep.subr.bf16.mxu0 %v3010
    %7247 = vmatpush1.bf16.msra.mxu0 %v3009
    %7248 = vmatprep.subr.bf16.mxu0 %v3018
    %7249 = vmatpush1.bf16.msra.mxu0 %v3017
    %7250 = vmatprep.subr.bf16.mxu0 %v3026
    %7251 = vmatpush1.bf16.msra.mxu0 %v3025
    %7252 = vmatprep.subr.bf16.mxu0 %v3034
    %7253 = vmatpush1.bf16.msra.mxu0 %v3033
    %7254 = vmatprep.mubr.bf16.mxu0 %v7098
    %7255 = vmatmul.mubr.bf16.gmra.mrb[0].mxu0 %v7097
    %v7256 = vpop.f32.mrb[0].mxu0
    %v7257 = vadd.f32 %v7216, %v7256
    %v7258 = vpop.f32.mrb[0].mxu0
    %v7259 = vadd.f32 %v7218, %v7258
    %v7260 = vpop.f32.mrb[0].mxu0
    %v7261 = vpop.f32.mrb[0].mxu0
    %7262 = vdwg.mxu0
    %7263 = vmatprep.subr.bf16.mxu0 %v2788
    %7264 = vmatpush1.bf16.msra.mxu0 %v2787
    %7265 = vmatprep.subr.bf16.mxu0 %v2796
    %7266 = vmatpush1.bf16.msra.mxu0 %v2795
    %7267 = vmatprep.subr.bf16.mxu0 %v2804
    %7268 = vmatpush1.bf16.msra.mxu0 %v2803
    %7269 = vmatprep.subr.bf16.mxu0 %v2812
    %7270 = vmatpush1.bf16.msra.mxu0 %v2811
    %7271 = vmatprep.subr.bf16.mxu0 %v2820
    %7272 = vmatpush1.bf16.msra.mxu0 %v2819
    %7273 = vmatprep.subr.bf16.mxu0 %v2828
    %7274 = vmatpush1.bf16.msra.mxu0 %v2827
    %7275 = vmatprep.subr.bf16.mxu0 %v2836
    %7276 = vmatpush1.bf16.msra.mxu0 %v2835
    %7277 = vmatprep.subr.bf16.mxu0 %v2844
    %7278 = vmatpush1.bf16.msra.mxu0 %v2843
    %7279 = vmatprep.subr.bf16.mxu0 %v2852
    %7280 = vmatpush1.bf16.msra.mxu0 %v2851
    %7281 = vmatprep.subr.bf16.mxu0 %v2860
    %7282 = vmatpush1.bf16.msra.mxu0 %v2859
    %7283 = vmatprep.subr.bf16.mxu0 %v2868
    %7284 = vmatpush1.bf16.msra.mxu0 %v2867
    %7285 = vmatprep.subr.bf16.mxu0 %v2876
    %7286 = vmatpush1.bf16.msra.mxu0 %v2875
    %7287 = vmatprep.subr.bf16.mxu0 %v2884
    %7288 = vmatpush1.bf16.msra.mxu0 %v2883
    %7289 = vmatprep.subr.bf16.mxu0 %v2892
    %7290 = vmatpush1.bf16.msra.mxu0 %v2891
    %7291 = vmatprep.subr.bf16.mxu0 %v2900
    %7292 = vmatpush1.bf16.msra.mxu0 %v2899
    %7293 = vmatprep.subr.bf16.mxu0 %v2908
    %7294 = vmatpush1.bf16.msra.mxu0 %v2907
    %7295 = vmatprep.mubr.bf16.mxu0 %v7096
    %7296 = vmatmul.mubr.bf16.gmra.mrb[0].mxu0 %v7095
    %v7297 = vpop.f32.mrb[0].mxu0
    %v7298 = vadd.f32 %v1994, %v7297
    %v7299 = vpop.f32.mrb[0].mxu0
    %v7300 = vadd.f32 %v1998, %v7299
    %v7301 = vpop.f32.mrb[0].mxu0
    %v7302 = vpop.f32.mrb[0].mxu0
    %7303 = vdwg.mxu0
    %7304 = vmatprep.subr.bf16.mxu0 %v2916
    %7305 = vmatpush1.bf16.msra.mxu0 %v2915
    %7306 = vmatprep.subr.bf16.mxu0 %v2924
    %7307 = vmatpush1.bf16.msra.mxu0 %v2923
    %7308 = vmatprep.subr.bf16.mxu0 %v2932
    %7309 = vmatpush1.bf16.msra.mxu0 %v2931
    %7310 = vmatprep.subr.bf16.mxu0 %v2940
    %7311 = vmatpush1.bf16.msra.mxu0 %v2939
    %7312 = vmatprep.subr.bf16.mxu0 %v2948
    %7313 = vmatpush1.bf16.msra.mxu0 %v2947
    %7314 = vmatprep.subr.bf16.mxu0 %v2956
    %7315 = vmatpush1.bf16.msra.mxu0 %v2955
    %7316 = vmatprep.subr.bf16.mxu0 %v2964
    %7317 = vmatpush1.bf16.msra.mxu0 %v2963
    %7318 = vmatprep.subr.bf16.mxu0 %v2972
    %7319 = vmatpush1.bf16.msra.mxu0 %v2971
    %7320 = vmatprep.subr.bf16.mxu0 %v2980
    %7321 = vmatpush1.bf16.msra.mxu0 %v2979
    %7322 = vmatprep.subr.bf16.mxu0 %v2988
    %7323 = vmatpush1.bf16.msra.mxu0 %v2987
    %7324 = vmatprep.subr.bf16.mxu0 %v2996
    %7325 = vmatpush1.bf16.msra.mxu0 %v2995
    %7326 = vmatprep.subr.bf16.mxu0 %v3004
    %7327 = vmatpush1.bf16.msra.mxu0 %v3003
    %7328 = vmatprep.subr.bf16.mxu0 %v3012
    %7329 = vmatpush1.bf16.msra.mxu0 %v3011
    %7330 = vmatprep.subr.bf16.mxu0 %v3020
    %7331 = vmatpush1.bf16.msra.mxu0 %v3019
    %7332 = vmatprep.subr.bf16.mxu0 %v3028
    %7333 = vmatpush1.bf16.msra.mxu0 %v3027
    %7334 = vmatprep.subr.bf16.mxu0 %v3036
    %7335 = vmatpush1.bf16.msra.mxu0 %v3035
    %7336 = vmatprep.mubr.bf16.mxu0 %v7098
    %7337 = vmatmul.mubr.bf16.gmra.mrb[0].mxu0 %v7097
    %v7338 = vpop.f32.mrb[0].mxu0
    %v7339 = vadd.f32 %v7298, %v7338
    %v7340 = vpop.f32.mrb[0].mxu0
    %v7341 = vadd.f32 %v7300, %v7340
    %v7342 = vpop.f32.mrb[0].mxu0
    %v7343 = vpop.f32.mrb[0].mxu0
    %7344 = vdwg.mxu0
    %7345 = vmatprep.subr.bf16.mxu0 %v2790
    %7346 = vmatpush1.bf16.msra.mxu0 %v2789
    %7347 = vmatprep.subr.bf16.mxu0 %v2798
    %7348 = vmatpush1.bf16.msra.mxu0 %v2797
    %7349 = vmatprep.subr.bf16.mxu0 %v2806
    %7350 = vmatpush1.bf16.msra.mxu0 %v2805
    %7351 = vmatprep.subr.bf16.mxu0 %v2814
    %7352 = vmatpush1.bf16.msra.mxu0 %v2813
    %7353 = vmatprep.subr.bf16.mxu0 %v2822
    %7354 = vmatpush1.bf16.msra.mxu0 %v2821
    %7355 = vmatprep.subr.bf16.mxu0 %v2830
    %7356 = vmatpush1.bf16.msra.mxu0 %v2829
    %7357 = vmatprep.subr.bf16.mxu0 %v2838
    %7358 = vmatpush1.bf16.msra.mxu0 %v2837
    %7359 = vmatprep.subr.bf16.mxu0 %v2846
    %7360 = vmatpush1.bf16.msra.mxu0 %v2845
    %7361 = vmatprep.subr.bf16.mxu0 %v2854
    %7362 = vmatpush1.bf16.msra.mxu0 %v2853
    %7363 = vmatprep.subr.bf16.mxu0 %v2862
    %7364 = vmatpush1.bf16.msra.mxu0 %v2861
    %7365 = vmatprep.subr.bf16.mxu0 %v2870
    %7366 = vmatpush1.bf16.msra.mxu0 %v2869
    %7367 = vmatprep.subr.bf16.mxu0 %v2878
    %7368 = vmatpush1.bf16.msra.mxu0 %v2877
    %7369 = vmatprep.subr.bf16.mxu0 %v2886
    %7370 = vmatpush1.bf16.msra.mxu0 %v2885
    %7371 = vmatprep.subr.bf16.mxu0 %v2894
    %7372 = vmatpush1.bf16.msra.mxu0 %v2893
    %7373 = vmatprep.subr.bf16.mxu0 %v2902
    %7374 = vmatpush1.bf16.msra.mxu0 %v2901
    %7375 = vmatprep.subr.bf16.mxu0 %v2910
    %7376 = vmatpush1.bf16.msra.mxu0 %v2909
    %7377 = vmatprep.mubr.bf16.mxu0 %v7096
    %7378 = vmatmul.mubr.bf16.gmra.mrb[0].mxu0 %v7095
    %v7379 = vpop.f32.mrb[0].mxu0
    %v7380 = vadd.f32 %v2002, %v7379
    %v7381 = vpop.f32.mrb[0].mxu0
    %v7382 = vadd.f32 %v2006, %v7381
    %v7383 = vpop.f32.mrb[0].mxu0
    %v7384 = vpop.f32.mrb[0].mxu0
    %7385 = vdwg.mxu0
    %7386 = vmatprep.subr.bf16.mxu0 %v2918
    %7387 = vmatpush1.bf16.msra.mxu0 %v2917
    %7388 = vmatprep.subr.bf16.mxu0 %v2926
    %7389 = vmatpush1.bf16.msra.mxu0 %v2925
    %7390 = vmatprep.subr.bf16.mxu0 %v2934
    %7391 = vmatpush1.bf16.msra.mxu0 %v2933
    %7392 = vmatprep.subr.bf16.mxu0 %v2942
    %7393 = vmatpush1.bf16.msra.mxu0 %v2941
    %7394 = vmatprep.subr.bf16.mxu0 %v2950
    %7395 = vmatpush1.bf16.msra.mxu0 %v2949
    %7396 = vmatprep.subr.bf16.mxu0 %v2958
    %7397 = vmatpush1.bf16.msra.mxu0 %v2957
    %7398 = vmatprep.subr.bf16.mxu0 %v2966
    %7399 = vmatpush1.bf16.msra.mxu0 %v2965
    %7400 = vmatprep.subr.bf16.mxu0 %v2974
    %7401 = vmatpush1.bf16.msra.mxu0 %v2973
    %7402 = vmatprep.subr.bf16.mxu0 %v2982
    %7403 = vmatpush1.bf16.msra.mxu0 %v2981
    %7404 = vmatprep.subr.bf16.mxu0 %v2990
    %7405 = vmatpush1.bf16.msra.mxu0 %v2989
    %7406 = vmatprep.subr.bf16.mxu0 %v2998
    %7407 = vmatpush1.bf16.msra.mxu0 %v2997
    %7408 = vmatprep.subr.bf16.mxu0 %v3006
    %7409 = vmatpush1.bf16.msra.mxu0 %v3005
    %7410 = vmatprep.subr.bf16.mxu0 %v3014
    %7411 = vmatpush1.bf16.msra.mxu0 %v3013
    %7412 = vmatprep.subr.bf16.mxu0 %v3022
    %7413 = vmatpush1.bf16.msra.mxu0 %v3021
    %7414 = vmatprep.subr.bf16.mxu0 %v3030
    %7415 = vmatpush1.bf16.msra.mxu0 %v3029
    %7416 = vmatprep.subr.bf16.mxu0 %v3038
    %7417 = vmatpush1.bf16.msra.mxu0 %v3037
    %7418 = vmatprep.mubr.bf16.mxu0 %v7098
    %7419 = vmatmul.mubr.bf16.gmra.mrb[0].mxu0 %v7097
    %v7420 = vpop.f32.mrb[0].mxu0
    %v7421 = vadd.f32 %v7380, %v7420
    %v7422 = vpop.f32.mrb[0].mxu0
    %v7423 = vadd.f32 %v7382, %v7422
    %v7424 = vpop.f32.mrb[0].mxu0
    %v7425 = vpop.f32.mrb[0].mxu0
    %7426 = vdwg.mxu0
    %v7427 = vxor.u32 %v7175, 2147483648
    %v7428 = vxor.u32 %v7177, 2147483648
    %v7429 = vmul.f32 %v7427, 1.442695
    %v7430 = vpow.pop %v7429
    %v7431 = vmul.f32 %v7428, 1.442695
    %v7432 = vpow.pop %v7431
    %v7433 = vadd.f32 %v7430, 1.0
    %v7434 = vadd.f32 %v7432, 1.0
    %v7435 = vrcp.pop %v7433
    %v7436 = vmul.f32 1.0, %v7435
    %v7437 = vrcp.pop %v7434
    %v7438 = vmul.f32 1.0, %v7437
    %v7439 = vxor.u32 %v7257, 2147483648
    %v7440 = vxor.u32 %v7259, 2147483648
    %v7441 = vmul.f32 %v7439, 1.442695
    %v7442 = vpow.pop %v7441
    %v7443 = vmul.f32 %v7440, 1.442695
    %v7444 = vpow.pop %v7443
    %v7445 = vadd.f32 %v7442, 1.0
    %v7446 = vadd.f32 %v7444, 1.0
    %v7447 = vrcp.pop %v7445
    %v7448 = vmul.f32 1.0, %v7447
    %v7449 = vrcp.pop %v7446
    %v7450 = vmul.f32 1.0, %v7449
    %v7451 = vtanh.pop %v7339
    %v7452 = vtanh.pop %v7341
    %v7453 = vxor.u32 %v7421, 2147483648
    %v7454 = vxor.u32 %v7423, 2147483648
    %v7455 = vmul.f32 %v7453, 1.442695
    %v7456 = vpow.pop %v7455
    %v7457 = vmul.f32 %v7454, 1.442695
    %v7458 = vpow.pop %v7457
    %v7459 = vadd.f32 %v7456, 1.0
    %v7460 = vadd.f32 %v7458, 1.0
    %v7461 = vrcp.pop %v7459
    %v7462 = vmul.f32 1.0, %v7461
    %v7463 = vrcp.pop %v7460
    %v7464 = vmul.f32 1.0, %v7463
    %v7465 = vmul.f32 %v7448, %v6835
    %v7466 = vmul.f32 %v7450, %v6836
    %v7467 = vmul.f32 %v7436, %v7451
    %v7468 = vmul.f32 %v7438, %v7452
    %v7469 = vadd.f32 %v7465, %v7467
    %v7470 = vadd.f32 %v7466, %v7468
    %v7471 = vtanh.pop %v7469
    %v7472 = vtanh.pop %v7470
    %v7473 = vmul.f32 %v7462, %v7471
    %v7474 = vmul.f32 %v7464, %v7472
    %s7475 = scalar_lea.vmem [#allocation2], 112
    %v7476 = vld [vmem:[%s7475] sm:$0xff]
    %v7477 = vld [vmem:[%s7475 + $0x8] sm:$0xff]
    %7478 = vmatprep.subr.bf16.mxu0 %v1466
    %7479 = vmatpush1.bf16.msra.mxu0 %v1465
    %7480 = vmatprep.subr.bf16.mxu0 %v1474
    %7481 = vmatpush1.bf16.msra.mxu0 %v1473
    %7482 = vmatprep.subr.bf16.mxu0 %v1482
    %7483 = vmatpush1.bf16.msra.mxu0 %v1481
    %7484 = vmatprep.subr.bf16.mxu0 %v1490
    %7485 = vmatpush1.bf16.msra.mxu0 %v1489
    %7486 = vmatprep.subr.bf16.mxu0 %v1498
    %7487 = vmatpush1.bf16.msra.mxu0 %v1497
    %7488 = vmatprep.subr.bf16.mxu0 %v1506
    %7489 = vmatpush1.bf16.msra.mxu0 %v1505
    %7490 = vmatprep.subr.bf16.mxu0 %v1514
    %7491 = vmatpush1.bf16.msra.mxu0 %v1513
    %7492 = vmatprep.subr.bf16.mxu0 %v1522
    %7493 = vmatpush1.bf16.msra.mxu0 %v1521
    %7494 = vmatprep.subr.bf16.mxu0 %v1530
    %7495 = vmatpush1.bf16.msra.mxu0 %v1529
    %7496 = vmatprep.subr.bf16.mxu0 %v1538
    %7497 = vmatpush1.bf16.msra.mxu0 %v1537
    %7498 = vmatprep.subr.bf16.mxu0 %v1546
    %7499 = vmatpush1.bf16.msra.mxu0 %v1545
    %7500 = vmatprep.subr.bf16.mxu0 %v1554
    %7501 = vmatpush1.bf16.msra.mxu0 %v1553
    %7502 = vmatprep.subr.bf16.mxu0 %v1562
    %7503 = vmatpush1.bf16.msra.mxu0 %v1561
    %7504 = vmatprep.subr.bf16.mxu0 %v1570
    %7505 = vmatpush1.bf16.msra.mxu0 %v1569
    %7506 = vmatprep.subr.bf16.mxu0 %v1578
    %7507 = vmatpush1.bf16.msra.mxu0 %v1577
    %7508 = vmatprep.subr.bf16.mxu0 %v1586
    %7509 = vmatpush1.bf16.msra.mxu0 %v1585
    %7510 = vmatprep.mubr.bf16.mxu0 %v7096
    %7511 = vmatmul.mubr.bf16.gmra.mrb[0].mxu0 %v7095
    %v7512 = vpop.f32.mrb[0].mxu0
    %v7513 = vadd.f32 0.0, %v7512
    %v7514 = vpop.f32.mrb[0].mxu0
    %v7515 = vadd.f32 0.0, %v7514
    %v7516 = vpop.f32.mrb[0].mxu0
    %v7517 = vpop.f32.mrb[0].mxu0
    %7518 = vdwg.mxu0
    %7519 = vmatprep.subr.bf16.mxu0 %v1468
    %7520 = vmatpush1.bf16.msra.mxu0 %v1467
    %7521 = vmatprep.subr.bf16.mxu0 %v1476
    %7522 = vmatpush1.bf16.msra.mxu0 %v1475
    %7523 = vmatprep.subr.bf16.mxu0 %v1484
    %7524 = vmatpush1.bf16.msra.mxu0 %v1483
    %7525 = vmatprep.subr.bf16.mxu0 %v1492
    %7526 = vmatpush1.bf16.msra.mxu0 %v1491
    %7527 = vmatprep.subr.bf16.mxu0 %v1500
    %7528 = vmatpush1.bf16.msra.mxu0 %v1499
    %7529 = vmatprep.subr.bf16.mxu0 %v1508
    %7530 = vmatpush1.bf16.msra.mxu0 %v1507
    %7531 = vmatprep.subr.bf16.mxu0 %v1516
    %7532 = vmatpush1.bf16.msra.mxu0 %v1515
    %7533 = vmatprep.subr.bf16.mxu0 %v1524
    %7534 = vmatpush1.bf16.msra.mxu0 %v1523
    %7535 = vmatprep.subr.bf16.mxu0 %v1532
    %7536 = vmatpush1.bf16.msra.mxu0 %v1531
    %7537 = vmatprep.subr.bf16.mxu0 %v1540
    %7538 = vmatpush1.bf16.msra.mxu0 %v1539
    %7539 = vmatprep.subr.bf16.mxu0 %v1548
    %7540 = vmatpush1.bf16.msra.mxu0 %v1547
    %7541 = vmatprep.subr.bf16.mxu0 %v1556
    %7542 = vmatpush1.bf16.msra.mxu0 %v1555
    %7543 = vmatprep.subr.bf16.mxu0 %v1564
    %7544 = vmatpush1.bf16.msra.mxu0 %v1563
    %7545 = vmatprep.subr.bf16.mxu0 %v1572
    %7546 = vmatpush1.bf16.msra.mxu0 %v1571
    %7547 = vmatprep.subr.bf16.mxu0 %v1580
    %7548 = vmatpush1.bf16.msra.mxu0 %v1579
    %7549 = vmatprep.subr.bf16.mxu0 %v1588
    %7550 = vmatpush1.bf16.msra.mxu0 %v1587
    %7551 = vmatprep.mubr.bf16.mxu0 %v7096
    %7552 = vmatmul.mubr.bf16.gmra.mrb[0].mxu0 %v7095
    %v7553 = vpop.f32.mrb[0].mxu0
    %v7554 = vadd.f32 0.0, %v7553
    %v7555 = vpop.f32.mrb[0].mxu0
    %v7556 = vadd.f32 0.0, %v7555
    %v7557 = vpop.f32.mrb[0].mxu0
    %v7558 = vpop.f32.mrb[0].mxu0
    %7559 = vdwg.mxu0
    %7560 = vmatprep.subr.bf16.mxu0 %v1470
    %7561 = vmatpush1.bf16.msra.mxu0 %v1469
    %7562 = vmatprep.subr.bf16.mxu0 %v1478
    %7563 = vmatpush1.bf16.msra.mxu0 %v1477
    %7564 = vmatprep.subr.bf16.mxu0 %v1486
    %7565 = vmatpush1.bf16.msra.mxu0 %v1485
    %7566 = vmatprep.subr.bf16.mxu0 %v1494
    %7567 = vmatpush1.bf16.msra.mxu0 %v1493
    %7568 = vmatprep.subr.bf16.mxu0 %v1502
    %7569 = vmatpush1.bf16.msra.mxu0 %v1501
    %7570 = vmatprep.subr.bf16.mxu0 %v1510
    %7571 = vmatpush1.bf16.msra.mxu0 %v1509
    %7572 = vmatprep.subr.bf16.mxu0 %v1518
    %7573 = vmatpush1.bf16.msra.mxu0 %v1517
    %7574 = vmatprep.subr.bf16.mxu0 %v1526
    %7575 = vmatpush1.bf16.msra.mxu0 %v1525
    %7576 = vmatprep.subr.bf16.mxu0 %v1534
    %7577 = vmatpush1.bf16.msra.mxu0 %v1533
    %7578 = vmatprep.subr.bf16.mxu0 %v1542
    %7579 = vmatpush1.bf16.msra.mxu0 %v1541
    %7580 = vmatprep.subr.bf16.mxu0 %v1550
    %7581 = vmatpush1.bf16.msra.mxu0 %v1549
    %7582 = vmatprep.subr.bf16.mxu0 %v1558
    %7583 = vmatpush1.bf16.msra.mxu0 %v1557
    %7584 = vmatprep.subr.bf16.mxu0 %v1566
    %7585 = vmatpush1.bf16.msra.mxu0 %v1565
    %7586 = vmatprep.subr.bf16.mxu0 %v1574
    %7587 = vmatpush1.bf16.msra.mxu0 %v1573
    %7588 = vmatprep.subr.bf16.mxu0 %v1582
    %7589 = vmatpush1.bf16.msra.mxu0 %v1581
    %7590 = vmatprep.subr.bf16.mxu0 %v1590
    %7591 = vmatpush1.bf16.msra.mxu0 %v1589
    %7592 = vmatprep.mubr.bf16.mxu0 %v7096
    %7593 = vmatmul.mubr.bf16.gmra.mrb[0].mxu0 %v7095
    %v7594 = vpop.f32.mrb[0].mxu0
    %v7595 = vadd.f32 0.0, %v7594
    %v7596 = vpop.f32.mrb[0].mxu0
    %v7597 = vadd.f32 0.0, %v7596
    %v7598 = vpop.f32.mrb[0].mxu0
    %v7599 = vpop.f32.mrb[0].mxu0
    %7600 = vdwg.mxu0
    %7601 = vmatprep.subr.bf16.mxu0 %v1472
    %7602 = vmatpush1.bf16.msra.mxu0 %v1471
    %7603 = vmatprep.subr.bf16.mxu0 %v1480
    %7604 = vmatpush1.bf16.msra.mxu0 %v1479
    %7605 = vmatprep.subr.bf16.mxu0 %v1488
    %7606 = vmatpush1.bf16.msra.mxu0 %v1487
    %7607 = vmatprep.subr.bf16.mxu0 %v1496
    %7608 = vmatpush1.bf16.msra.mxu0 %v1495
    %7609 = vmatprep.subr.bf16.mxu0 %v1504
    %7610 = vmatpush1.bf16.msra.mxu0 %v1503
    %7611 = vmatprep.subr.bf16.mxu0 %v1512
    %7612 = vmatpush1.bf16.msra.mxu0 %v1511
    %7613 = vmatprep.subr.bf16.mxu0 %v1520
    %7614 = vmatpush1.bf16.msra.mxu0 %v1519
    %7615 = vmatprep.subr.bf16.mxu0 %v1528
    %7616 = vmatpush1.bf16.msra.mxu0 %v1527
    %7617 = vmatprep.subr.bf16.mxu0 %v1536
    %7618 = vmatpush1.bf16.msra.mxu0 %v1535
    %7619 = vmatprep.subr.bf16.mxu0 %v1544
    %7620 = vmatpush1.bf16.msra.mxu0 %v1543
    %7621 = vmatprep.subr.bf16.mxu0 %v1552
    %7622 = vmatpush1.bf16.msra.mxu0 %v1551
    %7623 = vmatprep.subr.bf16.mxu0 %v1560
    %7624 = vmatpush1.bf16.msra.mxu0 %v1559
    %7625 = vmatprep.subr.bf16.mxu0 %v1568
    %7626 = vmatpush1.bf16.msra.mxu0 %v1567
    %7627 = vmatprep.subr.bf16.mxu0 %v1576
    %7628 = vmatpush1.bf16.msra.mxu0 %v1575
    %7629 = vmatprep.subr.bf16.mxu0 %v1584
    %7630 = vmatpush1.bf16.msra.mxu0 %v1583
    %7631 = vmatprep.subr.bf16.mxu0 %v1592
    %7632 = vmatpush1.bf16.msra.mxu0 %v1591
    %7633 = vmatprep.mubr.bf16.mxu0 %v7096
    %7634 = vmatmul.mubr.bf16.gmra.mrb[0].mxu0 %v7095
    %v7635 = vpop.f32.mrb[0].mxu0
    %v7636 = vadd.f32 0.0, %v7635
    %v7637 = vpop.f32.mrb[0].mxu0
    %v7638 = vadd.f32 0.0, %v7637
    %v7639 = vpop.f32.mrb[0].mxu0
    %v7640 = vpop.f32.mrb[0].mxu0
    %7641 = vdwg.mxu0
    %v7650 = vcombine.low %v7513, %v7515
    %v7651 = vcombine.low %v7554, %v7556
    %v7653 = vunpack.c.l.s4 1983009808
    %v7654 = vunpack.c.0.s8 %v7653
    %v7655 = vlaneseq
    %v7656 = vshrl.u32 %v7655, 7
    %v7657 = vsub.s32 %v7654, %v7656
    %v7658 = vrot.slane %v7650, %v7657
    %v7660 = vunpack.c.l.s4 1983009808
    %v7661 = vunpack.c.0.s8 %v7660
    %v7662 = vlaneseq
    %v7663 = vshrl.u32 %v7662, 7
    %v7664 = vsub.s32 %v7661, %v7663
    %v7665 = vrot.slane %v7651, %v7664
    %v7666 = vcombine.low %v7658, %v7665
    %v7667 = vcombine.low %v7595, %v7597
    %v7668 = vcombine.low %v7636, %v7638
    %v7670 = vunpack.c.l.s4 1983009808
    %v7671 = vunpack.c.0.s8 %v7670
    %v7672 = vlaneseq
    %v7673 = vshrl.u32 %v7672, 7
    %v7674 = vsub.s32 %v7671, %v7673
    %v7675 = vrot.slane %v7667, %v7674
    %v7677 = vunpack.c.l.s4 1983009808
    %v7678 = vunpack.c.0.s8 %v7677
    %v7679 = vlaneseq
    %v7680 = vshrl.u32 %v7679, 7
    %v7681 = vsub.s32 %v7678, %v7680
    %v7682 = vrot.slane %v7668, %v7681
    %v7683 = vcombine.low %v7675, %v7682
    %v7686 = vadd.f32 %v7476, %v7666
    %v7687 = vadd.f32 %v7477, %v7683
    %v7688 = vxor.u32 %v7686, 2147483648
    %v7689 = vmul.f32 %v7688, 1.442695
    %v7690 = vpow.pop %v7689
    %v7691 = vadd.f32 %v7690, 1.0
    %v7692 = vrcp.pop %v7691
    %v7693 = vmul.f32 1.0, %v7692
    %v7695 = vrot.slane %v7686, 4
    %v7697 = vxor.u32 %v7695, 2147483648
    %v7698 = vmul.f32 %v7697, 1.442695
    %v7699 = vpow.pop %v7698
    %v7700 = vadd.f32 %v7699, 1.0
    %v7701 = vrcp.pop %v7700
    %v7702 = vmul.f32 1.0, %v7701
    %v7703 = vtanh.pop %v7687
    %v7705 = vrot.slane %v7687, 4
    %v7707 = vxor.u32 %v7705, 2147483648
    %v7708 = vmul.f32 %v7707, 1.442695
    %v7709 = vpow.pop %v7708
    %v7710 = vadd.f32 %v7709, 1.0
    %v7711 = vrcp.pop %v7710
    %v7712 = vmul.f32 1.0, %v7711
    %v7713 = vmul.f32 %v7702, %v7081
    %v7714 = vmul.f32 %v7693, %v7703
    %v7715 = vadd.f32 %v7713, %v7714
    %v7716 = vtanh.pop %v7715
    %v7717 = vmul.f32 %v7712, %v7716
    %v7720 = vunpack.c.l.s4 1983009808
    %v7721 = vunpack.c.0.s8 %v7720
    %v7722 = vlaneseq
    %v7723 = vshrl.u32 %v7722, 7
    %v7724 = vsub.s32 %v7721, %v7723
    %v7725 = vrot.slane %v7717, %v7724
    %v7726 = vcombine.high %v7725, %v7725
    %v7729 = vpack.c.bf16 %v7725, %v7725
    %v7730 = vpack.c.bf16 %v7726, %v7726
    %v7731 = vpack.c.bf16 %v7473, %v7473
    %v7732 = vpack.c.bf16 %v7474, %v7474
    %7733 = vmatprep.subr.bf16.mxu0 %v2784
    %7734 = vmatpush1.bf16.msra.mxu0 %v2783
    %7735 = vmatprep.subr.bf16.mxu0 %v2792
    %7736 = vmatpush1.bf16.msra.mxu0 %v2791
    %7737 = vmatprep.subr.bf16.mxu0 %v2800
    %7738 = vmatpush1.bf16.msra.mxu0 %v2799
    %7739 = vmatprep.subr.bf16.mxu0 %v2808
    %7740 = vmatpush1.bf16.msra.mxu0 %v2807
    %7741 = vmatprep.subr.bf16.mxu0 %v2816
    %7742 = vmatpush1.bf16.msra.mxu0 %v2815
    %7743 = vmatprep.subr.bf16.mxu0 %v2824
    %7744 = vmatpush1.bf16.msra.mxu0 %v2823
    %7745 = vmatprep.subr.bf16.mxu0 %v2832
    %7746 = vmatpush1.bf16.msra.mxu0 %v2831
    %7747 = vmatprep.subr.bf16.mxu0 %v2840
    %7748 = vmatpush1.bf16.msra.mxu0 %v2839
    %7749 = vmatprep.subr.bf16.mxu0 %v2848
    %7750 = vmatpush1.bf16.msra.mxu0 %v2847
    %7751 = vmatprep.subr.bf16.mxu0 %v2856
    %7752 = vmatpush1.bf16.msra.mxu0 %v2855
    %7753 = vmatprep.subr.bf16.mxu0 %v2864
    %7754 = vmatpush1.bf16.msra.mxu0 %v2863
    %7755 = vmatprep.subr.bf16.mxu0 %v2872
    %7756 = vmatpush1.bf16.msra.mxu0 %v2871
    %7757 = vmatprep.subr.bf16.mxu0 %v2880
    %7758 = vmatpush1.bf16.msra.mxu0 %v2879
    %7759 = vmatprep.subr.bf16.mxu0 %v2888
    %7760 = vmatpush1.bf16.msra.mxu0 %v2887
    %7761 = vmatprep.subr.bf16.mxu0 %v2896
    %7762 = vmatpush1.bf16.msra.mxu0 %v2895
    %7763 = vmatprep.subr.bf16.mxu0 %v2904
    %7764 = vmatpush1.bf16.msra.mxu0 %v2903
    %7765 = vmatprep.mubr.bf16.mxu0 %v7730
    %7766 = vmatmul.mubr.bf16.gmra.mrb[0].mxu0 %v7729
    %v7767 = vpop.f32.mrb[0].mxu0
    %v7768 = vadd.f32 %v1978, %v7767
    %v7769 = vpop.f32.mrb[0].mxu0
    %v7770 = vadd.f32 %v1982, %v7769
    %v7771 = vpop.f32.mrb[0].mxu0
    %v7772 = vpop.f32.mrb[0].mxu0
    %7773 = vdwg.mxu0
    %7774 = vmatprep.subr.bf16.mxu0 %v2912
    %7775 = vmatpush1.bf16.msra.mxu0 %v2911
    %7776 = vmatprep.subr.bf16.mxu0 %v2920
    %7777 = vmatpush1.bf16.msra.mxu0 %v2919
    %7778 = vmatprep.subr.bf16.mxu0 %v2928
    %7779 = vmatpush1.bf16.msra.mxu0 %v2927
    %7780 = vmatprep.subr.bf16.mxu0 %v2936
    %7781 = vmatpush1.bf16.msra.mxu0 %v2935
    %7782 = vmatprep.subr.bf16.mxu0 %v2944
    %7783 = vmatpush1.bf16.msra.mxu0 %v2943
    %7784 = vmatprep.subr.bf16.mxu0 %v2952
    %7785 = vmatpush1.bf16.msra.mxu0 %v2951
    %7786 = vmatprep.subr.bf16.mxu0 %v2960
    %7787 = vmatpush1.bf16.msra.mxu0 %v2959
    %7788 = vmatprep.subr.bf16.mxu0 %v2968
    %7789 = vmatpush1.bf16.msra.mxu0 %v2967
    %7790 = vmatprep.subr.bf16.mxu0 %v2976
    %7791 = vmatpush1.bf16.msra.mxu0 %v2975
    %7792 = vmatprep.subr.bf16.mxu0 %v2984
    %7793 = vmatpush1.bf16.msra.mxu0 %v2983
    %7794 = vmatprep.subr.bf16.mxu0 %v2992
    %7795 = vmatpush1.bf16.msra.mxu0 %v2991
    %7796 = vmatprep.subr.bf16.mxu0 %v3000
    %7797 = vmatpush1.bf16.msra.mxu0 %v2999
    %7798 = vmatprep.subr.bf16.mxu0 %v3008
    %7799 = vmatpush1.bf16.msra.mxu0 %v3007
    %7800 = vmatprep.subr.bf16.mxu0 %v3016
    %7801 = vmatpush1.bf16.msra.mxu0 %v3015
    %7802 = vmatprep.subr.bf16.mxu0 %v3024
    %7803 = vmatpush1.bf16.msra.mxu0 %v3023
    %7804 = vmatprep.subr.bf16.mxu0 %v3032
    %7805 = vmatpush1.bf16.msra.mxu0 %v3031
    %7806 = vmatprep.mubr.bf16.mxu0 %v7732
    %7807 = vmatmul.mubr.bf16.gmra.mrb[0].mxu0 %v7731
    %v7808 = vpop.f32.mrb[0].mxu0
    %v7809 = vadd.f32 %v7768, %v7808
    %v7810 = vpop.f32.mrb[0].mxu0
    %v7811 = vadd.f32 %v7770, %v7810
    %v7812 = vpop.f32.mrb[0].mxu0
    %v7813 = vpop.f32.mrb[0].mxu0
    %7814 = vdwg.mxu0
    %7815 = vmatprep.subr.bf16.mxu0 %v2786
    %7816 = vmatpush1.bf16.msra.mxu0 %v2785
    %7817 = vmatprep.subr.bf16.mxu0 %v2794
    %7818 = vmatpush1.bf16.msra.mxu0 %v2793
    %7819 = vmatprep.subr.bf16.mxu0 %v2802
    %7820 = vmatpush1.bf16.msra.mxu0 %v2801
    %7821 = vmatprep.subr.bf16.mxu0 %v2810
    %7822 = vmatpush1.bf16.msra.mxu0 %v2809
    %7823 = vmatprep.subr.bf16.mxu0 %v2818
    %7824 = vmatpush1.bf16.msra.mxu0 %v2817
    %7825 = vmatprep.subr.bf16.mxu0 %v2826
    %7826 = vmatpush1.bf16.msra.mxu0 %v2825
    %7827 = vmatprep.subr.bf16.mxu0 %v2834
    %7828 = vmatpush1.bf16.msra.mxu0 %v2833
    %7829 = vmatprep.subr.bf16.mxu0 %v2842
    %7830 = vmatpush1.bf16.msra.mxu0 %v2841
    %7831 = vmatprep.subr.bf16.mxu0 %v2850
    %7832 = vmatpush1.bf16.msra.mxu0 %v2849
    %7833 = vmatprep.subr.bf16.mxu0 %v2858
    %7834 = vmatpush1.bf16.msra.mxu0 %v2857
    %7835 = vmatprep.subr.bf16.mxu0 %v2866
    %7836 = vmatpush1.bf16.msra.mxu0 %v2865
    %7837 = vmatprep.subr.bf16.mxu0 %v2874
    %7838 = vmatpush1.bf16.msra.mxu0 %v2873
    %7839 = vmatprep.subr.bf16.mxu0 %v2882
    %7840 = vmatpush1.bf16.msra.mxu0 %v2881
    %7841 = vmatprep.subr.bf16.mxu0 %v2890
    %7842 = vmatpush1.bf16.msra.mxu0 %v2889
    %7843 = vmatprep.subr.bf16.mxu0 %v2898
    %7844 = vmatpush1.bf16.msra.mxu0 %v2897
    %7845 = vmatprep.subr.bf16.mxu0 %v2906
    %7846 = vmatpush1.bf16.msra.mxu0 %v2905
    %7847 = vmatprep.mubr.bf16.mxu0 %v7730
    %7848 = vmatmul.mubr.bf16.gmra.mrb[0].mxu0 %v7729
    %v7849 = vpop.f32.mrb[0].mxu0
    %v7850 = vadd.f32 %v1986, %v7849
    %v7851 = vpop.f32.mrb[0].mxu0
    %v7852 = vadd.f32 %v1990, %v7851
    %v7853 = vpop.f32.mrb[0].mxu0
    %v7854 = vpop.f32.mrb[0].mxu0
    %7855 = vdwg.mxu0
    %7856 = vmatprep.subr.bf16.mxu0 %v2914
    %7857 = vmatpush1.bf16.msra.mxu0 %v2913
    %7858 = vmatprep.subr.bf16.mxu0 %v2922
    %7859 = vmatpush1.bf16.msra.mxu0 %v2921
    %7860 = vmatprep.subr.bf16.mxu0 %v2930
    %7861 = vmatpush1.bf16.msra.mxu0 %v2929
    %7862 = vmatprep.subr.bf16.mxu0 %v2938
    %7863 = vmatpush1.bf16.msra.mxu0 %v2937
    %7864 = vmatprep.subr.bf16.mxu0 %v2946
    %7865 = vmatpush1.bf16.msra.mxu0 %v2945
    %7866 = vmatprep.subr.bf16.mxu0 %v2954
    %7867 = vmatpush1.bf16.msra.mxu0 %v2953
    %7868 = vmatprep.subr.bf16.mxu0 %v2962
    %7869 = vmatpush1.bf16.msra.mxu0 %v2961
    %7870 = vmatprep.subr.bf16.mxu0 %v2970
    %7871 = vmatpush1.bf16.msra.mxu0 %v2969
    %7872 = vmatprep.subr.bf16.mxu0 %v2978
    %7873 = vmatpush1.bf16.msra.mxu0 %v2977
    %7874 = vmatprep.subr.bf16.mxu0 %v2986
    %7875 = vmatpush1.bf16.msra.mxu0 %v2985
    %7876 = vmatprep.subr.bf16.mxu0 %v2994
    %7877 = vmatpush1.bf16.msra.mxu0 %v2993
    %7878 = vmatprep.subr.bf16.mxu0 %v3002
    %7879 = vmatpush1.bf16.msra.mxu0 %v3001
    %7880 = vmatprep.subr.bf16.mxu0 %v3010
    %7881 = vmatpush1.bf16.msra.mxu0 %v3009
    %7882 = vmatprep.subr.bf16.mxu0 %v3018
    %7883 = vmatpush1.bf16.msra.mxu0 %v3017
    %7884 = vmatprep.subr.bf16.mxu0 %v3026
    %7885 = vmatpush1.bf16.msra.mxu0 %v3025
    %7886 = vmatprep.subr.bf16.mxu0 %v3034
    %7887 = vmatpush1.bf16.msra.mxu0 %v3033
    %7888 = vmatprep.mubr.bf16.mxu0 %v7732
    %7889 = vmatmul.mubr.bf16.gmra.mrb[0].mxu0 %v7731
    %v7890 = vpop.f32.mrb[0].mxu0
    %v7891 = vadd.f32 %v7850, %v7890
    %v7892 = vpop.f32.mrb[0].mxu0
    %v7893 = vadd.f32 %v7852, %v7892
    %v7894 = vpop.f32.mrb[0].mxu0
    %v7895 = vpop.f32.mrb[0].mxu0
    %7896 = vdwg.mxu0
    %7897 = vmatprep.subr.bf16.mxu0 %v2788
    %7898 = vmatpush1.bf16.msra.mxu0 %v2787
    %7899 = vmatprep.subr.bf16.mxu0 %v2796
    %7900 = vmatpush1.bf16.msra.mxu0 %v2795
    %7901 = vmatprep.subr.bf16.mxu0 %v2804
    %7902 = vmatpush1.bf16.msra.mxu0 %v2803
    %7903 = vmatprep.subr.bf16.mxu0 %v2812
    %7904 = vmatpush1.bf16.msra.mxu0 %v2811
    %7905 = vmatprep.subr.bf16.mxu0 %v2820
    %7906 = vmatpush1.bf16.msra.mxu0 %v2819
    %7907 = vmatprep.subr.bf16.mxu0 %v2828
    %7908 = vmatpush1.bf16.msra.mxu0 %v2827
    %7909 = vmatprep.subr.bf16.mxu0 %v2836
    %7910 = vmatpush1.bf16.msra.mxu0 %v2835
    %7911 = vmatprep.subr.bf16.mxu0 %v2844
    %7912 = vmatpush1.bf16.msra.mxu0 %v2843
    %7913 = vmatprep.subr.bf16.mxu0 %v2852
    %7914 = vmatpush1.bf16.msra.mxu0 %v2851
    %7915 = vmatprep.subr.bf16.mxu0 %v2860
    %7916 = vmatpush1.bf16.msra.mxu0 %v2859
    %7917 = vmatprep.subr.bf16.mxu0 %v2868
    %7918 = vmatpush1.bf16.msra.mxu0 %v2867
    %7919 = vmatprep.subr.bf16.mxu0 %v2876
    %7920 = vmatpush1.bf16.msra.mxu0 %v2875
    %7921 = vmatprep.subr.bf16.mxu0 %v2884
    %7922 = vmatpush1.bf16.msra.mxu0 %v2883
    %7923 = vmatprep.subr.bf16.mxu0 %v2892
    %7924 = vmatpush1.bf16.msra.mxu0 %v2891
    %7925 = vmatprep.subr.bf16.mxu0 %v2900
    %7926 = vmatpush1.bf16.msra.mxu0 %v2899
    %7927 = vmatprep.subr.bf16.mxu0 %v2908
    %7928 = vmatpush1.bf16.msra.mxu0 %v2907
    %7929 = vmatprep.mubr.bf16.mxu0 %v7730
    %7930 = vmatmul.mubr.bf16.gmra.mrb[0].mxu0 %v7729
    %v7931 = vpop.f32.mrb[0].mxu0
    %v7932 = vadd.f32 %v1994, %v7931
    %v7933 = vpop.f32.mrb[0].mxu0
    %v7934 = vadd.f32 %v1998, %v7933
    %v7935 = vpop.f32.mrb[0].mxu0
    %v7936 = vpop.f32.mrb[0].mxu0
    %7937 = vdwg.mxu0
    %7938 = vmatprep.subr.bf16.mxu0 %v2916
    %7939 = vmatpush1.bf16.msra.mxu0 %v2915
    %7940 = vmatprep.subr.bf16.mxu0 %v2924
    %7941 = vmatpush1.bf16.msra.mxu0 %v2923
    %7942 = vmatprep.subr.bf16.mxu0 %v2932
    %7943 = vmatpush1.bf16.msra.mxu0 %v2931
    %7944 = vmatprep.subr.bf16.mxu0 %v2940
    %7945 = vmatpush1.bf16.msra.mxu0 %v2939
    %7946 = vmatprep.subr.bf16.mxu0 %v2948
    %7947 = vmatpush1.bf16.msra.mxu0 %v2947
    %7948 = vmatprep.subr.bf16.mxu0 %v2956
    %7949 = vmatpush1.bf16.msra.mxu0 %v2955
    %7950 = vmatprep.subr.bf16.mxu0 %v2964
    %7951 = vmatpush1.bf16.msra.mxu0 %v2963
    %7952 = vmatprep.subr.bf16.mxu0 %v2972
    %7953 = vmatpush1.bf16.msra.mxu0 %v2971
    %7954 = vmatprep.subr.bf16.mxu0 %v2980
    %7955 = vmatpush1.bf16.msra.mxu0 %v2979
    %7956 = vmatprep.subr.bf16.mxu0 %v2988
    %7957 = vmatpush1.bf16.msra.mxu0 %v2987
    %7958 = vmatprep.subr.bf16.mxu0 %v2996
    %7959 = vmatpush1.bf16.msra.mxu0 %v2995
    %7960 = vmatprep.subr.bf16.mxu0 %v3004
    %7961 = vmatpush1.bf16.msra.mxu0 %v3003
    %7962 = vmatprep.subr.bf16.mxu0 %v3012
    %7963 = vmatpush1.bf16.msra.mxu0 %v3011
    %7964 = vmatprep.subr.bf16.mxu0 %v3020
    %7965 = vmatpush1.bf16.msra.mxu0 %v3019
    %7966 = vmatprep.subr.bf16.mxu0 %v3028
    %7967 = vmatpush1.bf16.msra.mxu0 %v3027
    %7968 = vmatprep.subr.bf16.mxu0 %v3036
    %7969 = vmatpush1.bf16.msra.mxu0 %v3035
    %7970 = vmatprep.mubr.bf16.mxu0 %v7732
    %7971 = vmatmul.mubr.bf16.gmra.mrb[0].mxu0 %v7731
    %v7972 = vpop.f32.mrb[0].mxu0
    %v7973 = vadd.f32 %v7932, %v7972
    %v7974 = vpop.f32.mrb[0].mxu0
    %v7975 = vadd.f32 %v7934, %v7974
    %v7976 = vpop.f32.mrb[0].mxu0
    %v7977 = vpop.f32.mrb[0].mxu0
    %7978 = vdwg.mxu0
    %7979 = vmatprep.subr.bf16.mxu0 %v2790
    %7980 = vmatpush1.bf16.msra.mxu0 %v2789
    %7981 = vmatprep.subr.bf16.mxu0 %v2798
    %7982 = vmatpush1.bf16.msra.mxu0 %v2797
    %7983 = vmatprep.subr.bf16.mxu0 %v2806
    %7984 = vmatpush1.bf16.msra.mxu0 %v2805
    %7985 = vmatprep.subr.bf16.mxu0 %v2814
    %7986 = vmatpush1.bf16.msra.mxu0 %v2813
    %7987 = vmatprep.subr.bf16.mxu0 %v2822
    %7988 = vmatpush1.bf16.msra.mxu0 %v2821
    %7989 = vmatprep.subr.bf16.mxu0 %v2830
    %7990 = vmatpush1.bf16.msra.mxu0 %v2829
    %7991 = vmatprep.subr.bf16.mxu0 %v2838
    %7992 = vmatpush1.bf16.msra.mxu0 %v2837
    %7993 = vmatprep.subr.bf16.mxu0 %v2846
    %7994 = vmatpush1.bf16.msra.mxu0 %v2845
    %7995 = vmatprep.subr.bf16.mxu0 %v2854
    %7996 = vmatpush1.bf16.msra.mxu0 %v2853
    %7997 = vmatprep.subr.bf16.mxu0 %v2862
    %7998 = vmatpush1.bf16.msra.mxu0 %v2861
    %7999 = vmatprep.subr.bf16.mxu0 %v2870
    %8000 = vmatpush1.bf16.msra.mxu0 %v2869
    %8001 = vmatprep.subr.bf16.mxu0 %v2878
    %8002 = vmatpush1.bf16.msra.mxu0 %v2877
    %8003 = vmatprep.subr.bf16.mxu0 %v2886
    %8004 = vmatpush1.bf16.msra.mxu0 %v2885
    %8005 = vmatprep.subr.bf16.mxu0 %v2894
    %8006 = vmatpush1.bf16.msra.mxu0 %v2893
    %8007 = vmatprep.subr.bf16.mxu0 %v2902
    %8008 = vmatpush1.bf16.msra.mxu0 %v2901
    %8009 = vmatprep.subr.bf16.mxu0 %v2910
    %8010 = vmatpush1.bf16.msra.mxu0 %v2909
    %8011 = vmatprep.mubr.bf16.mxu0 %v7730
    %8012 = vmatmul.mubr.bf16.gmra.mrb[0].mxu0 %v7729
    %v8013 = vpop.f32.mrb[0].mxu0
    %v8014 = vadd.f32 %v2002, %v8013
    %v8015 = vpop.f32.mrb[0].mxu0
    %v8016 = vadd.f32 %v2006, %v8015
    %v8017 = vpop.f32.mrb[0].mxu0
    %v8018 = vpop.f32.mrb[0].mxu0
    %8019 = vdwg.mxu0
    %8020 = vmatprep.subr.bf16.mxu0 %v2918
    %8021 = vmatpush1.bf16.msra.mxu0 %v2917
    %8022 = vmatprep.subr.bf16.mxu0 %v2926
    %8023 = vmatpush1.bf16.msra.mxu0 %v2925
    %8024 = vmatprep.subr.bf16.mxu0 %v2934
    %8025 = vmatpush1.bf16.msra.mxu0 %v2933
    %8026 = vmatprep.subr.bf16.mxu0 %v2942
    %8027 = vmatpush1.bf16.msra.mxu0 %v2941
    %8028 = vmatprep.subr.bf16.mxu0 %v2950
    %8029 = vmatpush1.bf16.msra.mxu0 %v2949
    %8030 = vmatprep.subr.bf16.mxu0 %v2958
    %8031 = vmatpush1.bf16.msra.mxu0 %v2957
    %8032 = vmatprep.subr.bf16.mxu0 %v2966
    %8033 = vmatpush1.bf16.msra.mxu0 %v2965
    %8034 = vmatprep.subr.bf16.mxu0 %v2974
    %8035 = vmatpush1.bf16.msra.mxu0 %v2973
    %8036 = vmatprep.subr.bf16.mxu0 %v2982
    %8037 = vmatpush1.bf16.msra.mxu0 %v2981
    %8038 = vmatprep.subr.bf16.mxu0 %v2990
    %8039 = vmatpush1.bf16.msra.mxu0 %v2989
    %8040 = vmatprep.subr.bf16.mxu0 %v2998
    %8041 = vmatpush1.bf16.msra.mxu0 %v2997
    %8042 = vmatprep.subr.bf16.mxu0 %v3006
    %8043 = vmatpush1.bf16.msra.mxu0 %v3005
    %8044 = vmatprep.subr.bf16.mxu0 %v3014
    %8045 = vmatpush1.bf16.msra.mxu0 %v3013
    %8046 = vmatprep.subr.bf16.mxu0 %v3022
    %8047 = vmatpush1.bf16.msra.mxu0 %v3021
    %8048 = vmatprep.subr.bf16.mxu0 %v3030
    %8049 = vmatpush1.bf16.msra.mxu0 %v3029
    %8050 = vmatprep.subr.bf16.mxu0 %v3038
    %8051 = vmatpush1.bf16.msra.mxu0 %v3037
    %8052 = vmatprep.mubr.bf16.mxu0 %v7732
    %8053 = vmatmul.mubr.bf16.gmra.mrb[0].mxu0 %v7731
    %v8054 = vpop.f32.mrb[0].mxu0
    %v8055 = vadd.f32 %v8014, %v8054
    %v8056 = vpop.f32.mrb[0].mxu0
    %v8057 = vadd.f32 %v8016, %v8056
    %v8058 = vpop.f32.mrb[0].mxu0
    %v8059 = vpop.f32.mrb[0].mxu0
    %8060 = vdwg.mxu0
    %v8061 = vxor.u32 %v7809, 2147483648
    %v8062 = vxor.u32 %v7811, 2147483648
    %v8063 = vmul.f32 %v8061, 1.442695
    %v8064 = vpow.pop %v8063
    %v8065 = vmul.f32 %v8062, 1.442695
    %v8066 = vpow.pop %v8065
    %v8067 = vadd.f32 %v8064, 1.0
    %v8068 = vadd.f32 %v8066, 1.0
    %v8069 = vrcp.pop %v8067
    %v8070 = vmul.f32 1.0, %v8069
    %v8071 = vrcp.pop %v8068
    %v8072 = vmul.f32 1.0, %v8071
    %v8073 = vxor.u32 %v7891, 2147483648
    %v8074 = vxor.u32 %v7893, 2147483648
    %v8075 = vmul.f32 %v8073, 1.442695
    %v8076 = vpow.pop %v8075
    %v8077 = vmul.f32 %v8074, 1.442695
    %v8078 = vpow.pop %v8077
    %v8079 = vadd.f32 %v8076, 1.0
    %v8080 = vadd.f32 %v8078, 1.0
    %v8081 = vrcp.pop %v8079
    %v8082 = vmul.f32 1.0, %v8081
    %v8083 = vrcp.pop %v8080
    %v8084 = vmul.f32 1.0, %v8083
    %v8085 = vtanh.pop %v7973
    %v8086 = vtanh.pop %v7975
    %v8087 = vxor.u32 %v8055, 2147483648
    %v8088 = vxor.u32 %v8057, 2147483648
    %v8089 = vmul.f32 %v8087, 1.442695
    %v8090 = vpow.pop %v8089
    %v8091 = vmul.f32 %v8088, 1.442695
    %v8092 = vpow.pop %v8091
    %v8093 = vadd.f32 %v8090, 1.0
    %v8094 = vadd.f32 %v8092, 1.0
    %v8095 = vrcp.pop %v8093
    %v8096 = vmul.f32 1.0, %v8095
    %v8097 = vrcp.pop %v8094
    %v8098 = vmul.f32 1.0, %v8097
    %v8099 = vmul.f32 %v8082, %v7469
    %v8100 = vmul.f32 %v8084, %v7470
    %v8101 = vmul.f32 %v8070, %v8085
    %v8102 = vmul.f32 %v8072, %v8086
    %v8103 = vadd.f32 %v8099, %v8101
    %v8104 = vadd.f32 %v8100, %v8102
    %v8105 = vtanh.pop %v8103
    %v8106 = vtanh.pop %v8104
    %v8107 = vmul.f32 %v8096, %v8105
    %v8108 = vmul.f32 %v8098, %v8106
    %v8109 = vld [vmem:[%s6] sm:$0xff]
    %v8110 = vld [vmem:[%s6 + $0x8] sm:$0xff]
    %v8111 = vld [vmem:[%s6 + $0x10] sm:$0xff]
    %v8112 = vld [vmem:[%s6 + $0x18] sm:$0xff]
    %v8113 = vld [vmem:[%s6 + $0x20] sm:$0xff]
    %v8114 = vld [vmem:[%s6 + $0x28] sm:$0xff]
    %v8115 = vld [vmem:[%s6 + $0x30] sm:$0xff]
    %v8116 = vld [vmem:[%s6 + $0x38] sm:$0xff]
    %v8117 = vld [vmem:[%s6 + $0x40] sm:$0xff]
    %v8118 = vld [vmem:[%s6 + $0x48] sm:$0xff]
    %v8119 = vld [vmem:[%s6 + $0x50] sm:$0xff]
    %v8120 = vld [vmem:[%s6 + $0x58] sm:$0xff]
    %v8121 = vld [vmem:[%s6 + $0x60] sm:$0xff]
    %v8122 = vld [vmem:[%s6 + $0x68] sm:$0xff]
    %v8123 = vld [vmem:[%s6 + $0x70] sm:$0xff]
    %v8124 = vld [vmem:[%s6 + $0x78] sm:$0xff]
    %v8125 = vld [vmem:[%s6 + $0x80] sm:$0xff]
    %v8126 = vld [vmem:[%s6 + $0x88] sm:$0xff]
    %v8127 = vld [vmem:[%s6 + $0x90] sm:$0xff]
    %v8128 = vld [vmem:[%s6 + $0x98] sm:$0xff]
    %v8129 = vld [vmem:[%s6 + $0xa0] sm:$0xff]
    %v8130 = vld [vmem:[%s6 + $0xa8] sm:$0xff]
    %v8131 = vld [vmem:[%s6 + $0xb0] sm:$0xff]
    %v8132 = vld [vmem:[%s6 + $0xb8] sm:$0xff]
    %v8133 = vld [vmem:[%s6 + $0xc0] sm:$0xff]
    %v8134 = vld [vmem:[%s6 + $0xc8] sm:$0xff]
    %v8135 = vld [vmem:[%s6 + $0xd0] sm:$0xff]
    %v8136 = vld [vmem:[%s6 + $0xd8] sm:$0xff]
    %v8137 = vld [vmem:[%s6 + $0xe0] sm:$0xff]
    %v8138 = vld [vmem:[%s6 + $0xe8] sm:$0xff]
    %v8139 = vld [vmem:[%s6 + $0xf0] sm:$0xff]
    %v8140 = vld [vmem:[%s6 + $0xf8] sm:$0xff]
    %v8141 = vld [vmem:[%s7] sm:$0x1]
    %v8143 = vlaneseq
    %v8144 = vshrl.u32 %v8143, 7
    %v8145 = vsub.s32 0, %v8144
    %v8146 = vrot.slane %v8141, %v8145
    %8148 = vmatprep.subr.mxu0 0.0
    %8149 = vmatpush1.msra.mxu0 %v8109
    %8150 = vmatprep.subr.mxu0 0.0
    %8151 = vmatpush1.msra.mxu0 %v8110
    %8152 = vmatprep.subr.mxu0 0.0
    %8153 = vmatpush1.msra.mxu0 %v8111
    %8154 = vmatprep.subr.mxu0 0.0
    %8155 = vmatpush1.msra.mxu0 %v8112
    %8156 = vmatprep.subr.mxu0 0.0
    %8157 = vmatpush1.msra.mxu0 %v8113
    %8158 = vmatprep.subr.mxu0 0.0
    %8159 = vmatpush1.msra.mxu0 %v8114
    %8160 = vmatprep.subr.mxu0 0.0
    %8161 = vmatpush1.msra.mxu0 %v8115
    %8162 = vmatprep.subr.mxu0 0.0
    %8163 = vmatpush1.msra.mxu0 %v8116
    %8164 = vmatprep.subr.mxu0 0.0
    %8165 = vmatpush1.msra.mxu0 %v8117
    %8166 = vmatprep.subr.mxu0 0.0
    %8167 = vmatpush1.msra.mxu0 %v8118
    %8168 = vmatprep.subr.mxu0 0.0
    %8169 = vmatpush1.msra.mxu0 %v8119
    %8170 = vmatprep.subr.mxu0 0.0
    %8171 = vmatpush1.msra.mxu0 %v8120
    %8172 = vmatprep.subr.mxu0 0.0
    %8173 = vmatpush1.msra.mxu0 %v8121
    %8174 = vmatprep.subr.mxu0 0.0
    %8175 = vmatpush1.msra.mxu0 %v8122
    %8176 = vmatprep.subr.mxu0 0.0
    %8177 = vmatpush1.msra.mxu0 %v8123
    %8178 = vmatprep.subr.mxu0 0.0
    %8179 = vmatpush1.msra.mxu0 %v8124
    %8180 = vmatprep.subr.mxu0 0.0
    %8181 = vmatpush1.msra.mxu0 %v8125
    %8182 = vmatprep.subr.mxu0 0.0
    %8183 = vmatpush1.msra.mxu0 %v8126
    %8184 = vmatprep.subr.mxu0 0.0
    %8185 = vmatpush1.msra.mxu0 %v8127
    %8186 = vmatprep.subr.mxu0 0.0
    %8187 = vmatpush1.msra.mxu0 %v8128
    %8188 = vmatprep.subr.mxu0 0.0
    %8189 = vmatpush1.msra.mxu0 %v8129
    %8190 = vmatprep.subr.mxu0 0.0
    %8191 = vmatpush1.msra.mxu0 %v8130
    %8192 = vmatprep.subr.mxu0 0.0
    %8193 = vmatpush1.msra.mxu0 %v8131
    %8194 = vmatprep.subr.mxu0 0.0
    %8195 = vmatpush1.msra.mxu0 %v8132
    %8196 = vmatprep.subr.mxu0 0.0
    %8197 = vmatpush1.msra.mxu0 %v8133
    %8198 = vmatprep.subr.mxu0 0.0
    %8199 = vmatpush1.msra.mxu0 %v8134
    %8200 = vmatprep.subr.mxu0 0.0
    %8201 = vmatpush1.msra.mxu0 %v8135
    %8202 = vmatprep.subr.mxu0 0.0
    %8203 = vmatpush1.msra.mxu0 %v8136
    %8204 = vmatprep.subr.mxu0 0.0
    %8205 = vmatpush1.msra.mxu0 %v8137
    %8206 = vmatprep.subr.mxu0 0.0
    %8207 = vmatpush1.msra.mxu0 %v8138
    %8208 = vmatprep.subr.mxu0 0.0
    %8209 = vmatpush1.msra.mxu0 %v8139
    %8210 = vmatprep.subr.mxu0 0.0
    %8211 = vmatpush1.msra.mxu0 %v8140
    %8212 = vmatprep.mubr.f32.mxu0 %v8108
    %8213 = vmatmul.mubr.f32.gmra.mrb[0].mxu0 %v8107
    %v8214 = vpop.f32.mrb[0].mxu0
    %v8215 = vadd.f32 %v8146, %v8214
    %v8216 = vpop.f32.mrb[0].mxu0
    %8217 = vdwg.mxu0
    %v8218 = vld [vmem:[%s8] sm:$0x1]
    %v8220 = vlaneseq
    %v8221 = vshrl.u32 %v8220, 7
    %v8222 = vsub.s32 0, %v8221
    %v8223 = vrot.slane %v8218, %v8222
    %v8225 = vmul.f32 %v8215, %v8223
    %vm8226 = vcmask 517120
    %v8227 = vsel %vm8226, %v8225, 0.0
    %8228 = vadd.xlane.f32.xlu0 %v8227
    %v8229 = vpop.xlane.xlu0 %8228
    %v8230 = vld [vmem:[#allocation3] sm:$0x1]
    %v8232 = vlaneseq
    %v8233 = vshrl.u32 %v8232, 7
    %v8234 = vsub.s32 0, %v8233
    %v8235 = vrot.slane %v8230, %v8234
    %v8237 = vadd.f32 %v8229, %v8235
    %vm8238 = vcmask 1024
    %8239 = vst.msk [vmem:[%s10] sm:$0x3] %vm8238, %v8237
    // Predicated region
    $region50: #{regrnet_forward.1} parent=1 // pred_check
      _
    $region51: #{regrnet_forward.1} parent=1 // pred_check_branch
      %8241 = sbr.rel (0) target = $region53
    $region52: #{regrnet_forward.1} parent=1 // pred_region
      _
    $region53: #{regrnet_forward.1} parent=1 // pred_fallthru
      _
    // Predicated region
    $region54: #{regrnet_forward.1} parent=1 // pred_check
      _
    $region55: #{regrnet_forward.1} parent=1 // pred_check_branch
      %8243 = sbr.rel (0) target = $region57
    $region56: #{regrnet_forward.1} parent=1 // pred_region
      _
    $region57: #{regrnet_forward.1} parent=1 // pred_fallthru
      _
    %8244 = vsyncpa [#allocation5], 1
    %8245 = vsyncpa [#allocation7], 1

</llo_original>
